<compile_context>
chip_gen: v6e
topology: v6e:2x2x1
jax: 0.10.0
libtpu: 0.0.40
codegen_flags: <defaults>
</compile_context>

<pallas_src>
import jax
import jax.numpy as jnp
from jax import lax
from jax.experimental import pallas as pl
from jax.experimental.pallas import tpu as pltpu

# ----------------------------- configuration -------------------------------
NUM_GENES        = 16                           # G
DIM_OUT_GAT      = 8
NUM_HEAD_GAT     = 4
D_MODEL          = DIM_OUT_GAT * NUM_HEAD_GAT   # 32  (transformer model dim)
NUM_LAYERS_TRANS = 2
NUM_HEADS_TRANS  = 4
DIM_HEAD_TRANS   = 8
DIM_QKV          = NUM_HEADS_TRANS * DIM_HEAD_TRANS   # 32
DIM_HID_TRANS    = 2 * D_MODEL                  # 64
DIM_IN_GCN       = D_MODEL                      # 32
DIM_HID_GCN      = 32
DIM_OUT_GCN      = 16
NUM_CMPD_TOKENS  = 8                            # M
BATCH            = 2

BG = BATCH * NUM_GENES          # flattened gene rows
BM = BATCH * NUM_CMPD_TOKENS    # flattened compound rows

# the single-slab weight packing relies on these widths lining up with D_MODEL
assert DIM_QKV == D_MODEL
assert DIM_IN_GCN == D_MODEL
assert DIM_HID_GCN == D_MODEL
assert DIM_OUT_GCN <= D_MODEL


# ----------------------- weight-slab layout (static) ------------------------
def _build_slab_layout():
    layout, off = {}, 0

    def add(name, rows):
        nonlocal off
        layout[name] = (off, rows)
        off += rows

    for l in range(NUM_LAYERS_TRANS):
        add(f"wqT{l}", DIM_QKV)            # (H*dh, D)  = Wq[l].T
        add(f"wkT{l}", DIM_QKV)
        add(f"wvT{l}", DIM_QKV)
        add(f"wo{l}",  DIM_QKV)            # (H*dh, D)  (normal orientation)
        add(f"wff1T{l}", DIM_HID_TRANS)    # (HID, D)   = Wff1[l].T
        add(f"wff2{l}",  DIM_HID_TRANS)    # (HID, D)
    add("gcn_w1",  DIM_IN_GCN)             # (D, GHID)
    add("gcn_w2T", DIM_OUT_GCN)            # (GOUT, GHID) = W2.T
    for l in range(NUM_LAYERS_TRANS):
        for name in ("ln1_g", "ln1_b", "ln2_g", "ln2_b", "bff2"):
            add(f"{name}{l}", 1)
    add("gcn_b1", 1)
    add("gcn_b2", 1)                       # padded to D_MODEL lanes
    return layout, off


SLAB_LAYOUT, SLAB_ROWS = _build_slab_layout()


def _blk(slab_ref, name):
    """Load one packed weight block (static sublane slice of the slab)."""
    off, rows = SLAB_LAYOUT[name]
    return slab_ref[off:off + rows, :]


def _layer_norm(x, gamma, beta, eps=1e-5):
    mu = jnp.mean(x, axis=-1, keepdims=True)
    var = jnp.mean(x * x, axis=-1, keepdims=True) - mu * mu   # single-pass
    return (x - mu) * lax.rsqrt(var + eps) * gamma + beta


# ------------------------------- kernel ------------------------------------
def tsp_kernel(tok_ref, dose_ref, graph_ref, slab_ref, bff1_ref, out_ref):
    f32 = jnp.float32
    G, M, B = NUM_GENES, NUM_CMPD_TOKENS, BATCH
    H, dh = NUM_HEADS_TRANS, DIM_HEAD_TRANS
    inv_sqrt_dh = 1.0 / (float(dh) ** 0.5)

    def dot_t(a, b):  # a @ b.T via dot_general contracting last dims (no XLU .T)
        return lax.dot_general(a, b, (((1,), (1,)), ((), ())),
                               preferred_element_type=f32)

    # -------- unpack the flat token slab: [gene | ck | cv | cell] ----------
    genef = tok_ref[0:BG, :]                            # (B*G, D)
    ckf   = tok_ref[BG:BG + BM, :]                      # (B*M, D)
    cvf   = tok_ref[BG + BM:BG + 2 * BM, :]             # (B*M, D)
    cellf = tok_ref[BG + 2 * BM:BG + 2 * BM + B, :]     # (B, D)

    # gene embeddings + per-sample cell-line token (broadcast over genes)
    x = jnp.concatenate(
        [genef[b * G:(b + 1) * G, :] + cellf[b:b + 1, :] for b in range(B)],
        axis=0)                                         # (B*G, D)

    # -------------------- transformer (cross-attention) --------------------
    for l in range(NUM_LAYERS_TRANS):
        wqT = _blk(slab_ref, f"wqT{l}")                 # (H*dh, D)
        wkT = _blk(slab_ref, f"wkT{l}")
        wvT = _blk(slab_ref, f"wvT{l}")
        wo  = _blk(slab_ref, f"wo{l}")                  # (H*dh, D)

        # K/V do not depend on x -> compute ahead of the x-dependent chain.
        # Per-head projections via sublane slices of the transposed weights.
        k_h = [dot_t(ckf, wkT[h * dh:(h + 1) * dh, :]) for h in range(H)]   # (B*M, dh)
        v_h = [dot_t(cvf, wvT[h * dh:(h + 1) * dh, :]) for h in range(H)]
        q_h = [dot_t(x,   wqT[h * dh:(h + 1) * dh, :]) for h in range(H)]   # (B*G, dh)

        per_sample = []
        for b in range(B):
            heads = []
            for h in range(H):
                qb = q_h[h][b * G:(b + 1) * G, :]       # (G, dh)
                kb = k_h[h][b * M:(b + 1) * M, :]       # (M, dh)
                vb = v_h[h][b * M:(b + 1) * M, :]       # (M, dh)
                s = dot_t(qb, kb) * inv_sqrt_dh         # (G, M) == q @ k.T
                s = s - jnp.max(s, axis=-1, keepdims=True)
                p = jnp.exp(s)
                p = p * pl.reciprocal(jnp.sum(p, axis=-1, keepdims=True),
                                      approx=True)
                heads.append(jnp.dot(p, vb, preferred_element_type=f32))    # (G, dh)
            per_sample.append(jnp.concatenate(heads, axis=-1))              # (G, H*dh)
        attn = jnp.concatenate(per_sample, axis=0)                          # (B*G, H*dh)
        attn = jnp.dot(attn, wo, preferred_element_type=f32)  # ONE Wo matmul per layer

        x = _layer_norm(x + attn,
                        _blk(slab_ref, f"ln1_g{l}"), _blk(slab_ref, f"ln1_b{l}"))

        hdd = dot_t(x, _blk(slab_ref, f"wff1T{l}")) + bff1_ref[l]           # (B*G, HID)
        hdd = jnp.maximum(hdd, 0.0)
        ff = jnp.dot(hdd, _blk(slab_ref, f"wff2{l}"), preferred_element_type=f32)
        ff = ff + _blk(slab_ref, f"bff2{l}")
        x = _layer_norm(x + ff,
                        _blk(slab_ref, f"ln2_g{l}"), _blk(slab_ref, f"ln2_b{l}"))

    # ------------------------ learnable dose gating -------------------------
    dose  = dose_ref[0]                                  # (B*G, 1)
    kdose = dose_ref[1]                                  # (B*G, 1) per-gene slope
    scale = pl.reciprocal(1.0 + jnp.exp(-kdose * dose), approx=True)
    x = x * scale

    # --------------------- weighted graph convolution -----------------------
    a = graph_ref[0] * graph_ref[1]                      # (G, G)
    xw = jnp.dot(x, _blk(slab_ref, "gcn_w1"), preferred_element_type=f32)   # (B*G, GHID)
    h1 = jnp.concatenate(
        [jnp.dot(a, xw[b * G:(b + 1) * G, :], preferred_element_type=f32)
         for b in range(B)], axis=0)                     # (B*G, GHID)
    h1 = jnp.maximum(h1 + _blk(slab_ref, "gcn_b1"), 0.0)
    hw = dot_t(h1, _blk(slab_ref, "gcn_w2T"))            # (B*G, GOUT)
    out = jnp.concatenate(
        [jnp.dot(a, hw[b * G:(b + 1) * G, :], preferred_element_type=f32)
         for b in range(B)], axis=0)                     # (B*G, GOUT)
    out = out + _blk(slab_ref, "gcn_b2")[:, :DIM_OUT_GCN]

    out_ref[...] = out.astype(out_ref.dtype)


# ------------------------------ param packing -------------------------------
def prepare_params(params):
    """Pack the many small parameter arrays into one weight slab (+ FFN bias)."""
    blocks = {}
    for l in range(NUM_LAYERS_TRANS):
        blocks[f"wqT{l}"]   = params["wq"][l].T          # (QKV, D)
        blocks[f"wkT{l}"]   = params["wk"][l].T
        blocks[f"wvT{l}"]   = params["wv"][l].T
        blocks[f"wo{l}"]    = params["wo"][l]            # (QKV, D)
        blocks[f"wff1T{l}"] = params["wff1"][l].T        # (HID, D)
        blocks[f"wff2{l}"]  = params["wff2"][l]          # (HID, D)
        blocks[f"ln1_g{l}"] = params["ln1_g"][l]
        blocks[f"ln1_b{l}"] = params["ln1_b"][l]
        blocks[f"ln2_g{l}"] = params["ln2_g"][l]
        blocks[f"ln2_b{l}"] = params["ln2_b"][l]
        blocks[f"bff2{l}"]  = params["bff2"][l]
    blocks["gcn_w1"]  = params["gcn_w1"]                 # (D, GHID)
    blocks["gcn_w2T"] = params["gcn_w2"].T               # (GOUT, GHID)
    blocks["gcn_b1"]  = params["gcn_b1"]                 # (1, GHID)
    blocks["gcn_b2"]  = jnp.pad(params["gcn_b2"],
                                ((0, 0), (0, D_MODEL - DIM_OUT_GCN)))

    pieces = []
    for name, (off, nrows) in sorted(SLAB_LAYOUT.items(), key=lambda kv: kv[1][0]):
        blk = jnp.asarray(blocks[name], jnp.float32)
        assert blk.shape == (nrows, D_MODEL), (name, blk.shape)
        pieces.append(blk)
    slab = jnp.concatenate(pieces, axis=0)
    assert slab.shape == (SLAB_ROWS, D_MODEL)

    return {
        "slab": slab,                                                       # (SLAB_ROWS, D)
        "bff1": params["bff1"].astype(jnp.float32),                         # (L, 1, HID)
        "dose_k_tiled": jnp.tile(params["dose_k"], (BATCH, 1)).astype(jnp.float32),  # (B*G, 1)
    }


# ------------------------------- wrapper ------------------------------------
@jax.jit
def time_series_prediction(cell_line_tokens, gene_embs, compounds_k, compounds_v,
                           dose_indices, weight_gene_relations, express_gene_adj,
                           packed):
    B, G, D = gene_embs.shape
    M = compounds_k.shape[1]
    assert (B, G, D, M) == (BATCH, NUM_GENES, D_MODEL, NUM_CMPD_TOKENS)

    # one flat data slab: [gene | ck | cv | cell], rows flattened over batch
    tok = jnp.concatenate([
        gene_embs.reshape(B * G, D),
        compounds_k.reshape(B * M, D),
        compounds_v.reshape(B * M, D),
        cell_line_tokens.reshape(B, D),
    ], axis=0)                                                       # (B*G+2*B*M+B, D)

    dose_pack = jnp.stack([dose_indices.reshape(B * G, 1).astype(jnp.float32),
                           packed["dose_k_tiled"]], axis=0)          # (2, B*G, 1)
    graph = jnp.stack([weight_gene_relations, express_gene_adj],
                      axis=0).astype(jnp.float32)                    # (2, G, G)

    vmem = lambda: pl.BlockSpec(memory_space=pltpu.MemorySpace.VMEM)
    # Single invocation, no grid (B=2 is tiny; grid-step overhead dominated the
    # previous version).  On v7x one could split the batch 2-way across the two
    # TensorCores with a parallel grid axis if batch grows.
    out_flat = pl.pallas_call(
        tsp_kernel,
        out_shape=jax.ShapeDtypeStruct((B * G, DIM_OUT_GCN), jnp.float32),
        in_specs=[vmem() for _ in range(5)],
        out_specs=vmem(),
    )(tok, dose_pack, graph, packed["slab"], packed["bff1"])

    return out_flat.reshape(B, G, DIM_OUT_GCN)


def init_params(key):
    L, D = NUM_LAYERS_TRANS, D_MODEL
    ks = jax.random.split(key, 12)

    def w(k, shape, fan_in):
        return (jax.random.normal(k, shape, jnp.float32) / (fan_in ** 0.5)).astype(jnp.float32)

    return {
        "wq": w(ks[0], (L, D, DIM_QKV), D),
        "wk": w(ks[1], (L, D, DIM_QKV), D),
        "wv": w(ks[2], (L, D, DIM_QKV), D),
        "wo": w(ks[3], (L, DIM_QKV, D), DIM_QKV),
        "ln1_g": jnp.ones((L, 1, D), jnp.float32),
        "ln1_b": jnp.zeros((L, 1, D), jnp.float32),
        "wff1": w(ks[4], (L, D, DIM_HID_TRANS), D),
        "bff1": jnp.zeros((L, 1, DIM_HID_TRANS), jnp.float32),
        "wff2": w(ks[5], (L, DIM_HID_TRANS, D), DIM_HID_TRANS),
        "bff2": jnp.zeros((L, 1, D), jnp.float32),
        "ln2_g": jnp.ones((L, 1, D), jnp.float32),
        "ln2_b": jnp.zeros((L, 1, D), jnp.float32),
        "dose_k": jnp.ones((NUM_GENES, 1), jnp.float32),
        "gcn_w1": w(ks[6], (DIM_IN_GCN, DIM_HID_GCN), DIM_IN_GCN),
        "gcn_b1": jnp.zeros((1, DIM_HID_GCN), jnp.float32),
        "gcn_w2": w(ks[7], (DIM_HID_GCN, DIM_OUT_GCN), DIM_HID_GCN),
        "gcn_b2": jnp.zeros((1, DIM_OUT_GCN), jnp.float32),
    }


if __name__ == "__main__":
    root = jax.random.PRNGKey(0)
    kp, k0, k1, k2, k3, k4, k5, k6 = jax.random.split(root, 8)

    params = init_params(kp)
    packed = prepare_params(params)        # pack weights once (2 weight DMAs per call)

    cell_line_tokens = jax.random.normal(k0, (BATCH, 1, D_MODEL), jnp.float32)
    gene_embs        = jax.random.normal(k1, (BATCH, NUM_GENES, D_MODEL), jnp.float32)
    compounds_k      = jax.random.normal(k2, (BATCH, NUM_CMPD_TOKENS, D_MODEL), jnp.float32)
    compounds_v      = jax.random.normal(k3, (BATCH, NUM_CMPD_TOKENS, D_MODEL), jnp.float32)
    dose_indices     = jax.random.uniform(k4, (BATCH, NUM_GENES, 1), jnp.float32)
    weight_gene_rel  = jax.random.uniform(k5, (NUM_GENES, NUM_GENES), jnp.float32)
    express_gene_adj = (jax.random.uniform(k6, (NUM_GENES, NUM_GENES), jnp.float32) > 0.5
                        ).astype(jnp.float32)

    out = time_series_prediction(cell_line_tokens, gene_embs, compounds_k, compounds_v,
                                 dose_indices, weight_gene_rel, express_gene_adj, packed)
    out = jax.block_until_ready(out)
    assert out.shape == (BATCH, NUM_GENES, DIM_OUT_GCN)
    assert bool(jnp.all(jnp.isfinite(out)))
    print("KERNEL_OK")
</pallas_src>

<mosaic_0001>
module attributes {stable_mosaic.version = 11 : i64} {
  func.func @tsp_kernel(%arg0: memref<66x32xf32, #tpu.memory_space<vmem>>, %arg1: memref<2x32x1xf32, #tpu.memory_space<vmem>>, %arg2: memref<2x16x16xf32, #tpu.memory_space<vmem>>, %arg3: memref<572x32xf32, #tpu.memory_space<vmem>>, %arg4: memref<2x1x64xf32, #tpu.memory_space<vmem>>, %arg5: memref<32x16xf32, #tpu.memory_space<vmem>>) attributes {dimension_semantics = [], scalar_prefetch = 0 : i64, scratch_operands = 0 : i64, tpu.core_type = #tpu.core_type<tc>} {
    %c0 = arith.constant 0 : index
    %c0_0 = arith.constant 0 : index
    %0 = vector.load %arg0[%c0, %c0_0] : memref<66x32xf32, #tpu.memory_space<vmem>>, vector<32x32xf32>
    %c32 = arith.constant 32 : index
    %c0_1 = arith.constant 0 : index
    %1 = vector.load %arg0[%c32, %c0_1] : memref<66x32xf32, #tpu.memory_space<vmem>>, vector<16x32xf32>
    %c48 = arith.constant 48 : index
    %c0_2 = arith.constant 0 : index
    %2 = vector.load %arg0[%c48, %c0_2] : memref<66x32xf32, #tpu.memory_space<vmem>>, vector<16x32xf32>
    %c64 = arith.constant 64 : index
    %c0_3 = arith.constant 0 : index
    %3 = vector.load %arg0[%c64, %c0_3] : memref<66x32xf32, #tpu.memory_space<vmem>>, vector<2x32xf32>
    %4 = vector.extract_strided_slice %0 {offsets = [0, 0], sizes = [16, 32], strides = [1, 1]} : vector<32x32xf32> to vector<16x32xf32>
    %5 = vector.extract_strided_slice %3 {offsets = [0, 0], sizes = [1, 32], strides = [1, 1]} : vector<2x32xf32> to vector<1x32xf32>
    %6 = vector.broadcast %5 : vector<1x32xf32> to vector<16x32xf32>
    %7 = arith.addf %4, %6 : vector<16x32xf32>
    %8 = vector.extract_strided_slice %0 {offsets = [16, 0], sizes = [16, 32], strides = [1, 1]} : vector<32x32xf32> to vector<16x32xf32>
    %9 = vector.extract_strided_slice %3 {offsets = [1, 0], sizes = [1, 32], strides = [1, 1]} : vector<2x32xf32> to vector<1x32xf32>
    %10 = vector.broadcast %9 : vector<1x32xf32> to vector<16x32xf32>
    %11 = arith.addf %8, %10 : vector<16x32xf32>
    %12 = tpu.concatenate %7, %11 in 0 : vector<16x32xf32>, vector<16x32xf32> -> vector<32x32xf32>
    %c0_4 = arith.constant 0 : index
    %c0_5 = arith.constant 0 : index
    %13 = vector.load %arg3[%c0_4, %c0_5] : memref<572x32xf32, #tpu.memory_space<vmem>>, vector<32x32xf32>
    %c32_6 = arith.constant 32 : index
    %c0_7 = arith.constant 0 : index
    %14 = vector.load %arg3[%c32_6, %c0_7] : memref<572x32xf32, #tpu.memory_space<vmem>>, vector<32x32xf32>
    %c64_8 = arith.constant 64 : index
    %c0_9 = arith.constant 0 : index
    %15 = vector.load %arg3[%c64_8, %c0_9] : memref<572x32xf32, #tpu.memory_space<vmem>>, vector<32x32xf32>
    %c96 = arith.constant 96 : index
    %c0_10 = arith.constant 0 : index
    %16 = vector.load %arg3[%c96, %c0_10] : memref<572x32xf32, #tpu.memory_space<vmem>>, vector<32x32xf32>
    %17 = vector.extract_strided_slice %14 {offsets = [0, 0], sizes = [8, 32], strides = [1, 1]} : vector<32x32xf32> to vector<8x32xf32>
    %cst = arith.constant dense<0.000000e+00> : vector<16x8xf32>
    %18 = tpu.matmul %1, %17, %cst {dimension_numbers = #tpu.dot_dimension_numbers<[1], [1], [0], [0], [0, 0, 1, 0], [], []>} : vector<16x32xf32>, vector<8x32xf32>, vector<16x8xf32> -> vector<16x8xf32>
    %19 = vector.extract_strided_slice %14 {offsets = [8, 0], sizes = [8, 32], strides = [1, 1]} : vector<32x32xf32> to vector<8x32xf32>
    %cst_11 = arith.constant dense<0.000000e+00> : vector<16x8xf32>
    %20 = tpu.matmul %1, %19, %cst_11 {dimension_numbers = #tpu.dot_dimension_numbers<[1], [1], [0], [0], [0, 0, 1, 0], [], []>} : vector<16x32xf32>, vector<8x32xf32>, vector<16x8xf32> -> vector<16x8xf32>
    %21 = vector.extract_strided_slice %14 {offsets = [16, 0], sizes = [8, 32], strides = [1, 1]} : vector<32x32xf32> to vector<8x32xf32>
    %cst_12 = arith.constant dense<0.000000e+00> : vector<16x8xf32>
    %22 = tpu.matmul %1, %21, %cst_12 {dimension_numbers = #tpu.dot_dimension_numbers<[1], [1], [0], [0], [0, 0, 1, 0], [], []>} : vector<16x32xf32>, vector<8x32xf32>, vector<16x8xf32> -> vector<16x8xf32>
    %23 = vector.extract_strided_slice %14 {offsets = [24, 0], sizes = [8, 32], strides = [1, 1]} : vector<32x32xf32> to vector<8x32xf32>
    %cst_13 = arith.constant dense<0.000000e+00> : vector<16x8xf32>
    %24 = tpu.matmul %1, %23, %cst_13 {dimension_numbers = #tpu.dot_dimension_numbers<[1], [1], [0], [0], [0, 0, 1, 0], [], []>} : vector<16x32xf32>, vector<8x32xf32>, vector<16x8xf32> -> vector<16x8xf32>
    %25 = vector.extract_strided_slice %15 {offsets = [0, 0], sizes = [8, 32], strides = [1, 1]} : vector<32x32xf32> to vector<8x32xf32>
    %cst_14 = arith.constant dense<0.000000e+00> : vector<16x8xf32>
    %26 = tpu.matmul %2, %25, %cst_14 {dimension_numbers = #tpu.dot_dimension_numbers<[1], [1], [0], [0], [0, 0, 1, 0], [], []>} : vector<16x32xf32>, vector<8x32xf32>, vector<16x8xf32> -> vector<16x8xf32>
    %27 = vector.extract_strided_slice %15 {offsets = [8, 0], sizes = [8, 32], strides = [1, 1]} : vector<32x32xf32> to vector<8x32xf32>
    %cst_15 = arith.constant dense<0.000000e+00> : vector<16x8xf32>
    %28 = tpu.matmul %2, %27, %cst_15 {dimension_numbers = #tpu.dot_dimension_numbers<[1], [1], [0], [0], [0, 0, 1, 0], [], []>} : vector<16x32xf32>, vector<8x32xf32>, vector<16x8xf32> -> vector<16x8xf32>
    %29 = vector.extract_strided_slice %15 {offsets = [16, 0], sizes = [8, 32], strides = [1, 1]} : vector<32x32xf32> to vector<8x32xf32>
    %cst_16 = arith.constant dense<0.000000e+00> : vector<16x8xf32>
    %30 = tpu.matmul %2, %29, %cst_16 {dimension_numbers = #tpu.dot_dimension_numbers<[1], [1], [0], [0], [0, 0, 1, 0], [], []>} : vector<16x32xf32>, vector<8x32xf32>, vector<16x8xf32> -> vector<16x8xf32>
    %31 = vector.extract_strided_slice %15 {offsets = [24, 0], sizes = [8, 32], strides = [1, 1]} : vector<32x32xf32> to vector<8x32xf32>
    %cst_17 = arith.constant dense<0.000000e+00> : vector<16x8xf32>
    %32 = tpu.matmul %2, %31, %cst_17 {dimension_numbers = #tpu.dot_dimension_numbers<[1], [1], [0], [0], [0, 0, 1, 0], [], []>} : vector<16x32xf32>, vector<8x32xf32>, vector<16x8xf32> -> vector<16x8xf32>
    %33 = vector.extract_strided_slice %13 {offsets = [0, 0], sizes = [8, 32], strides = [1, 1]} : vector<32x32xf32> to vector<8x32xf32>
    %cst_18 = arith.constant dense<0.000000e+00> : vector<32x8xf32>
    %34 = tpu.matmul %12, %33, %cst_18 {dimension_numbers = #tpu.dot_dimension_numbers<[1], [1], [0], [0], [0, 0, 1, 0], [], []>} : vector<32x32xf32>, vector<8x32xf32>, vector<32x8xf32> -> vector<32x8xf32>
    %35 = vector.extract_strided_slice %13 {offsets = [8, 0], sizes = [8, 32], strides = [1, 1]} : vector<32x32xf32> to vector<8x32xf32>
    %cst_19 = arith.constant dense<0.000000e+00> : vector<32x8xf32>
    %36 = tpu.matmul %12, %35, %cst_19 {dimension_numbers = #tpu.dot_dimension_numbers<[1], [1], [0], [0], [0, 0, 1, 0], [], []>} : vector<32x32xf32>, vector<8x32xf32>, vector<32x8xf32> -> vector<32x8xf32>
    %37 = vector.extract_strided_slice %13 {offsets = [16, 0], sizes = [8, 32], strides = [1, 1]} : vector<32x32xf32> to vector<8x32xf32>
    %cst_20 = arith.constant dense<0.000000e+00> : vector<32x8xf32>
    %38 = tpu.matmul %12, %37, %cst_20 {dimension_numbers = #tpu.dot_dimension_numbers<[1], [1], [0], [0], [0, 0, 1, 0], [], []>} : vector<32x32xf32>, vector<8x32xf32>, vector<32x8xf32> -> vector<32x8xf32>
    %39 = vector.extract_strided_slice %13 {offsets = [24, 0], sizes = [8, 32], strides = [1, 1]} : vector<32x32xf32> to vector<8x32xf32>
    %cst_21 = arith.constant dense<0.000000e+00> : vector<32x8xf32>
    %40 = tpu.matmul %12, %39, %cst_21 {dimension_numbers = #tpu.dot_dimension_numbers<[1], [1], [0], [0], [0, 0, 1, 0], [], []>} : vector<32x32xf32>, vector<8x32xf32>, vector<32x8xf32> -> vector<32x8xf32>
    %41 = vector.extract_strided_slice %34 {offsets = [0, 0], sizes = [16, 8], strides = [1, 1]} : vector<32x8xf32> to vector<16x8xf32>
    %42 = vector.extract_strided_slice %18 {offsets = [0, 0], sizes = [8, 8], strides = [1, 1]} : vector<16x8xf32> to vector<8x8xf32>
    %43 = vector.extract_strided_slice %26 {offsets = [0, 0], sizes = [8, 8], strides = [1, 1]} : vector<16x8xf32> to vector<8x8xf32>
    %cst_22 = arith.constant dense<0.000000e+00> : vector<16x8xf32>
    %44 = tpu.matmul %41, %42, %cst_22 {dimension_numbers = #tpu.dot_dimension_numbers<[1], [1], [0], [0], [0, 0, 1, 0], [], []>} : vector<16x8xf32>, vector<8x8xf32>, vector<16x8xf32> -> vector<16x8xf32>
    %cst_23 = arith.constant 0.353553385 : f32
    %45 = vector.broadcast %cst_23 : f32 to vector<16x8xf32>
    %46 = arith.mulf %44, %45 : vector<16x8xf32>
    %cst_24 = arith.constant dense<0xFF800000> : vector<16xf32>
    %47 = vector.multi_reduction <maximumf>, %46, %cst_24 [1] : vector<16x8xf32> to vector<16xf32>
    %48 = vector.shape_cast %47 : vector<16xf32> to vector<16x1xf32>
    %49 = vector.broadcast %48 : vector<16x1xf32> to vector<16x8xf32>
    %50 = arith.subf %46, %49 : vector<16x8xf32>
    %51 = math.exp %50 : vector<16x8xf32>
    %cst_25 = arith.constant dense<0.000000e+00> : vector<16xf32>
    %52 = vector.multi_reduction <add>, %51, %cst_25 [1] : vector<16x8xf32> to vector<16xf32>
    %53 = vector.shape_cast %52 : vector<16xf32> to vector<16x1xf32>
    %54 = tpu.reciprocal %53 {approx = true} : vector<16x1xf32> -> vector<16x1xf32>
    %55 = vector.broadcast %54 : vector<16x1xf32> to vector<16x8xf32>
    %56 = arith.mulf %51, %55 : vector<16x8xf32>
    %cst_26 = arith.constant dense<0.000000e+00> : vector<16x8xf32>
    %57 = tpu.matmul %56, %43, %cst_26 {dimension_numbers = #tpu.dot_dimension_numbers<[1], [0], [0], [1], [0, 0, 1, 1], [], []>} : vector<16x8xf32>, vector<8x8xf32>, vector<16x8xf32> -> vector<16x8xf32>
    %58 = vector.extract_strided_slice %36 {offsets = [0, 0], sizes = [16, 8], strides = [1, 1]} : vector<32x8xf32> to vector<16x8xf32>
    %59 = vector.extract_strided_slice %20 {offsets = [0, 0], sizes = [8, 8], strides = [1, 1]} : vector<16x8xf32> to vector<8x8xf32>
    %60 = vector.extract_strided_slice %28 {offsets = [0, 0], sizes = [8, 8], strides = [1, 1]} : vector<16x8xf32> to vector<8x8xf32>
    %cst_27 = arith.constant dense<0.000000e+00> : vector<16x8xf32>
    %61 = tpu.matmul %58, %59, %cst_27 {dimension_numbers = #tpu.dot_dimension_numbers<[1], [1], [0], [0], [0, 0, 1, 0], [], []>} : vector<16x8xf32>, vector<8x8xf32>, vector<16x8xf32> -> vector<16x8xf32>
    %cst_28 = arith.constant 0.353553385 : f32
    %62 = vector.broadcast %cst_28 : f32 to vector<16x8xf32>
    %63 = arith.mulf %61, %62 : vector<16x8xf32>
    %cst_29 = arith.constant dense<0xFF800000> : vector<16xf32>
    %64 = vector.multi_reduction <maximumf>, %63, %cst_29 [1] : vector<16x8xf32> to vector<16xf32>
    %65 = vector.shape_cast %64 : vector<16xf32> to vector<16x1xf32>
    %66 = vector.broadcast %65 : vector<16x1xf32> to vector<16x8xf32>
    %67 = arith.subf %63, %66 : vector<16x8xf32>
    %68 = math.exp %67 : vector<16x8xf32>
    %cst_30 = arith.constant dense<0.000000e+00> : vector<16xf32>
    %69 = vector.multi_reduction <add>, %68, %cst_30 [1] : vector<16x8xf32> to vector<16xf32>
    %70 = vector.shape_cast %69 : vector<16xf32> to vector<16x1xf32>
    %71 = tpu.reciprocal %70 {approx = true} : vector<16x1xf32> -> vector<16x1xf32>
    %72 = vector.broadcast %71 : vector<16x1xf32> to vector<16x8xf32>
    %73 = arith.mulf %68, %72 : vector<16x8xf32>
    %cst_31 = arith.constant dense<0.000000e+00> : vector<16x8xf32>
    %74 = tpu.matmul %73, %60, %cst_31 {dimension_numbers = #tpu.dot_dimension_numbers<[1], [0], [0], [1], [0, 0, 1, 1], [], []>} : vector<16x8xf32>, vector<8x8xf32>, vector<16x8xf32> -> vector<16x8xf32>
    %75 = vector.extract_strided_slice %38 {offsets = [0, 0], sizes = [16, 8], strides = [1, 1]} : vector<32x8xf32> to vector<16x8xf32>
    %76 = vector.extract_strided_slice %22 {offsets = [0, 0], sizes = [8, 8], strides = [1, 1]} : vector<16x8xf32> to vector<8x8xf32>
    %77 = vector.extract_strided_slice %30 {offsets = [0, 0], sizes = [8, 8], strides = [1, 1]} : vector<16x8xf32> to vector<8x8xf32>
    %cst_32 = arith.constant dense<0.000000e+00> : vector<16x8xf32>
    %78 = tpu.matmul %75, %76, %cst_32 {dimension_numbers = #tpu.dot_dimension_numbers<[1], [1], [0], [0], [0, 0, 1, 0], [], []>} : vector<16x8xf32>, vector<8x8xf32>, vector<16x8xf32> -> vector<16x8xf32>
    %cst_33 = arith.constant 0.353553385 : f32
    %79 = vector.broadcast %cst_33 : f32 to vector<16x8xf32>
    %80 = arith.mulf %78, %79 : vector<16x8xf32>
    %cst_34 = arith.constant dense<0xFF800000> : vector<16xf32>
    %81 = vector.multi_reduction <maximumf>, %80, %cst_34 [1] : vector<16x8xf32> to vector<16xf32>
    %82 = vector.shape_cast %81 : vector<16xf32> to vector<16x1xf32>
    %83 = vector.broadcast %82 : vector<16x1xf32> to vector<16x8xf32>
    %84 = arith.subf %80, %83 : vector<16x8xf32>
    %85 = math.exp %84 : vector<16x8xf32>
    %cst_35 = arith.constant dense<0.000000e+00> : vector<16xf32>
    %86 = vector.multi_reduction <add>, %85, %cst_35 [1] : vector<16x8xf32> to vector<16xf32>
    %87 = vector.shape_cast %86 : vector<16xf32> to vector<16x1xf32>
    %88 = tpu.reciprocal %87 {approx = true} : vector<16x1xf32> -> vector<16x1xf32>
    %89 = vector.broadcast %88 : vector<16x1xf32> to vector<16x8xf32>
    %90 = arith.mulf %85, %89 : vector<16x8xf32>
    %cst_36 = arith.constant dense<0.000000e+00> : vector<16x8xf32>
    %91 = tpu.matmul %90, %77, %cst_36 {dimension_numbers = #tpu.dot_dimension_numbers<[1], [0], [0], [1], [0, 0, 1, 1], [], []>} : vector<16x8xf32>, vector<8x8xf32>, vector<16x8xf32> -> vector<16x8xf32>
    %92 = vector.extract_strided_slice %40 {offsets = [0, 0], sizes = [16, 8], strides = [1, 1]} : vector<32x8xf32> to vector<16x8xf32>
    %93 = vector.extract_strided_slice %24 {offsets = [0, 0], sizes = [8, 8], strides = [1, 1]} : vector<16x8xf32> to vector<8x8xf32>
    %94 = vector.extract_strided_slice %32 {offsets = [0, 0], sizes = [8, 8], strides = [1, 1]} : vector<16x8xf32> to vector<8x8xf32>
    %cst_37 = arith.constant dense<0.000000e+00> : vector<16x8xf32>
    %95 = tpu.matmul %92, %93, %cst_37 {dimension_numbers = #tpu.dot_dimension_numbers<[1], [1], [0], [0], [0, 0, 1, 0], [], []>} : vector<16x8xf32>, vector<8x8xf32>, vector<16x8xf32> -> vector<16x8xf32>
    %cst_38 = arith.constant 0.353553385 : f32
    %96 = vector.broadcast %cst_38 : f32 to vector<16x8xf32>
    %97 = arith.mulf %95, %96 : vector<16x8xf32>
    %cst_39 = arith.constant dense<0xFF800000> : vector<16xf32>
    %98 = vector.multi_reduction <maximumf>, %97, %cst_39 [1] : vector<16x8xf32> to vector<16xf32>
    %99 = vector.shape_cast %98 : vector<16xf32> to vector<16x1xf32>
    %100 = vector.broadcast %99 : vector<16x1xf32> to vector<16x8xf32>
    %101 = arith.subf %97, %100 : vector<16x8xf32>
    %102 = math.exp %101 : vector<16x8xf32>
    %cst_40 = arith.constant dense<0.000000e+00> : vector<16xf32>
    %103 = vector.multi_reduction <add>, %102, %cst_40 [1] : vector<16x8xf32> to vector<16xf32>
    %104 = vector.shape_cast %103 : vector<16xf32> to vector<16x1xf32>
    %105 = tpu.reciprocal %104 {approx = true} : vector<16x1xf32> -> vector<16x1xf32>
    %106 = vector.broadcast %105 : vector<16x1xf32> to vector<16x8xf32>
    %107 = arith.mulf %102, %106 : vector<16x8xf32>
    %cst_41 = arith.constant dense<0.000000e+00> : vector<16x8xf32>
    %108 = tpu.matmul %107, %94, %cst_41 {dimension_numbers = #tpu.dot_dimension_numbers<[1], [0], [0], [1], [0, 0, 1, 1], [], []>} : vector<16x8xf32>, vector<8x8xf32>, vector<16x8xf32> -> vector<16x8xf32>
    %109 = tpu.concatenate %57, %74, %91, %108 in 1 : vector<16x8xf32>, vector<16x8xf32>, vector<16x8xf32>, vector<16x8xf32> -> vector<16x32xf32>
    %110 = vector.extract_strided_slice %34 {offsets = [16, 0], sizes = [16, 8], strides = [1, 1]} : vector<32x8xf32> to vector<16x8xf32>
    %111 = vector.extract_strided_slice %18 {offsets = [8, 0], sizes = [8, 8], strides = [1, 1]} : vector<16x8xf32> to vector<8x8xf32>
    %112 = vector.extract_strided_slice %26 {offsets = [8, 0], sizes = [8, 8], strides = [1, 1]} : vector<16x8xf32> to vector<8x8xf32>
    %cst_42 = arith.constant dense<0.000000e+00> : vector<16x8xf32>
    %113 = tpu.matmul %110, %111, %cst_42 {dimension_numbers = #tpu.dot_dimension_numbers<[1], [1], [0], [0], [0, 0, 1, 0], [], []>} : vector<16x8xf32>, vector<8x8xf32>, vector<16x8xf32> -> vector<16x8xf32>
    %cst_43 = arith.constant 0.353553385 : f32
    %114 = vector.broadcast %cst_43 : f32 to vector<16x8xf32>
    %115 = arith.mulf %113, %114 : vector<16x8xf32>
    %cst_44 = arith.constant dense<0xFF800000> : vector<16xf32>
    %116 = vector.multi_reduction <maximumf>, %115, %cst_44 [1] : vector<16x8xf32> to vector<16xf32>
    %117 = vector.shape_cast %116 : vector<16xf32> to vector<16x1xf32>
    %118 = vector.broadcast %117 : vector<16x1xf32> to vector<16x8xf32>
    %119 = arith.subf %115, %118 : vector<16x8xf32>
    %120 = math.exp %119 : vector<16x8xf32>
    %cst_45 = arith.constant dense<0.000000e+00> : vector<16xf32>
    %121 = vector.multi_reduction <add>, %120, %cst_45 [1] : vector<16x8xf32> to vector<16xf32>
    %122 = vector.shape_cast %121 : vector<16xf32> to vector<16x1xf32>
    %123 = tpu.reciprocal %122 {approx = true} : vector<16x1xf32> -> vector<16x1xf32>
    %124 = vector.broadcast %123 : vector<16x1xf32> to vector<16x8xf32>
    %125 = arith.mulf %120, %124 : vector<16x8xf32>
    %cst_46 = arith.constant dense<0.000000e+00> : vector<16x8xf32>
    %126 = tpu.matmul %125, %112, %cst_46 {dimension_numbers = #tpu.dot_dimension_numbers<[1], [0], [0], [1], [0, 0, 1, 1], [], []>} : vector<16x8xf32>, vector<8x8xf32>, vector<16x8xf32> -> vector<16x8xf32>
    %127 = vector.extract_strided_slice %36 {offsets = [16, 0], sizes = [16, 8], strides = [1, 1]} : vector<32x8xf32> to vector<16x8xf32>
    %128 = vector.extract_strided_slice %20 {offsets = [8, 0], sizes = [8, 8], strides = [1, 1]} : vector<16x8xf32> to vector<8x8xf32>
    %129 = vector.extract_strided_slice %28 {offsets = [8, 0], sizes = [8, 8], strides = [1, 1]} : vector<16x8xf32> to vector<8x8xf32>
    %cst_47 = arith.constant dense<0.000000e+00> : vector<16x8xf32>
    %130 = tpu.matmul %127, %128, %cst_47 {dimension_numbers = #tpu.dot_dimension_numbers<[1], [1], [0], [0], [0, 0, 1, 0], [], []>} : vector<16x8xf32>, vector<8x8xf32>, vector<16x8xf32> -> vector<16x8xf32>
    %cst_48 = arith.constant 0.353553385 : f32
    %131 = vector.broadcast %cst_48 : f32 to vector<16x8xf32>
    %132 = arith.mulf %130, %131 : vector<16x8xf32>
    %cst_49 = arith.constant dense<0xFF800000> : vector<16xf32>
    %133 = vector.multi_reduction <maximumf>, %132, %cst_49 [1] : vector<16x8xf32> to vector<16xf32>
    %134 = vector.shape_cast %133 : vector<16xf32> to vector<16x1xf32>
    %135 = vector.broadcast %134 : vector<16x1xf32> to vector<16x8xf32>
    %136 = arith.subf %132, %135 : vector<16x8xf32>
    %137 = math.exp %136 : vector<16x8xf32>
    %cst_50 = arith.constant dense<0.000000e+00> : vector<16xf32>
    %138 = vector.multi_reduction <add>, %137, %cst_50 [1] : vector<16x8xf32> to vector<16xf32>
    %139 = vector.shape_cast %138 : vector<16xf32> to vector<16x1xf32>
    %140 = tpu.reciprocal %139 {approx = true} : vector<16x1xf32> -> vector<16x1xf32>
    %141 = vector.broadcast %140 : vector<16x1xf32> to vector<16x8xf32>
    %142 = arith.mulf %137, %141 : vector<16x8xf32>
    %cst_51 = arith.constant dense<0.000000e+00> : vector<16x8xf32>
    %143 = tpu.matmul %142, %129, %cst_51 {dimension_numbers = #tpu.dot_dimension_numbers<[1], [0], [0], [1], [0, 0, 1, 1], [], []>} : vector<16x8xf32>, vector<8x8xf32>, vector<16x8xf32> -> vector<16x8xf32>
    %144 = vector.extract_strided_slice %38 {offsets = [16, 0], sizes = [16, 8], strides = [1, 1]} : vector<32x8xf32> to vector<16x8xf32>
    %145 = vector.extract_strided_slice %22 {offsets = [8, 0], sizes = [8, 8], strides = [1, 1]} : vector<16x8xf32> to vector<8x8xf32>
    %146 = vector.extract_strided_slice %30 {offsets = [8, 0], sizes = [8, 8], strides = [1, 1]} : vector<16x8xf32> to vector<8x8xf32>
    %cst_52 = arith.constant dense<0.000000e+00> : vector<16x8xf32>
    %147 = tpu.matmul %144, %145, %cst_52 {dimension_numbers = #tpu.dot_dimension_numbers<[1], [1], [0], [0], [0, 0, 1, 0], [], []>} : vector<16x8xf32>, vector<8x8xf32>, vector<16x8xf32> -> vector<16x8xf32>
    %cst_53 = arith.constant 0.353553385 : f32
    %148 = vector.broadcast %cst_53 : f32 to vector<16x8xf32>
    %149 = arith.mulf %147, %148 : vector<16x8xf32>
    %cst_54 = arith.constant dense<0xFF800000> : vector<16xf32>
    %150 = vector.multi_reduction <maximumf>, %149, %cst_54 [1] : vector<16x8xf32> to vector<16xf32>
    %151 = vector.shape_cast %150 : vector<16xf32> to vector<16x1xf32>
    %152 = vector.broadcast %151 : vector<16x1xf32> to vector<16x8xf32>
    %153 = arith.subf %149, %152 : vector<16x8xf32>
    %154 = math.exp %153 : vector<16x8xf32>
    %cst_55 = arith.constant dense<0.000000e+00> : vector<16xf32>
    %155 = vector.multi_reduction <add>, %154, %cst_55 [1] : vector<16x8xf32> to vector<16xf32>
    %156 = vector.shape_cast %155 : vector<16xf32> to vector<16x1xf32>
    %157 = tpu.reciprocal %156 {approx = true} : vector<16x1xf32> -> vector<16x1xf32>
    %158 = vector.broadcast %157 : vector<16x1xf32> to vector<16x8xf32>
    %159 = arith.mulf %154, %158 : vector<16x8xf32>
    %cst_56 = arith.constant dense<0.000000e+00> : vector<16x8xf32>
    %160 = tpu.matmul %159, %146, %cst_56 {dimension_numbers = #tpu.dot_dimension_numbers<[1], [0], [0], [1], [0, 0, 1, 1], [], []>} : vector<16x8xf32>, vector<8x8xf32>, vector<16x8xf32> -> vector<16x8xf32>
    %161 = vector.extract_strided_slice %40 {offsets = [16, 0], sizes = [16, 8], strides = [1, 1]} : vector<32x8xf32> to vector<16x8xf32>
    %162 = vector.extract_strided_slice %24 {offsets = [8, 0], sizes = [8, 8], strides = [1, 1]} : vector<16x8xf32> to vector<8x8xf32>
    %163 = vector.extract_strided_slice %32 {offsets = [8, 0], sizes = [8, 8], strides = [1, 1]} : vector<16x8xf32> to vector<8x8xf32>
    %cst_57 = arith.constant dense<0.000000e+00> : vector<16x8xf32>
    %164 = tpu.matmul %161, %162, %cst_57 {dimension_numbers = #tpu.dot_dimension_numbers<[1], [1], [0], [0], [0, 0, 1, 0], [], []>} : vector<16x8xf32>, vector<8x8xf32>, vector<16x8xf32> -> vector<16x8xf32>
    %cst_58 = arith.constant 0.353553385 : f32
    %165 = vector.broadcast %cst_58 : f32 to vector<16x8xf32>
    %166 = arith.mulf %164, %165 : vector<16x8xf32>
    %cst_59 = arith.constant dense<0xFF800000> : vector<16xf32>
    %167 = vector.multi_reduction <maximumf>, %166, %cst_59 [1] : vector<16x8xf32> to vector<16xf32>
    %168 = vector.shape_cast %167 : vector<16xf32> to vector<16x1xf32>
    %169 = vector.broadcast %168 : vector<16x1xf32> to vector<16x8xf32>
    %170 = arith.subf %166, %169 : vector<16x8xf32>
    %171 = math.exp %170 : vector<16x8xf32>
    %cst_60 = arith.constant dense<0.000000e+00> : vector<16xf32>
    %172 = vector.multi_reduction <add>, %171, %cst_60 [1] : vector<16x8xf32> to vector<16xf32>
    %173 = vector.shape_cast %172 : vector<16xf32> to vector<16x1xf32>
    %174 = tpu.reciprocal %173 {approx = true} : vector<16x1xf32> -> vector<16x1xf32>
    %175 = vector.broadcast %174 : vector<16x1xf32> to vector<16x8xf32>
    %176 = arith.mulf %171, %175 : vector<16x8xf32>
    %cst_61 = arith.constant dense<0.000000e+00> : vector<16x8xf32>
    %177 = tpu.matmul %176, %163, %cst_61 {dimension_numbers = #tpu.dot_dimension_numbers<[1], [0], [0], [1], [0, 0, 1, 1], [], []>} : vector<16x8xf32>, vector<8x8xf32>, vector<16x8xf32> -> vector<16x8xf32>
    %178 = tpu.concatenate %126, %143, %160, %177 in 1 : vector<16x8xf32>, vector<16x8xf32>, vector<16x8xf32>, vector<16x8xf32> -> vector<16x32xf32>
    %179 = tpu.concatenate %109, %178 in 0 : vector<16x32xf32>, vector<16x32xf32> -> vector<32x32xf32>
    %cst_62 = arith.constant dense<0.000000e+00> : vector<32x32xf32>
    %180 = tpu.matmul %179, %16, %cst_62 {dimension_numbers = #tpu.dot_dimension_numbers<[1], [0], [0], [1], [0, 0, 1, 1], [], []>} : vector<32x32xf32>, vector<32x32xf32>, vector<32x32xf32> -> vector<32x32xf32>
    %181 = arith.addf %12, %180 : vector<32x32xf32>
    %c560 = arith.constant 560 : index
    %c0_63 = arith.constant 0 : index
    %182 = vector.load %arg3[%c560, %c0_63] : memref<572x32xf32, #tpu.memory_space<vmem>>, vector<1x32xf32>
    %c561 = arith.constant 561 : index
    %c0_64 = arith.constant 0 : index
    %183 = vector.load %arg3[%c561, %c0_64] : memref<572x32xf32, #tpu.memory_space<vmem>>, vector<1x32xf32>
    %cst_65 = arith.constant dense<0.000000e+00> : vector<32xf32>
    %184 = vector.multi_reduction <add>, %181, %cst_65 [1] : vector<32x32xf32> to vector<32xf32>
    %185 = vector.shape_cast %184 : vector<32xf32> to vector<32x1xf32>
    %cst_66 = arith.constant 3.200000e+01 : f32
    %186 = vector.broadcast %cst_66 : f32 to vector<32x1xf32>
    %187 = arith.divf %185, %186 : vector<32x1xf32>
    %188 = arith.mulf %181, %181 : vector<32x32xf32>
    %cst_67 = arith.constant dense<0.000000e+00> : vector<32xf32>
    %189 = vector.multi_reduction <add>, %188, %cst_67 [1] : vector<32x32xf32> to vector<32xf32>
    %190 = vector.shape_cast %189 : vector<32xf32> to vector<32x1xf32>
    %cst_68 = arith.constant 3.200000e+01 : f32
    %191 = vector.broadcast %cst_68 : f32 to vector<32x1xf32>
    %192 = arith.divf %190, %191 : vector<32x1xf32>
    %193 = arith.mulf %187, %187 : vector<32x1xf32>
    %194 = arith.subf %192, %193 : vector<32x1xf32>
    %195 = vector.broadcast %187 : vector<32x1xf32> to vector<32x32xf32>
    %196 = arith.subf %181, %195 : vector<32x32xf32>
    %cst_69 = arith.constant 9.99999974E-6 : f32
    %197 = vector.broadcast %cst_69 : f32 to vector<32x1xf32>
    %198 = arith.addf %194, %197 : vector<32x1xf32>
    %199 = math.rsqrt %198 : vector<32x1xf32>
    %200 = vector.broadcast %199 : vector<32x1xf32> to vector<32x32xf32>
    %201 = arith.mulf %196, %200 : vector<32x32xf32>
    %202 = vector.broadcast %182 : vector<1x32xf32> to vector<32x32xf32>
    %203 = arith.mulf %201, %202 : vector<32x32xf32>
    %204 = vector.broadcast %183 : vector<1x32xf32> to vector<32x32xf32>
    %205 = arith.addf %203, %204 : vector<32x32xf32>
    %c128 = arith.constant 128 : index
    %c0_70 = arith.constant 0 : index
    %206 = vector.load %arg3[%c128, %c0_70] : memref<572x32xf32, #tpu.memory_space<vmem>>, vector<64x32xf32>
    %cst_71 = arith.constant dense<0.000000e+00> : vector<32x64xf32>
    %207 = tpu.matmul %205, %206, %cst_71 {dimension_numbers = #tpu.dot_dimension_numbers<[1], [1], [0], [0], [0, 0, 1, 0], [], []>} : vector<32x32xf32>, vector<64x32xf32>, vector<32x64xf32> -> vector<32x64xf32>
    %c0_72 = arith.constant 0 : index
    %c0_73 = arith.constant 0 : index
    %c0_74 = arith.constant 0 : index
    %208 = vector.load %arg4[%c0_72, %c0_73, %c0_74] : memref<2x1x64xf32, #tpu.memory_space<vmem>>, vector<1x1x64xf32>
    %209 = vector.shape_cast %208 : vector<1x1x64xf32> to vector<1x64xf32>
    %210 = vector.broadcast %209 : vector<1x64xf32> to vector<32x64xf32>
    %211 = arith.addf %207, %210 : vector<32x64xf32>
    %cst_75 = arith.constant 0.000000e+00 : f32
    %212 = vector.broadcast %cst_75 : f32 to vector<32x64xf32>
    %213 = arith.maximumf %211, %212 : vector<32x64xf32>
    %c192 = arith.constant 192 : index
    %c0_76 = arith.constant 0 : index
    %214 = vector.load %arg3[%c192, %c0_76] : memref<572x32xf32, #tpu.memory_space<vmem>>, vector<64x32xf32>
    %cst_77 = arith.constant dense<0.000000e+00> : vector<32x32xf32>
    %215 = tpu.matmul %213, %214, %cst_77 {dimension_numbers = #tpu.dot_dimension_numbers<[1], [0], [0], [1], [0, 0, 1, 1], [], []>} : vector<32x64xf32>, vector<64x32xf32>, vector<32x32xf32> -> vector<32x32xf32>
    %c564 = arith.constant 564 : index
    %c0_78 = arith.constant 0 : index
    %216 = vector.load %arg3[%c564, %c0_78] : memref<572x32xf32, #tpu.memory_space<vmem>>, vector<1x32xf32>
    %217 = vector.broadcast %216 : vector<1x32xf32> to vector<32x32xf32>
    %218 = arith.addf %215, %217 : vector<32x32xf32>
    %219 = arith.addf %205, %218 : vector<32x32xf32>
    %c562 = arith.constant 562 : index
    %c0_79 = arith.constant 0 : index
    %220 = vector.load %arg3[%c562, %c0_79] : memref<572x32xf32, #tpu.memory_space<vmem>>, vector<1x32xf32>
    %c563 = arith.constant 563 : index
    %c0_80 = arith.constant 0 : index
    %221 = vector.load %arg3[%c563, %c0_80] : memref<572x32xf32, #tpu.memory_space<vmem>>, vector<1x32xf32>
    %cst_81 = arith.constant dense<0.000000e+00> : vector<32xf32>
    %222 = vector.multi_reduction <add>, %219, %cst_81 [1] : vector<32x32xf32> to vector<32xf32>
    %223 = vector.shape_cast %222 : vector<32xf32> to vector<32x1xf32>
    %cst_82 = arith.constant 3.200000e+01 : f32
    %224 = vector.broadcast %cst_82 : f32 to vector<32x1xf32>
    %225 = arith.divf %223, %224 : vector<32x1xf32>
    %226 = arith.mulf %219, %219 : vector<32x32xf32>
    %cst_83 = arith.constant dense<0.000000e+00> : vector<32xf32>
    %227 = vector.multi_reduction <add>, %226, %cst_83 [1] : vector<32x32xf32> to vector<32xf32>
    %228 = vector.shape_cast %227 : vector<32xf32> to vector<32x1xf32>
    %cst_84 = arith.constant 3.200000e+01 : f32
    %229 = vector.broadcast %cst_84 : f32 to vector<32x1xf32>
    %230 = arith.divf %228, %229 : vector<32x1xf32>
    %231 = arith.mulf %225, %225 : vector<32x1xf32>
    %232 = arith.subf %230, %231 : vector<32x1xf32>
    %233 = vector.broadcast %225 : vector<32x1xf32> to vector<32x32xf32>
    %234 = arith.subf %219, %233 : vector<32x32xf32>
    %cst_85 = arith.constant 9.99999974E-6 : f32
    %235 = vector.broadcast %cst_85 : f32 to vector<32x1xf32>
    %236 = arith.addf %232, %235 : vector<32x1xf32>
    %237 = math.rsqrt %236 : vector<32x1xf32>
    %238 = vector.broadcast %237 : vector<32x1xf32> to vector<32x32xf32>
    %239 = arith.mulf %234, %238 : vector<32x32xf32>
    %240 = vector.broadcast %220 : vector<1x32xf32> to vector<32x32xf32>
    %241 = arith.mulf %239, %240 : vector<32x32xf32>
    %242 = vector.broadcast %221 : vector<1x32xf32> to vector<32x32xf32>
    %243 = arith.addf %241, %242 : vector<32x32xf32>
    %c256 = arith.constant 256 : index
    %c0_86 = arith.constant 0 : index
    %244 = vector.load %arg3[%c256, %c0_86] : memref<572x32xf32, #tpu.memory_space<vmem>>, vector<32x32xf32>
    %c288 = arith.constant 288 : index
    %c0_87 = arith.constant 0 : index
    %245 = vector.load %arg3[%c288, %c0_87] : memref<572x32xf32, #tpu.memory_space<vmem>>, vector<32x32xf32>
    %c320 = arith.constant 320 : index
    %c0_88 = arith.constant 0 : index
    %246 = vector.load %arg3[%c320, %c0_88] : memref<572x32xf32, #tpu.memory_space<vmem>>, vector<32x32xf32>
    %c352 = arith.constant 352 : index
    %c0_89 = arith.constant 0 : index
    %247 = vector.load %arg3[%c352, %c0_89] : memref<572x32xf32, #tpu.memory_space<vmem>>, vector<32x32xf32>
    %248 = vector.extract_strided_slice %245 {offsets = [0, 0], sizes = [8, 32], strides = [1, 1]} : vector<32x32xf32> to vector<8x32xf32>
    %cst_90 = arith.constant dense<0.000000e+00> : vector<16x8xf32>
    %249 = tpu.matmul %1, %248, %cst_90 {dimension_numbers = #tpu.dot_dimension_numbers<[1], [1], [0], [0], [0, 0, 1, 0], [], []>} : vector<16x32xf32>, vector<8x32xf32>, vector<16x8xf32> -> vector<16x8xf32>
    %250 = vector.extract_strided_slice %245 {offsets = [8, 0], sizes = [8, 32], strides = [1, 1]} : vector<32x32xf32> to vector<8x32xf32>
    %cst_91 = arith.constant dense<0.000000e+00> : vector<16x8xf32>
    %251 = tpu.matmul %1, %250, %cst_91 {dimension_numbers = #tpu.dot_dimension_numbers<[1], [1], [0], [0], [0, 0, 1, 0], [], []>} : vector<16x32xf32>, vector<8x32xf32>, vector<16x8xf32> -> vector<16x8xf32>
    %252 = vector.extract_strided_slice %245 {offsets = [16, 0], sizes = [8, 32], strides = [1, 1]} : vector<32x32xf32> to vector<8x32xf32>
    %cst_92 = arith.constant dense<0.000000e+00> : vector<16x8xf32>
    %253 = tpu.matmul %1, %252, %cst_92 {dimension_numbers = #tpu.dot_dimension_numbers<[1], [1], [0], [0], [0, 0, 1, 0], [], []>} : vector<16x32xf32>, vector<8x32xf32>, vector<16x8xf32> -> vector<16x8xf32>
    %254 = vector.extract_strided_slice %245 {offsets = [24, 0], sizes = [8, 32], strides = [1, 1]} : vector<32x32xf32> to vector<8x32xf32>
    %cst_93 = arith.constant dense<0.000000e+00> : vector<16x8xf32>
    %255 = tpu.matmul %1, %254, %cst_93 {dimension_numbers = #tpu.dot_dimension_numbers<[1], [1], [0], [0], [0, 0, 1, 0], [], []>} : vector<16x32xf32>, vector<8x32xf32>, vector<16x8xf32> -> vector<16x8xf32>
    %256 = vector.extract_strided_slice %246 {offsets = [0, 0], sizes = [8, 32], strides = [1, 1]} : vector<32x32xf32> to vector<8x32xf32>
    %cst_94 = arith.constant dense<0.000000e+00> : vector<16x8xf32>
    %257 = tpu.matmul %2, %256, %cst_94 {dimension_numbers = #tpu.dot_dimension_numbers<[1], [1], [0], [0], [0, 0, 1, 0], [], []>} : vector<16x32xf32>, vector<8x32xf32>, vector<16x8xf32> -> vector<16x8xf32>
    %258 = vector.extract_strided_slice %246 {offsets = [8, 0], sizes = [8, 32], strides = [1, 1]} : vector<32x32xf32> to vector<8x32xf32>
    %cst_95 = arith.constant dense<0.000000e+00> : vector<16x8xf32>
    %259 = tpu.matmul %2, %258, %cst_95 {dimension_numbers = #tpu.dot_dimension_numbers<[1], [1], [0], [0], [0, 0, 1, 0], [], []>} : vector<16x32xf32>, vector<8x32xf32>, vector<16x8xf32> -> vector<16x8xf32>
    %260 = vector.extract_strided_slice %246 {offsets = [16, 0], sizes = [8, 32], strides = [1, 1]} : vector<32x32xf32> to vector<8x32xf32>
    %cst_96 = arith.constant dense<0.000000e+00> : vector<16x8xf32>
    %261 = tpu.matmul %2, %260, %cst_96 {dimension_numbers = #tpu.dot_dimension_numbers<[1], [1], [0], [0], [0, 0, 1, 0], [], []>} : vector<16x32xf32>, vector<8x32xf32>, vector<16x8xf32> -> vector<16x8xf32>
    %262 = vector.extract_strided_slice %246 {offsets = [24, 0], sizes = [8, 32], strides = [1, 1]} : vector<32x32xf32> to vector<8x32xf32>
    %cst_97 = arith.constant dense<0.000000e+00> : vector<16x8xf32>
    %263 = tpu.matmul %2, %262, %cst_97 {dimension_numbers = #tpu.dot_dimension_numbers<[1], [1], [0], [0], [0, 0, 1, 0], [], []>} : vector<16x32xf32>, vector<8x32xf32>, vector<16x8xf32> -> vector<16x8xf32>
    %264 = vector.extract_strided_slice %244 {offsets = [0, 0], sizes = [8, 32], strides = [1, 1]} : vector<32x32xf32> to vector<8x32xf32>
    %cst_98 = arith.constant dense<0.000000e+00> : vector<32x8xf32>
    %265 = tpu.matmul %243, %264, %cst_98 {dimension_numbers = #tpu.dot_dimension_numbers<[1], [1], [0], [0], [0, 0, 1, 0], [], []>} : vector<32x32xf32>, vector<8x32xf32>, vector<32x8xf32> -> vector<32x8xf32>
    %266 = vector.extract_strided_slice %244 {offsets = [8, 0], sizes = [8, 32], strides = [1, 1]} : vector<32x32xf32> to vector<8x32xf32>
    %cst_99 = arith.constant dense<0.000000e+00> : vector<32x8xf32>
    %267 = tpu.matmul %243, %266, %cst_99 {dimension_numbers = #tpu.dot_dimension_numbers<[1], [1], [0], [0], [0, 0, 1, 0], [], []>} : vector<32x32xf32>, vector<8x32xf32>, vector<32x8xf32> -> vector<32x8xf32>
    %268 = vector.extract_strided_slice %244 {offsets = [16, 0], sizes = [8, 32], strides = [1, 1]} : vector<32x32xf32> to vector<8x32xf32>
    %cst_100 = arith.constant dense<0.000000e+00> : vector<32x8xf32>
    %269 = tpu.matmul %243, %268, %cst_100 {dimension_numbers = #tpu.dot_dimension_numbers<[1], [1], [0], [0], [0, 0, 1, 0], [], []>} : vector<32x32xf32>, vector<8x32xf32>, vector<32x8xf32> -> vector<32x8xf32>
    %270 = vector.extract_strided_slice %244 {offsets = [24, 0], sizes = [8, 32], strides = [1, 1]} : vector<32x32xf32> to vector<8x32xf32>
    %cst_101 = arith.constant dense<0.000000e+00> : vector<32x8xf32>
    %271 = tpu.matmul %243, %270, %cst_101 {dimension_numbers = #tpu.dot_dimension_numbers<[1], [1], [0], [0], [0, 0, 1, 0], [], []>} : vector<32x32xf32>, vector<8x32xf32>, vector<32x8xf32> -> vector<32x8xf32>
    %272 = vector.extract_strided_slice %265 {offsets = [0, 0], sizes = [16, 8], strides = [1, 1]} : vector<32x8xf32> to vector<16x8xf32>
    %273 = vector.extract_strided_slice %249 {offsets = [0, 0], sizes = [8, 8], strides = [1, 1]} : vector<16x8xf32> to vector<8x8xf32>
    %274 = vector.extract_strided_slice %257 {offsets = [0, 0], sizes = [8, 8], strides = [1, 1]} : vector<16x8xf32> to vector<8x8xf32>
    %cst_102 = arith.constant dense<0.000000e+00> : vector<16x8xf32>
    %275 = tpu.matmul %272, %273, %cst_102 {dimension_numbers = #tpu.dot_dimension_numbers<[1], [1], [0], [0], [0, 0, 1, 0], [], []>} : vector<16x8xf32>, vector<8x8xf32>, vector<16x8xf32> -> vector<16x8xf32>
    %cst_103 = arith.constant 0.353553385 : f32
    %276 = vector.broadcast %cst_103 : f32 to vector<16x8xf32>
    %277 = arith.mulf %275, %276 : vector<16x8xf32>
    %cst_104 = arith.constant dense<0xFF800000> : vector<16xf32>
    %278 = vector.multi_reduction <maximumf>, %277, %cst_104 [1] : vector<16x8xf32> to vector<16xf32>
    %279 = vector.shape_cast %278 : vector<16xf32> to vector<16x1xf32>
    %280 = vector.broadcast %279 : vector<16x1xf32> to vector<16x8xf32>
    %281 = arith.subf %277, %280 : vector<16x8xf32>
    %282 = math.exp %281 : vector<16x8xf32>
    %cst_105 = arith.constant dense<0.000000e+00> : vector<16xf32>
    %283 = vector.multi_reduction <add>, %282, %cst_105 [1] : vector<16x8xf32> to vector<16xf32>
    %284 = vector.shape_cast %283 : vector<16xf32> to vector<16x1xf32>
    %285 = tpu.reciprocal %284 {approx = true} : vector<16x1xf32> -> vector<16x1xf32>
    %286 = vector.broadcast %285 : vector<16x1xf32> to vector<16x8xf32>
    %287 = arith.mulf %282, %286 : vector<16x8xf32>
    %cst_106 = arith.constant dense<0.000000e+00> : vector<16x8xf32>
    %288 = tpu.matmul %287, %274, %cst_106 {dimension_numbers = #tpu.dot_dimension_numbers<[1], [0], [0], [1], [0, 0, 1, 1], [], []>} : vector<16x8xf32>, vector<8x8xf32>, vector<16x8xf32> -> vector<16x8xf32>
    %289 = vector.extract_strided_slice %267 {offsets = [0, 0], sizes = [16, 8], strides = [1, 1]} : vector<32x8xf32> to vector<16x8xf32>
    %290 = vector.extract_strided_slice %251 {offsets = [0, 0], sizes = [8, 8], strides = [1, 1]} : vector<16x8xf32> to vector<8x8xf32>
    %291 = vector.extract_strided_slice %259 {offsets = [0, 0], sizes = [8, 8], strides = [1, 1]} : vector<16x8xf32> to vector<8x8xf32>
    %cst_107 = arith.constant dense<0.000000e+00> : vector<16x8xf32>
    %292 = tpu.matmul %289, %290, %cst_107 {dimension_numbers = #tpu.dot_dimension_numbers<[1], [1], [0], [0], [0, 0, 1, 0], [], []>} : vector<16x8xf32>, vector<8x8xf32>, vector<16x8xf32> -> vector<16x8xf32>
    %cst_108 = arith.constant 0.353553385 : f32
    %293 = vector.broadcast %cst_108 : f32 to vector<16x8xf32>
    %294 = arith.mulf %292, %293 : vector<16x8xf32>
    %cst_109 = arith.constant dense<0xFF800000> : vector<16xf32>
    %295 = vector.multi_reduction <maximumf>, %294, %cst_109 [1] : vector<16x8xf32> to vector<16xf32>
    %296 = vector.shape_cast %295 : vector<16xf32> to vector<16x1xf32>
    %297 = vector.broadcast %296 : vector<16x1xf32> to vector<16x8xf32>
    %298 = arith.subf %294, %297 : vector<16x8xf32>
    %299 = math.exp %298 : vector<16x8xf32>
    %cst_110 = arith.constant dense<0.000000e+00> : vector<16xf32>
    %300 = vector.multi_reduction <add>, %299, %cst_110 [1] : vector<16x8xf32> to vector<16xf32>
    %301 = vector.shape_cast %300 : vector<16xf32> to vector<16x1xf32>
    %302 = tpu.reciprocal %301 {approx = true} : vector<16x1xf32> -> vector<16x1xf32>
    %303 = vector.broadcast %302 : vector<16x1xf32> to vector<16x8xf32>
    %304 = arith.mulf %299, %303 : vector<16x8xf32>
    %cst_111 = arith.constant dense<0.000000e+00> : vector<16x8xf32>
    %305 = tpu.matmul %304, %291, %cst_111 {dimension_numbers = #tpu.dot_dimension_numbers<[1], [0], [0], [1], [0, 0, 1, 1], [], []>} : vector<16x8xf32>, vector<8x8xf32>, vector<16x8xf32> -> vector<16x8xf32>
    %306 = vector.extract_strided_slice %269 {offsets = [0, 0], sizes = [16, 8], strides = [1, 1]} : vector<32x8xf32> to vector<16x8xf32>
    %307 = vector.extract_strided_slice %253 {offsets = [0, 0], sizes = [8, 8], strides = [1, 1]} : vector<16x8xf32> to vector<8x8xf32>
    %308 = vector.extract_strided_slice %261 {offsets = [0, 0], sizes = [8, 8], strides = [1, 1]} : vector<16x8xf32> to vector<8x8xf32>
    %cst_112 = arith.constant dense<0.000000e+00> : vector<16x8xf32>
    %309 = tpu.matmul %306, %307, %cst_112 {dimension_numbers = #tpu.dot_dimension_numbers<[1], [1], [0], [0], [0, 0, 1, 0], [], []>} : vector<16x8xf32>, vector<8x8xf32>, vector<16x8xf32> -> vector<16x8xf32>
    %cst_113 = arith.constant 0.353553385 : f32
    %310 = vector.broadcast %cst_113 : f32 to vector<16x8xf32>
    %311 = arith.mulf %309, %310 : vector<16x8xf32>
    %cst_114 = arith.constant dense<0xFF800000> : vector<16xf32>
    %312 = vector.multi_reduction <maximumf>, %311, %cst_114 [1] : vector<16x8xf32> to vector<16xf32>
    %313 = vector.shape_cast %312 : vector<16xf32> to vector<16x1xf32>
    %314 = vector.broadcast %313 : vector<16x1xf32> to vector<16x8xf32>
    %315 = arith.subf %311, %314 : vector<16x8xf32>
    %316 = math.exp %315 : vector<16x8xf32>
    %cst_115 = arith.constant dense<0.000000e+00> : vector<16xf32>
    %317 = vector.multi_reduction <add>, %316, %cst_115 [1] : vector<16x8xf32> to vector<16xf32>
    %318 = vector.shape_cast %317 : vector<16xf32> to vector<16x1xf32>
    %319 = tpu.reciprocal %318 {approx = true} : vector<16x1xf32> -> vector<16x1xf32>
    %320 = vector.broadcast %319 : vector<16x1xf32> to vector<16x8xf32>
    %321 = arith.mulf %316, %320 : vector<16x8xf32>
    %cst_116 = arith.constant dense<0.000000e+00> : vector<16x8xf32>
    %322 = tpu.matmul %321, %308, %cst_116 {dimension_numbers = #tpu.dot_dimension_numbers<[1], [0], [0], [1], [0, 0, 1, 1], [], []>} : vector<16x8xf32>, vector<8x8xf32>, vector<16x8xf32> -> vector<16x8xf32>
    %323 = vector.extract_strided_slice %271 {offsets = [0, 0], sizes = [16, 8], strides = [1, 1]} : vector<32x8xf32> to vector<16x8xf32>
    %324 = vector.extract_strided_slice %255 {offsets = [0, 0], sizes = [8, 8], strides = [1, 1]} : vector<16x8xf32> to vector<8x8xf32>
    %325 = vector.extract_strided_slice %263 {offsets = [0, 0], sizes = [8, 8], strides = [1, 1]} : vector<16x8xf32> to vector<8x8xf32>
    %cst_117 = arith.constant dense<0.000000e+00> : vector<16x8xf32>
    %326 = tpu.matmul %323, %324, %cst_117 {dimension_numbers = #tpu.dot_dimension_numbers<[1], [1], [0], [0], [0, 0, 1, 0], [], []>} : vector<16x8xf32>, vector<8x8xf32>, vector<16x8xf32> -> vector<16x8xf32>
    %cst_118 = arith.constant 0.353553385 : f32
    %327 = vector.broadcast %cst_118 : f32 to vector<16x8xf32>
    %328 = arith.mulf %326, %327 : vector<16x8xf32>
    %cst_119 = arith.constant dense<0xFF800000> : vector<16xf32>
    %329 = vector.multi_reduction <maximumf>, %328, %cst_119 [1] : vector<16x8xf32> to vector<16xf32>
    %330 = vector.shape_cast %329 : vector<16xf32> to vector<16x1xf32>
    %331 = vector.broadcast %330 : vector<16x1xf32> to vector<16x8xf32>
    %332 = arith.subf %328, %331 : vector<16x8xf32>
    %333 = math.exp %332 : vector<16x8xf32>
    %cst_120 = arith.constant dense<0.000000e+00> : vector<16xf32>
    %334 = vector.multi_reduction <add>, %333, %cst_120 [1] : vector<16x8xf32> to vector<16xf32>
    %335 = vector.shape_cast %334 : vector<16xf32> to vector<16x1xf32>
    %336 = tpu.reciprocal %335 {approx = true} : vector<16x1xf32> -> vector<16x1xf32>
    %337 = vector.broadcast %336 : vector<16x1xf32> to vector<16x8xf32>
    %338 = arith.mulf %333, %337 : vector<16x8xf32>
    %cst_121 = arith.constant dense<0.000000e+00> : vector<16x8xf32>
    %339 = tpu.matmul %338, %325, %cst_121 {dimension_numbers = #tpu.dot_dimension_numbers<[1], [0], [0], [1], [0, 0, 1, 1], [], []>} : vector<16x8xf32>, vector<8x8xf32>, vector<16x8xf32> -> vector<16x8xf32>
    %340 = tpu.concatenate %288, %305, %322, %339 in 1 : vector<16x8xf32>, vector<16x8xf32>, vector<16x8xf32>, vector<16x8xf32> -> vector<16x32xf32>
    %341 = vector.extract_strided_slice %265 {offsets = [16, 0], sizes = [16, 8], strides = [1, 1]} : vector<32x8xf32> to vector<16x8xf32>
    %342 = vector.extract_strided_slice %249 {offsets = [8, 0], sizes = [8, 8], strides = [1, 1]} : vector<16x8xf32> to vector<8x8xf32>
    %343 = vector.extract_strided_slice %257 {offsets = [8, 0], sizes = [8, 8], strides = [1, 1]} : vector<16x8xf32> to vector<8x8xf32>
    %cst_122 = arith.constant dense<0.000000e+00> : vector<16x8xf32>
    %344 = tpu.matmul %341, %342, %cst_122 {dimension_numbers = #tpu.dot_dimension_numbers<[1], [1], [0], [0], [0, 0, 1, 0], [], []>} : vector<16x8xf32>, vector<8x8xf32>, vector<16x8xf32> -> vector<16x8xf32>
    %cst_123 = arith.constant 0.353553385 : f32
    %345 = vector.broadcast %cst_123 : f32 to vector<16x8xf32>
    %346 = arith.mulf %344, %345 : vector<16x8xf32>
    %cst_124 = arith.constant dense<0xFF800000> : vector<16xf32>
    %347 = vector.multi_reduction <maximumf>, %346, %cst_124 [1] : vector<16x8xf32> to vector<16xf32>
    %348 = vector.shape_cast %347 : vector<16xf32> to vector<16x1xf32>
    %349 = vector.broadcast %348 : vector<16x1xf32> to vector<16x8xf32>
    %350 = arith.subf %346, %349 : vector<16x8xf32>
    %351 = math.exp %350 : vector<16x8xf32>
    %cst_125 = arith.constant dense<0.000000e+00> : vector<16xf32>
    %352 = vector.multi_reduction <add>, %351, %cst_125 [1] : vector<16x8xf32> to vector<16xf32>
    %353 = vector.shape_cast %352 : vector<16xf32> to vector<16x1xf32>
    %354 = tpu.reciprocal %353 {approx = true} : vector<16x1xf32> -> vector<16x1xf32>
    %355 = vector.broadcast %354 : vector<16x1xf32> to vector<16x8xf32>
    %356 = arith.mulf %351, %355 : vector<16x8xf32>
    %cst_126 = arith.constant dense<0.000000e+00> : vector<16x8xf32>
    %357 = tpu.matmul %356, %343, %cst_126 {dimension_numbers = #tpu.dot_dimension_numbers<[1], [0], [0], [1], [0, 0, 1, 1], [], []>} : vector<16x8xf32>, vector<8x8xf32>, vector<16x8xf32> -> vector<16x8xf32>
    %358 = vector.extract_strided_slice %267 {offsets = [16, 0], sizes = [16, 8], strides = [1, 1]} : vector<32x8xf32> to vector<16x8xf32>
    %359 = vector.extract_strided_slice %251 {offsets = [8, 0], sizes = [8, 8], strides = [1, 1]} : vector<16x8xf32> to vector<8x8xf32>
    %360 = vector.extract_strided_slice %259 {offsets = [8, 0], sizes = [8, 8], strides = [1, 1]} : vector<16x8xf32> to vector<8x8xf32>
    %cst_127 = arith.constant dense<0.000000e+00> : vector<16x8xf32>
    %361 = tpu.matmul %358, %359, %cst_127 {dimension_numbers = #tpu.dot_dimension_numbers<[1], [1], [0], [0], [0, 0, 1, 0], [], []>} : vector<16x8xf32>, vector<8x8xf32>, vector<16x8xf32> -> vector<16x8xf32>
    %cst_128 = arith.constant 0.353553385 : f32
    %362 = vector.broadcast %cst_128 : f32 to vector<16x8xf32>
    %363 = arith.mulf %361, %362 : vector<16x8xf32>
    %cst_129 = arith.constant dense<0xFF800000> : vector<16xf32>
    %364 = vector.multi_reduction <maximumf>, %363, %cst_129 [1] : vector<16x8xf32> to vector<16xf32>
    %365 = vector.shape_cast %364 : vector<16xf32> to vector<16x1xf32>
    %366 = vector.broadcast %365 : vector<16x1xf32> to vector<16x8xf32>
    %367 = arith.subf %363, %366 : vector<16x8xf32>
    %368 = math.exp %367 : vector<16x8xf32>
    %cst_130 = arith.constant dense<0.000000e+00> : vector<16xf32>
    %369 = vector.multi_reduction <add>, %368, %cst_130 [1] : vector<16x8xf32> to vector<16xf32>
    %370 = vector.shape_cast %369 : vector<16xf32> to vector<16x1xf32>
    %371 = tpu.reciprocal %370 {approx = true} : vector<16x1xf32> -> vector<16x1xf32>
    %372 = vector.broadcast %371 : vector<16x1xf32> to vector<16x8xf32>
    %373 = arith.mulf %368, %372 : vector<16x8xf32>
    %cst_131 = arith.constant dense<0.000000e+00> : vector<16x8xf32>
    %374 = tpu.matmul %373, %360, %cst_131 {dimension_numbers = #tpu.dot_dimension_numbers<[1], [0], [0], [1], [0, 0, 1, 1], [], []>} : vector<16x8xf32>, vector<8x8xf32>, vector<16x8xf32> -> vector<16x8xf32>
    %375 = vector.extract_strided_slice %269 {offsets = [16, 0], sizes = [16, 8], strides = [1, 1]} : vector<32x8xf32> to vector<16x8xf32>
    %376 = vector.extract_strided_slice %253 {offsets = [8, 0], sizes = [8, 8], strides = [1, 1]} : vector<16x8xf32> to vector<8x8xf32>
    %377 = vector.extract_strided_slice %261 {offsets = [8, 0], sizes = [8, 8], strides = [1, 1]} : vector<16x8xf32> to vector<8x8xf32>
    %cst_132 = arith.constant dense<0.000000e+00> : vector<16x8xf32>
    %378 = tpu.matmul %375, %376, %cst_132 {dimension_numbers = #tpu.dot_dimension_numbers<[1], [1], [0], [0], [0, 0, 1, 0], [], []>} : vector<16x8xf32>, vector<8x8xf32>, vector<16x8xf32> -> vector<16x8xf32>
    %cst_133 = arith.constant 0.353553385 : f32
    %379 = vector.broadcast %cst_133 : f32 to vector<16x8xf32>
    %380 = arith.mulf %378, %379 : vector<16x8xf32>
    %cst_134 = arith.constant dense<0xFF800000> : vector<16xf32>
    %381 = vector.multi_reduction <maximumf>, %380, %cst_134 [1] : vector<16x8xf32> to vector<16xf32>
    %382 = vector.shape_cast %381 : vector<16xf32> to vector<16x1xf32>
    %383 = vector.broadcast %382 : vector<16x1xf32> to vector<16x8xf32>
    %384 = arith.subf %380, %383 : vector<16x8xf32>
    %385 = math.exp %384 : vector<16x8xf32>
    %cst_135 = arith.constant dense<0.000000e+00> : vector<16xf32>
    %386 = vector.multi_reduction <add>, %385, %cst_135 [1] : vector<16x8xf32> to vector<16xf32>
    %387 = vector.shape_cast %386 : vector<16xf32> to vector<16x1xf32>
    %388 = tpu.reciprocal %387 {approx = true} : vector<16x1xf32> -> vector<16x1xf32>
    %389 = vector.broadcast %388 : vector<16x1xf32> to vector<16x8xf32>
    %390 = arith.mulf %385, %389 : vector<16x8xf32>
    %cst_136 = arith.constant dense<0.000000e+00> : vector<16x8xf32>
    %391 = tpu.matmul %390, %377, %cst_136 {dimension_numbers = #tpu.dot_dimension_numbers<[1], [0], [0], [1], [0, 0, 1, 1], [], []>} : vector<16x8xf32>, vector<8x8xf32>, vector<16x8xf32> -> vector<16x8xf32>
    %392 = vector.extract_strided_slice %271 {offsets = [16, 0], sizes = [16, 8], strides = [1, 1]} : vector<32x8xf32> to vector<16x8xf32>
    %393 = vector.extract_strided_slice %255 {offsets = [8, 0], sizes = [8, 8], strides = [1, 1]} : vector<16x8xf32> to vector<8x8xf32>
    %394 = vector.extract_strided_slice %263 {offsets = [8, 0], sizes = [8, 8], strides = [1, 1]} : vector<16x8xf32> to vector<8x8xf32>
    %cst_137 = arith.constant dense<0.000000e+00> : vector<16x8xf32>
    %395 = tpu.matmul %392, %393, %cst_137 {dimension_numbers = #tpu.dot_dimension_numbers<[1], [1], [0], [0], [0, 0, 1, 0], [], []>} : vector<16x8xf32>, vector<8x8xf32>, vector<16x8xf32> -> vector<16x8xf32>
    %cst_138 = arith.constant 0.353553385 : f32
    %396 = vector.broadcast %cst_138 : f32 to vector<16x8xf32>
    %397 = arith.mulf %395, %396 : vector<16x8xf32>
    %cst_139 = arith.constant dense<0xFF800000> : vector<16xf32>
    %398 = vector.multi_reduction <maximumf>, %397, %cst_139 [1] : vector<16x8xf32> to vector<16xf32>
    %399 = vector.shape_cast %398 : vector<16xf32> to vector<16x1xf32>
    %400 = vector.broadcast %399 : vector<16x1xf32> to vector<16x8xf32>
    %401 = arith.subf %397, %400 : vector<16x8xf32>
    %402 = math.exp %401 : vector<16x8xf32>
    %cst_140 = arith.constant dense<0.000000e+00> : vector<16xf32>
    %403 = vector.multi_reduction <add>, %402, %cst_140 [1] : vector<16x8xf32> to vector<16xf32>
    %404 = vector.shape_cast %403 : vector<16xf32> to vector<16x1xf32>
    %405 = tpu.reciprocal %404 {approx = true} : vector<16x1xf32> -> vector<16x1xf32>
    %406 = vector.broadcast %405 : vector<16x1xf32> to vector<16x8xf32>
    %407 = arith.mulf %402, %406 : vector<16x8xf32>
    %cst_141 = arith.constant dense<0.000000e+00> : vector<16x8xf32>
    %408 = tpu.matmul %407, %394, %cst_141 {dimension_numbers = #tpu.dot_dimension_numbers<[1], [0], [0], [1], [0, 0, 1, 1], [], []>} : vector<16x8xf32>, vector<8x8xf32>, vector<16x8xf32> -> vector<16x8xf32>
    %409 = tpu.concatenate %357, %374, %391, %408 in 1 : vector<16x8xf32>, vector<16x8xf32>, vector<16x8xf32>, vector<16x8xf32> -> vector<16x32xf32>
    %410 = tpu.concatenate %340, %409 in 0 : vector<16x32xf32>, vector<16x32xf32> -> vector<32x32xf32>
    %cst_142 = arith.constant dense<0.000000e+00> : vector<32x32xf32>
    %411 = tpu.matmul %410, %247, %cst_142 {dimension_numbers = #tpu.dot_dimension_numbers<[1], [0], [0], [1], [0, 0, 1, 1], [], []>} : vector<32x32xf32>, vector<32x32xf32>, vector<32x32xf32> -> vector<32x32xf32>
    %412 = arith.addf %243, %411 : vector<32x32xf32>
    %c565 = arith.constant 565 : index
    %c0_143 = arith.constant 0 : index
    %413 = vector.load %arg3[%c565, %c0_143] : memref<572x32xf32, #tpu.memory_space<vmem>>, vector<1x32xf32>
    %c566 = arith.constant 566 : index
    %c0_144 = arith.constant 0 : index
    %414 = vector.load %arg3[%c566, %c0_144] : memref<572x32xf32, #tpu.memory_space<vmem>>, vector<1x32xf32>
    %cst_145 = arith.constant dense<0.000000e+00> : vector<32xf32>
    %415 = vector.multi_reduction <add>, %412, %cst_145 [1] : vector<32x32xf32> to vector<32xf32>
    %416 = vector.shape_cast %415 : vector<32xf32> to vector<32x1xf32>
    %cst_146 = arith.constant 3.200000e+01 : f32
    %417 = vector.broadcast %cst_146 : f32 to vector<32x1xf32>
    %418 = arith.divf %416, %417 : vector<32x1xf32>
    %419 = arith.mulf %412, %412 : vector<32x32xf32>
    %cst_147 = arith.constant dense<0.000000e+00> : vector<32xf32>
    %420 = vector.multi_reduction <add>, %419, %cst_147 [1] : vector<32x32xf32> to vector<32xf32>
    %421 = vector.shape_cast %420 : vector<32xf32> to vector<32x1xf32>
    %cst_148 = arith.constant 3.200000e+01 : f32
    %422 = vector.broadcast %cst_148 : f32 to vector<32x1xf32>
    %423 = arith.divf %421, %422 : vector<32x1xf32>
    %424 = arith.mulf %418, %418 : vector<32x1xf32>
    %425 = arith.subf %423, %424 : vector<32x1xf32>
    %426 = vector.broadcast %418 : vector<32x1xf32> to vector<32x32xf32>
    %427 = arith.subf %412, %426 : vector<32x32xf32>
    %cst_149 = arith.constant 9.99999974E-6 : f32
    %428 = vector.broadcast %cst_149 : f32 to vector<32x1xf32>
    %429 = arith.addf %425, %428 : vector<32x1xf32>
    %430 = math.rsqrt %429 : vector<32x1xf32>
    %431 = vector.broadcast %430 : vector<32x1xf32> to vector<32x32xf32>
    %432 = arith.mulf %427, %431 : vector<32x32xf32>
    %433 = vector.broadcast %413 : vector<1x32xf32> to vector<32x32xf32>
    %434 = arith.mulf %432, %433 : vector<32x32xf32>
    %435 = vector.broadcast %414 : vector<1x32xf32> to vector<32x32xf32>
    %436 = arith.addf %434, %435 : vector<32x32xf32>
    %c384 = arith.constant 384 : index
    %c0_150 = arith.constant 0 : index
    %437 = vector.load %arg3[%c384, %c0_150] : memref<572x32xf32, #tpu.memory_space<vmem>>, vector<64x32xf32>
    %cst_151 = arith.constant dense<0.000000e+00> : vector<32x64xf32>
    %438 = tpu.matmul %436, %437, %cst_151 {dimension_numbers = #tpu.dot_dimension_numbers<[1], [1], [0], [0], [0, 0, 1, 0], [], []>} : vector<32x32xf32>, vector<64x32xf32>, vector<32x64xf32> -> vector<32x64xf32>
    %c1 = arith.constant 1 : index
    %c0_152 = arith.constant 0 : index
    %c0_153 = arith.constant 0 : index
    %439 = vector.load %arg4[%c1, %c0_152, %c0_153] : memref<2x1x64xf32, #tpu.memory_space<vmem>>, vector<1x1x64xf32>
    %440 = vector.shape_cast %439 : vector<1x1x64xf32> to vector<1x64xf32>
    %441 = vector.broadcast %440 : vector<1x64xf32> to vector<32x64xf32>
    %442 = arith.addf %438, %441 : vector<32x64xf32>
    %cst_154 = arith.constant 0.000000e+00 : f32
    %443 = vector.broadcast %cst_154 : f32 to vector<32x64xf32>
    %444 = arith.maximumf %442, %443 : vector<32x64xf32>
    %c448 = arith.constant 448 : index
    %c0_155 = arith.constant 0 : index
    %445 = vector.load %arg3[%c448, %c0_155] : memref<572x32xf32, #tpu.memory_space<vmem>>, vector<64x32xf32>
    %cst_156 = arith.constant dense<0.000000e+00> : vector<32x32xf32>
    %446 = tpu.matmul %444, %445, %cst_156 {dimension_numbers = #tpu.dot_dimension_numbers<[1], [0], [0], [1], [0, 0, 1, 1], [], []>} : vector<32x64xf32>, vector<64x32xf32>, vector<32x32xf32> -> vector<32x32xf32>
    %c569 = arith.constant 569 : index
    %c0_157 = arith.constant 0 : index
    %447 = vector.load %arg3[%c569, %c0_157] : memref<572x32xf32, #tpu.memory_space<vmem>>, vector<1x32xf32>
    %448 = vector.broadcast %447 : vector<1x32xf32> to vector<32x32xf32>
    %449 = arith.addf %446, %448 : vector<32x32xf32>
    %450 = arith.addf %436, %449 : vector<32x32xf32>
    %c567 = arith.constant 567 : index
    %c0_158 = arith.constant 0 : index
    %451 = vector.load %arg3[%c567, %c0_158] : memref<572x32xf32, #tpu.memory_space<vmem>>, vector<1x32xf32>
    %c568 = arith.constant 568 : index
    %c0_159 = arith.constant 0 : index
    %452 = vector.load %arg3[%c568, %c0_159] : memref<572x32xf32, #tpu.memory_space<vmem>>, vector<1x32xf32>
    %cst_160 = arith.constant dense<0.000000e+00> : vector<32xf32>
    %453 = vector.multi_reduction <add>, %450, %cst_160 [1] : vector<32x32xf32> to vector<32xf32>
    %454 = vector.shape_cast %453 : vector<32xf32> to vector<32x1xf32>
    %cst_161 = arith.constant 3.200000e+01 : f32
    %455 = vector.broadcast %cst_161 : f32 to vector<32x1xf32>
    %456 = arith.divf %454, %455 : vector<32x1xf32>
    %457 = arith.mulf %450, %450 : vector<32x32xf32>
    %cst_162 = arith.constant dense<0.000000e+00> : vector<32xf32>
    %458 = vector.multi_reduction <add>, %457, %cst_162 [1] : vector<32x32xf32> to vector<32xf32>
    %459 = vector.shape_cast %458 : vector<32xf32> to vector<32x1xf32>
    %cst_163 = arith.constant 3.200000e+01 : f32
    %460 = vector.broadcast %cst_163 : f32 to vector<32x1xf32>
    %461 = arith.divf %459, %460 : vector<32x1xf32>
    %462 = arith.mulf %456, %456 : vector<32x1xf32>
    %463 = arith.subf %461, %462 : vector<32x1xf32>
    %464 = vector.broadcast %456 : vector<32x1xf32> to vector<32x32xf32>
    %465 = arith.subf %450, %464 : vector<32x32xf32>
    %cst_164 = arith.constant 9.99999974E-6 : f32
    %466 = vector.broadcast %cst_164 : f32 to vector<32x1xf32>
    %467 = arith.addf %463, %466 : vector<32x1xf32>
    %468 = math.rsqrt %467 : vector<32x1xf32>
    %469 = vector.broadcast %468 : vector<32x1xf32> to vector<32x32xf32>
    %470 = arith.mulf %465, %469 : vector<32x32xf32>
    %471 = vector.broadcast %451 : vector<1x32xf32> to vector<32x32xf32>
    %472 = arith.mulf %470, %471 : vector<32x32xf32>
    %473 = vector.broadcast %452 : vector<1x32xf32> to vector<32x32xf32>
    %474 = arith.addf %472, %473 : vector<32x32xf32>
    %c0_165 = arith.constant 0 : index
    %c0_166 = arith.constant 0 : index
    %c0_167 = arith.constant 0 : index
    %475 = vector.load %arg1[%c0_165, %c0_166, %c0_167] : memref<2x32x1xf32, #tpu.memory_space<vmem>>, vector<1x32x1xf32>
    %476 = vector.shape_cast %475 : vector<1x32x1xf32> to vector<32x1xf32>
    %c1_168 = arith.constant 1 : index
    %c0_169 = arith.constant 0 : index
    %c0_170 = arith.constant 0 : index
    %477 = vector.load %arg1[%c1_168, %c0_169, %c0_170] : memref<2x32x1xf32, #tpu.memory_space<vmem>>, vector<1x32x1xf32>
    %478 = vector.shape_cast %477 : vector<1x32x1xf32> to vector<32x1xf32>
    %cst_171 = arith.constant 0.000000e+00 : f32
    %479 = vector.broadcast %cst_171 : f32 to vector<32x1xf32>
    %480 = arith.subf %479, %478 : vector<32x1xf32>
    %481 = arith.mulf %480, %476 : vector<32x1xf32>
    %482 = math.exp %481 : vector<32x1xf32>
    %cst_172 = arith.constant 1.000000e+00 : f32
    %483 = vector.broadcast %cst_172 : f32 to vector<32x1xf32>
    %484 = arith.addf %483, %482 : vector<32x1xf32>
    %485 = tpu.reciprocal %484 {approx = true} : vector<32x1xf32> -> vector<32x1xf32>
    %486 = vector.broadcast %485 : vector<32x1xf32> to vector<32x32xf32>
    %487 = arith.mulf %474, %486 : vector<32x32xf32>
    %c0_173 = arith.constant 0 : index
    %c0_174 = arith.constant 0 : index
    %c0_175 = arith.constant 0 : index
    %488 = vector.load %arg2[%c0_173, %c0_174, %c0_175] : memref<2x16x16xf32, #tpu.memory_space<vmem>>, vector<1x16x16xf32>
    %489 = vector.shape_cast %488 : vector<1x16x16xf32> to vector<16x16xf32>
    %c1_176 = arith.constant 1 : index
    %c0_177 = arith.constant 0 : index
    %c0_178 = arith.constant 0 : index
    %490 = vector.load %arg2[%c1_176, %c0_177, %c0_178] : memref<2x16x16xf32, #tpu.memory_space<vmem>>, vector<1x16x16xf32>
    %491 = vector.shape_cast %490 : vector<1x16x16xf32> to vector<16x16xf32>
    %492 = arith.mulf %489, %491 : vector<16x16xf32>
    %c512 = arith.constant 512 : index
    %c0_179 = arith.constant 0 : index
    %493 = vector.load %arg3[%c512, %c0_179] : memref<572x32xf32, #tpu.memory_space<vmem>>, vector<32x32xf32>
    %cst_180 = arith.constant dense<0.000000e+00> : vector<32x32xf32>
    %494 = tpu.matmul %487, %493, %cst_180 {dimension_numbers = #tpu.dot_dimension_numbers<[1], [0], [0], [1], [0, 0, 1, 1], [], []>} : vector<32x32xf32>, vector<32x32xf32>, vector<32x32xf32> -> vector<32x32xf32>
    %495 = vector.extract_strided_slice %494 {offsets = [0, 0], sizes = [16, 32], strides = [1, 1]} : vector<32x32xf32> to vector<16x32xf32>
    %cst_181 = arith.constant dense<0.000000e+00> : vector<16x32xf32>
    %496 = tpu.matmul %492, %495, %cst_181 {dimension_numbers = #tpu.dot_dimension_numbers<[1], [0], [0], [1], [0, 0, 1, 1], [], []>} : vector<16x16xf32>, vector<16x32xf32>, vector<16x32xf32> -> vector<16x32xf32>
    %497 = vector.extract_strided_slice %494 {offsets = [16, 0], sizes = [16, 32], strides = [1, 1]} : vector<32x32xf32> to vector<16x32xf32>
    %cst_182 = arith.constant dense<0.000000e+00> : vector<16x32xf32>
    %498 = tpu.matmul %492, %497, %cst_182 {dimension_numbers = #tpu.dot_dimension_numbers<[1], [0], [0], [1], [0, 0, 1, 1], [], []>} : vector<16x16xf32>, vector<16x32xf32>, vector<16x32xf32> -> vector<16x32xf32>
    %499 = tpu.concatenate %496, %498 in 0 : vector<16x32xf32>, vector<16x32xf32> -> vector<32x32xf32>
    %c570 = arith.constant 570 : index
    %c0_183 = arith.constant 0 : index
    %500 = vector.load %arg3[%c570, %c0_183] : memref<572x32xf32, #tpu.memory_space<vmem>>, vector<1x32xf32>
    %501 = vector.broadcast %500 : vector<1x32xf32> to vector<32x32xf32>
    %502 = arith.addf %499, %501 : vector<32x32xf32>
    %cst_184 = arith.constant 0.000000e+00 : f32
    %503 = vector.broadcast %cst_184 : f32 to vector<32x32xf32>
    %504 = arith.maximumf %502, %503 : vector<32x32xf32>
    %c544 = arith.constant 544 : index
    %c0_185 = arith.constant 0 : index
    %505 = vector.load %arg3[%c544, %c0_185] : memref<572x32xf32, #tpu.memory_space<vmem>>, vector<16x32xf32>
    %cst_186 = arith.constant dense<0.000000e+00> : vector<32x16xf32>
    %506 = tpu.matmul %504, %505, %cst_186 {dimension_numbers = #tpu.dot_dimension_numbers<[1], [1], [0], [0], [0, 0, 1, 0], [], []>} : vector<32x32xf32>, vector<16x32xf32>, vector<32x16xf32> -> vector<32x16xf32>
    %507 = vector.extract_strided_slice %506 {offsets = [0, 0], sizes = [16, 16], strides = [1, 1]} : vector<32x16xf32> to vector<16x16xf32>
    %cst_187 = arith.constant dense<0.000000e+00> : vector<16x16xf32>
    %508 = tpu.matmul %492, %507, %cst_187 {dimension_numbers = #tpu.dot_dimension_numbers<[1], [0], [0], [1], [0, 0, 1, 1], [], []>} : vector<16x16xf32>, vector<16x16xf32>, vector<16x16xf32> -> vector<16x16xf32>
    %509 = vector.extract_strided_slice %506 {offsets = [16, 0], sizes = [16, 16], strides = [1, 1]} : vector<32x16xf32> to vector<16x16xf32>
    %cst_188 = arith.constant dense<0.000000e+00> : vector<16x16xf32>
    %510 = tpu.matmul %492, %509, %cst_188 {dimension_numbers = #tpu.dot_dimension_numbers<[1], [0], [0], [1], [0, 0, 1, 1], [], []>} : vector<16x16xf32>, vector<16x16xf32>, vector<16x16xf32> -> vector<16x16xf32>
    %511 = tpu.concatenate %508, %510 in 0 : vector<16x16xf32>, vector<16x16xf32> -> vector<32x16xf32>
    %c571 = arith.constant 571 : index
    %c0_189 = arith.constant 0 : index
    %512 = vector.load %arg3[%c571, %c0_189] : memref<572x32xf32, #tpu.memory_space<vmem>>, vector<1x32xf32>
    %513 = vector.extract_strided_slice %512 {offsets = [0, 0], sizes = [1, 16], strides = [1, 1]} : vector<1x32xf32> to vector<1x16xf32>
    %514 = vector.broadcast %513 : vector<1x16xf32> to vector<32x16xf32>
    %515 = arith.addf %511, %514 : vector<32x16xf32>
    %c0_190 = arith.constant 0 : index
    %c0_191 = arith.constant 0 : index
    %516 = vector.load %arg5[%c0_190, %c0_191] : memref<32x16xf32, #tpu.memory_space<vmem>>, vector<32x16xf32>
    tpu.vector_store %arg5[%c0_190, %c0_191], %515 {strides = array<i32>} : memref<32x16xf32, #tpu.memory_space<vmem>>, vector<32x16xf32>,
    return
  }
}

</mosaic_0001>

<llo_original>
// kernel: time_series_prediction.1
$region0: #{time_series_prediction.1}
  #allocation0 [shape = 'u32[]', space=smem, size = 0x4, offset = 0x4, fixed_abs, tag = 'smem constant byte address 0x4 - core index']
  #allocation1 [shape = 'u32[144,128]{1,0:T(1,128)}', space=vmem, size = 0x12000, scoped, tag = 'internal scratch']
  %s0 = inlined_call_operand.vmem [shape: f32[66,32], index: 0, kind: input, shape index: {}]
  %s1 = inlined_call_operand.vmem [shape: f32[2,32,1], index: 1, kind: input, shape index: {}]
  %s2 = inlined_call_operand.vmem [shape: f32[2,16,16], index: 2, kind: input, shape index: {}]
  %s3 = inlined_call_operand.vmem [shape: f32[572,32], index: 3, kind: input, shape index: {}]
  %s4 = inlined_call_operand.vmem [shape: f32[2,1,64], index: 4, kind: input, shape index: {}]
  %s5 = inlined_call_operand.hbm [shape: f32[32,16], index: 5, kind: output, shape index: {}]
  %s6 = sld [smem:[#allocation0]]
  $region30: #{time_series_prediction.1} parent=0
    _
  %s8 = ssub.s32 1, %s6
  %s9 = scalar_select 0, %s8, %s6
  $region1: #{time_series_prediction.1} parent=0
    #allocation2 [shape = 'u8[16384]{0}', space=vmem, size = 0x4000, scoped, tag = 'output window, operand 0, single buffered']
    #allocation3 [shape = 's32[1]{0}', space=sflag, size = 0x4, scoped, tag = 'scoped memory for time_series_prediction.1']
    %10 = vsyncpa [#allocation3], 0
    // Predicated region
    $region2: #{time_series_prediction.1} parent=1 // pred_check
      _
    $region3: #{time_series_prediction.1} parent=1 // pred_check_branch
      %12 = sbr.rel (0) target = $region5
    $region4: #{time_series_prediction.1} parent=1 // pred_region
      _
    $region5: #{time_series_prediction.1} parent=1 // pred_fallthru
      _
    // Predicated region
    $region6: #{time_series_prediction.1} parent=1 // pred_check
      _
    $region7: #{time_series_prediction.1} parent=1 // pred_check_branch
      %14 = sbr.rel (0) target = $region9
    $region8: #{time_series_prediction.1} parent=1 // pred_region
      _
    $region9: #{time_series_prediction.1} parent=1 // pred_fallthru
      _
    // Predicated region
    $region10: #{time_series_prediction.1} parent=1 // pred_check
      _
    $region11: #{time_series_prediction.1} parent=1 // pred_check_branch
      %16 = sbr.rel (0) target = $region13
    $region12: #{time_series_prediction.1} parent=1 // pred_region
      _
    $region13: #{time_series_prediction.1} parent=1 // pred_fallthru
      _
    // Predicated region
    $region14: #{time_series_prediction.1} parent=1 // pred_check
      _
    $region15: #{time_series_prediction.1} parent=1 // pred_check_branch
      %18 = sbr.rel (0) target = $region17
    $region16: #{time_series_prediction.1} parent=1 // pred_region
      _
    $region17: #{time_series_prediction.1} parent=1 // pred_fallthru
      _
    // Predicated region
    $region18: #{time_series_prediction.1} parent=1 // pred_check
      _
    $region19: #{time_series_prediction.1} parent=1 // pred_check_branch
      %20 = sbr.rel (0) target = $region21
    $region20: #{time_series_prediction.1} parent=1 // pred_region
      _
    $region21: #{time_series_prediction.1} parent=1 // pred_fallthru
      _
    %v21 = vld [vmem:[%s0] sm:$0xff]
    %v22 = vld [vmem:[%s0 + $0x8] sm:$0xff]
    %v23 = vld [vmem:[%s0 + $0x10] sm:$0xff]
    %v24 = vld [vmem:[%s0 + $0x18] sm:$0xff]
    %v25 = vld [vmem:[%s0 + $0x20] sm:$0xff]
    %v26 = vld [vmem:[%s0 + $0x28] sm:$0xff]
    %v27 = vld [vmem:[%s0 + $0x30] sm:$0xff]
    %v28 = vld [vmem:[%s0 + $0x38] sm:$0xff]
    %v29 = vld [vmem:[%s0 + $0x40] sm:$0x3]
    %v30 = vlaneseq
    %v31 = vshrl.u32 %v30, 7
    %v32 = vsub.s32 0, %v31
    %v33 = vrot.slane %v29, %v32
    %v34 = vadd.f32 %v21, %v33
    %v35 = vadd.f32 %v22, %v33
    %v36 = vlaneseq
    %v37 = vshrl.u32 %v36, 7
    %v38 = vsub.s32 1, %v37
    %v39 = vrot.slane %v29, %v38
    %v40 = vadd.f32 %v23, %v39
    %v41 = vadd.f32 %v24, %v39
    %v42 = vld [vmem:[%s3] sm:$0xff]
    %v43 = vld [vmem:[%s3 + $0x8] sm:$0xff]
    %v44 = vld [vmem:[%s3 + $0x10] sm:$0xff]
    %v45 = vld [vmem:[%s3 + $0x18] sm:$0xff]
    %v46 = vld [vmem:[%s3 + $0x20] sm:$0xff]
    %v47 = vld [vmem:[%s3 + $0x28] sm:$0xff]
    %v48 = vld [vmem:[%s3 + $0x30] sm:$0xff]
    %v49 = vld [vmem:[%s3 + $0x38] sm:$0xff]
    %v50 = vld [vmem:[%s3 + $0x40] sm:$0xff]
    %v51 = vld [vmem:[%s3 + $0x48] sm:$0xff]
    %v52 = vld [vmem:[%s3 + $0x50] sm:$0xff]
    %v53 = vld [vmem:[%s3 + $0x58] sm:$0xff]
    %v54 = vld [vmem:[%s3 + $0x60] sm:$0xff]
    %v55 = vld [vmem:[%s3 + $0x68] sm:$0xff]
    %v56 = vld [vmem:[%s3 + $0x70] sm:$0xff]
    %v57 = vld [vmem:[%s3 + $0x78] sm:$0xff]
    %vm58 = vcmask 261120
    %v60 = vsel %vm58, %v25, 0
    %v63 = vsel %vm58, %v26, 0
    %v66 = vsel %vm58, %v46, 0
    %68 = vmatprep.subr.mxu0 0.0
    %69 = vmatpush1.xpose.msra.mxu0 0.0
    %70 = vmatprep.subr.mxu0 0.0
    %71 = vmatpush1.xpose.msra.mxu0 0.0
    %72 = vmatprep.subr.mxu0 0.0
    %73 = vmatpush1.xpose.msra.mxu0 0.0
    %74 = vmatprep.subr.mxu0 0.0
    %75 = vmatpush1.xpose.msra.mxu0 0.0
    %76 = vmatprep.subr.mxu0 0.0
    %77 = vmatpush1.xpose.msra.mxu0 0.0
    %78 = vmatprep.subr.mxu0 0.0
    %79 = vmatpush1.xpose.msra.mxu0 0.0
    %80 = vmatprep.subr.mxu0 0.0
    %81 = vmatpush1.xpose.msra.mxu0 0.0
    %82 = vmatprep.subr.mxu0 0.0
    %83 = vmatpush1.xpose.msra.mxu0 0.0
    %84 = vmatprep.subr.mxu0 0.0
    %85 = vmatpush1.xpose.msra.mxu0 0.0
    %86 = vmatprep.subr.mxu0 0.0
    %87 = vmatpush1.xpose.msra.mxu0 0.0
    %88 = vmatprep.subr.mxu0 0.0
    %89 = vmatpush1.xpose.msra.mxu0 0.0
    %90 = vmatprep.subr.mxu0 0.0
    %91 = vmatpush1.xpose.msra.mxu0 0.0
    %92 = vmatprep.subr.mxu0 0.0
    %93 = vmatpush1.xpose.msra.mxu0 0.0
    %94 = vmatprep.subr.mxu0 0.0
    %95 = vmatpush1.xpose.msra.mxu0 0.0
    %96 = vmatprep.subr.mxu0 0.0
    %97 = vmatpush1.xpose.msra.mxu0 0.0
    %98 = vmatprep.subr.mxu0 0.0
    %99 = vmatpush1.xpose.msra.mxu0 %v66
    %100 = vmatprep.subr.mxu0 0.0
    %101 = vmatpush2.xpose.msra.mxu0 0.0
    %102 = vmatprep.subr.mxu0 0.0
    %103 = vmatpush2.xpose.msra.mxu0 0.0
    %104 = vmatprep.subr.mxu0 0.0
    %105 = vmatpush2.xpose.msra.mxu0 0.0
    %106 = vmatprep.subr.mxu0 0.0
    %107 = vmatpush2.xpose.msra.mxu0 0.0
    %108 = vmatprep.subr.mxu0 0.0
    %109 = vmatpush2.xpose.msra.mxu0 0.0
    %110 = vmatprep.subr.mxu0 0.0
    %111 = vmatpush2.xpose.msra.mxu0 0.0
    %112 = vmatprep.subr.mxu0 0.0
    %113 = vmatpush2.xpose.msra.mxu0 0.0
    %114 = vmatprep.subr.mxu0 0.0
    %115 = vmatpush2.xpose.msra.mxu0 0.0
    %116 = vmatprep.subr.mxu0 0.0
    %117 = vmatpush2.xpose.msra.mxu0 0.0
    %118 = vmatprep.subr.mxu0 0.0
    %119 = vmatpush2.xpose.msra.mxu0 0.0
    %120 = vmatprep.subr.mxu0 0.0
    %121 = vmatpush2.xpose.msra.mxu0 0.0
    %122 = vmatprep.subr.mxu0 0.0
    %123 = vmatpush2.xpose.msra.mxu0 0.0
    %124 = vmatprep.subr.mxu0 0.0
    %125 = vmatpush2.xpose.msra.mxu0 0.0
    %126 = vmatprep.subr.mxu0 0.0
    %127 = vmatpush2.xpose.msra.mxu0 0.0
    %128 = vmatprep.subr.mxu0 0.0
    %129 = vmatpush2.xpose.msra.mxu0 0.0
    %130 = vmatprep.subr.mxu0 0.0
    %131 = vmatpush2.xpose.msra.mxu0 0.0
    %132 = vmatprep.mubr.f32.mxu0 0.0
    %133 = vmatmul.mubr.f32.gmra.mxu0 %v60
    %v134 = vpop.f32.mrf.mxu0
    %v135 = vadd.f32 0.0, %v134
    %v136 = vpop.f32.mrf.mxu0
    %137 = vmatprep.mubr.f32.mxu0 0.0
    %138 = vmatmul.mubr.f32.gmra.mxu0 %v63
    %v139 = vpop.f32.mrf.mxu0
    %v140 = vadd.f32 0.0, %v139
    %v141 = vpop.f32.mrf.mxu0
    %142 = vdwg.mxu0
    %v144 = vsel %vm58, %v47, 0
    %146 = vmatprep.subr.mxu0 0.0
    %147 = vmatpush1.xpose.msra.mxu0 0.0
    %148 = vmatprep.subr.mxu0 0.0
    %149 = vmatpush1.xpose.msra.mxu0 0.0
    %150 = vmatprep.subr.mxu0 0.0
    %151 = vmatpush1.xpose.msra.mxu0 0.0
    %152 = vmatprep.subr.mxu0 0.0
    %153 = vmatpush1.xpose.msra.mxu0 0.0
    %154 = vmatprep.subr.mxu0 0.0
    %155 = vmatpush1.xpose.msra.mxu0 0.0
    %156 = vmatprep.subr.mxu0 0.0
    %157 = vmatpush1.xpose.msra.mxu0 0.0
    %158 = vmatprep.subr.mxu0 0.0
    %159 = vmatpush1.xpose.msra.mxu0 0.0
    %160 = vmatprep.subr.mxu0 0.0
    %161 = vmatpush1.xpose.msra.mxu0 0.0
    %162 = vmatprep.subr.mxu0 0.0
    %163 = vmatpush1.xpose.msra.mxu0 0.0
    %164 = vmatprep.subr.mxu0 0.0
    %165 = vmatpush1.xpose.msra.mxu0 0.0
    %166 = vmatprep.subr.mxu0 0.0
    %167 = vmatpush1.xpose.msra.mxu0 0.0
    %168 = vmatprep.subr.mxu0 0.0
    %169 = vmatpush1.xpose.msra.mxu0 0.0
    %170 = vmatprep.subr.mxu0 0.0
    %171 = vmatpush1.xpose.msra.mxu0 0.0
    %172 = vmatprep.subr.mxu0 0.0
    %173 = vmatpush1.xpose.msra.mxu0 0.0
    %174 = vmatprep.subr.mxu0 0.0
    %175 = vmatpush1.xpose.msra.mxu0 0.0
    %176 = vmatprep.subr.mxu0 0.0
    %177 = vmatpush1.xpose.msra.mxu0 %v144
    %178 = vmatprep.subr.mxu0 0.0
    %179 = vmatpush2.xpose.msra.mxu0 0.0
    %180 = vmatprep.subr.mxu0 0.0
    %181 = vmatpush2.xpose.msra.mxu0 0.0
    %182 = vmatprep.subr.mxu0 0.0
    %183 = vmatpush2.xpose.msra.mxu0 0.0
    %184 = vmatprep.subr.mxu0 0.0
    %185 = vmatpush2.xpose.msra.mxu0 0.0
    %186 = vmatprep.subr.mxu0 0.0
    %187 = vmatpush2.xpose.msra.mxu0 0.0
    %188 = vmatprep.subr.mxu0 0.0
    %189 = vmatpush2.xpose.msra.mxu0 0.0
    %190 = vmatprep.subr.mxu0 0.0
    %191 = vmatpush2.xpose.msra.mxu0 0.0
    %192 = vmatprep.subr.mxu0 0.0
    %193 = vmatpush2.xpose.msra.mxu0 0.0
    %194 = vmatprep.subr.mxu0 0.0
    %195 = vmatpush2.xpose.msra.mxu0 0.0
    %196 = vmatprep.subr.mxu0 0.0
    %197 = vmatpush2.xpose.msra.mxu0 0.0
    %198 = vmatprep.subr.mxu0 0.0
    %199 = vmatpush2.xpose.msra.mxu0 0.0
    %200 = vmatprep.subr.mxu0 0.0
    %201 = vmatpush2.xpose.msra.mxu0 0.0
    %202 = vmatprep.subr.mxu0 0.0
    %203 = vmatpush2.xpose.msra.mxu0 0.0
    %204 = vmatprep.subr.mxu0 0.0
    %205 = vmatpush2.xpose.msra.mxu0 0.0
    %206 = vmatprep.subr.mxu0 0.0
    %207 = vmatpush2.xpose.msra.mxu0 0.0
    %208 = vmatprep.subr.mxu0 0.0
    %209 = vmatpush2.xpose.msra.mxu0 0.0
    %210 = vmatprep.mubr.f32.mxu0 0.0
    %211 = vmatmul.mubr.f32.gmra.mxu0 %v60
    %v212 = vpop.f32.mrf.mxu0
    %v213 = vadd.f32 0.0, %v212
    %v214 = vpop.f32.mrf.mxu0
    %215 = vmatprep.mubr.f32.mxu0 0.0
    %216 = vmatmul.mubr.f32.gmra.mxu0 %v63
    %v217 = vpop.f32.mrf.mxu0
    %v218 = vadd.f32 0.0, %v217
    %v219 = vpop.f32.mrf.mxu0
    %220 = vdwg.mxu0
    %v222 = vsel %vm58, %v48, 0
    %224 = vmatprep.subr.mxu0 0.0
    %225 = vmatpush1.xpose.msra.mxu0 0.0
    %226 = vmatprep.subr.mxu0 0.0
    %227 = vmatpush1.xpose.msra.mxu0 0.0
    %228 = vmatprep.subr.mxu0 0.0
    %229 = vmatpush1.xpose.msra.mxu0 0.0
    %230 = vmatprep.subr.mxu0 0.0
    %231 = vmatpush1.xpose.msra.mxu0 0.0
    %232 = vmatprep.subr.mxu0 0.0
    %233 = vmatpush1.xpose.msra.mxu0 0.0
    %234 = vmatprep.subr.mxu0 0.0
    %235 = vmatpush1.xpose.msra.mxu0 0.0
    %236 = vmatprep.subr.mxu0 0.0
    %237 = vmatpush1.xpose.msra.mxu0 0.0
    %238 = vmatprep.subr.mxu0 0.0
    %239 = vmatpush1.xpose.msra.mxu0 0.0
    %240 = vmatprep.subr.mxu0 0.0
    %241 = vmatpush1.xpose.msra.mxu0 0.0
    %242 = vmatprep.subr.mxu0 0.0
    %243 = vmatpush1.xpose.msra.mxu0 0.0
    %244 = vmatprep.subr.mxu0 0.0
    %245 = vmatpush1.xpose.msra.mxu0 0.0
    %246 = vmatprep.subr.mxu0 0.0
    %247 = vmatpush1.xpose.msra.mxu0 0.0
    %248 = vmatprep.subr.mxu0 0.0
    %249 = vmatpush1.xpose.msra.mxu0 0.0
    %250 = vmatprep.subr.mxu0 0.0
    %251 = vmatpush1.xpose.msra.mxu0 0.0
    %252 = vmatprep.subr.mxu0 0.0
    %253 = vmatpush1.xpose.msra.mxu0 0.0
    %254 = vmatprep.subr.mxu0 0.0
    %255 = vmatpush1.xpose.msra.mxu0 %v222
    %256 = vmatprep.subr.mxu0 0.0
    %257 = vmatpush2.xpose.msra.mxu0 0.0
    %258 = vmatprep.subr.mxu0 0.0
    %259 = vmatpush2.xpose.msra.mxu0 0.0
    %260 = vmatprep.subr.mxu0 0.0
    %261 = vmatpush2.xpose.msra.mxu0 0.0
    %262 = vmatprep.subr.mxu0 0.0
    %263 = vmatpush2.xpose.msra.mxu0 0.0
    %264 = vmatprep.subr.mxu0 0.0
    %265 = vmatpush2.xpose.msra.mxu0 0.0
    %266 = vmatprep.subr.mxu0 0.0
    %267 = vmatpush2.xpose.msra.mxu0 0.0
    %268 = vmatprep.subr.mxu0 0.0
    %269 = vmatpush2.xpose.msra.mxu0 0.0
    %270 = vmatprep.subr.mxu0 0.0
    %271 = vmatpush2.xpose.msra.mxu0 0.0
    %272 = vmatprep.subr.mxu0 0.0
    %273 = vmatpush2.xpose.msra.mxu0 0.0
    %274 = vmatprep.subr.mxu0 0.0
    %275 = vmatpush2.xpose.msra.mxu0 0.0
    %276 = vmatprep.subr.mxu0 0.0
    %277 = vmatpush2.xpose.msra.mxu0 0.0
    %278 = vmatprep.subr.mxu0 0.0
    %279 = vmatpush2.xpose.msra.mxu0 0.0
    %280 = vmatprep.subr.mxu0 0.0
    %281 = vmatpush2.xpose.msra.mxu0 0.0
    %282 = vmatprep.subr.mxu0 0.0
    %283 = vmatpush2.xpose.msra.mxu0 0.0
    %284 = vmatprep.subr.mxu0 0.0
    %285 = vmatpush2.xpose.msra.mxu0 0.0
    %286 = vmatprep.subr.mxu0 0.0
    %287 = vmatpush2.xpose.msra.mxu0 0.0
    %288 = vmatprep.mubr.f32.mxu0 0.0
    %289 = vmatmul.mubr.f32.gmra.mxu0 %v60
    %v290 = vpop.f32.mrf.mxu0
    %v291 = vadd.f32 0.0, %v290
    %v292 = vpop.f32.mrf.mxu0
    %293 = vmatprep.mubr.f32.mxu0 0.0
    %294 = vmatmul.mubr.f32.gmra.mxu0 %v63
    %v295 = vpop.f32.mrf.mxu0
    %v296 = vadd.f32 0.0, %v295
    %v297 = vpop.f32.mrf.mxu0
    %298 = vdwg.mxu0
    %v300 = vsel %vm58, %v49, 0
    %302 = vmatprep.subr.mxu0 0.0
    %303 = vmatpush1.xpose.msra.mxu0 0.0
    %304 = vmatprep.subr.mxu0 0.0
    %305 = vmatpush1.xpose.msra.mxu0 0.0
    %306 = vmatprep.subr.mxu0 0.0
    %307 = vmatpush1.xpose.msra.mxu0 0.0
    %308 = vmatprep.subr.mxu0 0.0
    %309 = vmatpush1.xpose.msra.mxu0 0.0
    %310 = vmatprep.subr.mxu0 0.0
    %311 = vmatpush1.xpose.msra.mxu0 0.0
    %312 = vmatprep.subr.mxu0 0.0
    %313 = vmatpush1.xpose.msra.mxu0 0.0
    %314 = vmatprep.subr.mxu0 0.0
    %315 = vmatpush1.xpose.msra.mxu0 0.0
    %316 = vmatprep.subr.mxu0 0.0
    %317 = vmatpush1.xpose.msra.mxu0 0.0
    %318 = vmatprep.subr.mxu0 0.0
    %319 = vmatpush1.xpose.msra.mxu0 0.0
    %320 = vmatprep.subr.mxu0 0.0
    %321 = vmatpush1.xpose.msra.mxu0 0.0
    %322 = vmatprep.subr.mxu0 0.0
    %323 = vmatpush1.xpose.msra.mxu0 0.0
    %324 = vmatprep.subr.mxu0 0.0
    %325 = vmatpush1.xpose.msra.mxu0 0.0
    %326 = vmatprep.subr.mxu0 0.0
    %327 = vmatpush1.xpose.msra.mxu0 0.0
    %328 = vmatprep.subr.mxu0 0.0
    %329 = vmatpush1.xpose.msra.mxu0 0.0
    %330 = vmatprep.subr.mxu0 0.0
    %331 = vmatpush1.xpose.msra.mxu0 0.0
    %332 = vmatprep.subr.mxu0 0.0
    %333 = vmatpush1.xpose.msra.mxu0 %v300
    %334 = vmatprep.subr.mxu0 0.0
    %335 = vmatpush2.xpose.msra.mxu0 0.0
    %336 = vmatprep.subr.mxu0 0.0
    %337 = vmatpush2.xpose.msra.mxu0 0.0
    %338 = vmatprep.subr.mxu0 0.0
    %339 = vmatpush2.xpose.msra.mxu0 0.0
    %340 = vmatprep.subr.mxu0 0.0
    %341 = vmatpush2.xpose.msra.mxu0 0.0
    %342 = vmatprep.subr.mxu0 0.0
    %343 = vmatpush2.xpose.msra.mxu0 0.0
    %344 = vmatprep.subr.mxu0 0.0
    %345 = vmatpush2.xpose.msra.mxu0 0.0
    %346 = vmatprep.subr.mxu0 0.0
    %347 = vmatpush2.xpose.msra.mxu0 0.0
    %348 = vmatprep.subr.mxu0 0.0
    %349 = vmatpush2.xpose.msra.mxu0 0.0
    %350 = vmatprep.subr.mxu0 0.0
    %351 = vmatpush2.xpose.msra.mxu0 0.0
    %352 = vmatprep.subr.mxu0 0.0
    %353 = vmatpush2.xpose.msra.mxu0 0.0
    %354 = vmatprep.subr.mxu0 0.0
    %355 = vmatpush2.xpose.msra.mxu0 0.0
    %356 = vmatprep.subr.mxu0 0.0
    %357 = vmatpush2.xpose.msra.mxu0 0.0
    %358 = vmatprep.subr.mxu0 0.0
    %359 = vmatpush2.xpose.msra.mxu0 0.0
    %360 = vmatprep.subr.mxu0 0.0
    %361 = vmatpush2.xpose.msra.mxu0 0.0
    %362 = vmatprep.subr.mxu0 0.0
    %363 = vmatpush2.xpose.msra.mxu0 0.0
    %364 = vmatprep.subr.mxu0 0.0
    %365 = vmatpush2.xpose.msra.mxu0 0.0
    %366 = vmatprep.mubr.f32.mxu0 0.0
    %367 = vmatmul.mubr.f32.gmra.mxu0 %v60
    %v368 = vpop.f32.mrf.mxu0
    %v369 = vadd.f32 0.0, %v368
    %v370 = vpop.f32.mrf.mxu0
    %371 = vmatprep.mubr.f32.mxu0 0.0
    %372 = vmatmul.mubr.f32.gmra.mxu0 %v63
    %v373 = vpop.f32.mrf.mxu0
    %v374 = vadd.f32 0.0, %v373
    %v375 = vpop.f32.mrf.mxu0
    %376 = vdwg.mxu0
    %v378 = vsel %vm58, %v27, 0
    %v381 = vsel %vm58, %v28, 0
    %v384 = vsel %vm58, %v50, 0
    %386 = vmatprep.subr.mxu0 0.0
    %387 = vmatpush1.xpose.msra.mxu0 0.0
    %388 = vmatprep.subr.mxu0 0.0
    %389 = vmatpush1.xpose.msra.mxu0 0.0
    %390 = vmatprep.subr.mxu0 0.0
    %391 = vmatpush1.xpose.msra.mxu0 0.0
    %392 = vmatprep.subr.mxu0 0.0
    %393 = vmatpush1.xpose.msra.mxu0 0.0
    %394 = vmatprep.subr.mxu0 0.0
    %395 = vmatpush1.xpose.msra.mxu0 0.0
    %396 = vmatprep.subr.mxu0 0.0
    %397 = vmatpush1.xpose.msra.mxu0 0.0
    %398 = vmatprep.subr.mxu0 0.0
    %399 = vmatpush1.xpose.msra.mxu0 0.0
    %400 = vmatprep.subr.mxu0 0.0
    %401 = vmatpush1.xpose.msra.mxu0 0.0
    %402 = vmatprep.subr.mxu0 0.0
    %403 = vmatpush1.xpose.msra.mxu0 0.0
    %404 = vmatprep.subr.mxu0 0.0
    %405 = vmatpush1.xpose.msra.mxu0 0.0
    %406 = vmatprep.subr.mxu0 0.0
    %407 = vmatpush1.xpose.msra.mxu0 0.0
    %408 = vmatprep.subr.mxu0 0.0
    %409 = vmatpush1.xpose.msra.mxu0 0.0
    %410 = vmatprep.subr.mxu0 0.0
    %411 = vmatpush1.xpose.msra.mxu0 0.0
    %412 = vmatprep.subr.mxu0 0.0
    %413 = vmatpush1.xpose.msra.mxu0 0.0
    %414 = vmatprep.subr.mxu0 0.0
    %415 = vmatpush1.xpose.msra.mxu0 0.0
    %416 = vmatprep.subr.mxu0 0.0
    %417 = vmatpush1.xpose.msra.mxu0 %v384
    %418 = vmatprep.subr.mxu0 0.0
    %419 = vmatpush2.xpose.msra.mxu0 0.0
    %420 = vmatprep.subr.mxu0 0.0
    %421 = vmatpush2.xpose.msra.mxu0 0.0
    %422 = vmatprep.subr.mxu0 0.0
    %423 = vmatpush2.xpose.msra.mxu0 0.0
    %424 = vmatprep.subr.mxu0 0.0
    %425 = vmatpush2.xpose.msra.mxu0 0.0
    %426 = vmatprep.subr.mxu0 0.0
    %427 = vmatpush2.xpose.msra.mxu0 0.0
    %428 = vmatprep.subr.mxu0 0.0
    %429 = vmatpush2.xpose.msra.mxu0 0.0
    %430 = vmatprep.subr.mxu0 0.0
    %431 = vmatpush2.xpose.msra.mxu0 0.0
    %432 = vmatprep.subr.mxu0 0.0
    %433 = vmatpush2.xpose.msra.mxu0 0.0
    %434 = vmatprep.subr.mxu0 0.0
    %435 = vmatpush2.xpose.msra.mxu0 0.0
    %436 = vmatprep.subr.mxu0 0.0
    %437 = vmatpush2.xpose.msra.mxu0 0.0
    %438 = vmatprep.subr.mxu0 0.0
    %439 = vmatpush2.xpose.msra.mxu0 0.0
    %440 = vmatprep.subr.mxu0 0.0
    %441 = vmatpush2.xpose.msra.mxu0 0.0
    %442 = vmatprep.subr.mxu0 0.0
    %443 = vmatpush2.xpose.msra.mxu0 0.0
    %444 = vmatprep.subr.mxu0 0.0
    %445 = vmatpush2.xpose.msra.mxu0 0.0
    %446 = vmatprep.subr.mxu0 0.0
    %447 = vmatpush2.xpose.msra.mxu0 0.0
    %448 = vmatprep.subr.mxu0 0.0
    %449 = vmatpush2.xpose.msra.mxu0 0.0
    %450 = vmatprep.mubr.f32.mxu0 0.0
    %451 = vmatmul.mubr.f32.gmra.mxu0 %v378
    %v452 = vpop.f32.mrf.mxu0
    %v453 = vadd.f32 0.0, %v452
    %v454 = vpop.f32.mrf.mxu0
    %455 = vmatprep.mubr.f32.mxu0 0.0
    %456 = vmatmul.mubr.f32.gmra.mxu0 %v381
    %v457 = vpop.f32.mrf.mxu0
    %v458 = vadd.f32 0.0, %v457
    %v459 = vpop.f32.mrf.mxu0
    %460 = vdwg.mxu0
    %v462 = vsel %vm58, %v51, 0
    %464 = vmatprep.subr.mxu0 0.0
    %465 = vmatpush1.xpose.msra.mxu0 0.0
    %466 = vmatprep.subr.mxu0 0.0
    %467 = vmatpush1.xpose.msra.mxu0 0.0
    %468 = vmatprep.subr.mxu0 0.0
    %469 = vmatpush1.xpose.msra.mxu0 0.0
    %470 = vmatprep.subr.mxu0 0.0
    %471 = vmatpush1.xpose.msra.mxu0 0.0
    %472 = vmatprep.subr.mxu0 0.0
    %473 = vmatpush1.xpose.msra.mxu0 0.0
    %474 = vmatprep.subr.mxu0 0.0
    %475 = vmatpush1.xpose.msra.mxu0 0.0
    %476 = vmatprep.subr.mxu0 0.0
    %477 = vmatpush1.xpose.msra.mxu0 0.0
    %478 = vmatprep.subr.mxu0 0.0
    %479 = vmatpush1.xpose.msra.mxu0 0.0
    %480 = vmatprep.subr.mxu0 0.0
    %481 = vmatpush1.xpose.msra.mxu0 0.0
    %482 = vmatprep.subr.mxu0 0.0
    %483 = vmatpush1.xpose.msra.mxu0 0.0
    %484 = vmatprep.subr.mxu0 0.0
    %485 = vmatpush1.xpose.msra.mxu0 0.0
    %486 = vmatprep.subr.mxu0 0.0
    %487 = vmatpush1.xpose.msra.mxu0 0.0
    %488 = vmatprep.subr.mxu0 0.0
    %489 = vmatpush1.xpose.msra.mxu0 0.0
    %490 = vmatprep.subr.mxu0 0.0
    %491 = vmatpush1.xpose.msra.mxu0 0.0
    %492 = vmatprep.subr.mxu0 0.0
    %493 = vmatpush1.xpose.msra.mxu0 0.0
    %494 = vmatprep.subr.mxu0 0.0
    %495 = vmatpush1.xpose.msra.mxu0 %v462
    %496 = vmatprep.subr.mxu0 0.0
    %497 = vmatpush2.xpose.msra.mxu0 0.0
    %498 = vmatprep.subr.mxu0 0.0
    %499 = vmatpush2.xpose.msra.mxu0 0.0
    %500 = vmatprep.subr.mxu0 0.0
    %501 = vmatpush2.xpose.msra.mxu0 0.0
    %502 = vmatprep.subr.mxu0 0.0
    %503 = vmatpush2.xpose.msra.mxu0 0.0
    %504 = vmatprep.subr.mxu0 0.0
    %505 = vmatpush2.xpose.msra.mxu0 0.0
    %506 = vmatprep.subr.mxu0 0.0
    %507 = vmatpush2.xpose.msra.mxu0 0.0
    %508 = vmatprep.subr.mxu0 0.0
    %509 = vmatpush2.xpose.msra.mxu0 0.0
    %510 = vmatprep.subr.mxu0 0.0
    %511 = vmatpush2.xpose.msra.mxu0 0.0
    %512 = vmatprep.subr.mxu0 0.0
    %513 = vmatpush2.xpose.msra.mxu0 0.0
    %514 = vmatprep.subr.mxu0 0.0
    %515 = vmatpush2.xpose.msra.mxu0 0.0
    %516 = vmatprep.subr.mxu0 0.0
    %517 = vmatpush2.xpose.msra.mxu0 0.0
    %518 = vmatprep.subr.mxu0 0.0
    %519 = vmatpush2.xpose.msra.mxu0 0.0
    %520 = vmatprep.subr.mxu0 0.0
    %521 = vmatpush2.xpose.msra.mxu0 0.0
    %522 = vmatprep.subr.mxu0 0.0
    %523 = vmatpush2.xpose.msra.mxu0 0.0
    %524 = vmatprep.subr.mxu0 0.0
    %525 = vmatpush2.xpose.msra.mxu0 0.0
    %526 = vmatprep.subr.mxu0 0.0
    %527 = vmatpush2.xpose.msra.mxu0 0.0
    %528 = vmatprep.mubr.f32.mxu0 0.0
    %529 = vmatmul.mubr.f32.gmra.mxu0 %v378
    %v530 = vpop.f32.mrf.mxu0
    %v531 = vadd.f32 0.0, %v530
    %v532 = vpop.f32.mrf.mxu0
    %533 = vmatprep.mubr.f32.mxu0 0.0
    %534 = vmatmul.mubr.f32.gmra.mxu0 %v381
    %v535 = vpop.f32.mrf.mxu0
    %v536 = vadd.f32 0.0, %v535
    %v537 = vpop.f32.mrf.mxu0
    %538 = vdwg.mxu0
    %v540 = vsel %vm58, %v52, 0
    %542 = vmatprep.subr.mxu0 0.0
    %543 = vmatpush1.xpose.msra.mxu0 0.0
    %544 = vmatprep.subr.mxu0 0.0
    %545 = vmatpush1.xpose.msra.mxu0 0.0
    %546 = vmatprep.subr.mxu0 0.0
    %547 = vmatpush1.xpose.msra.mxu0 0.0
    %548 = vmatprep.subr.mxu0 0.0
    %549 = vmatpush1.xpose.msra.mxu0 0.0
    %550 = vmatprep.subr.mxu0 0.0
    %551 = vmatpush1.xpose.msra.mxu0 0.0
    %552 = vmatprep.subr.mxu0 0.0
    %553 = vmatpush1.xpose.msra.mxu0 0.0
    %554 = vmatprep.subr.mxu0 0.0
    %555 = vmatpush1.xpose.msra.mxu0 0.0
    %556 = vmatprep.subr.mxu0 0.0
    %557 = vmatpush1.xpose.msra.mxu0 0.0
    %558 = vmatprep.subr.mxu0 0.0
    %559 = vmatpush1.xpose.msra.mxu0 0.0
    %560 = vmatprep.subr.mxu0 0.0
    %561 = vmatpush1.xpose.msra.mxu0 0.0
    %562 = vmatprep.subr.mxu0 0.0
    %563 = vmatpush1.xpose.msra.mxu0 0.0
    %564 = vmatprep.subr.mxu0 0.0
    %565 = vmatpush1.xpose.msra.mxu0 0.0
    %566 = vmatprep.subr.mxu0 0.0
    %567 = vmatpush1.xpose.msra.mxu0 0.0
    %568 = vmatprep.subr.mxu0 0.0
    %569 = vmatpush1.xpose.msra.mxu0 0.0
    %570 = vmatprep.subr.mxu0 0.0
    %571 = vmatpush1.xpose.msra.mxu0 0.0
    %572 = vmatprep.subr.mxu0 0.0
    %573 = vmatpush1.xpose.msra.mxu0 %v540
    %574 = vmatprep.subr.mxu0 0.0
    %575 = vmatpush2.xpose.msra.mxu0 0.0
    %576 = vmatprep.subr.mxu0 0.0
    %577 = vmatpush2.xpose.msra.mxu0 0.0
    %578 = vmatprep.subr.mxu0 0.0
    %579 = vmatpush2.xpose.msra.mxu0 0.0
    %580 = vmatprep.subr.mxu0 0.0
    %581 = vmatpush2.xpose.msra.mxu0 0.0
    %582 = vmatprep.subr.mxu0 0.0
    %583 = vmatpush2.xpose.msra.mxu0 0.0
    %584 = vmatprep.subr.mxu0 0.0
    %585 = vmatpush2.xpose.msra.mxu0 0.0
    %586 = vmatprep.subr.mxu0 0.0
    %587 = vmatpush2.xpose.msra.mxu0 0.0
    %588 = vmatprep.subr.mxu0 0.0
    %589 = vmatpush2.xpose.msra.mxu0 0.0
    %590 = vmatprep.subr.mxu0 0.0
    %591 = vmatpush2.xpose.msra.mxu0 0.0
    %592 = vmatprep.subr.mxu0 0.0
    %593 = vmatpush2.xpose.msra.mxu0 0.0
    %594 = vmatprep.subr.mxu0 0.0
    %595 = vmatpush2.xpose.msra.mxu0 0.0
    %596 = vmatprep.subr.mxu0 0.0
    %597 = vmatpush2.xpose.msra.mxu0 0.0
    %598 = vmatprep.subr.mxu0 0.0
    %599 = vmatpush2.xpose.msra.mxu0 0.0
    %600 = vmatprep.subr.mxu0 0.0
    %601 = vmatpush2.xpose.msra.mxu0 0.0
    %602 = vmatprep.subr.mxu0 0.0
    %603 = vmatpush2.xpose.msra.mxu0 0.0
    %604 = vmatprep.subr.mxu0 0.0
    %605 = vmatpush2.xpose.msra.mxu0 0.0
    %606 = vmatprep.mubr.f32.mxu0 0.0
    %607 = vmatmul.mubr.f32.gmra.mxu0 %v378
    %v608 = vpop.f32.mrf.mxu0
    %v609 = vadd.f32 0.0, %v608
    %v610 = vpop.f32.mrf.mxu0
    %611 = vmatprep.mubr.f32.mxu0 0.0
    %612 = vmatmul.mubr.f32.gmra.mxu0 %v381
    %v613 = vpop.f32.mrf.mxu0
    %v614 = vadd.f32 0.0, %v613
    %v615 = vpop.f32.mrf.mxu0
    %616 = vdwg.mxu0
    %v618 = vsel %vm58, %v53, 0
    %620 = vmatprep.subr.mxu0 0.0
    %621 = vmatpush1.xpose.msra.mxu0 0.0
    %622 = vmatprep.subr.mxu0 0.0
    %623 = vmatpush1.xpose.msra.mxu0 0.0
    %624 = vmatprep.subr.mxu0 0.0
    %625 = vmatpush1.xpose.msra.mxu0 0.0
    %626 = vmatprep.subr.mxu0 0.0
    %627 = vmatpush1.xpose.msra.mxu0 0.0
    %628 = vmatprep.subr.mxu0 0.0
    %629 = vmatpush1.xpose.msra.mxu0 0.0
    %630 = vmatprep.subr.mxu0 0.0
    %631 = vmatpush1.xpose.msra.mxu0 0.0
    %632 = vmatprep.subr.mxu0 0.0
    %633 = vmatpush1.xpose.msra.mxu0 0.0
    %634 = vmatprep.subr.mxu0 0.0
    %635 = vmatpush1.xpose.msra.mxu0 0.0
    %636 = vmatprep.subr.mxu0 0.0
    %637 = vmatpush1.xpose.msra.mxu0 0.0
    %638 = vmatprep.subr.mxu0 0.0
    %639 = vmatpush1.xpose.msra.mxu0 0.0
    %640 = vmatprep.subr.mxu0 0.0
    %641 = vmatpush1.xpose.msra.mxu0 0.0
    %642 = vmatprep.subr.mxu0 0.0
    %643 = vmatpush1.xpose.msra.mxu0 0.0
    %644 = vmatprep.subr.mxu0 0.0
    %645 = vmatpush1.xpose.msra.mxu0 0.0
    %646 = vmatprep.subr.mxu0 0.0
    %647 = vmatpush1.xpose.msra.mxu0 0.0
    %648 = vmatprep.subr.mxu0 0.0
    %649 = vmatpush1.xpose.msra.mxu0 0.0
    %650 = vmatprep.subr.mxu0 0.0
    %651 = vmatpush1.xpose.msra.mxu0 %v618
    %652 = vmatprep.subr.mxu0 0.0
    %653 = vmatpush2.xpose.msra.mxu0 0.0
    %654 = vmatprep.subr.mxu0 0.0
    %655 = vmatpush2.xpose.msra.mxu0 0.0
    %656 = vmatprep.subr.mxu0 0.0
    %657 = vmatpush2.xpose.msra.mxu0 0.0
    %658 = vmatprep.subr.mxu0 0.0
    %659 = vmatpush2.xpose.msra.mxu0 0.0
    %660 = vmatprep.subr.mxu0 0.0
    %661 = vmatpush2.xpose.msra.mxu0 0.0
    %662 = vmatprep.subr.mxu0 0.0
    %663 = vmatpush2.xpose.msra.mxu0 0.0
    %664 = vmatprep.subr.mxu0 0.0
    %665 = vmatpush2.xpose.msra.mxu0 0.0
    %666 = vmatprep.subr.mxu0 0.0
    %667 = vmatpush2.xpose.msra.mxu0 0.0
    %668 = vmatprep.subr.mxu0 0.0
    %669 = vmatpush2.xpose.msra.mxu0 0.0
    %670 = vmatprep.subr.mxu0 0.0
    %671 = vmatpush2.xpose.msra.mxu0 0.0
    %672 = vmatprep.subr.mxu0 0.0
    %673 = vmatpush2.xpose.msra.mxu0 0.0
    %674 = vmatprep.subr.mxu0 0.0
    %675 = vmatpush2.xpose.msra.mxu0 0.0
    %676 = vmatprep.subr.mxu0 0.0
    %677 = vmatpush2.xpose.msra.mxu0 0.0
    %678 = vmatprep.subr.mxu0 0.0
    %679 = vmatpush2.xpose.msra.mxu0 0.0
    %680 = vmatprep.subr.mxu0 0.0
    %681 = vmatpush2.xpose.msra.mxu0 0.0
    %682 = vmatprep.subr.mxu0 0.0
    %683 = vmatpush2.xpose.msra.mxu0 0.0
    %684 = vmatprep.mubr.f32.mxu0 0.0
    %685 = vmatmul.mubr.f32.gmra.mxu0 %v378
    %v686 = vpop.f32.mrf.mxu0
    %v687 = vadd.f32 0.0, %v686
    %v688 = vpop.f32.mrf.mxu0
    %689 = vmatprep.mubr.f32.mxu0 0.0
    %690 = vmatmul.mubr.f32.gmra.mxu0 %v381
    %v691 = vpop.f32.mrf.mxu0
    %v692 = vadd.f32 0.0, %v691
    %v693 = vpop.f32.mrf.mxu0
    %694 = vdwg.mxu0
    %v696 = vsel %vm58, %v34, 0
    %v699 = vsel %vm58, %v35, 0
    %v702 = vsel %vm58, %v40, 0
    %v705 = vsel %vm58, %v41, 0
    %v708 = vsel %vm58, %v42, 0
    %710 = vmatprep.subr.mxu0 0.0
    %711 = vmatpush1.xpose.msra.mxu0 0.0
    %712 = vmatprep.subr.mxu0 0.0
    %713 = vmatpush1.xpose.msra.mxu0 0.0
    %714 = vmatprep.subr.mxu0 0.0
    %715 = vmatpush1.xpose.msra.mxu0 0.0
    %716 = vmatprep.subr.mxu0 0.0
    %717 = vmatpush1.xpose.msra.mxu0 0.0
    %718 = vmatprep.subr.mxu0 0.0
    %719 = vmatpush1.xpose.msra.mxu0 0.0
    %720 = vmatprep.subr.mxu0 0.0
    %721 = vmatpush1.xpose.msra.mxu0 0.0
    %722 = vmatprep.subr.mxu0 0.0
    %723 = vmatpush1.xpose.msra.mxu0 0.0
    %724 = vmatprep.subr.mxu0 0.0
    %725 = vmatpush1.xpose.msra.mxu0 0.0
    %726 = vmatprep.subr.mxu0 0.0
    %727 = vmatpush1.xpose.msra.mxu0 0.0
    %728 = vmatprep.subr.mxu0 0.0
    %729 = vmatpush1.xpose.msra.mxu0 0.0
    %730 = vmatprep.subr.mxu0 0.0
    %731 = vmatpush1.xpose.msra.mxu0 0.0
    %732 = vmatprep.subr.mxu0 0.0
    %733 = vmatpush1.xpose.msra.mxu0 0.0
    %734 = vmatprep.subr.mxu0 0.0
    %735 = vmatpush1.xpose.msra.mxu0 0.0
    %736 = vmatprep.subr.mxu0 0.0
    %737 = vmatpush1.xpose.msra.mxu0 0.0
    %738 = vmatprep.subr.mxu0 0.0
    %739 = vmatpush1.xpose.msra.mxu0 0.0
    %740 = vmatprep.subr.mxu0 0.0
    %741 = vmatpush1.xpose.msra.mxu0 %v708
    %742 = vmatprep.subr.mxu0 0.0
    %743 = vmatpush2.xpose.msra.mxu0 0.0
    %744 = vmatprep.subr.mxu0 0.0
    %745 = vmatpush2.xpose.msra.mxu0 0.0
    %746 = vmatprep.subr.mxu0 0.0
    %747 = vmatpush2.xpose.msra.mxu0 0.0
    %748 = vmatprep.subr.mxu0 0.0
    %749 = vmatpush2.xpose.msra.mxu0 0.0
    %750 = vmatprep.subr.mxu0 0.0
    %751 = vmatpush2.xpose.msra.mxu0 0.0
    %752 = vmatprep.subr.mxu0 0.0
    %753 = vmatpush2.xpose.msra.mxu0 0.0
    %754 = vmatprep.subr.mxu0 0.0
    %755 = vmatpush2.xpose.msra.mxu0 0.0
    %756 = vmatprep.subr.mxu0 0.0
    %757 = vmatpush2.xpose.msra.mxu0 0.0
    %758 = vmatprep.subr.mxu0 0.0
    %759 = vmatpush2.xpose.msra.mxu0 0.0
    %760 = vmatprep.subr.mxu0 0.0
    %761 = vmatpush2.xpose.msra.mxu0 0.0
    %762 = vmatprep.subr.mxu0 0.0
    %763 = vmatpush2.xpose.msra.mxu0 0.0
    %764 = vmatprep.subr.mxu0 0.0
    %765 = vmatpush2.xpose.msra.mxu0 0.0
    %766 = vmatprep.subr.mxu0 0.0
    %767 = vmatpush2.xpose.msra.mxu0 0.0
    %768 = vmatprep.subr.mxu0 0.0
    %769 = vmatpush2.xpose.msra.mxu0 0.0
    %770 = vmatprep.subr.mxu0 0.0
    %771 = vmatpush2.xpose.msra.mxu0 0.0
    %772 = vmatprep.subr.mxu0 0.0
    %773 = vmatpush2.xpose.msra.mxu0 0.0
    %774 = vmatprep.mubr.f32.mxu0 0.0
    %775 = vmatmul.mubr.f32.gmra.mxu0 %v696
    %v776 = vpop.f32.mrf.mxu0
    %v777 = vadd.f32 0.0, %v776
    %v778 = vpop.f32.mrf.mxu0
    %779 = vmatprep.mubr.f32.mxu0 0.0
    %780 = vmatmul.mubr.f32.gmra.mxu0 %v699
    %v781 = vpop.f32.mrf.mxu0
    %v782 = vadd.f32 0.0, %v781
    %v783 = vpop.f32.mrf.mxu0
    %784 = vmatprep.mubr.f32.mxu0 0.0
    %785 = vmatmul.mubr.f32.gmra.mxu0 %v702
    %v786 = vpop.f32.mrf.mxu0
    %v787 = vadd.f32 0.0, %v786
    %v788 = vpop.f32.mrf.mxu0
    %789 = vmatprep.mubr.f32.mxu0 0.0
    %790 = vmatmul.mubr.f32.gmra.mxu0 %v705
    %v791 = vpop.f32.mrf.mxu0
    %v792 = vadd.f32 0.0, %v791
    %v793 = vpop.f32.mrf.mxu0
    %794 = vdwg.mxu0
    %v796 = vsel %vm58, %v43, 0
    %798 = vmatprep.subr.mxu0 0.0
    %799 = vmatpush1.xpose.msra.mxu0 0.0
    %800 = vmatprep.subr.mxu0 0.0
    %801 = vmatpush1.xpose.msra.mxu0 0.0
    %802 = vmatprep.subr.mxu0 0.0
    %803 = vmatpush1.xpose.msra.mxu0 0.0
    %804 = vmatprep.subr.mxu0 0.0
    %805 = vmatpush1.xpose.msra.mxu0 0.0
    %806 = vmatprep.subr.mxu0 0.0
    %807 = vmatpush1.xpose.msra.mxu0 0.0
    %808 = vmatprep.subr.mxu0 0.0
    %809 = vmatpush1.xpose.msra.mxu0 0.0
    %810 = vmatprep.subr.mxu0 0.0
    %811 = vmatpush1.xpose.msra.mxu0 0.0
    %812 = vmatprep.subr.mxu0 0.0
    %813 = vmatpush1.xpose.msra.mxu0 0.0
    %814 = vmatprep.subr.mxu0 0.0
    %815 = vmatpush1.xpose.msra.mxu0 0.0
    %816 = vmatprep.subr.mxu0 0.0
    %817 = vmatpush1.xpose.msra.mxu0 0.0
    %818 = vmatprep.subr.mxu0 0.0
    %819 = vmatpush1.xpose.msra.mxu0 0.0
    %820 = vmatprep.subr.mxu0 0.0
    %821 = vmatpush1.xpose.msra.mxu0 0.0
    %822 = vmatprep.subr.mxu0 0.0
    %823 = vmatpush1.xpose.msra.mxu0 0.0
    %824 = vmatprep.subr.mxu0 0.0
    %825 = vmatpush1.xpose.msra.mxu0 0.0
    %826 = vmatprep.subr.mxu0 0.0
    %827 = vmatpush1.xpose.msra.mxu0 0.0
    %828 = vmatprep.subr.mxu0 0.0
    %829 = vmatpush1.xpose.msra.mxu0 %v796
    %830 = vmatprep.subr.mxu0 0.0
    %831 = vmatpush2.xpose.msra.mxu0 0.0
    %832 = vmatprep.subr.mxu0 0.0
    %833 = vmatpush2.xpose.msra.mxu0 0.0
    %834 = vmatprep.subr.mxu0 0.0
    %835 = vmatpush2.xpose.msra.mxu0 0.0
    %836 = vmatprep.subr.mxu0 0.0
    %837 = vmatpush2.xpose.msra.mxu0 0.0
    %838 = vmatprep.subr.mxu0 0.0
    %839 = vmatpush2.xpose.msra.mxu0 0.0
    %840 = vmatprep.subr.mxu0 0.0
    %841 = vmatpush2.xpose.msra.mxu0 0.0
    %842 = vmatprep.subr.mxu0 0.0
    %843 = vmatpush2.xpose.msra.mxu0 0.0
    %844 = vmatprep.subr.mxu0 0.0
    %845 = vmatpush2.xpose.msra.mxu0 0.0
    %846 = vmatprep.subr.mxu0 0.0
    %847 = vmatpush2.xpose.msra.mxu0 0.0
    %848 = vmatprep.subr.mxu0 0.0
    %849 = vmatpush2.xpose.msra.mxu0 0.0
    %850 = vmatprep.subr.mxu0 0.0
    %851 = vmatpush2.xpose.msra.mxu0 0.0
    %852 = vmatprep.subr.mxu0 0.0
    %853 = vmatpush2.xpose.msra.mxu0 0.0
    %854 = vmatprep.subr.mxu0 0.0
    %855 = vmatpush2.xpose.msra.mxu0 0.0
    %856 = vmatprep.subr.mxu0 0.0
    %857 = vmatpush2.xpose.msra.mxu0 0.0
    %858 = vmatprep.subr.mxu0 0.0
    %859 = vmatpush2.xpose.msra.mxu0 0.0
    %860 = vmatprep.subr.mxu0 0.0
    %861 = vmatpush2.xpose.msra.mxu0 0.0
    %862 = vmatprep.mubr.f32.mxu0 0.0
    %863 = vmatmul.mubr.f32.gmra.mxu0 %v696
    %v864 = vpop.f32.mrf.mxu0
    %v865 = vadd.f32 0.0, %v864
    %v866 = vpop.f32.mrf.mxu0
    %867 = vmatprep.mubr.f32.mxu0 0.0
    %868 = vmatmul.mubr.f32.gmra.mxu0 %v699
    %v869 = vpop.f32.mrf.mxu0
    %v870 = vadd.f32 0.0, %v869
    %v871 = vpop.f32.mrf.mxu0
    %872 = vmatprep.mubr.f32.mxu0 0.0
    %873 = vmatmul.mubr.f32.gmra.mxu0 %v702
    %v874 = vpop.f32.mrf.mxu0
    %v875 = vadd.f32 0.0, %v874
    %v876 = vpop.f32.mrf.mxu0
    %877 = vmatprep.mubr.f32.mxu0 0.0
    %878 = vmatmul.mubr.f32.gmra.mxu0 %v705
    %v879 = vpop.f32.mrf.mxu0
    %v880 = vadd.f32 0.0, %v879
    %v881 = vpop.f32.mrf.mxu0
    %882 = vdwg.mxu0
    %v884 = vsel %vm58, %v44, 0
    %886 = vmatprep.subr.mxu0 0.0
    %887 = vmatpush1.xpose.msra.mxu0 0.0
    %888 = vmatprep.subr.mxu0 0.0
    %889 = vmatpush1.xpose.msra.mxu0 0.0
    %890 = vmatprep.subr.mxu0 0.0
    %891 = vmatpush1.xpose.msra.mxu0 0.0
    %892 = vmatprep.subr.mxu0 0.0
    %893 = vmatpush1.xpose.msra.mxu0 0.0
    %894 = vmatprep.subr.mxu0 0.0
    %895 = vmatpush1.xpose.msra.mxu0 0.0
    %896 = vmatprep.subr.mxu0 0.0
    %897 = vmatpush1.xpose.msra.mxu0 0.0
    %898 = vmatprep.subr.mxu0 0.0
    %899 = vmatpush1.xpose.msra.mxu0 0.0
    %900 = vmatprep.subr.mxu0 0.0
    %901 = vmatpush1.xpose.msra.mxu0 0.0
    %902 = vmatprep.subr.mxu0 0.0
    %903 = vmatpush1.xpose.msra.mxu0 0.0
    %904 = vmatprep.subr.mxu0 0.0
    %905 = vmatpush1.xpose.msra.mxu0 0.0
    %906 = vmatprep.subr.mxu0 0.0
    %907 = vmatpush1.xpose.msra.mxu0 0.0
    %908 = vmatprep.subr.mxu0 0.0
    %909 = vmatpush1.xpose.msra.mxu0 0.0
    %910 = vmatprep.subr.mxu0 0.0
    %911 = vmatpush1.xpose.msra.mxu0 0.0
    %912 = vmatprep.subr.mxu0 0.0
    %913 = vmatpush1.xpose.msra.mxu0 0.0
    %914 = vmatprep.subr.mxu0 0.0
    %915 = vmatpush1.xpose.msra.mxu0 0.0
    %916 = vmatprep.subr.mxu0 0.0
    %917 = vmatpush1.xpose.msra.mxu0 %v884
    %918 = vmatprep.subr.mxu0 0.0
    %919 = vmatpush2.xpose.msra.mxu0 0.0
    %920 = vmatprep.subr.mxu0 0.0
    %921 = vmatpush2.xpose.msra.mxu0 0.0
    %922 = vmatprep.subr.mxu0 0.0
    %923 = vmatpush2.xpose.msra.mxu0 0.0
    %924 = vmatprep.subr.mxu0 0.0
    %925 = vmatpush2.xpose.msra.mxu0 0.0
    %926 = vmatprep.subr.mxu0 0.0
    %927 = vmatpush2.xpose.msra.mxu0 0.0
    %928 = vmatprep.subr.mxu0 0.0
    %929 = vmatpush2.xpose.msra.mxu0 0.0
    %930 = vmatprep.subr.mxu0 0.0
    %931 = vmatpush2.xpose.msra.mxu0 0.0
    %932 = vmatprep.subr.mxu0 0.0
    %933 = vmatpush2.xpose.msra.mxu0 0.0
    %934 = vmatprep.subr.mxu0 0.0
    %935 = vmatpush2.xpose.msra.mxu0 0.0
    %936 = vmatprep.subr.mxu0 0.0
    %937 = vmatpush2.xpose.msra.mxu0 0.0
    %938 = vmatprep.subr.mxu0 0.0
    %939 = vmatpush2.xpose.msra.mxu0 0.0
    %940 = vmatprep.subr.mxu0 0.0
    %941 = vmatpush2.xpose.msra.mxu0 0.0
    %942 = vmatprep.subr.mxu0 0.0
    %943 = vmatpush2.xpose.msra.mxu0 0.0
    %944 = vmatprep.subr.mxu0 0.0
    %945 = vmatpush2.xpose.msra.mxu0 0.0
    %946 = vmatprep.subr.mxu0 0.0
    %947 = vmatpush2.xpose.msra.mxu0 0.0
    %948 = vmatprep.subr.mxu0 0.0
    %949 = vmatpush2.xpose.msra.mxu0 0.0
    %950 = vmatprep.mubr.f32.mxu0 0.0
    %951 = vmatmul.mubr.f32.gmra.mxu0 %v696
    %v952 = vpop.f32.mrf.mxu0
    %v953 = vadd.f32 0.0, %v952
    %v954 = vpop.f32.mrf.mxu0
    %955 = vmatprep.mubr.f32.mxu0 0.0
    %956 = vmatmul.mubr.f32.gmra.mxu0 %v699
    %v957 = vpop.f32.mrf.mxu0
    %v958 = vadd.f32 0.0, %v957
    %v959 = vpop.f32.mrf.mxu0
    %960 = vmatprep.mubr.f32.mxu0 0.0
    %961 = vmatmul.mubr.f32.gmra.mxu0 %v702
    %v962 = vpop.f32.mrf.mxu0
    %v963 = vadd.f32 0.0, %v962
    %v964 = vpop.f32.mrf.mxu0
    %965 = vmatprep.mubr.f32.mxu0 0.0
    %966 = vmatmul.mubr.f32.gmra.mxu0 %v705
    %v967 = vpop.f32.mrf.mxu0
    %v968 = vadd.f32 0.0, %v967
    %v969 = vpop.f32.mrf.mxu0
    %970 = vdwg.mxu0
    %v972 = vsel %vm58, %v45, 0
    %974 = vmatprep.subr.mxu0 0.0
    %975 = vmatpush1.xpose.msra.mxu0 0.0
    %976 = vmatprep.subr.mxu0 0.0
    %977 = vmatpush1.xpose.msra.mxu0 0.0
    %978 = vmatprep.subr.mxu0 0.0
    %979 = vmatpush1.xpose.msra.mxu0 0.0
    %980 = vmatprep.subr.mxu0 0.0
    %981 = vmatpush1.xpose.msra.mxu0 0.0
    %982 = vmatprep.subr.mxu0 0.0
    %983 = vmatpush1.xpose.msra.mxu0 0.0
    %984 = vmatprep.subr.mxu0 0.0
    %985 = vmatpush1.xpose.msra.mxu0 0.0
    %986 = vmatprep.subr.mxu0 0.0
    %987 = vmatpush1.xpose.msra.mxu0 0.0
    %988 = vmatprep.subr.mxu0 0.0
    %989 = vmatpush1.xpose.msra.mxu0 0.0
    %990 = vmatprep.subr.mxu0 0.0
    %991 = vmatpush1.xpose.msra.mxu0 0.0
    %992 = vmatprep.subr.mxu0 0.0
    %993 = vmatpush1.xpose.msra.mxu0 0.0
    %994 = vmatprep.subr.mxu0 0.0
    %995 = vmatpush1.xpose.msra.mxu0 0.0
    %996 = vmatprep.subr.mxu0 0.0
    %997 = vmatpush1.xpose.msra.mxu0 0.0
    %998 = vmatprep.subr.mxu0 0.0
    %999 = vmatpush1.xpose.msra.mxu0 0.0
    %1000 = vmatprep.subr.mxu0 0.0
    %1001 = vmatpush1.xpose.msra.mxu0 0.0
    %1002 = vmatprep.subr.mxu0 0.0
    %1003 = vmatpush1.xpose.msra.mxu0 0.0
    %1004 = vmatprep.subr.mxu0 0.0
    %1005 = vmatpush1.xpose.msra.mxu0 %v972
    %1006 = vmatprep.subr.mxu0 0.0
    %1007 = vmatpush2.xpose.msra.mxu0 0.0
    %1008 = vmatprep.subr.mxu0 0.0
    %1009 = vmatpush2.xpose.msra.mxu0 0.0
    %1010 = vmatprep.subr.mxu0 0.0
    %1011 = vmatpush2.xpose.msra.mxu0 0.0
    %1012 = vmatprep.subr.mxu0 0.0
    %1013 = vmatpush2.xpose.msra.mxu0 0.0
    %1014 = vmatprep.subr.mxu0 0.0
    %1015 = vmatpush2.xpose.msra.mxu0 0.0
    %1016 = vmatprep.subr.mxu0 0.0
    %1017 = vmatpush2.xpose.msra.mxu0 0.0
    %1018 = vmatprep.subr.mxu0 0.0
    %1019 = vmatpush2.xpose.msra.mxu0 0.0
    %1020 = vmatprep.subr.mxu0 0.0
    %1021 = vmatpush2.xpose.msra.mxu0 0.0
    %1022 = vmatprep.subr.mxu0 0.0
    %1023 = vmatpush2.xpose.msra.mxu0 0.0
    %1024 = vmatprep.subr.mxu0 0.0
    %1025 = vmatpush2.xpose.msra.mxu0 0.0
    %1026 = vmatprep.subr.mxu0 0.0
    %1027 = vmatpush2.xpose.msra.mxu0 0.0
    %1028 = vmatprep.subr.mxu0 0.0
    %1029 = vmatpush2.xpose.msra.mxu0 0.0
    %1030 = vmatprep.subr.mxu0 0.0
    %1031 = vmatpush2.xpose.msra.mxu0 0.0
    %1032 = vmatprep.subr.mxu0 0.0
    %1033 = vmatpush2.xpose.msra.mxu0 0.0
    %1034 = vmatprep.subr.mxu0 0.0
    %1035 = vmatpush2.xpose.msra.mxu0 0.0
    %1036 = vmatprep.subr.mxu0 0.0
    %1037 = vmatpush2.xpose.msra.mxu0 0.0
    %1038 = vmatprep.mubr.f32.mxu0 0.0
    %1039 = vmatmul.mubr.f32.gmra.mxu0 %v696
    %v1040 = vpop.f32.mrf.mxu0
    %v1041 = vadd.f32 0.0, %v1040
    %v1042 = vpop.f32.mrf.mxu0
    %1043 = vmatprep.mubr.f32.mxu0 0.0
    %1044 = vmatmul.mubr.f32.gmra.mxu0 %v699
    %v1045 = vpop.f32.mrf.mxu0
    %v1046 = vadd.f32 0.0, %v1045
    %v1047 = vpop.f32.mrf.mxu0
    %1048 = vmatprep.mubr.f32.mxu0 0.0
    %1049 = vmatmul.mubr.f32.gmra.mxu0 %v702
    %v1050 = vpop.f32.mrf.mxu0
    %v1051 = vadd.f32 0.0, %v1050
    %v1052 = vpop.f32.mrf.mxu0
    %1053 = vmatprep.mubr.f32.mxu0 0.0
    %1054 = vmatmul.mubr.f32.gmra.mxu0 %v705
    %v1055 = vpop.f32.mrf.mxu0
    %v1056 = vadd.f32 0.0, %v1055
    %v1057 = vpop.f32.mrf.mxu0
    %1058 = vdwg.mxu0
    %vm1059 = vcmask 64512
    %v1061 = vsel %vm1059, %v777, 0
    %v1064 = vsel %vm1059, %v782, 0
    %v1067 = vsel %vm1059, %v135, 0
    %1069 = vmatprep.subr.mxu0 0.0
    %1070 = vmatpush1.xpose.msra.mxu0 0.0
    %1071 = vmatprep.subr.mxu0 0.0
    %1072 = vmatpush1.xpose.msra.mxu0 0.0
    %1073 = vmatprep.subr.mxu0 0.0
    %1074 = vmatpush1.xpose.msra.mxu0 0.0
    %1075 = vmatprep.subr.mxu0 0.0
    %1076 = vmatpush1.xpose.msra.mxu0 0.0
    %1077 = vmatprep.subr.mxu0 0.0
    %1078 = vmatpush1.xpose.msra.mxu0 0.0
    %1079 = vmatprep.subr.mxu0 0.0
    %1080 = vmatpush1.xpose.msra.mxu0 0.0
    %1081 = vmatprep.subr.mxu0 0.0
    %1082 = vmatpush1.xpose.msra.mxu0 0.0
    %1083 = vmatprep.subr.mxu0 0.0
    %1084 = vmatpush1.xpose.msra.mxu0 0.0
    %1085 = vmatprep.subr.mxu0 0.0
    %1086 = vmatpush1.xpose.msra.mxu0 0.0
    %1087 = vmatprep.subr.mxu0 0.0
    %1088 = vmatpush1.xpose.msra.mxu0 0.0
    %1089 = vmatprep.subr.mxu0 0.0
    %1090 = vmatpush1.xpose.msra.mxu0 0.0
    %1091 = vmatprep.subr.mxu0 0.0
    %1092 = vmatpush1.xpose.msra.mxu0 0.0
    %1093 = vmatprep.subr.mxu0 0.0
    %1094 = vmatpush1.xpose.msra.mxu0 0.0
    %1095 = vmatprep.subr.mxu0 0.0
    %1096 = vmatpush1.xpose.msra.mxu0 0.0
    %1097 = vmatprep.subr.mxu0 0.0
    %1098 = vmatpush1.xpose.msra.mxu0 0.0
    %1099 = vmatprep.subr.mxu0 0.0
    %1100 = vmatpush1.xpose.msra.mxu0 %v1067
    %1101 = vmatprep.subr.mxu0 0.0
    %1102 = vmatpush2.xpose.msra.mxu0 0.0
    %1103 = vmatprep.subr.mxu0 0.0
    %1104 = vmatpush2.xpose.msra.mxu0 0.0
    %1105 = vmatprep.subr.mxu0 0.0
    %1106 = vmatpush2.xpose.msra.mxu0 0.0
    %1107 = vmatprep.subr.mxu0 0.0
    %1108 = vmatpush2.xpose.msra.mxu0 0.0
    %1109 = vmatprep.subr.mxu0 0.0
    %1110 = vmatpush2.xpose.msra.mxu0 0.0
    %1111 = vmatprep.subr.mxu0 0.0
    %1112 = vmatpush2.xpose.msra.mxu0 0.0
    %1113 = vmatprep.subr.mxu0 0.0
    %1114 = vmatpush2.xpose.msra.mxu0 0.0
    %1115 = vmatprep.subr.mxu0 0.0
    %1116 = vmatpush2.xpose.msra.mxu0 0.0
    %1117 = vmatprep.subr.mxu0 0.0
    %1118 = vmatpush2.xpose.msra.mxu0 0.0
    %1119 = vmatprep.subr.mxu0 0.0
    %1120 = vmatpush2.xpose.msra.mxu0 0.0
    %1121 = vmatprep.subr.mxu0 0.0
    %1122 = vmatpush2.xpose.msra.mxu0 0.0
    %1123 = vmatprep.subr.mxu0 0.0
    %1124 = vmatpush2.xpose.msra.mxu0 0.0
    %1125 = vmatprep.subr.mxu0 0.0
    %1126 = vmatpush2.xpose.msra.mxu0 0.0
    %1127 = vmatprep.subr.mxu0 0.0
    %1128 = vmatpush2.xpose.msra.mxu0 0.0
    %1129 = vmatprep.subr.mxu0 0.0
    %1130 = vmatpush2.xpose.msra.mxu0 0.0
    %1131 = vmatprep.subr.mxu0 0.0
    %1132 = vmatpush2.xpose.msra.mxu0 0.0
    %1133 = vmatprep.mubr.f32.mxu0 0.0
    %1134 = vmatmul.mubr.f32.gmra.mxu0 %v1061
    %v1135 = vpop.f32.mrf.mxu0
    %v1136 = vadd.f32 0.0, %v1135
    %v1137 = vpop.f32.mrf.mxu0
    %1138 = vmatprep.mubr.f32.mxu0 0.0
    %1139 = vmatmul.mubr.f32.gmra.mxu0 %v1064
    %v1140 = vpop.f32.mrf.mxu0
    %v1141 = vadd.f32 0.0, %v1140
    %v1142 = vpop.f32.mrf.mxu0
    %1143 = vdwg.mxu0
    %v1144 = vmul.f32 %v1136, 0.35355338
    %v1145 = vmul.f32 %v1141, 0.35355338
    %v1146 = vsel %vm1059, %v1144, -inf
    %1147 = vmax.xlane.f32.xlu0 %v1146
    %v1148 = vpop.xlane.xlu0 %1147
    %v1149 = vsel %vm1059, %v1145, -inf
    %1150 = vmax.xlane.f32.xlu0 %v1149
    %v1151 = vpop.xlane.xlu0 %1150
    %v1152 = vsub.f32 %v1144, %v1148
    %v1153 = vsub.f32 %v1145, %v1151
    %v1154 = vmul.f32 %v1152, 1.442695
    %v1155 = vpow.pop %v1154
    %v1156 = vmul.f32 %v1153, 1.442695
    %v1157 = vpow.pop %v1156
    %v1158 = vsel %vm1059, %v1155, 0.0
    %1159 = vadd.xlane.f32.xlu0 %v1158
    %v1160 = vpop.xlane.xlu0 %1159
    %v1161 = vsel %vm1059, %v1157, 0.0
    %1162 = vadd.xlane.f32.xlu0 %v1161
    %v1163 = vpop.xlane.xlu0 %1162
    %v1164 = vrcp.pop %v1160
    %v1165 = vrcp.pop %v1163
    %v1166 = vmul.f32 %v1155, %v1164
    %v1167 = vmul.f32 %v1157, %v1165
    %v1169 = vsel %vm1059, %v1166, 0
    %v1172 = vsel %vm1059, %v1167, 0
    %1174 = vmatprep.subr.mxu0 0.0
    %1175 = vmatpush1.msra.mxu0 0.0
    %1176 = vmatprep.subr.mxu0 0.0
    %1177 = vmatpush1.msra.mxu0 0.0
    %1178 = vmatprep.subr.mxu0 0.0
    %1179 = vmatpush1.msra.mxu0 0.0
    %1180 = vmatprep.subr.mxu0 0.0
    %1181 = vmatpush1.msra.mxu0 0.0
    %1182 = vmatprep.subr.mxu0 0.0
    %1183 = vmatpush1.msra.mxu0 0.0
    %1184 = vmatprep.subr.mxu0 0.0
    %1185 = vmatpush1.msra.mxu0 0.0
    %1186 = vmatprep.subr.mxu0 0.0
    %1187 = vmatpush1.msra.mxu0 0.0
    %1188 = vmatprep.subr.mxu0 0.0
    %1189 = vmatpush1.msra.mxu0 0.0
    %1190 = vmatprep.subr.mxu0 0.0
    %1191 = vmatpush1.msra.mxu0 0.0
    %1192 = vmatprep.subr.mxu0 0.0
    %1193 = vmatpush1.msra.mxu0 0.0
    %1194 = vmatprep.subr.mxu0 0.0
    %1195 = vmatpush1.msra.mxu0 0.0
    %1196 = vmatprep.subr.mxu0 0.0
    %1197 = vmatpush1.msra.mxu0 0.0
    %1198 = vmatprep.subr.mxu0 0.0
    %1199 = vmatpush1.msra.mxu0 0.0
    %1200 = vmatprep.subr.mxu0 0.0
    %1201 = vmatpush1.msra.mxu0 0.0
    %1202 = vmatprep.subr.mxu0 0.0
    %1203 = vmatpush1.msra.mxu0 0.0
    %1204 = vmatprep.subr.mxu0 0.0
    %1205 = vmatpush1.msra.mxu0 %v453
    %1206 = vmatprep.subr.mxu0 0.0
    %1207 = vmatpush2.msra.mxu0 0.0
    %1208 = vmatprep.subr.mxu0 0.0
    %1209 = vmatpush2.msra.mxu0 0.0
    %1210 = vmatprep.subr.mxu0 0.0
    %1211 = vmatpush2.msra.mxu0 0.0
    %1212 = vmatprep.subr.mxu0 0.0
    %1213 = vmatpush2.msra.mxu0 0.0
    %1214 = vmatprep.subr.mxu0 0.0
    %1215 = vmatpush2.msra.mxu0 0.0
    %1216 = vmatprep.subr.mxu0 0.0
    %1217 = vmatpush2.msra.mxu0 0.0
    %1218 = vmatprep.subr.mxu0 0.0
    %1219 = vmatpush2.msra.mxu0 0.0
    %1220 = vmatprep.subr.mxu0 0.0
    %1221 = vmatpush2.msra.mxu0 0.0
    %1222 = vmatprep.subr.mxu0 0.0
    %1223 = vmatpush2.msra.mxu0 0.0
    %1224 = vmatprep.subr.mxu0 0.0
    %1225 = vmatpush2.msra.mxu0 0.0
    %1226 = vmatprep.subr.mxu0 0.0
    %1227 = vmatpush2.msra.mxu0 0.0
    %1228 = vmatprep.subr.mxu0 0.0
    %1229 = vmatpush2.msra.mxu0 0.0
    %1230 = vmatprep.subr.mxu0 0.0
    %1231 = vmatpush2.msra.mxu0 0.0
    %1232 = vmatprep.subr.mxu0 0.0
    %1233 = vmatpush2.msra.mxu0 0.0
    %1234 = vmatprep.subr.mxu0 0.0
    %1235 = vmatpush2.msra.mxu0 0.0
    %1236 = vmatprep.subr.mxu0 0.0
    %1237 = vmatpush2.msra.mxu0 0.0
    %1238 = vmatprep.mubr.f32.mxu0 0.0
    %1239 = vmatmul.mubr.f32.gmra.mxu0 %v1169
    %v1240 = vpop.f32.mrf.mxu0
    %v1241 = vadd.f32 0.0, %v1240
    %v1242 = vpop.f32.mrf.mxu0
    %1243 = vmatprep.mubr.f32.mxu0 0.0
    %1244 = vmatmul.mubr.f32.gmra.mxu0 %v1172
    %v1245 = vpop.f32.mrf.mxu0
    %v1246 = vadd.f32 0.0, %v1245
    %v1247 = vpop.f32.mrf.mxu0
    %1248 = vdwg.mxu0
    %v1250 = vsel %vm1059, %v865, 0
    %v1253 = vsel %vm1059, %v870, 0
    %v1256 = vsel %vm1059, %v213, 0
    %1258 = vmatprep.subr.mxu0 0.0
    %1259 = vmatpush1.xpose.msra.mxu0 0.0
    %1260 = vmatprep.subr.mxu0 0.0
    %1261 = vmatpush1.xpose.msra.mxu0 0.0
    %1262 = vmatprep.subr.mxu0 0.0
    %1263 = vmatpush1.xpose.msra.mxu0 0.0
    %1264 = vmatprep.subr.mxu0 0.0
    %1265 = vmatpush1.xpose.msra.mxu0 0.0
    %1266 = vmatprep.subr.mxu0 0.0
    %1267 = vmatpush1.xpose.msra.mxu0 0.0
    %1268 = vmatprep.subr.mxu0 0.0
    %1269 = vmatpush1.xpose.msra.mxu0 0.0
    %1270 = vmatprep.subr.mxu0 0.0
    %1271 = vmatpush1.xpose.msra.mxu0 0.0
    %1272 = vmatprep.subr.mxu0 0.0
    %1273 = vmatpush1.xpose.msra.mxu0 0.0
    %1274 = vmatprep.subr.mxu0 0.0
    %1275 = vmatpush1.xpose.msra.mxu0 0.0
    %1276 = vmatprep.subr.mxu0 0.0
    %1277 = vmatpush1.xpose.msra.mxu0 0.0
    %1278 = vmatprep.subr.mxu0 0.0
    %1279 = vmatpush1.xpose.msra.mxu0 0.0
    %1280 = vmatprep.subr.mxu0 0.0
    %1281 = vmatpush1.xpose.msra.mxu0 0.0
    %1282 = vmatprep.subr.mxu0 0.0
    %1283 = vmatpush1.xpose.msra.mxu0 0.0
    %1284 = vmatprep.subr.mxu0 0.0
    %1285 = vmatpush1.xpose.msra.mxu0 0.0
    %1286 = vmatprep.subr.mxu0 0.0
    %1287 = vmatpush1.xpose.msra.mxu0 0.0
    %1288 = vmatprep.subr.mxu0 0.0
    %1289 = vmatpush1.xpose.msra.mxu0 %v1256
    %1290 = vmatprep.subr.mxu0 0.0
    %1291 = vmatpush2.xpose.msra.mxu0 0.0
    %1292 = vmatprep.subr.mxu0 0.0
    %1293 = vmatpush2.xpose.msra.mxu0 0.0
    %1294 = vmatprep.subr.mxu0 0.0
    %1295 = vmatpush2.xpose.msra.mxu0 0.0
    %1296 = vmatprep.subr.mxu0 0.0
    %1297 = vmatpush2.xpose.msra.mxu0 0.0
    %1298 = vmatprep.subr.mxu0 0.0
    %1299 = vmatpush2.xpose.msra.mxu0 0.0
    %1300 = vmatprep.subr.mxu0 0.0
    %1301 = vmatpush2.xpose.msra.mxu0 0.0
    %1302 = vmatprep.subr.mxu0 0.0
    %1303 = vmatpush2.xpose.msra.mxu0 0.0
    %1304 = vmatprep.subr.mxu0 0.0
    %1305 = vmatpush2.xpose.msra.mxu0 0.0
    %1306 = vmatprep.subr.mxu0 0.0
    %1307 = vmatpush2.xpose.msra.mxu0 0.0
    %1308 = vmatprep.subr.mxu0 0.0
    %1309 = vmatpush2.xpose.msra.mxu0 0.0
    %1310 = vmatprep.subr.mxu0 0.0
    %1311 = vmatpush2.xpose.msra.mxu0 0.0
    %1312 = vmatprep.subr.mxu0 0.0
    %1313 = vmatpush2.xpose.msra.mxu0 0.0
    %1314 = vmatprep.subr.mxu0 0.0
    %1315 = vmatpush2.xpose.msra.mxu0 0.0
    %1316 = vmatprep.subr.mxu0 0.0
    %1317 = vmatpush2.xpose.msra.mxu0 0.0
    %1318 = vmatprep.subr.mxu0 0.0
    %1319 = vmatpush2.xpose.msra.mxu0 0.0
    %1320 = vmatprep.subr.mxu0 0.0
    %1321 = vmatpush2.xpose.msra.mxu0 0.0
    %1322 = vmatprep.mubr.f32.mxu0 0.0
    %1323 = vmatmul.mubr.f32.gmra.mxu0 %v1250
    %v1324 = vpop.f32.mrf.mxu0
    %v1325 = vadd.f32 0.0, %v1324
    %v1326 = vpop.f32.mrf.mxu0
    %1327 = vmatprep.mubr.f32.mxu0 0.0
    %1328 = vmatmul.mubr.f32.gmra.mxu0 %v1253
    %v1329 = vpop.f32.mrf.mxu0
    %v1330 = vadd.f32 0.0, %v1329
    %v1331 = vpop.f32.mrf.mxu0
    %1332 = vdwg.mxu0
    %v1333 = vmul.f32 %v1325, 0.35355338
    %v1334 = vmul.f32 %v1330, 0.35355338
    %v1335 = vsel %vm1059, %v1333, -inf
    %1336 = vmax.xlane.f32.xlu0 %v1335
    %v1337 = vpop.xlane.xlu0 %1336
    %v1338 = vsel %vm1059, %v1334, -inf
    %1339 = vmax.xlane.f32.xlu0 %v1338
    %v1340 = vpop.xlane.xlu0 %1339
    %v1341 = vsub.f32 %v1333, %v1337
    %v1342 = vsub.f32 %v1334, %v1340
    %v1343 = vmul.f32 %v1341, 1.442695
    %v1344 = vpow.pop %v1343
    %v1345 = vmul.f32 %v1342, 1.442695
    %v1346 = vpow.pop %v1345
    %v1347 = vsel %vm1059, %v1344, 0.0
    %1348 = vadd.xlane.f32.xlu0 %v1347
    %v1349 = vpop.xlane.xlu0 %1348
    %v1350 = vsel %vm1059, %v1346, 0.0
    %1351 = vadd.xlane.f32.xlu0 %v1350
    %v1352 = vpop.xlane.xlu0 %1351
    %v1353 = vrcp.pop %v1349
    %v1354 = vrcp.pop %v1352
    %v1355 = vmul.f32 %v1344, %v1353
    %v1356 = vmul.f32 %v1346, %v1354
    %v1358 = vsel %vm1059, %v1355, 0
    %v1361 = vsel %vm1059, %v1356, 0
    %1363 = vmatprep.subr.mxu0 0.0
    %1364 = vmatpush1.msra.mxu0 0.0
    %1365 = vmatprep.subr.mxu0 0.0
    %1366 = vmatpush1.msra.mxu0 0.0
    %1367 = vmatprep.subr.mxu0 0.0
    %1368 = vmatpush1.msra.mxu0 0.0
    %1369 = vmatprep.subr.mxu0 0.0
    %1370 = vmatpush1.msra.mxu0 0.0
    %1371 = vmatprep.subr.mxu0 0.0
    %1372 = vmatpush1.msra.mxu0 0.0
    %1373 = vmatprep.subr.mxu0 0.0
    %1374 = vmatpush1.msra.mxu0 0.0
    %1375 = vmatprep.subr.mxu0 0.0
    %1376 = vmatpush1.msra.mxu0 0.0
    %1377 = vmatprep.subr.mxu0 0.0
    %1378 = vmatpush1.msra.mxu0 0.0
    %1379 = vmatprep.subr.mxu0 0.0
    %1380 = vmatpush1.msra.mxu0 0.0
    %1381 = vmatprep.subr.mxu0 0.0
    %1382 = vmatpush1.msra.mxu0 0.0
    %1383 = vmatprep.subr.mxu0 0.0
    %1384 = vmatpush1.msra.mxu0 0.0
    %1385 = vmatprep.subr.mxu0 0.0
    %1386 = vmatpush1.msra.mxu0 0.0
    %1387 = vmatprep.subr.mxu0 0.0
    %1388 = vmatpush1.msra.mxu0 0.0
    %1389 = vmatprep.subr.mxu0 0.0
    %1390 = vmatpush1.msra.mxu0 0.0
    %1391 = vmatprep.subr.mxu0 0.0
    %1392 = vmatpush1.msra.mxu0 0.0
    %1393 = vmatprep.subr.mxu0 0.0
    %1394 = vmatpush1.msra.mxu0 %v531
    %1395 = vmatprep.subr.mxu0 0.0
    %1396 = vmatpush2.msra.mxu0 0.0
    %1397 = vmatprep.subr.mxu0 0.0
    %1398 = vmatpush2.msra.mxu0 0.0
    %1399 = vmatprep.subr.mxu0 0.0
    %1400 = vmatpush2.msra.mxu0 0.0
    %1401 = vmatprep.subr.mxu0 0.0
    %1402 = vmatpush2.msra.mxu0 0.0
    %1403 = vmatprep.subr.mxu0 0.0
    %1404 = vmatpush2.msra.mxu0 0.0
    %1405 = vmatprep.subr.mxu0 0.0
    %1406 = vmatpush2.msra.mxu0 0.0
    %1407 = vmatprep.subr.mxu0 0.0
    %1408 = vmatpush2.msra.mxu0 0.0
    %1409 = vmatprep.subr.mxu0 0.0
    %1410 = vmatpush2.msra.mxu0 0.0
    %1411 = vmatprep.subr.mxu0 0.0
    %1412 = vmatpush2.msra.mxu0 0.0
    %1413 = vmatprep.subr.mxu0 0.0
    %1414 = vmatpush2.msra.mxu0 0.0
    %1415 = vmatprep.subr.mxu0 0.0
    %1416 = vmatpush2.msra.mxu0 0.0
    %1417 = vmatprep.subr.mxu0 0.0
    %1418 = vmatpush2.msra.mxu0 0.0
    %1419 = vmatprep.subr.mxu0 0.0
    %1420 = vmatpush2.msra.mxu0 0.0
    %1421 = vmatprep.subr.mxu0 0.0
    %1422 = vmatpush2.msra.mxu0 0.0
    %1423 = vmatprep.subr.mxu0 0.0
    %1424 = vmatpush2.msra.mxu0 0.0
    %1425 = vmatprep.subr.mxu0 0.0
    %1426 = vmatpush2.msra.mxu0 0.0
    %1427 = vmatprep.mubr.f32.mxu0 0.0
    %1428 = vmatmul.mubr.f32.gmra.mxu0 %v1358
    %v1429 = vpop.f32.mrf.mxu0
    %v1430 = vadd.f32 0.0, %v1429
    %v1431 = vpop.f32.mrf.mxu0
    %1432 = vmatprep.mubr.f32.mxu0 0.0
    %1433 = vmatmul.mubr.f32.gmra.mxu0 %v1361
    %v1434 = vpop.f32.mrf.mxu0
    %v1435 = vadd.f32 0.0, %v1434
    %v1436 = vpop.f32.mrf.mxu0
    %1437 = vdwg.mxu0
    %v1439 = vsel %vm1059, %v953, 0
    %v1442 = vsel %vm1059, %v958, 0
    %v1445 = vsel %vm1059, %v291, 0
    %1447 = vmatprep.subr.mxu0 0.0
    %1448 = vmatpush1.xpose.msra.mxu0 0.0
    %1449 = vmatprep.subr.mxu0 0.0
    %1450 = vmatpush1.xpose.msra.mxu0 0.0
    %1451 = vmatprep.subr.mxu0 0.0
    %1452 = vmatpush1.xpose.msra.mxu0 0.0
    %1453 = vmatprep.subr.mxu0 0.0
    %1454 = vmatpush1.xpose.msra.mxu0 0.0
    %1455 = vmatprep.subr.mxu0 0.0
    %1456 = vmatpush1.xpose.msra.mxu0 0.0
    %1457 = vmatprep.subr.mxu0 0.0
    %1458 = vmatpush1.xpose.msra.mxu0 0.0
    %1459 = vmatprep.subr.mxu0 0.0
    %1460 = vmatpush1.xpose.msra.mxu0 0.0
    %1461 = vmatprep.subr.mxu0 0.0
    %1462 = vmatpush1.xpose.msra.mxu0 0.0
    %1463 = vmatprep.subr.mxu0 0.0
    %1464 = vmatpush1.xpose.msra.mxu0 0.0
    %1465 = vmatprep.subr.mxu0 0.0
    %1466 = vmatpush1.xpose.msra.mxu0 0.0
    %1467 = vmatprep.subr.mxu0 0.0
    %1468 = vmatpush1.xpose.msra.mxu0 0.0
    %1469 = vmatprep.subr.mxu0 0.0
    %1470 = vmatpush1.xpose.msra.mxu0 0.0
    %1471 = vmatprep.subr.mxu0 0.0
    %1472 = vmatpush1.xpose.msra.mxu0 0.0
    %1473 = vmatprep.subr.mxu0 0.0
    %1474 = vmatpush1.xpose.msra.mxu0 0.0
    %1475 = vmatprep.subr.mxu0 0.0
    %1476 = vmatpush1.xpose.msra.mxu0 0.0
    %1477 = vmatprep.subr.mxu0 0.0
    %1478 = vmatpush1.xpose.msra.mxu0 %v1445
    %1479 = vmatprep.subr.mxu0 0.0
    %1480 = vmatpush2.xpose.msra.mxu0 0.0
    %1481 = vmatprep.subr.mxu0 0.0
    %1482 = vmatpush2.xpose.msra.mxu0 0.0
    %1483 = vmatprep.subr.mxu0 0.0
    %1484 = vmatpush2.xpose.msra.mxu0 0.0
    %1485 = vmatprep.subr.mxu0 0.0
    %1486 = vmatpush2.xpose.msra.mxu0 0.0
    %1487 = vmatprep.subr.mxu0 0.0
    %1488 = vmatpush2.xpose.msra.mxu0 0.0
    %1489 = vmatprep.subr.mxu0 0.0
    %1490 = vmatpush2.xpose.msra.mxu0 0.0
    %1491 = vmatprep.subr.mxu0 0.0
    %1492 = vmatpush2.xpose.msra.mxu0 0.0
    %1493 = vmatprep.subr.mxu0 0.0
    %1494 = vmatpush2.xpose.msra.mxu0 0.0
    %1495 = vmatprep.subr.mxu0 0.0
    %1496 = vmatpush2.xpose.msra.mxu0 0.0
    %1497 = vmatprep.subr.mxu0 0.0
    %1498 = vmatpush2.xpose.msra.mxu0 0.0
    %1499 = vmatprep.subr.mxu0 0.0
    %1500 = vmatpush2.xpose.msra.mxu0 0.0
    %1501 = vmatprep.subr.mxu0 0.0
    %1502 = vmatpush2.xpose.msra.mxu0 0.0
    %1503 = vmatprep.subr.mxu0 0.0
    %1504 = vmatpush2.xpose.msra.mxu0 0.0
    %1505 = vmatprep.subr.mxu0 0.0
    %1506 = vmatpush2.xpose.msra.mxu0 0.0
    %1507 = vmatprep.subr.mxu0 0.0
    %1508 = vmatpush2.xpose.msra.mxu0 0.0
    %1509 = vmatprep.subr.mxu0 0.0
    %1510 = vmatpush2.xpose.msra.mxu0 0.0
    %1511 = vmatprep.mubr.f32.mxu0 0.0
    %1512 = vmatmul.mubr.f32.gmra.mxu0 %v1439
    %v1513 = vpop.f32.mrf.mxu0
    %v1514 = vadd.f32 0.0, %v1513
    %v1515 = vpop.f32.mrf.mxu0
    %1516 = vmatprep.mubr.f32.mxu0 0.0
    %1517 = vmatmul.mubr.f32.gmra.mxu0 %v1442
    %v1518 = vpop.f32.mrf.mxu0
    %v1519 = vadd.f32 0.0, %v1518
    %v1520 = vpop.f32.mrf.mxu0
    %1521 = vdwg.mxu0
    %v1522 = vmul.f32 %v1514, 0.35355338
    %v1523 = vmul.f32 %v1519, 0.35355338
    %v1524 = vsel %vm1059, %v1522, -inf
    %1525 = vmax.xlane.f32.xlu0 %v1524
    %v1526 = vpop.xlane.xlu0 %1525
    %v1527 = vsel %vm1059, %v1523, -inf
    %1528 = vmax.xlane.f32.xlu0 %v1527
    %v1529 = vpop.xlane.xlu0 %1528
    %v1530 = vsub.f32 %v1522, %v1526
    %v1531 = vsub.f32 %v1523, %v1529
    %v1532 = vmul.f32 %v1530, 1.442695
    %v1533 = vpow.pop %v1532
    %v1534 = vmul.f32 %v1531, 1.442695
    %v1535 = vpow.pop %v1534
    %v1536 = vsel %vm1059, %v1533, 0.0
    %1537 = vadd.xlane.f32.xlu0 %v1536
    %v1538 = vpop.xlane.xlu0 %1537
    %v1539 = vsel %vm1059, %v1535, 0.0
    %1540 = vadd.xlane.f32.xlu0 %v1539
    %v1541 = vpop.xlane.xlu0 %1540
    %v1542 = vrcp.pop %v1538
    %v1543 = vrcp.pop %v1541
    %v1544 = vmul.f32 %v1533, %v1542
    %v1545 = vmul.f32 %v1535, %v1543
    %v1547 = vsel %vm1059, %v1544, 0
    %v1550 = vsel %vm1059, %v1545, 0
    %1552 = vmatprep.subr.mxu0 0.0
    %1553 = vmatpush1.msra.mxu0 0.0
    %1554 = vmatprep.subr.mxu0 0.0
    %1555 = vmatpush1.msra.mxu0 0.0
    %1556 = vmatprep.subr.mxu0 0.0
    %1557 = vmatpush1.msra.mxu0 0.0
    %1558 = vmatprep.subr.mxu0 0.0
    %1559 = vmatpush1.msra.mxu0 0.0
    %1560 = vmatprep.subr.mxu0 0.0
    %1561 = vmatpush1.msra.mxu0 0.0
    %1562 = vmatprep.subr.mxu0 0.0
    %1563 = vmatpush1.msra.mxu0 0.0
    %1564 = vmatprep.subr.mxu0 0.0
    %1565 = vmatpush1.msra.mxu0 0.0
    %1566 = vmatprep.subr.mxu0 0.0
    %1567 = vmatpush1.msra.mxu0 0.0
    %1568 = vmatprep.subr.mxu0 0.0
    %1569 = vmatpush1.msra.mxu0 0.0
    %1570 = vmatprep.subr.mxu0 0.0
    %1571 = vmatpush1.msra.mxu0 0.0
    %1572 = vmatprep.subr.mxu0 0.0
    %1573 = vmatpush1.msra.mxu0 0.0
    %1574 = vmatprep.subr.mxu0 0.0
    %1575 = vmatpush1.msra.mxu0 0.0
    %1576 = vmatprep.subr.mxu0 0.0
    %1577 = vmatpush1.msra.mxu0 0.0
    %1578 = vmatprep.subr.mxu0 0.0
    %1579 = vmatpush1.msra.mxu0 0.0
    %1580 = vmatprep.subr.mxu0 0.0
    %1581 = vmatpush1.msra.mxu0 0.0
    %1582 = vmatprep.subr.mxu0 0.0
    %1583 = vmatpush1.msra.mxu0 %v609
    %1584 = vmatprep.subr.mxu0 0.0
    %1585 = vmatpush2.msra.mxu0 0.0
    %1586 = vmatprep.subr.mxu0 0.0
    %1587 = vmatpush2.msra.mxu0 0.0
    %1588 = vmatprep.subr.mxu0 0.0
    %1589 = vmatpush2.msra.mxu0 0.0
    %1590 = vmatprep.subr.mxu0 0.0
    %1591 = vmatpush2.msra.mxu0 0.0
    %1592 = vmatprep.subr.mxu0 0.0
    %1593 = vmatpush2.msra.mxu0 0.0
    %1594 = vmatprep.subr.mxu0 0.0
    %1595 = vmatpush2.msra.mxu0 0.0
    %1596 = vmatprep.subr.mxu0 0.0
    %1597 = vmatpush2.msra.mxu0 0.0
    %1598 = vmatprep.subr.mxu0 0.0
    %1599 = vmatpush2.msra.mxu0 0.0
    %1600 = vmatprep.subr.mxu0 0.0
    %1601 = vmatpush2.msra.mxu0 0.0
    %1602 = vmatprep.subr.mxu0 0.0
    %1603 = vmatpush2.msra.mxu0 0.0
    %1604 = vmatprep.subr.mxu0 0.0
    %1605 = vmatpush2.msra.mxu0 0.0
    %1606 = vmatprep.subr.mxu0 0.0
    %1607 = vmatpush2.msra.mxu0 0.0
    %1608 = vmatprep.subr.mxu0 0.0
    %1609 = vmatpush2.msra.mxu0 0.0
    %1610 = vmatprep.subr.mxu0 0.0
    %1611 = vmatpush2.msra.mxu0 0.0
    %1612 = vmatprep.subr.mxu0 0.0
    %1613 = vmatpush2.msra.mxu0 0.0
    %1614 = vmatprep.subr.mxu0 0.0
    %1615 = vmatpush2.msra.mxu0 0.0
    %1616 = vmatprep.mubr.f32.mxu0 0.0
    %1617 = vmatmul.mubr.f32.gmra.mxu0 %v1547
    %v1618 = vpop.f32.mrf.mxu0
    %v1619 = vadd.f32 0.0, %v1618
    %v1620 = vpop.f32.mrf.mxu0
    %1621 = vmatprep.mubr.f32.mxu0 0.0
    %1622 = vmatmul.mubr.f32.gmra.mxu0 %v1550
    %v1623 = vpop.f32.mrf.mxu0
    %v1624 = vadd.f32 0.0, %v1623
    %v1625 = vpop.f32.mrf.mxu0
    %1626 = vdwg.mxu0
    %v1628 = vsel %vm1059, %v1041, 0
    %v1631 = vsel %vm1059, %v1046, 0
    %v1634 = vsel %vm1059, %v369, 0
    %1636 = vmatprep.subr.mxu0 0.0
    %1637 = vmatpush1.xpose.msra.mxu0 0.0
    %1638 = vmatprep.subr.mxu0 0.0
    %1639 = vmatpush1.xpose.msra.mxu0 0.0
    %1640 = vmatprep.subr.mxu0 0.0
    %1641 = vmatpush1.xpose.msra.mxu0 0.0
    %1642 = vmatprep.subr.mxu0 0.0
    %1643 = vmatpush1.xpose.msra.mxu0 0.0
    %1644 = vmatprep.subr.mxu0 0.0
    %1645 = vmatpush1.xpose.msra.mxu0 0.0
    %1646 = vmatprep.subr.mxu0 0.0
    %1647 = vmatpush1.xpose.msra.mxu0 0.0
    %1648 = vmatprep.subr.mxu0 0.0
    %1649 = vmatpush1.xpose.msra.mxu0 0.0
    %1650 = vmatprep.subr.mxu0 0.0
    %1651 = vmatpush1.xpose.msra.mxu0 0.0
    %1652 = vmatprep.subr.mxu0 0.0
    %1653 = vmatpush1.xpose.msra.mxu0 0.0
    %1654 = vmatprep.subr.mxu0 0.0
    %1655 = vmatpush1.xpose.msra.mxu0 0.0
    %1656 = vmatprep.subr.mxu0 0.0
    %1657 = vmatpush1.xpose.msra.mxu0 0.0
    %1658 = vmatprep.subr.mxu0 0.0
    %1659 = vmatpush1.xpose.msra.mxu0 0.0
    %1660 = vmatprep.subr.mxu0 0.0
    %1661 = vmatpush1.xpose.msra.mxu0 0.0
    %1662 = vmatprep.subr.mxu0 0.0
    %1663 = vmatpush1.xpose.msra.mxu0 0.0
    %1664 = vmatprep.subr.mxu0 0.0
    %1665 = vmatpush1.xpose.msra.mxu0 0.0
    %1666 = vmatprep.subr.mxu0 0.0
    %1667 = vmatpush1.xpose.msra.mxu0 %v1634
    %1668 = vmatprep.subr.mxu0 0.0
    %1669 = vmatpush2.xpose.msra.mxu0 0.0
    %1670 = vmatprep.subr.mxu0 0.0
    %1671 = vmatpush2.xpose.msra.mxu0 0.0
    %1672 = vmatprep.subr.mxu0 0.0
    %1673 = vmatpush2.xpose.msra.mxu0 0.0
    %1674 = vmatprep.subr.mxu0 0.0
    %1675 = vmatpush2.xpose.msra.mxu0 0.0
    %1676 = vmatprep.subr.mxu0 0.0
    %1677 = vmatpush2.xpose.msra.mxu0 0.0
    %1678 = vmatprep.subr.mxu0 0.0
    %1679 = vmatpush2.xpose.msra.mxu0 0.0
    %1680 = vmatprep.subr.mxu0 0.0
    %1681 = vmatpush2.xpose.msra.mxu0 0.0
    %1682 = vmatprep.subr.mxu0 0.0
    %1683 = vmatpush2.xpose.msra.mxu0 0.0
    %1684 = vmatprep.subr.mxu0 0.0
    %1685 = vmatpush2.xpose.msra.mxu0 0.0
    %1686 = vmatprep.subr.mxu0 0.0
    %1687 = vmatpush2.xpose.msra.mxu0 0.0
    %1688 = vmatprep.subr.mxu0 0.0
    %1689 = vmatpush2.xpose.msra.mxu0 0.0
    %1690 = vmatprep.subr.mxu0 0.0
    %1691 = vmatpush2.xpose.msra.mxu0 0.0
    %1692 = vmatprep.subr.mxu0 0.0
    %1693 = vmatpush2.xpose.msra.mxu0 0.0
    %1694 = vmatprep.subr.mxu0 0.0
    %1695 = vmatpush2.xpose.msra.mxu0 0.0
    %1696 = vmatprep.subr.mxu0 0.0
    %1697 = vmatpush2.xpose.msra.mxu0 0.0
    %1698 = vmatprep.subr.mxu0 0.0
    %1699 = vmatpush2.xpose.msra.mxu0 0.0
    %1700 = vmatprep.mubr.f32.mxu0 0.0
    %1701 = vmatmul.mubr.f32.gmra.mxu0 %v1628
    %v1702 = vpop.f32.mrf.mxu0
    %v1703 = vadd.f32 0.0, %v1702
    %v1704 = vpop.f32.mrf.mxu0
    %1705 = vmatprep.mubr.f32.mxu0 0.0
    %1706 = vmatmul.mubr.f32.gmra.mxu0 %v1631
    %v1707 = vpop.f32.mrf.mxu0
    %v1708 = vadd.f32 0.0, %v1707
    %v1709 = vpop.f32.mrf.mxu0
    %1710 = vdwg.mxu0
    %v1711 = vmul.f32 %v1703, 0.35355338
    %v1712 = vmul.f32 %v1708, 0.35355338
    %v1713 = vsel %vm1059, %v1711, -inf
    %1714 = vmax.xlane.f32.xlu0 %v1713
    %v1715 = vpop.xlane.xlu0 %1714
    %v1716 = vsel %vm1059, %v1712, -inf
    %1717 = vmax.xlane.f32.xlu0 %v1716
    %v1718 = vpop.xlane.xlu0 %1717
    %v1719 = vsub.f32 %v1711, %v1715
    %v1720 = vsub.f32 %v1712, %v1718
    %v1721 = vmul.f32 %v1719, 1.442695
    %v1722 = vpow.pop %v1721
    %v1723 = vmul.f32 %v1720, 1.442695
    %v1724 = vpow.pop %v1723
    %v1725 = vsel %vm1059, %v1722, 0.0
    %1726 = vadd.xlane.f32.xlu0 %v1725
    %v1727 = vpop.xlane.xlu0 %1726
    %v1728 = vsel %vm1059, %v1724, 0.0
    %1729 = vadd.xlane.f32.xlu0 %v1728
    %v1730 = vpop.xlane.xlu0 %1729
    %v1731 = vrcp.pop %v1727
    %v1732 = vrcp.pop %v1730
    %v1733 = vmul.f32 %v1722, %v1731
    %v1734 = vmul.f32 %v1724, %v1732
    %v1736 = vsel %vm1059, %v1733, 0
    %v1739 = vsel %vm1059, %v1734, 0
    %1741 = vmatprep.subr.mxu0 0.0
    %1742 = vmatpush1.msra.mxu0 0.0
    %1743 = vmatprep.subr.mxu0 0.0
    %1744 = vmatpush1.msra.mxu0 0.0
    %1745 = vmatprep.subr.mxu0 0.0
    %1746 = vmatpush1.msra.mxu0 0.0
    %1747 = vmatprep.subr.mxu0 0.0
    %1748 = vmatpush1.msra.mxu0 0.0
    %1749 = vmatprep.subr.mxu0 0.0
    %1750 = vmatpush1.msra.mxu0 0.0
    %1751 = vmatprep.subr.mxu0 0.0
    %1752 = vmatpush1.msra.mxu0 0.0
    %1753 = vmatprep.subr.mxu0 0.0
    %1754 = vmatpush1.msra.mxu0 0.0
    %1755 = vmatprep.subr.mxu0 0.0
    %1756 = vmatpush1.msra.mxu0 0.0
    %1757 = vmatprep.subr.mxu0 0.0
    %1758 = vmatpush1.msra.mxu0 0.0
    %1759 = vmatprep.subr.mxu0 0.0
    %1760 = vmatpush1.msra.mxu0 0.0
    %1761 = vmatprep.subr.mxu0 0.0
    %1762 = vmatpush1.msra.mxu0 0.0
    %1763 = vmatprep.subr.mxu0 0.0
    %1764 = vmatpush1.msra.mxu0 0.0
    %1765 = vmatprep.subr.mxu0 0.0
    %1766 = vmatpush1.msra.mxu0 0.0
    %1767 = vmatprep.subr.mxu0 0.0
    %1768 = vmatpush1.msra.mxu0 0.0
    %1769 = vmatprep.subr.mxu0 0.0
    %1770 = vmatpush1.msra.mxu0 0.0
    %1771 = vmatprep.subr.mxu0 0.0
    %1772 = vmatpush1.msra.mxu0 %v687
    %1773 = vmatprep.subr.mxu0 0.0
    %1774 = vmatpush2.msra.mxu0 0.0
    %1775 = vmatprep.subr.mxu0 0.0
    %1776 = vmatpush2.msra.mxu0 0.0
    %1777 = vmatprep.subr.mxu0 0.0
    %1778 = vmatpush2.msra.mxu0 0.0
    %1779 = vmatprep.subr.mxu0 0.0
    %1780 = vmatpush2.msra.mxu0 0.0
    %1781 = vmatprep.subr.mxu0 0.0
    %1782 = vmatpush2.msra.mxu0 0.0
    %1783 = vmatprep.subr.mxu0 0.0
    %1784 = vmatpush2.msra.mxu0 0.0
    %1785 = vmatprep.subr.mxu0 0.0
    %1786 = vmatpush2.msra.mxu0 0.0
    %1787 = vmatprep.subr.mxu0 0.0
    %1788 = vmatpush2.msra.mxu0 0.0
    %1789 = vmatprep.subr.mxu0 0.0
    %1790 = vmatpush2.msra.mxu0 0.0
    %1791 = vmatprep.subr.mxu0 0.0
    %1792 = vmatpush2.msra.mxu0 0.0
    %1793 = vmatprep.subr.mxu0 0.0
    %1794 = vmatpush2.msra.mxu0 0.0
    %1795 = vmatprep.subr.mxu0 0.0
    %1796 = vmatpush2.msra.mxu0 0.0
    %1797 = vmatprep.subr.mxu0 0.0
    %1798 = vmatpush2.msra.mxu0 0.0
    %1799 = vmatprep.subr.mxu0 0.0
    %1800 = vmatpush2.msra.mxu0 0.0
    %1801 = vmatprep.subr.mxu0 0.0
    %1802 = vmatpush2.msra.mxu0 0.0
    %1803 = vmatprep.subr.mxu0 0.0
    %1804 = vmatpush2.msra.mxu0 0.0
    %1805 = vmatprep.mubr.f32.mxu0 0.0
    %1806 = vmatmul.mubr.f32.gmra.mxu0 %v1736
    %v1807 = vpop.f32.mrf.mxu0
    %v1808 = vadd.f32 0.0, %v1807
    %v1809 = vpop.f32.mrf.mxu0
    %1810 = vmatprep.mubr.f32.mxu0 0.0
    %1811 = vmatmul.mubr.f32.gmra.mxu0 %v1739
    %v1812 = vpop.f32.mrf.mxu0
    %v1813 = vadd.f32 0.0, %v1812
    %v1814 = vpop.f32.mrf.mxu0
    %1815 = vdwg.mxu0
    %1818 = vrot.lane.b32.xlu0 %v1430, 8
    %v1819 = vpop.permute.xlu0 %1818
    %1820 = vrot.lane.b32.xlu0 %v1435, 8
    %v1821 = vpop.permute.xlu0 %1820
    %1826 = vrot.lane.b32.xlu0 %v1619, 16
    %v1827 = vpop.permute.xlu0 %1826
    %1828 = vrot.lane.b32.xlu0 %v1624, 16
    %v1829 = vpop.permute.xlu0 %1828
    %1834 = vrot.lane.b32.xlu0 %v1808, 24
    %v1835 = vpop.permute.xlu0 %1834
    %1836 = vrot.lane.b32.xlu0 %v1813, 24
    %v1837 = vpop.permute.xlu0 %1836
    %v1840 = vsel %vm1059, %v1241, %v1819
    %v1841 = vsel %vm1059, %v1246, %v1821
    %vm1842 = vcmask 130048
    %v1843 = vsel %vm1842, %v1840, %v1827
    %v1844 = vsel %vm1842, %v1841, %v1829
    %vm1845 = vcmask 195584
    %v1846 = vsel %vm1845, %v1843, %v1835
    %v1847 = vsel %vm1845, %v1844, %v1837
    %v1849 = vsel %vm1059, %v787, 0
    %v1852 = vsel %vm1059, %v792, 0
    %v1855 = vsel %vm1059, %v140, 0
    %1857 = vmatprep.subr.mxu0 0.0
    %1858 = vmatpush1.xpose.msra.mxu0 0.0
    %1859 = vmatprep.subr.mxu0 0.0
    %1860 = vmatpush1.xpose.msra.mxu0 0.0
    %1861 = vmatprep.subr.mxu0 0.0
    %1862 = vmatpush1.xpose.msra.mxu0 0.0
    %1863 = vmatprep.subr.mxu0 0.0
    %1864 = vmatpush1.xpose.msra.mxu0 0.0
    %1865 = vmatprep.subr.mxu0 0.0
    %1866 = vmatpush1.xpose.msra.mxu0 0.0
    %1867 = vmatprep.subr.mxu0 0.0
    %1868 = vmatpush1.xpose.msra.mxu0 0.0
    %1869 = vmatprep.subr.mxu0 0.0
    %1870 = vmatpush1.xpose.msra.mxu0 0.0
    %1871 = vmatprep.subr.mxu0 0.0
    %1872 = vmatpush1.xpose.msra.mxu0 0.0
    %1873 = vmatprep.subr.mxu0 0.0
    %1874 = vmatpush1.xpose.msra.mxu0 0.0
    %1875 = vmatprep.subr.mxu0 0.0
    %1876 = vmatpush1.xpose.msra.mxu0 0.0
    %1877 = vmatprep.subr.mxu0 0.0
    %1878 = vmatpush1.xpose.msra.mxu0 0.0
    %1879 = vmatprep.subr.mxu0 0.0
    %1880 = vmatpush1.xpose.msra.mxu0 0.0
    %1881 = vmatprep.subr.mxu0 0.0
    %1882 = vmatpush1.xpose.msra.mxu0 0.0
    %1883 = vmatprep.subr.mxu0 0.0
    %1884 = vmatpush1.xpose.msra.mxu0 0.0
    %1885 = vmatprep.subr.mxu0 0.0
    %1886 = vmatpush1.xpose.msra.mxu0 0.0
    %1887 = vmatprep.subr.mxu0 0.0
    %1888 = vmatpush1.xpose.msra.mxu0 %v1855
    %1889 = vmatprep.subr.mxu0 0.0
    %1890 = vmatpush2.xpose.msra.mxu0 0.0
    %1891 = vmatprep.subr.mxu0 0.0
    %1892 = vmatpush2.xpose.msra.mxu0 0.0
    %1893 = vmatprep.subr.mxu0 0.0
    %1894 = vmatpush2.xpose.msra.mxu0 0.0
    %1895 = vmatprep.subr.mxu0 0.0
    %1896 = vmatpush2.xpose.msra.mxu0 0.0
    %1897 = vmatprep.subr.mxu0 0.0
    %1898 = vmatpush2.xpose.msra.mxu0 0.0
    %1899 = vmatprep.subr.mxu0 0.0
    %1900 = vmatpush2.xpose.msra.mxu0 0.0
    %1901 = vmatprep.subr.mxu0 0.0
    %1902 = vmatpush2.xpose.msra.mxu0 0.0
    %1903 = vmatprep.subr.mxu0 0.0
    %1904 = vmatpush2.xpose.msra.mxu0 0.0
    %1905 = vmatprep.subr.mxu0 0.0
    %1906 = vmatpush2.xpose.msra.mxu0 0.0
    %1907 = vmatprep.subr.mxu0 0.0
    %1908 = vmatpush2.xpose.msra.mxu0 0.0
    %1909 = vmatprep.subr.mxu0 0.0
    %1910 = vmatpush2.xpose.msra.mxu0 0.0
    %1911 = vmatprep.subr.mxu0 0.0
    %1912 = vmatpush2.xpose.msra.mxu0 0.0
    %1913 = vmatprep.subr.mxu0 0.0
    %1914 = vmatpush2.xpose.msra.mxu0 0.0
    %1915 = vmatprep.subr.mxu0 0.0
    %1916 = vmatpush2.xpose.msra.mxu0 0.0
    %1917 = vmatprep.subr.mxu0 0.0
    %1918 = vmatpush2.xpose.msra.mxu0 0.0
    %1919 = vmatprep.subr.mxu0 0.0
    %1920 = vmatpush2.xpose.msra.mxu0 0.0
    %1921 = vmatprep.mubr.f32.mxu0 0.0
    %1922 = vmatmul.mubr.f32.gmra.mxu0 %v1849
    %v1923 = vpop.f32.mrf.mxu0
    %v1924 = vadd.f32 0.0, %v1923
    %v1925 = vpop.f32.mrf.mxu0
    %1926 = vmatprep.mubr.f32.mxu0 0.0
    %1927 = vmatmul.mubr.f32.gmra.mxu0 %v1852
    %v1928 = vpop.f32.mrf.mxu0
    %v1929 = vadd.f32 0.0, %v1928
    %v1930 = vpop.f32.mrf.mxu0
    %1931 = vdwg.mxu0
    %v1932 = vmul.f32 %v1924, 0.35355338
    %v1933 = vmul.f32 %v1929, 0.35355338
    %v1934 = vsel %vm1059, %v1932, -inf
    %1935 = vmax.xlane.f32.xlu0 %v1934
    %v1936 = vpop.xlane.xlu0 %1935
    %v1937 = vsel %vm1059, %v1933, -inf
    %1938 = vmax.xlane.f32.xlu0 %v1937
    %v1939 = vpop.xlane.xlu0 %1938
    %v1940 = vsub.f32 %v1932, %v1936
    %v1941 = vsub.f32 %v1933, %v1939
    %v1942 = vmul.f32 %v1940, 1.442695
    %v1943 = vpow.pop %v1942
    %v1944 = vmul.f32 %v1941, 1.442695
    %v1945 = vpow.pop %v1944
    %v1946 = vsel %vm1059, %v1943, 0.0
    %1947 = vadd.xlane.f32.xlu0 %v1946
    %v1948 = vpop.xlane.xlu0 %1947
    %v1949 = vsel %vm1059, %v1945, 0.0
    %1950 = vadd.xlane.f32.xlu0 %v1949
    %v1951 = vpop.xlane.xlu0 %1950
    %v1952 = vrcp.pop %v1948
    %v1953 = vrcp.pop %v1951
    %v1954 = vmul.f32 %v1943, %v1952
    %v1955 = vmul.f32 %v1945, %v1953
    %v1957 = vsel %vm1059, %v1954, 0
    %v1960 = vsel %vm1059, %v1955, 0
    %1962 = vmatprep.subr.mxu0 0.0
    %1963 = vmatpush1.msra.mxu0 0.0
    %1964 = vmatprep.subr.mxu0 0.0
    %1965 = vmatpush1.msra.mxu0 0.0
    %1966 = vmatprep.subr.mxu0 0.0
    %1967 = vmatpush1.msra.mxu0 0.0
    %1968 = vmatprep.subr.mxu0 0.0
    %1969 = vmatpush1.msra.mxu0 0.0
    %1970 = vmatprep.subr.mxu0 0.0
    %1971 = vmatpush1.msra.mxu0 0.0
    %1972 = vmatprep.subr.mxu0 0.0
    %1973 = vmatpush1.msra.mxu0 0.0
    %1974 = vmatprep.subr.mxu0 0.0
    %1975 = vmatpush1.msra.mxu0 0.0
    %1976 = vmatprep.subr.mxu0 0.0
    %1977 = vmatpush1.msra.mxu0 0.0
    %1978 = vmatprep.subr.mxu0 0.0
    %1979 = vmatpush1.msra.mxu0 0.0
    %1980 = vmatprep.subr.mxu0 0.0
    %1981 = vmatpush1.msra.mxu0 0.0
    %1982 = vmatprep.subr.mxu0 0.0
    %1983 = vmatpush1.msra.mxu0 0.0
    %1984 = vmatprep.subr.mxu0 0.0
    %1985 = vmatpush1.msra.mxu0 0.0
    %1986 = vmatprep.subr.mxu0 0.0
    %1987 = vmatpush1.msra.mxu0 0.0
    %1988 = vmatprep.subr.mxu0 0.0
    %1989 = vmatpush1.msra.mxu0 0.0
    %1990 = vmatprep.subr.mxu0 0.0
    %1991 = vmatpush1.msra.mxu0 0.0
    %1992 = vmatprep.subr.mxu0 0.0
    %1993 = vmatpush1.msra.mxu0 %v458
    %1994 = vmatprep.subr.mxu0 0.0
    %1995 = vmatpush2.msra.mxu0 0.0
    %1996 = vmatprep.subr.mxu0 0.0
    %1997 = vmatpush2.msra.mxu0 0.0
    %1998 = vmatprep.subr.mxu0 0.0
    %1999 = vmatpush2.msra.mxu0 0.0
    %2000 = vmatprep.subr.mxu0 0.0
    %2001 = vmatpush2.msra.mxu0 0.0
    %2002 = vmatprep.subr.mxu0 0.0
    %2003 = vmatpush2.msra.mxu0 0.0
    %2004 = vmatprep.subr.mxu0 0.0
    %2005 = vmatpush2.msra.mxu0 0.0
    %2006 = vmatprep.subr.mxu0 0.0
    %2007 = vmatpush2.msra.mxu0 0.0
    %2008 = vmatprep.subr.mxu0 0.0
    %2009 = vmatpush2.msra.mxu0 0.0
    %2010 = vmatprep.subr.mxu0 0.0
    %2011 = vmatpush2.msra.mxu0 0.0
    %2012 = vmatprep.subr.mxu0 0.0
    %2013 = vmatpush2.msra.mxu0 0.0
    %2014 = vmatprep.subr.mxu0 0.0
    %2015 = vmatpush2.msra.mxu0 0.0
    %2016 = vmatprep.subr.mxu0 0.0
    %2017 = vmatpush2.msra.mxu0 0.0
    %2018 = vmatprep.subr.mxu0 0.0
    %2019 = vmatpush2.msra.mxu0 0.0
    %2020 = vmatprep.subr.mxu0 0.0
    %2021 = vmatpush2.msra.mxu0 0.0
    %2022 = vmatprep.subr.mxu0 0.0
    %2023 = vmatpush2.msra.mxu0 0.0
    %2024 = vmatprep.subr.mxu0 0.0
    %2025 = vmatpush2.msra.mxu0 0.0
    %2026 = vmatprep.mubr.f32.mxu0 0.0
    %2027 = vmatmul.mubr.f32.gmra.mxu0 %v1957
    %v2028 = vpop.f32.mrf.mxu0
    %v2029 = vadd.f32 0.0, %v2028
    %v2030 = vpop.f32.mrf.mxu0
    %2031 = vmatprep.mubr.f32.mxu0 0.0
    %2032 = vmatmul.mubr.f32.gmra.mxu0 %v1960
    %v2033 = vpop.f32.mrf.mxu0
    %v2034 = vadd.f32 0.0, %v2033
    %v2035 = vpop.f32.mrf.mxu0
    %2036 = vdwg.mxu0
    %v2038 = vsel %vm1059, %v875, 0
    %v2041 = vsel %vm1059, %v880, 0
    %v2044 = vsel %vm1059, %v218, 0
    %2046 = vmatprep.subr.mxu0 0.0
    %2047 = vmatpush1.xpose.msra.mxu0 0.0
    %2048 = vmatprep.subr.mxu0 0.0
    %2049 = vmatpush1.xpose.msra.mxu0 0.0
    %2050 = vmatprep.subr.mxu0 0.0
    %2051 = vmatpush1.xpose.msra.mxu0 0.0
    %2052 = vmatprep.subr.mxu0 0.0
    %2053 = vmatpush1.xpose.msra.mxu0 0.0
    %2054 = vmatprep.subr.mxu0 0.0
    %2055 = vmatpush1.xpose.msra.mxu0 0.0
    %2056 = vmatprep.subr.mxu0 0.0
    %2057 = vmatpush1.xpose.msra.mxu0 0.0
    %2058 = vmatprep.subr.mxu0 0.0
    %2059 = vmatpush1.xpose.msra.mxu0 0.0
    %2060 = vmatprep.subr.mxu0 0.0
    %2061 = vmatpush1.xpose.msra.mxu0 0.0
    %2062 = vmatprep.subr.mxu0 0.0
    %2063 = vmatpush1.xpose.msra.mxu0 0.0
    %2064 = vmatprep.subr.mxu0 0.0
    %2065 = vmatpush1.xpose.msra.mxu0 0.0
    %2066 = vmatprep.subr.mxu0 0.0
    %2067 = vmatpush1.xpose.msra.mxu0 0.0
    %2068 = vmatprep.subr.mxu0 0.0
    %2069 = vmatpush1.xpose.msra.mxu0 0.0
    %2070 = vmatprep.subr.mxu0 0.0
    %2071 = vmatpush1.xpose.msra.mxu0 0.0
    %2072 = vmatprep.subr.mxu0 0.0
    %2073 = vmatpush1.xpose.msra.mxu0 0.0
    %2074 = vmatprep.subr.mxu0 0.0
    %2075 = vmatpush1.xpose.msra.mxu0 0.0
    %2076 = vmatprep.subr.mxu0 0.0
    %2077 = vmatpush1.xpose.msra.mxu0 %v2044
    %2078 = vmatprep.subr.mxu0 0.0
    %2079 = vmatpush2.xpose.msra.mxu0 0.0
    %2080 = vmatprep.subr.mxu0 0.0
    %2081 = vmatpush2.xpose.msra.mxu0 0.0
    %2082 = vmatprep.subr.mxu0 0.0
    %2083 = vmatpush2.xpose.msra.mxu0 0.0
    %2084 = vmatprep.subr.mxu0 0.0
    %2085 = vmatpush2.xpose.msra.mxu0 0.0
    %2086 = vmatprep.subr.mxu0 0.0
    %2087 = vmatpush2.xpose.msra.mxu0 0.0
    %2088 = vmatprep.subr.mxu0 0.0
    %2089 = vmatpush2.xpose.msra.mxu0 0.0
    %2090 = vmatprep.subr.mxu0 0.0
    %2091 = vmatpush2.xpose.msra.mxu0 0.0
    %2092 = vmatprep.subr.mxu0 0.0
    %2093 = vmatpush2.xpose.msra.mxu0 0.0
    %2094 = vmatprep.subr.mxu0 0.0
    %2095 = vmatpush2.xpose.msra.mxu0 0.0
    %2096 = vmatprep.subr.mxu0 0.0
    %2097 = vmatpush2.xpose.msra.mxu0 0.0
    %2098 = vmatprep.subr.mxu0 0.0
    %2099 = vmatpush2.xpose.msra.mxu0 0.0
    %2100 = vmatprep.subr.mxu0 0.0
    %2101 = vmatpush2.xpose.msra.mxu0 0.0
    %2102 = vmatprep.subr.mxu0 0.0
    %2103 = vmatpush2.xpose.msra.mxu0 0.0
    %2104 = vmatprep.subr.mxu0 0.0
    %2105 = vmatpush2.xpose.msra.mxu0 0.0
    %2106 = vmatprep.subr.mxu0 0.0
    %2107 = vmatpush2.xpose.msra.mxu0 0.0
    %2108 = vmatprep.subr.mxu0 0.0
    %2109 = vmatpush2.xpose.msra.mxu0 0.0
    %2110 = vmatprep.mubr.f32.mxu0 0.0
    %2111 = vmatmul.mubr.f32.gmra.mxu0 %v2038
    %v2112 = vpop.f32.mrf.mxu0
    %v2113 = vadd.f32 0.0, %v2112
    %v2114 = vpop.f32.mrf.mxu0
    %2115 = vmatprep.mubr.f32.mxu0 0.0
    %2116 = vmatmul.mubr.f32.gmra.mxu0 %v2041
    %v2117 = vpop.f32.mrf.mxu0
    %v2118 = vadd.f32 0.0, %v2117
    %v2119 = vpop.f32.mrf.mxu0
    %2120 = vdwg.mxu0
    %v2121 = vmul.f32 %v2113, 0.35355338
    %v2122 = vmul.f32 %v2118, 0.35355338
    %v2123 = vsel %vm1059, %v2121, -inf
    %2124 = vmax.xlane.f32.xlu0 %v2123
    %v2125 = vpop.xlane.xlu0 %2124
    %v2126 = vsel %vm1059, %v2122, -inf
    %2127 = vmax.xlane.f32.xlu0 %v2126
    %v2128 = vpop.xlane.xlu0 %2127
    %v2129 = vsub.f32 %v2121, %v2125
    %v2130 = vsub.f32 %v2122, %v2128
    %v2131 = vmul.f32 %v2129, 1.442695
    %v2132 = vpow.pop %v2131
    %v2133 = vmul.f32 %v2130, 1.442695
    %v2134 = vpow.pop %v2133
    %v2135 = vsel %vm1059, %v2132, 0.0
    %2136 = vadd.xlane.f32.xlu0 %v2135
    %v2137 = vpop.xlane.xlu0 %2136
    %v2138 = vsel %vm1059, %v2134, 0.0
    %2139 = vadd.xlane.f32.xlu0 %v2138
    %v2140 = vpop.xlane.xlu0 %2139
    %v2141 = vrcp.pop %v2137
    %v2142 = vrcp.pop %v2140
    %v2143 = vmul.f32 %v2132, %v2141
    %v2144 = vmul.f32 %v2134, %v2142
    %v2146 = vsel %vm1059, %v2143, 0
    %v2149 = vsel %vm1059, %v2144, 0
    %2151 = vmatprep.subr.mxu0 0.0
    %2152 = vmatpush1.msra.mxu0 0.0
    %2153 = vmatprep.subr.mxu0 0.0
    %2154 = vmatpush1.msra.mxu0 0.0
    %2155 = vmatprep.subr.mxu0 0.0
    %2156 = vmatpush1.msra.mxu0 0.0
    %2157 = vmatprep.subr.mxu0 0.0
    %2158 = vmatpush1.msra.mxu0 0.0
    %2159 = vmatprep.subr.mxu0 0.0
    %2160 = vmatpush1.msra.mxu0 0.0
    %2161 = vmatprep.subr.mxu0 0.0
    %2162 = vmatpush1.msra.mxu0 0.0
    %2163 = vmatprep.subr.mxu0 0.0
    %2164 = vmatpush1.msra.mxu0 0.0
    %2165 = vmatprep.subr.mxu0 0.0
    %2166 = vmatpush1.msra.mxu0 0.0
    %2167 = vmatprep.subr.mxu0 0.0
    %2168 = vmatpush1.msra.mxu0 0.0
    %2169 = vmatprep.subr.mxu0 0.0
    %2170 = vmatpush1.msra.mxu0 0.0
    %2171 = vmatprep.subr.mxu0 0.0
    %2172 = vmatpush1.msra.mxu0 0.0
    %2173 = vmatprep.subr.mxu0 0.0
    %2174 = vmatpush1.msra.mxu0 0.0
    %2175 = vmatprep.subr.mxu0 0.0
    %2176 = vmatpush1.msra.mxu0 0.0
    %2177 = vmatprep.subr.mxu0 0.0
    %2178 = vmatpush1.msra.mxu0 0.0
    %2179 = vmatprep.subr.mxu0 0.0
    %2180 = vmatpush1.msra.mxu0 0.0
    %2181 = vmatprep.subr.mxu0 0.0
    %2182 = vmatpush1.msra.mxu0 %v536
    %2183 = vmatprep.subr.mxu0 0.0
    %2184 = vmatpush2.msra.mxu0 0.0
    %2185 = vmatprep.subr.mxu0 0.0
    %2186 = vmatpush2.msra.mxu0 0.0
    %2187 = vmatprep.subr.mxu0 0.0
    %2188 = vmatpush2.msra.mxu0 0.0
    %2189 = vmatprep.subr.mxu0 0.0
    %2190 = vmatpush2.msra.mxu0 0.0
    %2191 = vmatprep.subr.mxu0 0.0
    %2192 = vmatpush2.msra.mxu0 0.0
    %2193 = vmatprep.subr.mxu0 0.0
    %2194 = vmatpush2.msra.mxu0 0.0
    %2195 = vmatprep.subr.mxu0 0.0
    %2196 = vmatpush2.msra.mxu0 0.0
    %2197 = vmatprep.subr.mxu0 0.0
    %2198 = vmatpush2.msra.mxu0 0.0
    %2199 = vmatprep.subr.mxu0 0.0
    %2200 = vmatpush2.msra.mxu0 0.0
    %2201 = vmatprep.subr.mxu0 0.0
    %2202 = vmatpush2.msra.mxu0 0.0
    %2203 = vmatprep.subr.mxu0 0.0
    %2204 = vmatpush2.msra.mxu0 0.0
    %2205 = vmatprep.subr.mxu0 0.0
    %2206 = vmatpush2.msra.mxu0 0.0
    %2207 = vmatprep.subr.mxu0 0.0
    %2208 = vmatpush2.msra.mxu0 0.0
    %2209 = vmatprep.subr.mxu0 0.0
    %2210 = vmatpush2.msra.mxu0 0.0
    %2211 = vmatprep.subr.mxu0 0.0
    %2212 = vmatpush2.msra.mxu0 0.0
    %2213 = vmatprep.subr.mxu0 0.0
    %2214 = vmatpush2.msra.mxu0 0.0
    %2215 = vmatprep.mubr.f32.mxu0 0.0
    %2216 = vmatmul.mubr.f32.gmra.mxu0 %v2146
    %v2217 = vpop.f32.mrf.mxu0
    %v2218 = vadd.f32 0.0, %v2217
    %v2219 = vpop.f32.mrf.mxu0
    %2220 = vmatprep.mubr.f32.mxu0 0.0
    %2221 = vmatmul.mubr.f32.gmra.mxu0 %v2149
    %v2222 = vpop.f32.mrf.mxu0
    %v2223 = vadd.f32 0.0, %v2222
    %v2224 = vpop.f32.mrf.mxu0
    %2225 = vdwg.mxu0
    %v2227 = vsel %vm1059, %v963, 0
    %v2230 = vsel %vm1059, %v968, 0
    %v2233 = vsel %vm1059, %v296, 0
    %2235 = vmatprep.subr.mxu0 0.0
    %2236 = vmatpush1.xpose.msra.mxu0 0.0
    %2237 = vmatprep.subr.mxu0 0.0
    %2238 = vmatpush1.xpose.msra.mxu0 0.0
    %2239 = vmatprep.subr.mxu0 0.0
    %2240 = vmatpush1.xpose.msra.mxu0 0.0
    %2241 = vmatprep.subr.mxu0 0.0
    %2242 = vmatpush1.xpose.msra.mxu0 0.0
    %2243 = vmatprep.subr.mxu0 0.0
    %2244 = vmatpush1.xpose.msra.mxu0 0.0
    %2245 = vmatprep.subr.mxu0 0.0
    %2246 = vmatpush1.xpose.msra.mxu0 0.0
    %2247 = vmatprep.subr.mxu0 0.0
    %2248 = vmatpush1.xpose.msra.mxu0 0.0
    %2249 = vmatprep.subr.mxu0 0.0
    %2250 = vmatpush1.xpose.msra.mxu0 0.0
    %2251 = vmatprep.subr.mxu0 0.0
    %2252 = vmatpush1.xpose.msra.mxu0 0.0
    %2253 = vmatprep.subr.mxu0 0.0
    %2254 = vmatpush1.xpose.msra.mxu0 0.0
    %2255 = vmatprep.subr.mxu0 0.0
    %2256 = vmatpush1.xpose.msra.mxu0 0.0
    %2257 = vmatprep.subr.mxu0 0.0
    %2258 = vmatpush1.xpose.msra.mxu0 0.0
    %2259 = vmatprep.subr.mxu0 0.0
    %2260 = vmatpush1.xpose.msra.mxu0 0.0
    %2261 = vmatprep.subr.mxu0 0.0
    %2262 = vmatpush1.xpose.msra.mxu0 0.0
    %2263 = vmatprep.subr.mxu0 0.0
    %2264 = vmatpush1.xpose.msra.mxu0 0.0
    %2265 = vmatprep.subr.mxu0 0.0
    %2266 = vmatpush1.xpose.msra.mxu0 %v2233
    %2267 = vmatprep.subr.mxu0 0.0
    %2268 = vmatpush2.xpose.msra.mxu0 0.0
    %2269 = vmatprep.subr.mxu0 0.0
    %2270 = vmatpush2.xpose.msra.mxu0 0.0
    %2271 = vmatprep.subr.mxu0 0.0
    %2272 = vmatpush2.xpose.msra.mxu0 0.0
    %2273 = vmatprep.subr.mxu0 0.0
    %2274 = vmatpush2.xpose.msra.mxu0 0.0
    %2275 = vmatprep.subr.mxu0 0.0
    %2276 = vmatpush2.xpose.msra.mxu0 0.0
    %2277 = vmatprep.subr.mxu0 0.0
    %2278 = vmatpush2.xpose.msra.mxu0 0.0
    %2279 = vmatprep.subr.mxu0 0.0
    %2280 = vmatpush2.xpose.msra.mxu0 0.0
    %2281 = vmatprep.subr.mxu0 0.0
    %2282 = vmatpush2.xpose.msra.mxu0 0.0
    %2283 = vmatprep.subr.mxu0 0.0
    %2284 = vmatpush2.xpose.msra.mxu0 0.0
    %2285 = vmatprep.subr.mxu0 0.0
    %2286 = vmatpush2.xpose.msra.mxu0 0.0
    %2287 = vmatprep.subr.mxu0 0.0
    %2288 = vmatpush2.xpose.msra.mxu0 0.0
    %2289 = vmatprep.subr.mxu0 0.0
    %2290 = vmatpush2.xpose.msra.mxu0 0.0
    %2291 = vmatprep.subr.mxu0 0.0
    %2292 = vmatpush2.xpose.msra.mxu0 0.0
    %2293 = vmatprep.subr.mxu0 0.0
    %2294 = vmatpush2.xpose.msra.mxu0 0.0
    %2295 = vmatprep.subr.mxu0 0.0
    %2296 = vmatpush2.xpose.msra.mxu0 0.0
    %2297 = vmatprep.subr.mxu0 0.0
    %2298 = vmatpush2.xpose.msra.mxu0 0.0
    %2299 = vmatprep.mubr.f32.mxu0 0.0
    %2300 = vmatmul.mubr.f32.gmra.mxu0 %v2227
    %v2301 = vpop.f32.mrf.mxu0
    %v2302 = vadd.f32 0.0, %v2301
    %v2303 = vpop.f32.mrf.mxu0
    %2304 = vmatprep.mubr.f32.mxu0 0.0
    %2305 = vmatmul.mubr.f32.gmra.mxu0 %v2230
    %v2306 = vpop.f32.mrf.mxu0
    %v2307 = vadd.f32 0.0, %v2306
    %v2308 = vpop.f32.mrf.mxu0
    %2309 = vdwg.mxu0
    %v2310 = vmul.f32 %v2302, 0.35355338
    %v2311 = vmul.f32 %v2307, 0.35355338
    %v2312 = vsel %vm1059, %v2310, -inf
    %2313 = vmax.xlane.f32.xlu0 %v2312
    %v2314 = vpop.xlane.xlu0 %2313
    %v2315 = vsel %vm1059, %v2311, -inf
    %2316 = vmax.xlane.f32.xlu0 %v2315
    %v2317 = vpop.xlane.xlu0 %2316
    %v2318 = vsub.f32 %v2310, %v2314
    %v2319 = vsub.f32 %v2311, %v2317
    %v2320 = vmul.f32 %v2318, 1.442695
    %v2321 = vpow.pop %v2320
    %v2322 = vmul.f32 %v2319, 1.442695
    %v2323 = vpow.pop %v2322
    %v2324 = vsel %vm1059, %v2321, 0.0
    %2325 = vadd.xlane.f32.xlu0 %v2324
    %v2326 = vpop.xlane.xlu0 %2325
    %v2327 = vsel %vm1059, %v2323, 0.0
    %2328 = vadd.xlane.f32.xlu0 %v2327
    %v2329 = vpop.xlane.xlu0 %2328
    %v2330 = vrcp.pop %v2326
    %v2331 = vrcp.pop %v2329
    %v2332 = vmul.f32 %v2321, %v2330
    %v2333 = vmul.f32 %v2323, %v2331
    %v2335 = vsel %vm1059, %v2332, 0
    %v2338 = vsel %vm1059, %v2333, 0
    %2340 = vmatprep.subr.mxu0 0.0
    %2341 = vmatpush1.msra.mxu0 0.0
    %2342 = vmatprep.subr.mxu0 0.0
    %2343 = vmatpush1.msra.mxu0 0.0
    %2344 = vmatprep.subr.mxu0 0.0
    %2345 = vmatpush1.msra.mxu0 0.0
    %2346 = vmatprep.subr.mxu0 0.0
    %2347 = vmatpush1.msra.mxu0 0.0
    %2348 = vmatprep.subr.mxu0 0.0
    %2349 = vmatpush1.msra.mxu0 0.0
    %2350 = vmatprep.subr.mxu0 0.0
    %2351 = vmatpush1.msra.mxu0 0.0
    %2352 = vmatprep.subr.mxu0 0.0
    %2353 = vmatpush1.msra.mxu0 0.0
    %2354 = vmatprep.subr.mxu0 0.0
    %2355 = vmatpush1.msra.mxu0 0.0
    %2356 = vmatprep.subr.mxu0 0.0
    %2357 = vmatpush1.msra.mxu0 0.0
    %2358 = vmatprep.subr.mxu0 0.0
    %2359 = vmatpush1.msra.mxu0 0.0
    %2360 = vmatprep.subr.mxu0 0.0
    %2361 = vmatpush1.msra.mxu0 0.0
    %2362 = vmatprep.subr.mxu0 0.0
    %2363 = vmatpush1.msra.mxu0 0.0
    %2364 = vmatprep.subr.mxu0 0.0
    %2365 = vmatpush1.msra.mxu0 0.0
    %2366 = vmatprep.subr.mxu0 0.0
    %2367 = vmatpush1.msra.mxu0 0.0
    %2368 = vmatprep.subr.mxu0 0.0
    %2369 = vmatpush1.msra.mxu0 0.0
    %2370 = vmatprep.subr.mxu0 0.0
    %2371 = vmatpush1.msra.mxu0 %v614
    %2372 = vmatprep.subr.mxu0 0.0
    %2373 = vmatpush2.msra.mxu0 0.0
    %2374 = vmatprep.subr.mxu0 0.0
    %2375 = vmatpush2.msra.mxu0 0.0
    %2376 = vmatprep.subr.mxu0 0.0
    %2377 = vmatpush2.msra.mxu0 0.0
    %2378 = vmatprep.subr.mxu0 0.0
    %2379 = vmatpush2.msra.mxu0 0.0
    %2380 = vmatprep.subr.mxu0 0.0
    %2381 = vmatpush2.msra.mxu0 0.0
    %2382 = vmatprep.subr.mxu0 0.0
    %2383 = vmatpush2.msra.mxu0 0.0
    %2384 = vmatprep.subr.mxu0 0.0
    %2385 = vmatpush2.msra.mxu0 0.0
    %2386 = vmatprep.subr.mxu0 0.0
    %2387 = vmatpush2.msra.mxu0 0.0
    %2388 = vmatprep.subr.mxu0 0.0
    %2389 = vmatpush2.msra.mxu0 0.0
    %2390 = vmatprep.subr.mxu0 0.0
    %2391 = vmatpush2.msra.mxu0 0.0
    %2392 = vmatprep.subr.mxu0 0.0
    %2393 = vmatpush2.msra.mxu0 0.0
    %2394 = vmatprep.subr.mxu0 0.0
    %2395 = vmatpush2.msra.mxu0 0.0
    %2396 = vmatprep.subr.mxu0 0.0
    %2397 = vmatpush2.msra.mxu0 0.0
    %2398 = vmatprep.subr.mxu0 0.0
    %2399 = vmatpush2.msra.mxu0 0.0
    %2400 = vmatprep.subr.mxu0 0.0
    %2401 = vmatpush2.msra.mxu0 0.0
    %2402 = vmatprep.subr.mxu0 0.0
    %2403 = vmatpush2.msra.mxu0 0.0
    %2404 = vmatprep.mubr.f32.mxu0 0.0
    %2405 = vmatmul.mubr.f32.gmra.mxu0 %v2335
    %v2406 = vpop.f32.mrf.mxu0
    %v2407 = vadd.f32 0.0, %v2406
    %v2408 = vpop.f32.mrf.mxu0
    %2409 = vmatprep.mubr.f32.mxu0 0.0
    %2410 = vmatmul.mubr.f32.gmra.mxu0 %v2338
    %v2411 = vpop.f32.mrf.mxu0
    %v2412 = vadd.f32 0.0, %v2411
    %v2413 = vpop.f32.mrf.mxu0
    %2414 = vdwg.mxu0
    %v2416 = vsel %vm1059, %v1051, 0
    %v2419 = vsel %vm1059, %v1056, 0
    %v2422 = vsel %vm1059, %v374, 0
    %2424 = vmatprep.subr.mxu0 0.0
    %2425 = vmatpush1.xpose.msra.mxu0 0.0
    %2426 = vmatprep.subr.mxu0 0.0
    %2427 = vmatpush1.xpose.msra.mxu0 0.0
    %2428 = vmatprep.subr.mxu0 0.0
    %2429 = vmatpush1.xpose.msra.mxu0 0.0
    %2430 = vmatprep.subr.mxu0 0.0
    %2431 = vmatpush1.xpose.msra.mxu0 0.0
    %2432 = vmatprep.subr.mxu0 0.0
    %2433 = vmatpush1.xpose.msra.mxu0 0.0
    %2434 = vmatprep.subr.mxu0 0.0
    %2435 = vmatpush1.xpose.msra.mxu0 0.0
    %2436 = vmatprep.subr.mxu0 0.0
    %2437 = vmatpush1.xpose.msra.mxu0 0.0
    %2438 = vmatprep.subr.mxu0 0.0
    %2439 = vmatpush1.xpose.msra.mxu0 0.0
    %2440 = vmatprep.subr.mxu0 0.0
    %2441 = vmatpush1.xpose.msra.mxu0 0.0
    %2442 = vmatprep.subr.mxu0 0.0
    %2443 = vmatpush1.xpose.msra.mxu0 0.0
    %2444 = vmatprep.subr.mxu0 0.0
    %2445 = vmatpush1.xpose.msra.mxu0 0.0
    %2446 = vmatprep.subr.mxu0 0.0
    %2447 = vmatpush1.xpose.msra.mxu0 0.0
    %2448 = vmatprep.subr.mxu0 0.0
    %2449 = vmatpush1.xpose.msra.mxu0 0.0
    %2450 = vmatprep.subr.mxu0 0.0
    %2451 = vmatpush1.xpose.msra.mxu0 0.0
    %2452 = vmatprep.subr.mxu0 0.0
    %2453 = vmatpush1.xpose.msra.mxu0 0.0
    %2454 = vmatprep.subr.mxu0 0.0
    %2455 = vmatpush1.xpose.msra.mxu0 %v2422
    %2456 = vmatprep.subr.mxu0 0.0
    %2457 = vmatpush2.xpose.msra.mxu0 0.0
    %2458 = vmatprep.subr.mxu0 0.0
    %2459 = vmatpush2.xpose.msra.mxu0 0.0
    %2460 = vmatprep.subr.mxu0 0.0
    %2461 = vmatpush2.xpose.msra.mxu0 0.0
    %2462 = vmatprep.subr.mxu0 0.0
    %2463 = vmatpush2.xpose.msra.mxu0 0.0
    %2464 = vmatprep.subr.mxu0 0.0
    %2465 = vmatpush2.xpose.msra.mxu0 0.0
    %2466 = vmatprep.subr.mxu0 0.0
    %2467 = vmatpush2.xpose.msra.mxu0 0.0
    %2468 = vmatprep.subr.mxu0 0.0
    %2469 = vmatpush2.xpose.msra.mxu0 0.0
    %2470 = vmatprep.subr.mxu0 0.0
    %2471 = vmatpush2.xpose.msra.mxu0 0.0
    %2472 = vmatprep.subr.mxu0 0.0
    %2473 = vmatpush2.xpose.msra.mxu0 0.0
    %2474 = vmatprep.subr.mxu0 0.0
    %2475 = vmatpush2.xpose.msra.mxu0 0.0
    %2476 = vmatprep.subr.mxu0 0.0
    %2477 = vmatpush2.xpose.msra.mxu0 0.0
    %2478 = vmatprep.subr.mxu0 0.0
    %2479 = vmatpush2.xpose.msra.mxu0 0.0
    %2480 = vmatprep.subr.mxu0 0.0
    %2481 = vmatpush2.xpose.msra.mxu0 0.0
    %2482 = vmatprep.subr.mxu0 0.0
    %2483 = vmatpush2.xpose.msra.mxu0 0.0
    %2484 = vmatprep.subr.mxu0 0.0
    %2485 = vmatpush2.xpose.msra.mxu0 0.0
    %2486 = vmatprep.subr.mxu0 0.0
    %2487 = vmatpush2.xpose.msra.mxu0 0.0
    %2488 = vmatprep.mubr.f32.mxu0 0.0
    %2489 = vmatmul.mubr.f32.gmra.mxu0 %v2416
    %v2490 = vpop.f32.mrf.mxu0
    %v2491 = vadd.f32 0.0, %v2490
    %v2492 = vpop.f32.mrf.mxu0
    %2493 = vmatprep.mubr.f32.mxu0 0.0
    %2494 = vmatmul.mubr.f32.gmra.mxu0 %v2419
    %v2495 = vpop.f32.mrf.mxu0
    %v2496 = vadd.f32 0.0, %v2495
    %v2497 = vpop.f32.mrf.mxu0
    %2498 = vdwg.mxu0
    %v2499 = vmul.f32 %v2491, 0.35355338
    %v2500 = vmul.f32 %v2496, 0.35355338
    %v2501 = vsel %vm1059, %v2499, -inf
    %2502 = vmax.xlane.f32.xlu0 %v2501
    %v2503 = vpop.xlane.xlu0 %2502
    %v2504 = vsel %vm1059, %v2500, -inf
    %2505 = vmax.xlane.f32.xlu0 %v2504
    %v2506 = vpop.xlane.xlu0 %2505
    %v2507 = vsub.f32 %v2499, %v2503
    %v2508 = vsub.f32 %v2500, %v2506
    %v2509 = vmul.f32 %v2507, 1.442695
    %v2510 = vpow.pop %v2509
    %v2511 = vmul.f32 %v2508, 1.442695
    %v2512 = vpow.pop %v2511
    %v2513 = vsel %vm1059, %v2510, 0.0
    %2514 = vadd.xlane.f32.xlu0 %v2513
    %v2515 = vpop.xlane.xlu0 %2514
    %v2516 = vsel %vm1059, %v2512, 0.0
    %2517 = vadd.xlane.f32.xlu0 %v2516
    %v2518 = vpop.xlane.xlu0 %2517
    %v2519 = vrcp.pop %v2515
    %v2520 = vrcp.pop %v2518
    %v2521 = vmul.f32 %v2510, %v2519
    %v2522 = vmul.f32 %v2512, %v2520
    %v2524 = vsel %vm1059, %v2521, 0
    %v2527 = vsel %vm1059, %v2522, 0
    %2529 = vmatprep.subr.mxu0 0.0
    %2530 = vmatpush1.msra.mxu0 0.0
    %2531 = vmatprep.subr.mxu0 0.0
    %2532 = vmatpush1.msra.mxu0 0.0
    %2533 = vmatprep.subr.mxu0 0.0
    %2534 = vmatpush1.msra.mxu0 0.0
    %2535 = vmatprep.subr.mxu0 0.0
    %2536 = vmatpush1.msra.mxu0 0.0
    %2537 = vmatprep.subr.mxu0 0.0
    %2538 = vmatpush1.msra.mxu0 0.0
    %2539 = vmatprep.subr.mxu0 0.0
    %2540 = vmatpush1.msra.mxu0 0.0
    %2541 = vmatprep.subr.mxu0 0.0
    %2542 = vmatpush1.msra.mxu0 0.0
    %2543 = vmatprep.subr.mxu0 0.0
    %2544 = vmatpush1.msra.mxu0 0.0
    %2545 = vmatprep.subr.mxu0 0.0
    %2546 = vmatpush1.msra.mxu0 0.0
    %2547 = vmatprep.subr.mxu0 0.0
    %2548 = vmatpush1.msra.mxu0 0.0
    %2549 = vmatprep.subr.mxu0 0.0
    %2550 = vmatpush1.msra.mxu0 0.0
    %2551 = vmatprep.subr.mxu0 0.0
    %2552 = vmatpush1.msra.mxu0 0.0
    %2553 = vmatprep.subr.mxu0 0.0
    %2554 = vmatpush1.msra.mxu0 0.0
    %2555 = vmatprep.subr.mxu0 0.0
    %2556 = vmatpush1.msra.mxu0 0.0
    %2557 = vmatprep.subr.mxu0 0.0
    %2558 = vmatpush1.msra.mxu0 0.0
    %2559 = vmatprep.subr.mxu0 0.0
    %2560 = vmatpush1.msra.mxu0 %v692
    %2561 = vmatprep.subr.mxu0 0.0
    %2562 = vmatpush2.msra.mxu0 0.0
    %2563 = vmatprep.subr.mxu0 0.0
    %2564 = vmatpush2.msra.mxu0 0.0
    %2565 = vmatprep.subr.mxu0 0.0
    %2566 = vmatpush2.msra.mxu0 0.0
    %2567 = vmatprep.subr.mxu0 0.0
    %2568 = vmatpush2.msra.mxu0 0.0
    %2569 = vmatprep.subr.mxu0 0.0
    %2570 = vmatpush2.msra.mxu0 0.0
    %2571 = vmatprep.subr.mxu0 0.0
    %2572 = vmatpush2.msra.mxu0 0.0
    %2573 = vmatprep.subr.mxu0 0.0
    %2574 = vmatpush2.msra.mxu0 0.0
    %2575 = vmatprep.subr.mxu0 0.0
    %2576 = vmatpush2.msra.mxu0 0.0
    %2577 = vmatprep.subr.mxu0 0.0
    %2578 = vmatpush2.msra.mxu0 0.0
    %2579 = vmatprep.subr.mxu0 0.0
    %2580 = vmatpush2.msra.mxu0 0.0
    %2581 = vmatprep.subr.mxu0 0.0
    %2582 = vmatpush2.msra.mxu0 0.0
    %2583 = vmatprep.subr.mxu0 0.0
    %2584 = vmatpush2.msra.mxu0 0.0
    %2585 = vmatprep.subr.mxu0 0.0
    %2586 = vmatpush2.msra.mxu0 0.0
    %2587 = vmatprep.subr.mxu0 0.0
    %2588 = vmatpush2.msra.mxu0 0.0
    %2589 = vmatprep.subr.mxu0 0.0
    %2590 = vmatpush2.msra.mxu0 0.0
    %2591 = vmatprep.subr.mxu0 0.0
    %2592 = vmatpush2.msra.mxu0 0.0
    %2593 = vmatprep.mubr.f32.mxu0 0.0
    %2594 = vmatmul.mubr.f32.gmra.mxu0 %v2524
    %v2595 = vpop.f32.mrf.mxu0
    %v2596 = vadd.f32 0.0, %v2595
    %v2597 = vpop.f32.mrf.mxu0
    %2598 = vmatprep.mubr.f32.mxu0 0.0
    %2599 = vmatmul.mubr.f32.gmra.mxu0 %v2527
    %v2600 = vpop.f32.mrf.mxu0
    %v2601 = vadd.f32 0.0, %v2600
    %v2602 = vpop.f32.mrf.mxu0
    %2603 = vdwg.mxu0
    %2606 = vrot.lane.b32.xlu0 %v2218, 8
    %v2607 = vpop.permute.xlu0 %2606
    %2608 = vrot.lane.b32.xlu0 %v2223, 8
    %v2609 = vpop.permute.xlu0 %2608
    %2614 = vrot.lane.b32.xlu0 %v2407, 16
    %v2615 = vpop.permute.xlu0 %2614
    %2616 = vrot.lane.b32.xlu0 %v2412, 16
    %v2617 = vpop.permute.xlu0 %2616
    %2622 = vrot.lane.b32.xlu0 %v2596, 24
    %v2623 = vpop.permute.xlu0 %2622
    %2624 = vrot.lane.b32.xlu0 %v2601, 24
    %v2625 = vpop.permute.xlu0 %2624
    %v2628 = vsel %vm1059, %v2029, %v2607
    %v2629 = vsel %vm1059, %v2034, %v2609
    %v2630 = vsel %vm1842, %v2628, %v2615
    %v2631 = vsel %vm1842, %v2629, %v2617
    %v2632 = vsel %vm1845, %v2630, %v2623
    %v2633 = vsel %vm1845, %v2631, %v2625
    %v2635 = vsel %vm58, %v1846, 0
    %v2638 = vsel %vm58, %v1847, 0
    %v2641 = vsel %vm58, %v2632, 0
    %v2644 = vsel %vm58, %v2633, 0
    %2646 = vmatprep.subr.mxu0 0.0
    %2647 = vmatpush1.msra.mxu0 0.0
    %2648 = vmatprep.subr.mxu0 0.0
    %2649 = vmatpush1.msra.mxu0 0.0
    %2650 = vmatprep.subr.mxu0 0.0
    %2651 = vmatpush1.msra.mxu0 0.0
    %2652 = vmatprep.subr.mxu0 0.0
    %2653 = vmatpush1.msra.mxu0 0.0
    %2654 = vmatprep.subr.mxu0 0.0
    %2655 = vmatpush1.msra.mxu0 0.0
    %2656 = vmatprep.subr.mxu0 0.0
    %2657 = vmatpush1.msra.mxu0 0.0
    %2658 = vmatprep.subr.mxu0 0.0
    %2659 = vmatpush1.msra.mxu0 0.0
    %2660 = vmatprep.subr.mxu0 0.0
    %2661 = vmatpush1.msra.mxu0 0.0
    %2662 = vmatprep.subr.mxu0 0.0
    %2663 = vmatpush1.msra.mxu0 0.0
    %2664 = vmatprep.subr.mxu0 0.0
    %2665 = vmatpush1.msra.mxu0 0.0
    %2666 = vmatprep.subr.mxu0 0.0
    %2667 = vmatpush1.msra.mxu0 0.0
    %2668 = vmatprep.subr.mxu0 0.0
    %2669 = vmatpush1.msra.mxu0 0.0
    %2670 = vmatprep.subr.mxu0 0.0
    %2671 = vmatpush1.msra.mxu0 %v57
    %2672 = vmatprep.subr.mxu0 0.0
    %2673 = vmatpush1.msra.mxu0 %v56
    %2674 = vmatprep.subr.mxu0 0.0
    %2675 = vmatpush1.msra.mxu0 %v55
    %2676 = vmatprep.subr.mxu0 0.0
    %2677 = vmatpush1.msra.mxu0 %v54
    %2678 = vmatprep.subr.mxu0 0.0
    %2679 = vmatpush2.msra.mxu0 0.0
    %2680 = vmatprep.subr.mxu0 0.0
    %2681 = vmatpush2.msra.mxu0 0.0
    %2682 = vmatprep.subr.mxu0 0.0
    %2683 = vmatpush2.msra.mxu0 0.0
    %2684 = vmatprep.subr.mxu0 0.0
    %2685 = vmatpush2.msra.mxu0 0.0
    %2686 = vmatprep.subr.mxu0 0.0
    %2687 = vmatpush2.msra.mxu0 0.0
    %2688 = vmatprep.subr.mxu0 0.0
    %2689 = vmatpush2.msra.mxu0 0.0
    %2690 = vmatprep.subr.mxu0 0.0
    %2691 = vmatpush2.msra.mxu0 0.0
    %2692 = vmatprep.subr.mxu0 0.0
    %2693 = vmatpush2.msra.mxu0 0.0
    %2694 = vmatprep.subr.mxu0 0.0
    %2695 = vmatpush2.msra.mxu0 0.0
    %2696 = vmatprep.subr.mxu0 0.0
    %2697 = vmatpush2.msra.mxu0 0.0
    %2698 = vmatprep.subr.mxu0 0.0
    %2699 = vmatpush2.msra.mxu0 0.0
    %2700 = vmatprep.subr.mxu0 0.0
    %2701 = vmatpush2.msra.mxu0 0.0
    %2702 = vmatprep.subr.mxu0 0.0
    %2703 = vmatpush2.msra.mxu0 0.0
    %2704 = vmatprep.subr.mxu0 0.0
    %2705 = vmatpush2.msra.mxu0 0.0
    %2706 = vmatprep.subr.mxu0 0.0
    %2707 = vmatpush2.msra.mxu0 0.0
    %2708 = vmatprep.subr.mxu0 0.0
    %2709 = vmatpush2.msra.mxu0 0.0
    %2710 = vmatprep.mubr.f32.mxu0 0.0
    %2711 = vmatmul.mubr.f32.gmra.mxu0 %v2635
    %v2712 = vpop.f32.mrf.mxu0
    %v2713 = vadd.f32 0.0, %v2712
    %v2714 = vpop.f32.mrf.mxu0
    %2715 = vmatprep.mubr.f32.mxu0 0.0
    %2716 = vmatmul.mubr.f32.gmra.mxu0 %v2638
    %v2717 = vpop.f32.mrf.mxu0
    %v2718 = vadd.f32 0.0, %v2717
    %v2719 = vpop.f32.mrf.mxu0
    %2720 = vmatprep.mubr.f32.mxu0 0.0
    %2721 = vmatmul.mubr.f32.gmra.mxu0 %v2641
    %v2722 = vpop.f32.mrf.mxu0
    %v2723 = vadd.f32 0.0, %v2722
    %v2724 = vpop.f32.mrf.mxu0
    %2725 = vmatprep.mubr.f32.mxu0 0.0
    %2726 = vmatmul.mubr.f32.gmra.mxu0 %v2644
    %v2727 = vpop.f32.mrf.mxu0
    %v2728 = vadd.f32 0.0, %v2727
    %v2729 = vpop.f32.mrf.mxu0
    %2730 = vdwg.mxu0
    %v2731 = vadd.f32 %v34, %v2713
    %v2732 = vadd.f32 %v35, %v2718
    %v2733 = vadd.f32 %v40, %v2723
    %v2734 = vadd.f32 %v41, %v2728
    %v2735 = vld [vmem:[%s3 + $0x230] sm:$0x1]
    %v2736 = vld [vmem:[%s3 + $0x231] sm:$0x1]
    %v2737 = vsel %vm58, %v2731, 0.0
    %2738 = vadd.xlane.f32.xlu0 %v2737
    %v2739 = vpop.xlane.xlu0 %2738
    %v2740 = vsel %vm58, %v2732, 0.0
    %2741 = vadd.xlane.f32.xlu0 %v2740
    %v2742 = vpop.xlane.xlu0 %2741
    %v2743 = vsel %vm58, %v2733, 0.0
    %2744 = vadd.xlane.f32.xlu0 %v2743
    %v2745 = vpop.xlane.xlu0 %2744
    %v2746 = vsel %vm58, %v2734, 0.0
    %2747 = vadd.xlane.f32.xlu0 %v2746
    %v2748 = vpop.xlane.xlu0 %2747
    %v2749 = vrcp.pop 32.0
    %v2750 = vmul.f32 %v2739, %v2749
    %v2751 = vmul.f32 %v2742, %v2749
    %v2752 = vmul.f32 %v2745, %v2749
    %v2753 = vmul.f32 %v2748, %v2749
    %v2754 = vmul.f32 %v2731, %v2731
    %v2755 = vmul.f32 %v2732, %v2732
    %v2756 = vmul.f32 %v2733, %v2733
    %v2757 = vmul.f32 %v2734, %v2734
    %v2758 = vsel %vm58, %v2754, 0.0
    %2759 = vadd.xlane.f32.xlu0 %v2758
    %v2760 = vpop.xlane.xlu0 %2759
    %v2761 = vsel %vm58, %v2755, 0.0
    %2762 = vadd.xlane.f32.xlu0 %v2761
    %v2763 = vpop.xlane.xlu0 %2762
    %v2764 = vsel %vm58, %v2756, 0.0
    %2765 = vadd.xlane.f32.xlu0 %v2764
    %v2766 = vpop.xlane.xlu0 %2765
    %v2767 = vsel %vm58, %v2757, 0.0
    %2768 = vadd.xlane.f32.xlu0 %v2767
    %v2769 = vpop.xlane.xlu0 %2768
    %v2770 = vmul.f32 %v2760, %v2749
    %v2771 = vmul.f32 %v2763, %v2749
    %v2772 = vmul.f32 %v2766, %v2749
    %v2773 = vmul.f32 %v2769, %v2749
    %v2774 = vmul.f32 %v2750, %v2750
    %v2775 = vmul.f32 %v2751, %v2751
    %v2776 = vmul.f32 %v2752, %v2752
    %v2777 = vmul.f32 %v2753, %v2753
    %v2778 = vsub.f32 %v2770, %v2774
    %v2779 = vsub.f32 %v2771, %v2775
    %v2780 = vsub.f32 %v2772, %v2776
    %v2781 = vsub.f32 %v2773, %v2777
    %v2782 = vsub.f32 %v2731, %v2750
    %v2783 = vsub.f32 %v2732, %v2751
    %v2784 = vsub.f32 %v2733, %v2752
    %v2785 = vsub.f32 %v2734, %v2753
    %v2786 = vadd.f32 %v2778, 1e-05
    %v2787 = vadd.f32 %v2779, 1e-05
    %v2788 = vadd.f32 %v2780, 1e-05
    %v2789 = vadd.f32 %v2781, 1e-05
    %v2790 = vrsqrt.pop %v2786
    %v2791 = vrsqrt.pop %v2787
    %v2792 = vrsqrt.pop %v2788
    %v2793 = vrsqrt.pop %v2789
    %v2794 = vmul.f32 %v2782, %v2790
    %v2795 = vmul.f32 %v2783, %v2791
    %v2796 = vmul.f32 %v2784, %v2792
    %v2797 = vmul.f32 %v2785, %v2793
    %v2798 = vlaneseq
    %v2799 = vshrl.u32 %v2798, 7
    %v2800 = vsub.s32 0, %v2799
    %v2801 = vrot.slane %v2735, %v2800
    %v2802 = vmul.f32 %v2794, %v2801
    %v2803 = vmul.f32 %v2795, %v2801
    %v2804 = vmul.f32 %v2796, %v2801
    %v2805 = vmul.f32 %v2797, %v2801
    %v2806 = vlaneseq
    %v2807 = vshrl.u32 %v2806, 7
    %v2808 = vsub.s32 0, %v2807
    %v2809 = vrot.slane %v2736, %v2808
    %v2810 = vadd.f32 %v2802, %v2809
    %v2811 = vadd.f32 %v2803, %v2809
    %v2812 = vadd.f32 %v2804, %v2809
    %v2813 = vadd.f32 %v2805, %v2809
    %v2814 = vld [vmem:[%s3 + $0x80] sm:$0xff]
    %v2815 = vld [vmem:[%s3 + $0x88] sm:$0xff]
    %v2816 = vld [vmem:[%s3 + $0x90] sm:$0xff]
    %v2817 = vld [vmem:[%s3 + $0x98] sm:$0xff]
    %v2818 = vld [vmem:[%s3 + $0xa0] sm:$0xff]
    %v2819 = vld [vmem:[%s3 + $0xa8] sm:$0xff]
    %v2820 = vld [vmem:[%s3 + $0xb0] sm:$0xff]
    %v2821 = vld [vmem:[%s3 + $0xb8] sm:$0xff]
    %v2822 = vld [vmem:[%s4] sm:$0x1]
    %v2824 = vlaneseq
    %v2825 = vshrl.u32 %v2824, 7
    %v2826 = vsub.s32 0, %v2825
    %v2827 = vrot.slane %v2822, %v2826
    %v2830 = vsel %vm58, %v2810, 0
    %v2833 = vsel %vm58, %v2811, 0
    %v2836 = vsel %vm58, %v2812, 0
    %v2839 = vsel %vm58, %v2813, 0
    %v2842 = vsel %vm58, %v2814, 0
    %v2845 = vsel %vm58, %v2815, 0
    %v2848 = vsel %vm58, %v2816, 0
    %v2851 = vsel %vm58, %v2817, 0
    %v2854 = vsel %vm58, %v2818, 0
    %v2857 = vsel %vm58, %v2819, 0
    %v2860 = vsel %vm58, %v2820, 0
    %v2863 = vsel %vm58, %v2821, 0
    %2865 = vmatprep.subr.mxu0 0.0
    %2866 = vmatpush1.xpose.msra.mxu0 0.0
    %2867 = vmatprep.subr.mxu0 0.0
    %2868 = vmatpush1.xpose.msra.mxu0 0.0
    %2869 = vmatprep.subr.mxu0 0.0
    %2870 = vmatpush1.xpose.msra.mxu0 0.0
    %2871 = vmatprep.subr.mxu0 0.0
    %2872 = vmatpush1.xpose.msra.mxu0 0.0
    %2873 = vmatprep.subr.mxu0 0.0
    %2874 = vmatpush1.xpose.msra.mxu0 0.0
    %2875 = vmatprep.subr.mxu0 0.0
    %2876 = vmatpush1.xpose.msra.mxu0 0.0
    %2877 = vmatprep.subr.mxu0 0.0
    %2878 = vmatpush1.xpose.msra.mxu0 0.0
    %2879 = vmatprep.subr.mxu0 0.0
    %2880 = vmatpush1.xpose.msra.mxu0 0.0
    %2881 = vmatprep.subr.mxu0 0.0
    %2882 = vmatpush1.xpose.msra.mxu0 %v2863
    %2883 = vmatprep.subr.mxu0 0.0
    %2884 = vmatpush1.xpose.msra.mxu0 %v2860
    %2885 = vmatprep.subr.mxu0 0.0
    %2886 = vmatpush1.xpose.msra.mxu0 %v2857
    %2887 = vmatprep.subr.mxu0 0.0
    %2888 = vmatpush1.xpose.msra.mxu0 %v2854
    %2889 = vmatprep.subr.mxu0 0.0
    %2890 = vmatpush1.xpose.msra.mxu0 %v2851
    %2891 = vmatprep.subr.mxu0 0.0
    %2892 = vmatpush1.xpose.msra.mxu0 %v2848
    %2893 = vmatprep.subr.mxu0 0.0
    %2894 = vmatpush1.xpose.msra.mxu0 %v2845
    %2895 = vmatprep.subr.mxu0 0.0
    %2896 = vmatpush1.xpose.msra.mxu0 %v2842
    %2897 = vmatprep.subr.mxu0 0.0
    %2898 = vmatpush2.xpose.msra.mxu0 0.0
    %2899 = vmatprep.subr.mxu0 0.0
    %2900 = vmatpush2.xpose.msra.mxu0 0.0
    %2901 = vmatprep.subr.mxu0 0.0
    %2902 = vmatpush2.xpose.msra.mxu0 0.0
    %2903 = vmatprep.subr.mxu0 0.0
    %2904 = vmatpush2.xpose.msra.mxu0 0.0
    %2905 = vmatprep.subr.mxu0 0.0
    %2906 = vmatpush2.xpose.msra.mxu0 0.0
    %2907 = vmatprep.subr.mxu0 0.0
    %2908 = vmatpush2.xpose.msra.mxu0 0.0
    %2909 = vmatprep.subr.mxu0 0.0
    %2910 = vmatpush2.xpose.msra.mxu0 0.0
    %2911 = vmatprep.subr.mxu0 0.0
    %2912 = vmatpush2.xpose.msra.mxu0 0.0
    %2913 = vmatprep.subr.mxu0 0.0
    %2914 = vmatpush2.xpose.msra.mxu0 0.0
    %2915 = vmatprep.subr.mxu0 0.0
    %2916 = vmatpush2.xpose.msra.mxu0 0.0
    %2917 = vmatprep.subr.mxu0 0.0
    %2918 = vmatpush2.xpose.msra.mxu0 0.0
    %2919 = vmatprep.subr.mxu0 0.0
    %2920 = vmatpush2.xpose.msra.mxu0 0.0
    %2921 = vmatprep.subr.mxu0 0.0
    %2922 = vmatpush2.xpose.msra.mxu0 0.0
    %2923 = vmatprep.subr.mxu0 0.0
    %2924 = vmatpush2.xpose.msra.mxu0 0.0
    %2925 = vmatprep.subr.mxu0 0.0
    %2926 = vmatpush2.xpose.msra.mxu0 0.0
    %2927 = vmatprep.subr.mxu0 0.0
    %2928 = vmatpush2.xpose.msra.mxu0 0.0
    %2929 = vmatprep.mubr.f32.mxu0 0.0
    %2930 = vmatmul.mubr.f32.gmra.mxu0 %v2830
    %v2931 = vpop.f32.mrf.mxu0
    %v2932 = vadd.f32 %v2827, %v2931
    %v2933 = vpop.f32.mrf.mxu0
    %2934 = vmatprep.mubr.f32.mxu0 0.0
    %2935 = vmatmul.mubr.f32.gmra.mxu0 %v2833
    %v2936 = vpop.f32.mrf.mxu0
    %v2937 = vadd.f32 %v2827, %v2936
    %v2938 = vpop.f32.mrf.mxu0
    %2939 = vmatprep.mubr.f32.mxu0 0.0
    %2940 = vmatmul.mubr.f32.gmra.mxu0 %v2836
    %v2941 = vpop.f32.mrf.mxu0
    %v2942 = vadd.f32 %v2827, %v2941
    %v2943 = vpop.f32.mrf.mxu0
    %2944 = vmatprep.mubr.f32.mxu0 0.0
    %2945 = vmatmul.mubr.f32.gmra.mxu0 %v2839
    %v2946 = vpop.f32.mrf.mxu0
    %v2947 = vadd.f32 %v2827, %v2946
    %v2948 = vpop.f32.mrf.mxu0
    %2949 = vdwg.mxu0
    %v2950 = vmax.f32 %v2932, 0.0
    %v2951 = vmax.f32 %v2937, 0.0
    %v2952 = vmax.f32 %v2942, 0.0
    %v2953 = vmax.f32 %v2947, 0.0
    %v2954 = vld [vmem:[%s3 + $0xc0] sm:$0xff]
    %v2955 = vld [vmem:[%s3 + $0xc8] sm:$0xff]
    %v2956 = vld [vmem:[%s3 + $0xd0] sm:$0xff]
    %v2957 = vld [vmem:[%s3 + $0xd8] sm:$0xff]
    %v2958 = vld [vmem:[%s3 + $0xe0] sm:$0xff]
    %v2959 = vld [vmem:[%s3 + $0xe8] sm:$0xff]
    %v2960 = vld [vmem:[%s3 + $0xf0] sm:$0xff]
    %v2961 = vld [vmem:[%s3 + $0xf8] sm:$0xff]
    %v2962 = vld [vmem:[%s3 + $0x234] sm:$0x1]
    %v2963 = vlaneseq
    %v2964 = vshrl.u32 %v2963, 7
    %v2965 = vsub.s32 0, %v2964
    %v2966 = vrot.slane %v2962, %v2965
    %vm2967 = vcmask 523264
    %v2969 = vsel %vm2967, %v2950, 0
    %v2972 = vsel %vm2967, %v2951, 0
    %v2975 = vsel %vm2967, %v2952, 0
    %v2978 = vsel %vm2967, %v2953, 0
    %2980 = vmatprep.subr.mxu0 0.0
    %2981 = vmatpush1.msra.mxu0 0.0
    %2982 = vmatprep.subr.mxu0 0.0
    %2983 = vmatpush1.msra.mxu0 0.0
    %2984 = vmatprep.subr.mxu0 0.0
    %2985 = vmatpush1.msra.mxu0 0.0
    %2986 = vmatprep.subr.mxu0 0.0
    %2987 = vmatpush1.msra.mxu0 0.0
    %2988 = vmatprep.subr.mxu0 0.0
    %2989 = vmatpush1.msra.mxu0 0.0
    %2990 = vmatprep.subr.mxu0 0.0
    %2991 = vmatpush1.msra.mxu0 0.0
    %2992 = vmatprep.subr.mxu0 0.0
    %2993 = vmatpush1.msra.mxu0 0.0
    %2994 = vmatprep.subr.mxu0 0.0
    %2995 = vmatpush1.msra.mxu0 0.0
    %2996 = vmatprep.subr.mxu0 0.0
    %2997 = vmatpush1.msra.mxu0 %v2961
    %2998 = vmatprep.subr.mxu0 0.0
    %2999 = vmatpush1.msra.mxu0 %v2960
    %3000 = vmatprep.subr.mxu0 0.0
    %3001 = vmatpush1.msra.mxu0 %v2959
    %3002 = vmatprep.subr.mxu0 0.0
    %3003 = vmatpush1.msra.mxu0 %v2958
    %3004 = vmatprep.subr.mxu0 0.0
    %3005 = vmatpush1.msra.mxu0 %v2957
    %3006 = vmatprep.subr.mxu0 0.0
    %3007 = vmatpush1.msra.mxu0 %v2956
    %3008 = vmatprep.subr.mxu0 0.0
    %3009 = vmatpush1.msra.mxu0 %v2955
    %3010 = vmatprep.subr.mxu0 0.0
    %3011 = vmatpush1.msra.mxu0 %v2954
    %3012 = vmatprep.subr.mxu0 0.0
    %3013 = vmatpush2.msra.mxu0 0.0
    %3014 = vmatprep.subr.mxu0 0.0
    %3015 = vmatpush2.msra.mxu0 0.0
    %3016 = vmatprep.subr.mxu0 0.0
    %3017 = vmatpush2.msra.mxu0 0.0
    %3018 = vmatprep.subr.mxu0 0.0
    %3019 = vmatpush2.msra.mxu0 0.0
    %3020 = vmatprep.subr.mxu0 0.0
    %3021 = vmatpush2.msra.mxu0 0.0
    %3022 = vmatprep.subr.mxu0 0.0
    %3023 = vmatpush2.msra.mxu0 0.0
    %3024 = vmatprep.subr.mxu0 0.0
    %3025 = vmatpush2.msra.mxu0 0.0
    %3026 = vmatprep.subr.mxu0 0.0
    %3027 = vmatpush2.msra.mxu0 0.0
    %3028 = vmatprep.subr.mxu0 0.0
    %3029 = vmatpush2.msra.mxu0 0.0
    %3030 = vmatprep.subr.mxu0 0.0
    %3031 = vmatpush2.msra.mxu0 0.0
    %3032 = vmatprep.subr.mxu0 0.0
    %3033 = vmatpush2.msra.mxu0 0.0
    %3034 = vmatprep.subr.mxu0 0.0
    %3035 = vmatpush2.msra.mxu0 0.0
    %3036 = vmatprep.subr.mxu0 0.0
    %3037 = vmatpush2.msra.mxu0 0.0
    %3038 = vmatprep.subr.mxu0 0.0
    %3039 = vmatpush2.msra.mxu0 0.0
    %3040 = vmatprep.subr.mxu0 0.0
    %3041 = vmatpush2.msra.mxu0 0.0
    %3042 = vmatprep.subr.mxu0 0.0
    %3043 = vmatpush2.msra.mxu0 0.0
    %3044 = vmatprep.mubr.f32.mxu0 0.0
    %3045 = vmatmul.mubr.f32.gmra.mxu0 %v2969
    %v3046 = vpop.f32.mrf.mxu0
    %v3047 = vadd.f32 %v2966, %v3046
    %v3048 = vpop.f32.mrf.mxu0
    %3049 = vmatprep.mubr.f32.mxu0 0.0
    %3050 = vmatmul.mubr.f32.gmra.mxu0 %v2972
    %v3051 = vpop.f32.mrf.mxu0
    %v3052 = vadd.f32 %v2966, %v3051
    %v3053 = vpop.f32.mrf.mxu0
    %3054 = vmatprep.mubr.f32.mxu0 0.0
    %3055 = vmatmul.mubr.f32.gmra.mxu0 %v2975
    %v3056 = vpop.f32.mrf.mxu0
    %v3057 = vadd.f32 %v2966, %v3056
    %v3058 = vpop.f32.mrf.mxu0
    %3059 = vmatprep.mubr.f32.mxu0 0.0
    %3060 = vmatmul.mubr.f32.gmra.mxu0 %v2978
    %v3061 = vpop.f32.mrf.mxu0
    %v3062 = vadd.f32 %v2966, %v3061
    %v3063 = vpop.f32.mrf.mxu0
    %3064 = vdwg.mxu0
    %v3065 = vadd.f32 %v2810, %v3047
    %v3066 = vadd.f32 %v2811, %v3052
    %v3067 = vadd.f32 %v2812, %v3057
    %v3068 = vadd.f32 %v2813, %v3062
    %v3069 = vld [vmem:[%s3 + $0x232] sm:$0x1]
    %v3070 = vld [vmem:[%s3 + $0x233] sm:$0x1]
    %v3071 = vsel %vm58, %v3065, 0.0
    %3072 = vadd.xlane.f32.xlu0 %v3071
    %v3073 = vpop.xlane.xlu0 %3072
    %v3074 = vsel %vm58, %v3066, 0.0
    %3075 = vadd.xlane.f32.xlu0 %v3074
    %v3076 = vpop.xlane.xlu0 %3075
    %v3077 = vsel %vm58, %v3067, 0.0
    %3078 = vadd.xlane.f32.xlu0 %v3077
    %v3079 = vpop.xlane.xlu0 %3078
    %v3080 = vsel %vm58, %v3068, 0.0
    %3081 = vadd.xlane.f32.xlu0 %v3080
    %v3082 = vpop.xlane.xlu0 %3081
    %v3083 = vmul.f32 %v3073, %v2749
    %v3084 = vmul.f32 %v3076, %v2749
    %v3085 = vmul.f32 %v3079, %v2749
    %v3086 = vmul.f32 %v3082, %v2749
    %v3087 = vmul.f32 %v3065, %v3065
    %v3088 = vmul.f32 %v3066, %v3066
    %v3089 = vmul.f32 %v3067, %v3067
    %v3090 = vmul.f32 %v3068, %v3068
    %v3091 = vsel %vm58, %v3087, 0.0
    %3092 = vadd.xlane.f32.xlu0 %v3091
    %v3093 = vpop.xlane.xlu0 %3092
    %v3094 = vsel %vm58, %v3088, 0.0
    %3095 = vadd.xlane.f32.xlu0 %v3094
    %v3096 = vpop.xlane.xlu0 %3095
    %v3097 = vsel %vm58, %v3089, 0.0
    %3098 = vadd.xlane.f32.xlu0 %v3097
    %v3099 = vpop.xlane.xlu0 %3098
    %v3100 = vsel %vm58, %v3090, 0.0
    %3101 = vadd.xlane.f32.xlu0 %v3100
    %v3102 = vpop.xlane.xlu0 %3101
    %v3103 = vmul.f32 %v3093, %v2749
    %v3104 = vmul.f32 %v3096, %v2749
    %v3105 = vmul.f32 %v3099, %v2749
    %v3106 = vmul.f32 %v3102, %v2749
    %v3107 = vmul.f32 %v3083, %v3083
    %v3108 = vmul.f32 %v3084, %v3084
    %v3109 = vmul.f32 %v3085, %v3085
    %v3110 = vmul.f32 %v3086, %v3086
    %v3111 = vsub.f32 %v3103, %v3107
    %v3112 = vsub.f32 %v3104, %v3108
    %v3113 = vsub.f32 %v3105, %v3109
    %v3114 = vsub.f32 %v3106, %v3110
    %v3115 = vsub.f32 %v3065, %v3083
    %v3116 = vsub.f32 %v3066, %v3084
    %v3117 = vsub.f32 %v3067, %v3085
    %v3118 = vsub.f32 %v3068, %v3086
    %v3119 = vadd.f32 %v3111, 1e-05
    %v3120 = vadd.f32 %v3112, 1e-05
    %v3121 = vadd.f32 %v3113, 1e-05
    %v3122 = vadd.f32 %v3114, 1e-05
    %v3123 = vrsqrt.pop %v3119
    %v3124 = vrsqrt.pop %v3120
    %v3125 = vrsqrt.pop %v3121
    %v3126 = vrsqrt.pop %v3122
    %v3127 = vmul.f32 %v3115, %v3123
    %v3128 = vmul.f32 %v3116, %v3124
    %v3129 = vmul.f32 %v3117, %v3125
    %v3130 = vmul.f32 %v3118, %v3126
    %v3131 = vlaneseq
    %v3132 = vshrl.u32 %v3131, 7
    %v3133 = vsub.s32 0, %v3132
    %v3134 = vrot.slane %v3069, %v3133
    %v3135 = vmul.f32 %v3127, %v3134
    %v3136 = vmul.f32 %v3128, %v3134
    %v3137 = vmul.f32 %v3129, %v3134
    %v3138 = vmul.f32 %v3130, %v3134
    %v3139 = vlaneseq
    %v3140 = vshrl.u32 %v3139, 7
    %v3141 = vsub.s32 0, %v3140
    %v3142 = vrot.slane %v3070, %v3141
    %v3143 = vadd.f32 %v3135, %v3142
    %v3144 = vadd.f32 %v3136, %v3142
    %v3145 = vadd.f32 %v3137, %v3142
    %v3146 = vadd.f32 %v3138, %v3142
    %v3147 = vld [vmem:[%s3 + $0x100] sm:$0xff]
    %v3148 = vld [vmem:[%s3 + $0x108] sm:$0xff]
    %v3149 = vld [vmem:[%s3 + $0x110] sm:$0xff]
    %v3150 = vld [vmem:[%s3 + $0x118] sm:$0xff]
    %v3151 = vld [vmem:[%s3 + $0x120] sm:$0xff]
    %v3152 = vld [vmem:[%s3 + $0x128] sm:$0xff]
    %v3153 = vld [vmem:[%s3 + $0x130] sm:$0xff]
    %v3154 = vld [vmem:[%s3 + $0x138] sm:$0xff]
    %v3155 = vld [vmem:[%s3 + $0x140] sm:$0xff]
    %v3156 = vld [vmem:[%s3 + $0x148] sm:$0xff]
    %v3157 = vld [vmem:[%s3 + $0x150] sm:$0xff]
    %v3158 = vld [vmem:[%s3 + $0x158] sm:$0xff]
    %v3159 = vld [vmem:[%s3 + $0x160] sm:$0xff]
    %v3160 = vld [vmem:[%s3 + $0x168] sm:$0xff]
    %v3161 = vld [vmem:[%s3 + $0x170] sm:$0xff]
    %v3162 = vld [vmem:[%s3 + $0x178] sm:$0xff]
    %v3164 = vsel %vm58, %v3151, 0
    %3166 = vmatprep.subr.mxu0 0.0
    %3167 = vmatpush1.xpose.msra.mxu0 0.0
    %3168 = vmatprep.subr.mxu0 0.0
    %3169 = vmatpush1.xpose.msra.mxu0 0.0
    %3170 = vmatprep.subr.mxu0 0.0
    %3171 = vmatpush1.xpose.msra.mxu0 0.0
    %3172 = vmatprep.subr.mxu0 0.0
    %3173 = vmatpush1.xpose.msra.mxu0 0.0
    %3174 = vmatprep.subr.mxu0 0.0
    %3175 = vmatpush1.xpose.msra.mxu0 0.0
    %3176 = vmatprep.subr.mxu0 0.0
    %3177 = vmatpush1.xpose.msra.mxu0 0.0
    %3178 = vmatprep.subr.mxu0 0.0
    %3179 = vmatpush1.xpose.msra.mxu0 0.0
    %3180 = vmatprep.subr.mxu0 0.0
    %3181 = vmatpush1.xpose.msra.mxu0 0.0
    %3182 = vmatprep.subr.mxu0 0.0
    %3183 = vmatpush1.xpose.msra.mxu0 0.0
    %3184 = vmatprep.subr.mxu0 0.0
    %3185 = vmatpush1.xpose.msra.mxu0 0.0
    %3186 = vmatprep.subr.mxu0 0.0
    %3187 = vmatpush1.xpose.msra.mxu0 0.0
    %3188 = vmatprep.subr.mxu0 0.0
    %3189 = vmatpush1.xpose.msra.mxu0 0.0
    %3190 = vmatprep.subr.mxu0 0.0
    %3191 = vmatpush1.xpose.msra.mxu0 0.0
    %3192 = vmatprep.subr.mxu0 0.0
    %3193 = vmatpush1.xpose.msra.mxu0 0.0
    %3194 = vmatprep.subr.mxu0 0.0
    %3195 = vmatpush1.xpose.msra.mxu0 0.0
    %3196 = vmatprep.subr.mxu0 0.0
    %3197 = vmatpush1.xpose.msra.mxu0 %v3164
    %3198 = vmatprep.subr.mxu0 0.0
    %3199 = vmatpush2.xpose.msra.mxu0 0.0
    %3200 = vmatprep.subr.mxu0 0.0
    %3201 = vmatpush2.xpose.msra.mxu0 0.0
    %3202 = vmatprep.subr.mxu0 0.0
    %3203 = vmatpush2.xpose.msra.mxu0 0.0
    %3204 = vmatprep.subr.mxu0 0.0
    %3205 = vmatpush2.xpose.msra.mxu0 0.0
    %3206 = vmatprep.subr.mxu0 0.0
    %3207 = vmatpush2.xpose.msra.mxu0 0.0
    %3208 = vmatprep.subr.mxu0 0.0
    %3209 = vmatpush2.xpose.msra.mxu0 0.0
    %3210 = vmatprep.subr.mxu0 0.0
    %3211 = vmatpush2.xpose.msra.mxu0 0.0
    %3212 = vmatprep.subr.mxu0 0.0
    %3213 = vmatpush2.xpose.msra.mxu0 0.0
    %3214 = vmatprep.subr.mxu0 0.0
    %3215 = vmatpush2.xpose.msra.mxu0 0.0
    %3216 = vmatprep.subr.mxu0 0.0
    %3217 = vmatpush2.xpose.msra.mxu0 0.0
    %3218 = vmatprep.subr.mxu0 0.0
    %3219 = vmatpush2.xpose.msra.mxu0 0.0
    %3220 = vmatprep.subr.mxu0 0.0
    %3221 = vmatpush2.xpose.msra.mxu0 0.0
    %3222 = vmatprep.subr.mxu0 0.0
    %3223 = vmatpush2.xpose.msra.mxu0 0.0
    %3224 = vmatprep.subr.mxu0 0.0
    %3225 = vmatpush2.xpose.msra.mxu0 0.0
    %3226 = vmatprep.subr.mxu0 0.0
    %3227 = vmatpush2.xpose.msra.mxu0 0.0
    %3228 = vmatprep.subr.mxu0 0.0
    %3229 = vmatpush2.xpose.msra.mxu0 0.0
    %3230 = vmatprep.mubr.f32.mxu0 0.0
    %3231 = vmatmul.mubr.f32.gmra.mxu0 %v60
    %v3232 = vpop.f32.mrf.mxu0
    %v3233 = vadd.f32 0.0, %v3232
    %v3234 = vpop.f32.mrf.mxu0
    %3235 = vmatprep.mubr.f32.mxu0 0.0
    %3236 = vmatmul.mubr.f32.gmra.mxu0 %v63
    %v3237 = vpop.f32.mrf.mxu0
    %v3238 = vadd.f32 0.0, %v3237
    %v3239 = vpop.f32.mrf.mxu0
    %3240 = vdwg.mxu0
    %v3242 = vsel %vm58, %v3152, 0
    %3244 = vmatprep.subr.mxu0 0.0
    %3245 = vmatpush1.xpose.msra.mxu0 0.0
    %3246 = vmatprep.subr.mxu0 0.0
    %3247 = vmatpush1.xpose.msra.mxu0 0.0
    %3248 = vmatprep.subr.mxu0 0.0
    %3249 = vmatpush1.xpose.msra.mxu0 0.0
    %3250 = vmatprep.subr.mxu0 0.0
    %3251 = vmatpush1.xpose.msra.mxu0 0.0
    %3252 = vmatprep.subr.mxu0 0.0
    %3253 = vmatpush1.xpose.msra.mxu0 0.0
    %3254 = vmatprep.subr.mxu0 0.0
    %3255 = vmatpush1.xpose.msra.mxu0 0.0
    %3256 = vmatprep.subr.mxu0 0.0
    %3257 = vmatpush1.xpose.msra.mxu0 0.0
    %3258 = vmatprep.subr.mxu0 0.0
    %3259 = vmatpush1.xpose.msra.mxu0 0.0
    %3260 = vmatprep.subr.mxu0 0.0
    %3261 = vmatpush1.xpose.msra.mxu0 0.0
    %3262 = vmatprep.subr.mxu0 0.0
    %3263 = vmatpush1.xpose.msra.mxu0 0.0
    %3264 = vmatprep.subr.mxu0 0.0
    %3265 = vmatpush1.xpose.msra.mxu0 0.0
    %3266 = vmatprep.subr.mxu0 0.0
    %3267 = vmatpush1.xpose.msra.mxu0 0.0
    %3268 = vmatprep.subr.mxu0 0.0
    %3269 = vmatpush1.xpose.msra.mxu0 0.0
    %3270 = vmatprep.subr.mxu0 0.0
    %3271 = vmatpush1.xpose.msra.mxu0 0.0
    %3272 = vmatprep.subr.mxu0 0.0
    %3273 = vmatpush1.xpose.msra.mxu0 0.0
    %3274 = vmatprep.subr.mxu0 0.0
    %3275 = vmatpush1.xpose.msra.mxu0 %v3242
    %3276 = vmatprep.subr.mxu0 0.0
    %3277 = vmatpush2.xpose.msra.mxu0 0.0
    %3278 = vmatprep.subr.mxu0 0.0
    %3279 = vmatpush2.xpose.msra.mxu0 0.0
    %3280 = vmatprep.subr.mxu0 0.0
    %3281 = vmatpush2.xpose.msra.mxu0 0.0
    %3282 = vmatprep.subr.mxu0 0.0
    %3283 = vmatpush2.xpose.msra.mxu0 0.0
    %3284 = vmatprep.subr.mxu0 0.0
    %3285 = vmatpush2.xpose.msra.mxu0 0.0
    %3286 = vmatprep.subr.mxu0 0.0
    %3287 = vmatpush2.xpose.msra.mxu0 0.0
    %3288 = vmatprep.subr.mxu0 0.0
    %3289 = vmatpush2.xpose.msra.mxu0 0.0
    %3290 = vmatprep.subr.mxu0 0.0
    %3291 = vmatpush2.xpose.msra.mxu0 0.0
    %3292 = vmatprep.subr.mxu0 0.0
    %3293 = vmatpush2.xpose.msra.mxu0 0.0
    %3294 = vmatprep.subr.mxu0 0.0
    %3295 = vmatpush2.xpose.msra.mxu0 0.0
    %3296 = vmatprep.subr.mxu0 0.0
    %3297 = vmatpush2.xpose.msra.mxu0 0.0
    %3298 = vmatprep.subr.mxu0 0.0
    %3299 = vmatpush2.xpose.msra.mxu0 0.0
    %3300 = vmatprep.subr.mxu0 0.0
    %3301 = vmatpush2.xpose.msra.mxu0 0.0
    %3302 = vmatprep.subr.mxu0 0.0
    %3303 = vmatpush2.xpose.msra.mxu0 0.0
    %3304 = vmatprep.subr.mxu0 0.0
    %3305 = vmatpush2.xpose.msra.mxu0 0.0
    %3306 = vmatprep.subr.mxu0 0.0
    %3307 = vmatpush2.xpose.msra.mxu0 0.0
    %3308 = vmatprep.mubr.f32.mxu0 0.0
    %3309 = vmatmul.mubr.f32.gmra.mxu0 %v60
    %v3310 = vpop.f32.mrf.mxu0
    %v3311 = vadd.f32 0.0, %v3310
    %v3312 = vpop.f32.mrf.mxu0
    %3313 = vmatprep.mubr.f32.mxu0 0.0
    %3314 = vmatmul.mubr.f32.gmra.mxu0 %v63
    %v3315 = vpop.f32.mrf.mxu0
    %v3316 = vadd.f32 0.0, %v3315
    %v3317 = vpop.f32.mrf.mxu0
    %3318 = vdwg.mxu0
    %v3320 = vsel %vm58, %v3153, 0
    %3322 = vmatprep.subr.mxu0 0.0
    %3323 = vmatpush1.xpose.msra.mxu0 0.0
    %3324 = vmatprep.subr.mxu0 0.0
    %3325 = vmatpush1.xpose.msra.mxu0 0.0
    %3326 = vmatprep.subr.mxu0 0.0
    %3327 = vmatpush1.xpose.msra.mxu0 0.0
    %3328 = vmatprep.subr.mxu0 0.0
    %3329 = vmatpush1.xpose.msra.mxu0 0.0
    %3330 = vmatprep.subr.mxu0 0.0
    %3331 = vmatpush1.xpose.msra.mxu0 0.0
    %3332 = vmatprep.subr.mxu0 0.0
    %3333 = vmatpush1.xpose.msra.mxu0 0.0
    %3334 = vmatprep.subr.mxu0 0.0
    %3335 = vmatpush1.xpose.msra.mxu0 0.0
    %3336 = vmatprep.subr.mxu0 0.0
    %3337 = vmatpush1.xpose.msra.mxu0 0.0
    %3338 = vmatprep.subr.mxu0 0.0
    %3339 = vmatpush1.xpose.msra.mxu0 0.0
    %3340 = vmatprep.subr.mxu0 0.0
    %3341 = vmatpush1.xpose.msra.mxu0 0.0
    %3342 = vmatprep.subr.mxu0 0.0
    %3343 = vmatpush1.xpose.msra.mxu0 0.0
    %3344 = vmatprep.subr.mxu0 0.0
    %3345 = vmatpush1.xpose.msra.mxu0 0.0
    %3346 = vmatprep.subr.mxu0 0.0
    %3347 = vmatpush1.xpose.msra.mxu0 0.0
    %3348 = vmatprep.subr.mxu0 0.0
    %3349 = vmatpush1.xpose.msra.mxu0 0.0
    %3350 = vmatprep.subr.mxu0 0.0
    %3351 = vmatpush1.xpose.msra.mxu0 0.0
    %3352 = vmatprep.subr.mxu0 0.0
    %3353 = vmatpush1.xpose.msra.mxu0 %v3320
    %3354 = vmatprep.subr.mxu0 0.0
    %3355 = vmatpush2.xpose.msra.mxu0 0.0
    %3356 = vmatprep.subr.mxu0 0.0
    %3357 = vmatpush2.xpose.msra.mxu0 0.0
    %3358 = vmatprep.subr.mxu0 0.0
    %3359 = vmatpush2.xpose.msra.mxu0 0.0
    %3360 = vmatprep.subr.mxu0 0.0
    %3361 = vmatpush2.xpose.msra.mxu0 0.0
    %3362 = vmatprep.subr.mxu0 0.0
    %3363 = vmatpush2.xpose.msra.mxu0 0.0
    %3364 = vmatprep.subr.mxu0 0.0
    %3365 = vmatpush2.xpose.msra.mxu0 0.0
    %3366 = vmatprep.subr.mxu0 0.0
    %3367 = vmatpush2.xpose.msra.mxu0 0.0
    %3368 = vmatprep.subr.mxu0 0.0
    %3369 = vmatpush2.xpose.msra.mxu0 0.0
    %3370 = vmatprep.subr.mxu0 0.0
    %3371 = vmatpush2.xpose.msra.mxu0 0.0
    %3372 = vmatprep.subr.mxu0 0.0
    %3373 = vmatpush2.xpose.msra.mxu0 0.0
    %3374 = vmatprep.subr.mxu0 0.0
    %3375 = vmatpush2.xpose.msra.mxu0 0.0
    %3376 = vmatprep.subr.mxu0 0.0
    %3377 = vmatpush2.xpose.msra.mxu0 0.0
    %3378 = vmatprep.subr.mxu0 0.0
    %3379 = vmatpush2.xpose.msra.mxu0 0.0
    %3380 = vmatprep.subr.mxu0 0.0
    %3381 = vmatpush2.xpose.msra.mxu0 0.0
    %3382 = vmatprep.subr.mxu0 0.0
    %3383 = vmatpush2.xpose.msra.mxu0 0.0
    %3384 = vmatprep.subr.mxu0 0.0
    %3385 = vmatpush2.xpose.msra.mxu0 0.0
    %3386 = vmatprep.mubr.f32.mxu0 0.0
    %3387 = vmatmul.mubr.f32.gmra.mxu0 %v60
    %v3388 = vpop.f32.mrf.mxu0
    %v3389 = vadd.f32 0.0, %v3388
    %v3390 = vpop.f32.mrf.mxu0
    %3391 = vmatprep.mubr.f32.mxu0 0.0
    %3392 = vmatmul.mubr.f32.gmra.mxu0 %v63
    %v3393 = vpop.f32.mrf.mxu0
    %v3394 = vadd.f32 0.0, %v3393
    %v3395 = vpop.f32.mrf.mxu0
    %3396 = vdwg.mxu0
    %v3398 = vsel %vm58, %v3154, 0
    %3400 = vmatprep.subr.mxu0 0.0
    %3401 = vmatpush1.xpose.msra.mxu0 0.0
    %3402 = vmatprep.subr.mxu0 0.0
    %3403 = vmatpush1.xpose.msra.mxu0 0.0
    %3404 = vmatprep.subr.mxu0 0.0
    %3405 = vmatpush1.xpose.msra.mxu0 0.0
    %3406 = vmatprep.subr.mxu0 0.0
    %3407 = vmatpush1.xpose.msra.mxu0 0.0
    %3408 = vmatprep.subr.mxu0 0.0
    %3409 = vmatpush1.xpose.msra.mxu0 0.0
    %3410 = vmatprep.subr.mxu0 0.0
    %3411 = vmatpush1.xpose.msra.mxu0 0.0
    %3412 = vmatprep.subr.mxu0 0.0
    %3413 = vmatpush1.xpose.msra.mxu0 0.0
    %3414 = vmatprep.subr.mxu0 0.0
    %3415 = vmatpush1.xpose.msra.mxu0 0.0
    %3416 = vmatprep.subr.mxu0 0.0
    %3417 = vmatpush1.xpose.msra.mxu0 0.0
    %3418 = vmatprep.subr.mxu0 0.0
    %3419 = vmatpush1.xpose.msra.mxu0 0.0
    %3420 = vmatprep.subr.mxu0 0.0
    %3421 = vmatpush1.xpose.msra.mxu0 0.0
    %3422 = vmatprep.subr.mxu0 0.0
    %3423 = vmatpush1.xpose.msra.mxu0 0.0
    %3424 = vmatprep.subr.mxu0 0.0
    %3425 = vmatpush1.xpose.msra.mxu0 0.0
    %3426 = vmatprep.subr.mxu0 0.0
    %3427 = vmatpush1.xpose.msra.mxu0 0.0
    %3428 = vmatprep.subr.mxu0 0.0
    %3429 = vmatpush1.xpose.msra.mxu0 0.0
    %3430 = vmatprep.subr.mxu0 0.0
    %3431 = vmatpush1.xpose.msra.mxu0 %v3398
    %3432 = vmatprep.subr.mxu0 0.0
    %3433 = vmatpush2.xpose.msra.mxu0 0.0
    %3434 = vmatprep.subr.mxu0 0.0
    %3435 = vmatpush2.xpose.msra.mxu0 0.0
    %3436 = vmatprep.subr.mxu0 0.0
    %3437 = vmatpush2.xpose.msra.mxu0 0.0
    %3438 = vmatprep.subr.mxu0 0.0
    %3439 = vmatpush2.xpose.msra.mxu0 0.0
    %3440 = vmatprep.subr.mxu0 0.0
    %3441 = vmatpush2.xpose.msra.mxu0 0.0
    %3442 = vmatprep.subr.mxu0 0.0
    %3443 = vmatpush2.xpose.msra.mxu0 0.0
    %3444 = vmatprep.subr.mxu0 0.0
    %3445 = vmatpush2.xpose.msra.mxu0 0.0
    %3446 = vmatprep.subr.mxu0 0.0
    %3447 = vmatpush2.xpose.msra.mxu0 0.0
    %3448 = vmatprep.subr.mxu0 0.0
    %3449 = vmatpush2.xpose.msra.mxu0 0.0
    %3450 = vmatprep.subr.mxu0 0.0
    %3451 = vmatpush2.xpose.msra.mxu0 0.0
    %3452 = vmatprep.subr.mxu0 0.0
    %3453 = vmatpush2.xpose.msra.mxu0 0.0
    %3454 = vmatprep.subr.mxu0 0.0
    %3455 = vmatpush2.xpose.msra.mxu0 0.0
    %3456 = vmatprep.subr.mxu0 0.0
    %3457 = vmatpush2.xpose.msra.mxu0 0.0
    %3458 = vmatprep.subr.mxu0 0.0
    %3459 = vmatpush2.xpose.msra.mxu0 0.0
    %3460 = vmatprep.subr.mxu0 0.0
    %3461 = vmatpush2.xpose.msra.mxu0 0.0
    %3462 = vmatprep.subr.mxu0 0.0
    %3463 = vmatpush2.xpose.msra.mxu0 0.0
    %3464 = vmatprep.mubr.f32.mxu0 0.0
    %3465 = vmatmul.mubr.f32.gmra.mxu0 %v60
    %v3466 = vpop.f32.mrf.mxu0
    %v3467 = vadd.f32 0.0, %v3466
    %v3468 = vpop.f32.mrf.mxu0
    %3469 = vmatprep.mubr.f32.mxu0 0.0
    %3470 = vmatmul.mubr.f32.gmra.mxu0 %v63
    %v3471 = vpop.f32.mrf.mxu0
    %v3472 = vadd.f32 0.0, %v3471
    %v3473 = vpop.f32.mrf.mxu0
    %3474 = vdwg.mxu0
    %v3476 = vsel %vm58, %v3155, 0
    %3478 = vmatprep.subr.mxu0 0.0
    %3479 = vmatpush1.xpose.msra.mxu0 0.0
    %3480 = vmatprep.subr.mxu0 0.0
    %3481 = vmatpush1.xpose.msra.mxu0 0.0
    %3482 = vmatprep.subr.mxu0 0.0
    %3483 = vmatpush1.xpose.msra.mxu0 0.0
    %3484 = vmatprep.subr.mxu0 0.0
    %3485 = vmatpush1.xpose.msra.mxu0 0.0
    %3486 = vmatprep.subr.mxu0 0.0
    %3487 = vmatpush1.xpose.msra.mxu0 0.0
    %3488 = vmatprep.subr.mxu0 0.0
    %3489 = vmatpush1.xpose.msra.mxu0 0.0
    %3490 = vmatprep.subr.mxu0 0.0
    %3491 = vmatpush1.xpose.msra.mxu0 0.0
    %3492 = vmatprep.subr.mxu0 0.0
    %3493 = vmatpush1.xpose.msra.mxu0 0.0
    %3494 = vmatprep.subr.mxu0 0.0
    %3495 = vmatpush1.xpose.msra.mxu0 0.0
    %3496 = vmatprep.subr.mxu0 0.0
    %3497 = vmatpush1.xpose.msra.mxu0 0.0
    %3498 = vmatprep.subr.mxu0 0.0
    %3499 = vmatpush1.xpose.msra.mxu0 0.0
    %3500 = vmatprep.subr.mxu0 0.0
    %3501 = vmatpush1.xpose.msra.mxu0 0.0
    %3502 = vmatprep.subr.mxu0 0.0
    %3503 = vmatpush1.xpose.msra.mxu0 0.0
    %3504 = vmatprep.subr.mxu0 0.0
    %3505 = vmatpush1.xpose.msra.mxu0 0.0
    %3506 = vmatprep.subr.mxu0 0.0
    %3507 = vmatpush1.xpose.msra.mxu0 0.0
    %3508 = vmatprep.subr.mxu0 0.0
    %3509 = vmatpush1.xpose.msra.mxu0 %v3476
    %3510 = vmatprep.subr.mxu0 0.0
    %3511 = vmatpush2.xpose.msra.mxu0 0.0
    %3512 = vmatprep.subr.mxu0 0.0
    %3513 = vmatpush2.xpose.msra.mxu0 0.0
    %3514 = vmatprep.subr.mxu0 0.0
    %3515 = vmatpush2.xpose.msra.mxu0 0.0
    %3516 = vmatprep.subr.mxu0 0.0
    %3517 = vmatpush2.xpose.msra.mxu0 0.0
    %3518 = vmatprep.subr.mxu0 0.0
    %3519 = vmatpush2.xpose.msra.mxu0 0.0
    %3520 = vmatprep.subr.mxu0 0.0
    %3521 = vmatpush2.xpose.msra.mxu0 0.0
    %3522 = vmatprep.subr.mxu0 0.0
    %3523 = vmatpush2.xpose.msra.mxu0 0.0
    %3524 = vmatprep.subr.mxu0 0.0
    %3525 = vmatpush2.xpose.msra.mxu0 0.0
    %3526 = vmatprep.subr.mxu0 0.0
    %3527 = vmatpush2.xpose.msra.mxu0 0.0
    %3528 = vmatprep.subr.mxu0 0.0
    %3529 = vmatpush2.xpose.msra.mxu0 0.0
    %3530 = vmatprep.subr.mxu0 0.0
    %3531 = vmatpush2.xpose.msra.mxu0 0.0
    %3532 = vmatprep.subr.mxu0 0.0
    %3533 = vmatpush2.xpose.msra.mxu0 0.0
    %3534 = vmatprep.subr.mxu0 0.0
    %3535 = vmatpush2.xpose.msra.mxu0 0.0
    %3536 = vmatprep.subr.mxu0 0.0
    %3537 = vmatpush2.xpose.msra.mxu0 0.0
    %3538 = vmatprep.subr.mxu0 0.0
    %3539 = vmatpush2.xpose.msra.mxu0 0.0
    %3540 = vmatprep.subr.mxu0 0.0
    %3541 = vmatpush2.xpose.msra.mxu0 0.0
    %3542 = vmatprep.mubr.f32.mxu0 0.0
    %3543 = vmatmul.mubr.f32.gmra.mxu0 %v378
    %v3544 = vpop.f32.mrf.mxu0
    %v3545 = vadd.f32 0.0, %v3544
    %v3546 = vpop.f32.mrf.mxu0
    %3547 = vmatprep.mubr.f32.mxu0 0.0
    %3548 = vmatmul.mubr.f32.gmra.mxu0 %v381
    %v3549 = vpop.f32.mrf.mxu0
    %v3550 = vadd.f32 0.0, %v3549
    %v3551 = vpop.f32.mrf.mxu0
    %3552 = vdwg.mxu0
    %v3554 = vsel %vm58, %v3156, 0
    %3556 = vmatprep.subr.mxu0 0.0
    %3557 = vmatpush1.xpose.msra.mxu0 0.0
    %3558 = vmatprep.subr.mxu0 0.0
    %3559 = vmatpush1.xpose.msra.mxu0 0.0
    %3560 = vmatprep.subr.mxu0 0.0
    %3561 = vmatpush1.xpose.msra.mxu0 0.0
    %3562 = vmatprep.subr.mxu0 0.0
    %3563 = vmatpush1.xpose.msra.mxu0 0.0
    %3564 = vmatprep.subr.mxu0 0.0
    %3565 = vmatpush1.xpose.msra.mxu0 0.0
    %3566 = vmatprep.subr.mxu0 0.0
    %3567 = vmatpush1.xpose.msra.mxu0 0.0
    %3568 = vmatprep.subr.mxu0 0.0
    %3569 = vmatpush1.xpose.msra.mxu0 0.0
    %3570 = vmatprep.subr.mxu0 0.0
    %3571 = vmatpush1.xpose.msra.mxu0 0.0
    %3572 = vmatprep.subr.mxu0 0.0
    %3573 = vmatpush1.xpose.msra.mxu0 0.0
    %3574 = vmatprep.subr.mxu0 0.0
    %3575 = vmatpush1.xpose.msra.mxu0 0.0
    %3576 = vmatprep.subr.mxu0 0.0
    %3577 = vmatpush1.xpose.msra.mxu0 0.0
    %3578 = vmatprep.subr.mxu0 0.0
    %3579 = vmatpush1.xpose.msra.mxu0 0.0
    %3580 = vmatprep.subr.mxu0 0.0
    %3581 = vmatpush1.xpose.msra.mxu0 0.0
    %3582 = vmatprep.subr.mxu0 0.0
    %3583 = vmatpush1.xpose.msra.mxu0 0.0
    %3584 = vmatprep.subr.mxu0 0.0
    %3585 = vmatpush1.xpose.msra.mxu0 0.0
    %3586 = vmatprep.subr.mxu0 0.0
    %3587 = vmatpush1.xpose.msra.mxu0 %v3554
    %3588 = vmatprep.subr.mxu0 0.0
    %3589 = vmatpush2.xpose.msra.mxu0 0.0
    %3590 = vmatprep.subr.mxu0 0.0
    %3591 = vmatpush2.xpose.msra.mxu0 0.0
    %3592 = vmatprep.subr.mxu0 0.0
    %3593 = vmatpush2.xpose.msra.mxu0 0.0
    %3594 = vmatprep.subr.mxu0 0.0
    %3595 = vmatpush2.xpose.msra.mxu0 0.0
    %3596 = vmatprep.subr.mxu0 0.0
    %3597 = vmatpush2.xpose.msra.mxu0 0.0
    %3598 = vmatprep.subr.mxu0 0.0
    %3599 = vmatpush2.xpose.msra.mxu0 0.0
    %3600 = vmatprep.subr.mxu0 0.0
    %3601 = vmatpush2.xpose.msra.mxu0 0.0
    %3602 = vmatprep.subr.mxu0 0.0
    %3603 = vmatpush2.xpose.msra.mxu0 0.0
    %3604 = vmatprep.subr.mxu0 0.0
    %3605 = vmatpush2.xpose.msra.mxu0 0.0
    %3606 = vmatprep.subr.mxu0 0.0
    %3607 = vmatpush2.xpose.msra.mxu0 0.0
    %3608 = vmatprep.subr.mxu0 0.0
    %3609 = vmatpush2.xpose.msra.mxu0 0.0
    %3610 = vmatprep.subr.mxu0 0.0
    %3611 = vmatpush2.xpose.msra.mxu0 0.0
    %3612 = vmatprep.subr.mxu0 0.0
    %3613 = vmatpush2.xpose.msra.mxu0 0.0
    %3614 = vmatprep.subr.mxu0 0.0
    %3615 = vmatpush2.xpose.msra.mxu0 0.0
    %3616 = vmatprep.subr.mxu0 0.0
    %3617 = vmatpush2.xpose.msra.mxu0 0.0
    %3618 = vmatprep.subr.mxu0 0.0
    %3619 = vmatpush2.xpose.msra.mxu0 0.0
    %3620 = vmatprep.mubr.f32.mxu0 0.0
    %3621 = vmatmul.mubr.f32.gmra.mxu0 %v378
    %v3622 = vpop.f32.mrf.mxu0
    %v3623 = vadd.f32 0.0, %v3622
    %v3624 = vpop.f32.mrf.mxu0
    %3625 = vmatprep.mubr.f32.mxu0 0.0
    %3626 = vmatmul.mubr.f32.gmra.mxu0 %v381
    %v3627 = vpop.f32.mrf.mxu0
    %v3628 = vadd.f32 0.0, %v3627
    %v3629 = vpop.f32.mrf.mxu0
    %3630 = vdwg.mxu0
    %v3632 = vsel %vm58, %v3157, 0
    %3634 = vmatprep.subr.mxu0 0.0
    %3635 = vmatpush1.xpose.msra.mxu0 0.0
    %3636 = vmatprep.subr.mxu0 0.0
    %3637 = vmatpush1.xpose.msra.mxu0 0.0
    %3638 = vmatprep.subr.mxu0 0.0
    %3639 = vmatpush1.xpose.msra.mxu0 0.0
    %3640 = vmatprep.subr.mxu0 0.0
    %3641 = vmatpush1.xpose.msra.mxu0 0.0
    %3642 = vmatprep.subr.mxu0 0.0
    %3643 = vmatpush1.xpose.msra.mxu0 0.0
    %3644 = vmatprep.subr.mxu0 0.0
    %3645 = vmatpush1.xpose.msra.mxu0 0.0
    %3646 = vmatprep.subr.mxu0 0.0
    %3647 = vmatpush1.xpose.msra.mxu0 0.0
    %3648 = vmatprep.subr.mxu0 0.0
    %3649 = vmatpush1.xpose.msra.mxu0 0.0
    %3650 = vmatprep.subr.mxu0 0.0
    %3651 = vmatpush1.xpose.msra.mxu0 0.0
    %3652 = vmatprep.subr.mxu0 0.0
    %3653 = vmatpush1.xpose.msra.mxu0 0.0
    %3654 = vmatprep.subr.mxu0 0.0
    %3655 = vmatpush1.xpose.msra.mxu0 0.0
    %3656 = vmatprep.subr.mxu0 0.0
    %3657 = vmatpush1.xpose.msra.mxu0 0.0
    %3658 = vmatprep.subr.mxu0 0.0
    %3659 = vmatpush1.xpose.msra.mxu0 0.0
    %3660 = vmatprep.subr.mxu0 0.0
    %3661 = vmatpush1.xpose.msra.mxu0 0.0
    %3662 = vmatprep.subr.mxu0 0.0
    %3663 = vmatpush1.xpose.msra.mxu0 0.0
    %3664 = vmatprep.subr.mxu0 0.0
    %3665 = vmatpush1.xpose.msra.mxu0 %v3632
    %3666 = vmatprep.subr.mxu0 0.0
    %3667 = vmatpush2.xpose.msra.mxu0 0.0
    %3668 = vmatprep.subr.mxu0 0.0
    %3669 = vmatpush2.xpose.msra.mxu0 0.0
    %3670 = vmatprep.subr.mxu0 0.0
    %3671 = vmatpush2.xpose.msra.mxu0 0.0
    %3672 = vmatprep.subr.mxu0 0.0
    %3673 = vmatpush2.xpose.msra.mxu0 0.0
    %3674 = vmatprep.subr.mxu0 0.0
    %3675 = vmatpush2.xpose.msra.mxu0 0.0
    %3676 = vmatprep.subr.mxu0 0.0
    %3677 = vmatpush2.xpose.msra.mxu0 0.0
    %3678 = vmatprep.subr.mxu0 0.0
    %3679 = vmatpush2.xpose.msra.mxu0 0.0
    %3680 = vmatprep.subr.mxu0 0.0
    %3681 = vmatpush2.xpose.msra.mxu0 0.0
    %3682 = vmatprep.subr.mxu0 0.0
    %3683 = vmatpush2.xpose.msra.mxu0 0.0
    %3684 = vmatprep.subr.mxu0 0.0
    %3685 = vmatpush2.xpose.msra.mxu0 0.0
    %3686 = vmatprep.subr.mxu0 0.0
    %3687 = vmatpush2.xpose.msra.mxu0 0.0
    %3688 = vmatprep.subr.mxu0 0.0
    %3689 = vmatpush2.xpose.msra.mxu0 0.0
    %3690 = vmatprep.subr.mxu0 0.0
    %3691 = vmatpush2.xpose.msra.mxu0 0.0
    %3692 = vmatprep.subr.mxu0 0.0
    %3693 = vmatpush2.xpose.msra.mxu0 0.0
    %3694 = vmatprep.subr.mxu0 0.0
    %3695 = vmatpush2.xpose.msra.mxu0 0.0
    %3696 = vmatprep.subr.mxu0 0.0
    %3697 = vmatpush2.xpose.msra.mxu0 0.0
    %3698 = vmatprep.mubr.f32.mxu0 0.0
    %3699 = vmatmul.mubr.f32.gmra.mxu0 %v378
    %v3700 = vpop.f32.mrf.mxu0
    %v3701 = vadd.f32 0.0, %v3700
    %v3702 = vpop.f32.mrf.mxu0
    %3703 = vmatprep.mubr.f32.mxu0 0.0
    %3704 = vmatmul.mubr.f32.gmra.mxu0 %v381
    %v3705 = vpop.f32.mrf.mxu0
    %v3706 = vadd.f32 0.0, %v3705
    %v3707 = vpop.f32.mrf.mxu0
    %3708 = vdwg.mxu0
    %v3710 = vsel %vm58, %v3158, 0
    %3712 = vmatprep.subr.mxu0 0.0
    %3713 = vmatpush1.xpose.msra.mxu0 0.0
    %3714 = vmatprep.subr.mxu0 0.0
    %3715 = vmatpush1.xpose.msra.mxu0 0.0
    %3716 = vmatprep.subr.mxu0 0.0
    %3717 = vmatpush1.xpose.msra.mxu0 0.0
    %3718 = vmatprep.subr.mxu0 0.0
    %3719 = vmatpush1.xpose.msra.mxu0 0.0
    %3720 = vmatprep.subr.mxu0 0.0
    %3721 = vmatpush1.xpose.msra.mxu0 0.0
    %3722 = vmatprep.subr.mxu0 0.0
    %3723 = vmatpush1.xpose.msra.mxu0 0.0
    %3724 = vmatprep.subr.mxu0 0.0
    %3725 = vmatpush1.xpose.msra.mxu0 0.0
    %3726 = vmatprep.subr.mxu0 0.0
    %3727 = vmatpush1.xpose.msra.mxu0 0.0
    %3728 = vmatprep.subr.mxu0 0.0
    %3729 = vmatpush1.xpose.msra.mxu0 0.0
    %3730 = vmatprep.subr.mxu0 0.0
    %3731 = vmatpush1.xpose.msra.mxu0 0.0
    %3732 = vmatprep.subr.mxu0 0.0
    %3733 = vmatpush1.xpose.msra.mxu0 0.0
    %3734 = vmatprep.subr.mxu0 0.0
    %3735 = vmatpush1.xpose.msra.mxu0 0.0
    %3736 = vmatprep.subr.mxu0 0.0
    %3737 = vmatpush1.xpose.msra.mxu0 0.0
    %3738 = vmatprep.subr.mxu0 0.0
    %3739 = vmatpush1.xpose.msra.mxu0 0.0
    %3740 = vmatprep.subr.mxu0 0.0
    %3741 = vmatpush1.xpose.msra.mxu0 0.0
    %3742 = vmatprep.subr.mxu0 0.0
    %3743 = vmatpush1.xpose.msra.mxu0 %v3710
    %3744 = vmatprep.subr.mxu0 0.0
    %3745 = vmatpush2.xpose.msra.mxu0 0.0
    %3746 = vmatprep.subr.mxu0 0.0
    %3747 = vmatpush2.xpose.msra.mxu0 0.0
    %3748 = vmatprep.subr.mxu0 0.0
    %3749 = vmatpush2.xpose.msra.mxu0 0.0
    %3750 = vmatprep.subr.mxu0 0.0
    %3751 = vmatpush2.xpose.msra.mxu0 0.0
    %3752 = vmatprep.subr.mxu0 0.0
    %3753 = vmatpush2.xpose.msra.mxu0 0.0
    %3754 = vmatprep.subr.mxu0 0.0
    %3755 = vmatpush2.xpose.msra.mxu0 0.0
    %3756 = vmatprep.subr.mxu0 0.0
    %3757 = vmatpush2.xpose.msra.mxu0 0.0
    %3758 = vmatprep.subr.mxu0 0.0
    %3759 = vmatpush2.xpose.msra.mxu0 0.0
    %3760 = vmatprep.subr.mxu0 0.0
    %3761 = vmatpush2.xpose.msra.mxu0 0.0
    %3762 = vmatprep.subr.mxu0 0.0
    %3763 = vmatpush2.xpose.msra.mxu0 0.0
    %3764 = vmatprep.subr.mxu0 0.0
    %3765 = vmatpush2.xpose.msra.mxu0 0.0
    %3766 = vmatprep.subr.mxu0 0.0
    %3767 = vmatpush2.xpose.msra.mxu0 0.0
    %3768 = vmatprep.subr.mxu0 0.0
    %3769 = vmatpush2.xpose.msra.mxu0 0.0
    %3770 = vmatprep.subr.mxu0 0.0
    %3771 = vmatpush2.xpose.msra.mxu0 0.0
    %3772 = vmatprep.subr.mxu0 0.0
    %3773 = vmatpush2.xpose.msra.mxu0 0.0
    %3774 = vmatprep.subr.mxu0 0.0
    %3775 = vmatpush2.xpose.msra.mxu0 0.0
    %3776 = vmatprep.mubr.f32.mxu0 0.0
    %3777 = vmatmul.mubr.f32.gmra.mxu0 %v378
    %v3778 = vpop.f32.mrf.mxu0
    %v3779 = vadd.f32 0.0, %v3778
    %v3780 = vpop.f32.mrf.mxu0
    %3781 = vmatprep.mubr.f32.mxu0 0.0
    %3782 = vmatmul.mubr.f32.gmra.mxu0 %v381
    %v3783 = vpop.f32.mrf.mxu0
    %v3784 = vadd.f32 0.0, %v3783
    %v3785 = vpop.f32.mrf.mxu0
    %3786 = vdwg.mxu0
    %v3788 = vsel %vm58, %v3143, 0
    %v3791 = vsel %vm58, %v3144, 0
    %v3794 = vsel %vm58, %v3145, 0
    %v3797 = vsel %vm58, %v3146, 0
    %v3800 = vsel %vm58, %v3147, 0
    %3802 = vmatprep.subr.mxu0 0.0
    %3803 = vmatpush1.xpose.msra.mxu0 0.0
    %3804 = vmatprep.subr.mxu0 0.0
    %3805 = vmatpush1.xpose.msra.mxu0 0.0
    %3806 = vmatprep.subr.mxu0 0.0
    %3807 = vmatpush1.xpose.msra.mxu0 0.0
    %3808 = vmatprep.subr.mxu0 0.0
    %3809 = vmatpush1.xpose.msra.mxu0 0.0
    %3810 = vmatprep.subr.mxu0 0.0
    %3811 = vmatpush1.xpose.msra.mxu0 0.0
    %3812 = vmatprep.subr.mxu0 0.0
    %3813 = vmatpush1.xpose.msra.mxu0 0.0
    %3814 = vmatprep.subr.mxu0 0.0
    %3815 = vmatpush1.xpose.msra.mxu0 0.0
    %3816 = vmatprep.subr.mxu0 0.0
    %3817 = vmatpush1.xpose.msra.mxu0 0.0
    %3818 = vmatprep.subr.mxu0 0.0
    %3819 = vmatpush1.xpose.msra.mxu0 0.0
    %3820 = vmatprep.subr.mxu0 0.0
    %3821 = vmatpush1.xpose.msra.mxu0 0.0
    %3822 = vmatprep.subr.mxu0 0.0
    %3823 = vmatpush1.xpose.msra.mxu0 0.0
    %3824 = vmatprep.subr.mxu0 0.0
    %3825 = vmatpush1.xpose.msra.mxu0 0.0
    %3826 = vmatprep.subr.mxu0 0.0
    %3827 = vmatpush1.xpose.msra.mxu0 0.0
    %3828 = vmatprep.subr.mxu0 0.0
    %3829 = vmatpush1.xpose.msra.mxu0 0.0
    %3830 = vmatprep.subr.mxu0 0.0
    %3831 = vmatpush1.xpose.msra.mxu0 0.0
    %3832 = vmatprep.subr.mxu0 0.0
    %3833 = vmatpush1.xpose.msra.mxu0 %v3800
    %3834 = vmatprep.subr.mxu0 0.0
    %3835 = vmatpush2.xpose.msra.mxu0 0.0
    %3836 = vmatprep.subr.mxu0 0.0
    %3837 = vmatpush2.xpose.msra.mxu0 0.0
    %3838 = vmatprep.subr.mxu0 0.0
    %3839 = vmatpush2.xpose.msra.mxu0 0.0
    %3840 = vmatprep.subr.mxu0 0.0
    %3841 = vmatpush2.xpose.msra.mxu0 0.0
    %3842 = vmatprep.subr.mxu0 0.0
    %3843 = vmatpush2.xpose.msra.mxu0 0.0
    %3844 = vmatprep.subr.mxu0 0.0
    %3845 = vmatpush2.xpose.msra.mxu0 0.0
    %3846 = vmatprep.subr.mxu0 0.0
    %3847 = vmatpush2.xpose.msra.mxu0 0.0
    %3848 = vmatprep.subr.mxu0 0.0
    %3849 = vmatpush2.xpose.msra.mxu0 0.0
    %3850 = vmatprep.subr.mxu0 0.0
    %3851 = vmatpush2.xpose.msra.mxu0 0.0
    %3852 = vmatprep.subr.mxu0 0.0
    %3853 = vmatpush2.xpose.msra.mxu0 0.0
    %3854 = vmatprep.subr.mxu0 0.0
    %3855 = vmatpush2.xpose.msra.mxu0 0.0
    %3856 = vmatprep.subr.mxu0 0.0
    %3857 = vmatpush2.xpose.msra.mxu0 0.0
    %3858 = vmatprep.subr.mxu0 0.0
    %3859 = vmatpush2.xpose.msra.mxu0 0.0
    %3860 = vmatprep.subr.mxu0 0.0
    %3861 = vmatpush2.xpose.msra.mxu0 0.0
    %3862 = vmatprep.subr.mxu0 0.0
    %3863 = vmatpush2.xpose.msra.mxu0 0.0
    %3864 = vmatprep.subr.mxu0 0.0
    %3865 = vmatpush2.xpose.msra.mxu0 0.0
    %3866 = vmatprep.mubr.f32.mxu0 0.0
    %3867 = vmatmul.mubr.f32.gmra.mxu0 %v3788
    %v3868 = vpop.f32.mrf.mxu0
    %v3869 = vadd.f32 0.0, %v3868
    %v3870 = vpop.f32.mrf.mxu0
    %3871 = vmatprep.mubr.f32.mxu0 0.0
    %3872 = vmatmul.mubr.f32.gmra.mxu0 %v3791
    %v3873 = vpop.f32.mrf.mxu0
    %v3874 = vadd.f32 0.0, %v3873
    %v3875 = vpop.f32.mrf.mxu0
    %3876 = vmatprep.mubr.f32.mxu0 0.0
    %3877 = vmatmul.mubr.f32.gmra.mxu0 %v3794
    %v3878 = vpop.f32.mrf.mxu0
    %v3879 = vadd.f32 0.0, %v3878
    %v3880 = vpop.f32.mrf.mxu0
    %3881 = vmatprep.mubr.f32.mxu0 0.0
    %3882 = vmatmul.mubr.f32.gmra.mxu0 %v3797
    %v3883 = vpop.f32.mrf.mxu0
    %v3884 = vadd.f32 0.0, %v3883
    %v3885 = vpop.f32.mrf.mxu0
    %3886 = vdwg.mxu0
    %v3888 = vsel %vm58, %v3148, 0
    %3890 = vmatprep.subr.mxu0 0.0
    %3891 = vmatpush1.xpose.msra.mxu0 0.0
    %3892 = vmatprep.subr.mxu0 0.0
    %3893 = vmatpush1.xpose.msra.mxu0 0.0
    %3894 = vmatprep.subr.mxu0 0.0
    %3895 = vmatpush1.xpose.msra.mxu0 0.0
    %3896 = vmatprep.subr.mxu0 0.0
    %3897 = vmatpush1.xpose.msra.mxu0 0.0
    %3898 = vmatprep.subr.mxu0 0.0
    %3899 = vmatpush1.xpose.msra.mxu0 0.0
    %3900 = vmatprep.subr.mxu0 0.0
    %3901 = vmatpush1.xpose.msra.mxu0 0.0
    %3902 = vmatprep.subr.mxu0 0.0
    %3903 = vmatpush1.xpose.msra.mxu0 0.0
    %3904 = vmatprep.subr.mxu0 0.0
    %3905 = vmatpush1.xpose.msra.mxu0 0.0
    %3906 = vmatprep.subr.mxu0 0.0
    %3907 = vmatpush1.xpose.msra.mxu0 0.0
    %3908 = vmatprep.subr.mxu0 0.0
    %3909 = vmatpush1.xpose.msra.mxu0 0.0
    %3910 = vmatprep.subr.mxu0 0.0
    %3911 = vmatpush1.xpose.msra.mxu0 0.0
    %3912 = vmatprep.subr.mxu0 0.0
    %3913 = vmatpush1.xpose.msra.mxu0 0.0
    %3914 = vmatprep.subr.mxu0 0.0
    %3915 = vmatpush1.xpose.msra.mxu0 0.0
    %3916 = vmatprep.subr.mxu0 0.0
    %3917 = vmatpush1.xpose.msra.mxu0 0.0
    %3918 = vmatprep.subr.mxu0 0.0
    %3919 = vmatpush1.xpose.msra.mxu0 0.0
    %3920 = vmatprep.subr.mxu0 0.0
    %3921 = vmatpush1.xpose.msra.mxu0 %v3888
    %3922 = vmatprep.subr.mxu0 0.0
    %3923 = vmatpush2.xpose.msra.mxu0 0.0
    %3924 = vmatprep.subr.mxu0 0.0
    %3925 = vmatpush2.xpose.msra.mxu0 0.0
    %3926 = vmatprep.subr.mxu0 0.0
    %3927 = vmatpush2.xpose.msra.mxu0 0.0
    %3928 = vmatprep.subr.mxu0 0.0
    %3929 = vmatpush2.xpose.msra.mxu0 0.0
    %3930 = vmatprep.subr.mxu0 0.0
    %3931 = vmatpush2.xpose.msra.mxu0 0.0
    %3932 = vmatprep.subr.mxu0 0.0
    %3933 = vmatpush2.xpose.msra.mxu0 0.0
    %3934 = vmatprep.subr.mxu0 0.0
    %3935 = vmatpush2.xpose.msra.mxu0 0.0
    %3936 = vmatprep.subr.mxu0 0.0
    %3937 = vmatpush2.xpose.msra.mxu0 0.0
    %3938 = vmatprep.subr.mxu0 0.0
    %3939 = vmatpush2.xpose.msra.mxu0 0.0
    %3940 = vmatprep.subr.mxu0 0.0
    %3941 = vmatpush2.xpose.msra.mxu0 0.0
    %3942 = vmatprep.subr.mxu0 0.0
    %3943 = vmatpush2.xpose.msra.mxu0 0.0
    %3944 = vmatprep.subr.mxu0 0.0
    %3945 = vmatpush2.xpose.msra.mxu0 0.0
    %3946 = vmatprep.subr.mxu0 0.0
    %3947 = vmatpush2.xpose.msra.mxu0 0.0
    %3948 = vmatprep.subr.mxu0 0.0
    %3949 = vmatpush2.xpose.msra.mxu0 0.0
    %3950 = vmatprep.subr.mxu0 0.0
    %3951 = vmatpush2.xpose.msra.mxu0 0.0
    %3952 = vmatprep.subr.mxu0 0.0
    %3953 = vmatpush2.xpose.msra.mxu0 0.0
    %3954 = vmatprep.mubr.f32.mxu0 0.0
    %3955 = vmatmul.mubr.f32.gmra.mxu0 %v3788
    %v3956 = vpop.f32.mrf.mxu0
    %v3957 = vadd.f32 0.0, %v3956
    %v3958 = vpop.f32.mrf.mxu0
    %3959 = vmatprep.mubr.f32.mxu0 0.0
    %3960 = vmatmul.mubr.f32.gmra.mxu0 %v3791
    %v3961 = vpop.f32.mrf.mxu0
    %v3962 = vadd.f32 0.0, %v3961
    %v3963 = vpop.f32.mrf.mxu0
    %3964 = vmatprep.mubr.f32.mxu0 0.0
    %3965 = vmatmul.mubr.f32.gmra.mxu0 %v3794
    %v3966 = vpop.f32.mrf.mxu0
    %v3967 = vadd.f32 0.0, %v3966
    %v3968 = vpop.f32.mrf.mxu0
    %3969 = vmatprep.mubr.f32.mxu0 0.0
    %3970 = vmatmul.mubr.f32.gmra.mxu0 %v3797
    %v3971 = vpop.f32.mrf.mxu0
    %v3972 = vadd.f32 0.0, %v3971
    %v3973 = vpop.f32.mrf.mxu0
    %3974 = vdwg.mxu0
    %v3976 = vsel %vm58, %v3149, 0
    %3978 = vmatprep.subr.mxu0 0.0
    %3979 = vmatpush1.xpose.msra.mxu0 0.0
    %3980 = vmatprep.subr.mxu0 0.0
    %3981 = vmatpush1.xpose.msra.mxu0 0.0
    %3982 = vmatprep.subr.mxu0 0.0
    %3983 = vmatpush1.xpose.msra.mxu0 0.0
    %3984 = vmatprep.subr.mxu0 0.0
    %3985 = vmatpush1.xpose.msra.mxu0 0.0
    %3986 = vmatprep.subr.mxu0 0.0
    %3987 = vmatpush1.xpose.msra.mxu0 0.0
    %3988 = vmatprep.subr.mxu0 0.0
    %3989 = vmatpush1.xpose.msra.mxu0 0.0
    %3990 = vmatprep.subr.mxu0 0.0
    %3991 = vmatpush1.xpose.msra.mxu0 0.0
    %3992 = vmatprep.subr.mxu0 0.0
    %3993 = vmatpush1.xpose.msra.mxu0 0.0
    %3994 = vmatprep.subr.mxu0 0.0
    %3995 = vmatpush1.xpose.msra.mxu0 0.0
    %3996 = vmatprep.subr.mxu0 0.0
    %3997 = vmatpush1.xpose.msra.mxu0 0.0
    %3998 = vmatprep.subr.mxu0 0.0
    %3999 = vmatpush1.xpose.msra.mxu0 0.0
    %4000 = vmatprep.subr.mxu0 0.0
    %4001 = vmatpush1.xpose.msra.mxu0 0.0
    %4002 = vmatprep.subr.mxu0 0.0
    %4003 = vmatpush1.xpose.msra.mxu0 0.0
    %4004 = vmatprep.subr.mxu0 0.0
    %4005 = vmatpush1.xpose.msra.mxu0 0.0
    %4006 = vmatprep.subr.mxu0 0.0
    %4007 = vmatpush1.xpose.msra.mxu0 0.0
    %4008 = vmatprep.subr.mxu0 0.0
    %4009 = vmatpush1.xpose.msra.mxu0 %v3976
    %4010 = vmatprep.subr.mxu0 0.0
    %4011 = vmatpush2.xpose.msra.mxu0 0.0
    %4012 = vmatprep.subr.mxu0 0.0
    %4013 = vmatpush2.xpose.msra.mxu0 0.0
    %4014 = vmatprep.subr.mxu0 0.0
    %4015 = vmatpush2.xpose.msra.mxu0 0.0
    %4016 = vmatprep.subr.mxu0 0.0
    %4017 = vmatpush2.xpose.msra.mxu0 0.0
    %4018 = vmatprep.subr.mxu0 0.0
    %4019 = vmatpush2.xpose.msra.mxu0 0.0
    %4020 = vmatprep.subr.mxu0 0.0
    %4021 = vmatpush2.xpose.msra.mxu0 0.0
    %4022 = vmatprep.subr.mxu0 0.0
    %4023 = vmatpush2.xpose.msra.mxu0 0.0
    %4024 = vmatprep.subr.mxu0 0.0
    %4025 = vmatpush2.xpose.msra.mxu0 0.0
    %4026 = vmatprep.subr.mxu0 0.0
    %4027 = vmatpush2.xpose.msra.mxu0 0.0
    %4028 = vmatprep.subr.mxu0 0.0
    %4029 = vmatpush2.xpose.msra.mxu0 0.0
    %4030 = vmatprep.subr.mxu0 0.0
    %4031 = vmatpush2.xpose.msra.mxu0 0.0
    %4032 = vmatprep.subr.mxu0 0.0
    %4033 = vmatpush2.xpose.msra.mxu0 0.0
    %4034 = vmatprep.subr.mxu0 0.0
    %4035 = vmatpush2.xpose.msra.mxu0 0.0
    %4036 = vmatprep.subr.mxu0 0.0
    %4037 = vmatpush2.xpose.msra.mxu0 0.0
    %4038 = vmatprep.subr.mxu0 0.0
    %4039 = vmatpush2.xpose.msra.mxu0 0.0
    %4040 = vmatprep.subr.mxu0 0.0
    %4041 = vmatpush2.xpose.msra.mxu0 0.0
    %4042 = vmatprep.mubr.f32.mxu0 0.0
    %4043 = vmatmul.mubr.f32.gmra.mxu0 %v3788
    %v4044 = vpop.f32.mrf.mxu0
    %v4045 = vadd.f32 0.0, %v4044
    %v4046 = vpop.f32.mrf.mxu0
    %4047 = vmatprep.mubr.f32.mxu0 0.0
    %4048 = vmatmul.mubr.f32.gmra.mxu0 %v3791
    %v4049 = vpop.f32.mrf.mxu0
    %v4050 = vadd.f32 0.0, %v4049
    %v4051 = vpop.f32.mrf.mxu0
    %4052 = vmatprep.mubr.f32.mxu0 0.0
    %4053 = vmatmul.mubr.f32.gmra.mxu0 %v3794
    %v4054 = vpop.f32.mrf.mxu0
    %v4055 = vadd.f32 0.0, %v4054
    %v4056 = vpop.f32.mrf.mxu0
    %4057 = vmatprep.mubr.f32.mxu0 0.0
    %4058 = vmatmul.mubr.f32.gmra.mxu0 %v3797
    %v4059 = vpop.f32.mrf.mxu0
    %v4060 = vadd.f32 0.0, %v4059
    %v4061 = vpop.f32.mrf.mxu0
    %4062 = vdwg.mxu0
    %v4064 = vsel %vm58, %v3150, 0
    %4066 = vmatprep.subr.mxu0 0.0
    %4067 = vmatpush1.xpose.msra.mxu0 0.0
    %4068 = vmatprep.subr.mxu0 0.0
    %4069 = vmatpush1.xpose.msra.mxu0 0.0
    %4070 = vmatprep.subr.mxu0 0.0
    %4071 = vmatpush1.xpose.msra.mxu0 0.0
    %4072 = vmatprep.subr.mxu0 0.0
    %4073 = vmatpush1.xpose.msra.mxu0 0.0
    %4074 = vmatprep.subr.mxu0 0.0
    %4075 = vmatpush1.xpose.msra.mxu0 0.0
    %4076 = vmatprep.subr.mxu0 0.0
    %4077 = vmatpush1.xpose.msra.mxu0 0.0
    %4078 = vmatprep.subr.mxu0 0.0
    %4079 = vmatpush1.xpose.msra.mxu0 0.0
    %4080 = vmatprep.subr.mxu0 0.0
    %4081 = vmatpush1.xpose.msra.mxu0 0.0
    %4082 = vmatprep.subr.mxu0 0.0
    %4083 = vmatpush1.xpose.msra.mxu0 0.0
    %4084 = vmatprep.subr.mxu0 0.0
    %4085 = vmatpush1.xpose.msra.mxu0 0.0
    %4086 = vmatprep.subr.mxu0 0.0
    %4087 = vmatpush1.xpose.msra.mxu0 0.0
    %4088 = vmatprep.subr.mxu0 0.0
    %4089 = vmatpush1.xpose.msra.mxu0 0.0
    %4090 = vmatprep.subr.mxu0 0.0
    %4091 = vmatpush1.xpose.msra.mxu0 0.0
    %4092 = vmatprep.subr.mxu0 0.0
    %4093 = vmatpush1.xpose.msra.mxu0 0.0
    %4094 = vmatprep.subr.mxu0 0.0
    %4095 = vmatpush1.xpose.msra.mxu0 0.0
    %4096 = vmatprep.subr.mxu0 0.0
    %4097 = vmatpush1.xpose.msra.mxu0 %v4064
    %4098 = vmatprep.subr.mxu0 0.0
    %4099 = vmatpush2.xpose.msra.mxu0 0.0
    %4100 = vmatprep.subr.mxu0 0.0
    %4101 = vmatpush2.xpose.msra.mxu0 0.0
    %4102 = vmatprep.subr.mxu0 0.0
    %4103 = vmatpush2.xpose.msra.mxu0 0.0
    %4104 = vmatprep.subr.mxu0 0.0
    %4105 = vmatpush2.xpose.msra.mxu0 0.0
    %4106 = vmatprep.subr.mxu0 0.0
    %4107 = vmatpush2.xpose.msra.mxu0 0.0
    %4108 = vmatprep.subr.mxu0 0.0
    %4109 = vmatpush2.xpose.msra.mxu0 0.0
    %4110 = vmatprep.subr.mxu0 0.0
    %4111 = vmatpush2.xpose.msra.mxu0 0.0
    %4112 = vmatprep.subr.mxu0 0.0
    %4113 = vmatpush2.xpose.msra.mxu0 0.0
    %4114 = vmatprep.subr.mxu0 0.0
    %4115 = vmatpush2.xpose.msra.mxu0 0.0
    %4116 = vmatprep.subr.mxu0 0.0
    %4117 = vmatpush2.xpose.msra.mxu0 0.0
    %4118 = vmatprep.subr.mxu0 0.0
    %4119 = vmatpush2.xpose.msra.mxu0 0.0
    %4120 = vmatprep.subr.mxu0 0.0
    %4121 = vmatpush2.xpose.msra.mxu0 0.0
    %4122 = vmatprep.subr.mxu0 0.0
    %4123 = vmatpush2.xpose.msra.mxu0 0.0
    %4124 = vmatprep.subr.mxu0 0.0
    %4125 = vmatpush2.xpose.msra.mxu0 0.0
    %4126 = vmatprep.subr.mxu0 0.0
    %4127 = vmatpush2.xpose.msra.mxu0 0.0
    %4128 = vmatprep.subr.mxu0 0.0
    %4129 = vmatpush2.xpose.msra.mxu0 0.0
    %4130 = vmatprep.mubr.f32.mxu0 0.0
    %4131 = vmatmul.mubr.f32.gmra.mxu0 %v3788
    %v4132 = vpop.f32.mrf.mxu0
    %v4133 = vadd.f32 0.0, %v4132
    %v4134 = vpop.f32.mrf.mxu0
    %4135 = vmatprep.mubr.f32.mxu0 0.0
    %4136 = vmatmul.mubr.f32.gmra.mxu0 %v3791
    %v4137 = vpop.f32.mrf.mxu0
    %v4138 = vadd.f32 0.0, %v4137
    %v4139 = vpop.f32.mrf.mxu0
    %4140 = vmatprep.mubr.f32.mxu0 0.0
    %4141 = vmatmul.mubr.f32.gmra.mxu0 %v3794
    %v4142 = vpop.f32.mrf.mxu0
    %v4143 = vadd.f32 0.0, %v4142
    %v4144 = vpop.f32.mrf.mxu0
    %4145 = vmatprep.mubr.f32.mxu0 0.0
    %4146 = vmatmul.mubr.f32.gmra.mxu0 %v3797
    %v4147 = vpop.f32.mrf.mxu0
    %v4148 = vadd.f32 0.0, %v4147
    %v4149 = vpop.f32.mrf.mxu0
    %4150 = vdwg.mxu0
    %v4152 = vsel %vm1059, %v3869, 0
    %v4155 = vsel %vm1059, %v3874, 0
    %v4158 = vsel %vm1059, %v3233, 0
    %4160 = vmatprep.subr.mxu0 0.0
    %4161 = vmatpush1.xpose.msra.mxu0 0.0
    %4162 = vmatprep.subr.mxu0 0.0
    %4163 = vmatpush1.xpose.msra.mxu0 0.0
    %4164 = vmatprep.subr.mxu0 0.0
    %4165 = vmatpush1.xpose.msra.mxu0 0.0
    %4166 = vmatprep.subr.mxu0 0.0
    %4167 = vmatpush1.xpose.msra.mxu0 0.0
    %4168 = vmatprep.subr.mxu0 0.0
    %4169 = vmatpush1.xpose.msra.mxu0 0.0
    %4170 = vmatprep.subr.mxu0 0.0
    %4171 = vmatpush1.xpose.msra.mxu0 0.0
    %4172 = vmatprep.subr.mxu0 0.0
    %4173 = vmatpush1.xpose.msra.mxu0 0.0
    %4174 = vmatprep.subr.mxu0 0.0
    %4175 = vmatpush1.xpose.msra.mxu0 0.0
    %4176 = vmatprep.subr.mxu0 0.0
    %4177 = vmatpush1.xpose.msra.mxu0 0.0
    %4178 = vmatprep.subr.mxu0 0.0
    %4179 = vmatpush1.xpose.msra.mxu0 0.0
    %4180 = vmatprep.subr.mxu0 0.0
    %4181 = vmatpush1.xpose.msra.mxu0 0.0
    %4182 = vmatprep.subr.mxu0 0.0
    %4183 = vmatpush1.xpose.msra.mxu0 0.0
    %4184 = vmatprep.subr.mxu0 0.0
    %4185 = vmatpush1.xpose.msra.mxu0 0.0
    %4186 = vmatprep.subr.mxu0 0.0
    %4187 = vmatpush1.xpose.msra.mxu0 0.0
    %4188 = vmatprep.subr.mxu0 0.0
    %4189 = vmatpush1.xpose.msra.mxu0 0.0
    %4190 = vmatprep.subr.mxu0 0.0
    %4191 = vmatpush1.xpose.msra.mxu0 %v4158
    %4192 = vmatprep.subr.mxu0 0.0
    %4193 = vmatpush2.xpose.msra.mxu0 0.0
    %4194 = vmatprep.subr.mxu0 0.0
    %4195 = vmatpush2.xpose.msra.mxu0 0.0
    %4196 = vmatprep.subr.mxu0 0.0
    %4197 = vmatpush2.xpose.msra.mxu0 0.0
    %4198 = vmatprep.subr.mxu0 0.0
    %4199 = vmatpush2.xpose.msra.mxu0 0.0
    %4200 = vmatprep.subr.mxu0 0.0
    %4201 = vmatpush2.xpose.msra.mxu0 0.0
    %4202 = vmatprep.subr.mxu0 0.0
    %4203 = vmatpush2.xpose.msra.mxu0 0.0
    %4204 = vmatprep.subr.mxu0 0.0
    %4205 = vmatpush2.xpose.msra.mxu0 0.0
    %4206 = vmatprep.subr.mxu0 0.0
    %4207 = vmatpush2.xpose.msra.mxu0 0.0
    %4208 = vmatprep.subr.mxu0 0.0
    %4209 = vmatpush2.xpose.msra.mxu0 0.0
    %4210 = vmatprep.subr.mxu0 0.0
    %4211 = vmatpush2.xpose.msra.mxu0 0.0
    %4212 = vmatprep.subr.mxu0 0.0
    %4213 = vmatpush2.xpose.msra.mxu0 0.0
    %4214 = vmatprep.subr.mxu0 0.0
    %4215 = vmatpush2.xpose.msra.mxu0 0.0
    %4216 = vmatprep.subr.mxu0 0.0
    %4217 = vmatpush2.xpose.msra.mxu0 0.0
    %4218 = vmatprep.subr.mxu0 0.0
    %4219 = vmatpush2.xpose.msra.mxu0 0.0
    %4220 = vmatprep.subr.mxu0 0.0
    %4221 = vmatpush2.xpose.msra.mxu0 0.0
    %4222 = vmatprep.subr.mxu0 0.0
    %4223 = vmatpush2.xpose.msra.mxu0 0.0
    %4224 = vmatprep.mubr.f32.mxu0 0.0
    %4225 = vmatmul.mubr.f32.gmra.mxu0 %v4152
    %v4226 = vpop.f32.mrf.mxu0
    %v4227 = vadd.f32 0.0, %v4226
    %v4228 = vpop.f32.mrf.mxu0
    %4229 = vmatprep.mubr.f32.mxu0 0.0
    %4230 = vmatmul.mubr.f32.gmra.mxu0 %v4155
    %v4231 = vpop.f32.mrf.mxu0
    %v4232 = vadd.f32 0.0, %v4231
    %v4233 = vpop.f32.mrf.mxu0
    %4234 = vdwg.mxu0
    %v4235 = vmul.f32 %v4227, 0.35355338
    %v4236 = vmul.f32 %v4232, 0.35355338
    %v4237 = vsel %vm1059, %v4235, -inf
    %4238 = vmax.xlane.f32.xlu0 %v4237
    %v4239 = vpop.xlane.xlu0 %4238
    %v4240 = vsel %vm1059, %v4236, -inf
    %4241 = vmax.xlane.f32.xlu0 %v4240
    %v4242 = vpop.xlane.xlu0 %4241
    %v4243 = vsub.f32 %v4235, %v4239
    %v4244 = vsub.f32 %v4236, %v4242
    %v4245 = vmul.f32 %v4243, 1.442695
    %v4246 = vpow.pop %v4245
    %v4247 = vmul.f32 %v4244, 1.442695
    %v4248 = vpow.pop %v4247
    %v4249 = vsel %vm1059, %v4246, 0.0
    %4250 = vadd.xlane.f32.xlu0 %v4249
    %v4251 = vpop.xlane.xlu0 %4250
    %v4252 = vsel %vm1059, %v4248, 0.0
    %4253 = vadd.xlane.f32.xlu0 %v4252
    %v4254 = vpop.xlane.xlu0 %4253
    %v4255 = vrcp.pop %v4251
    %v4256 = vrcp.pop %v4254
    %v4257 = vmul.f32 %v4246, %v4255
    %v4258 = vmul.f32 %v4248, %v4256
    %v4260 = vsel %vm1059, %v4257, 0
    %v4263 = vsel %vm1059, %v4258, 0
    %4265 = vmatprep.subr.mxu0 0.0
    %4266 = vmatpush1.msra.mxu0 0.0
    %4267 = vmatprep.subr.mxu0 0.0
    %4268 = vmatpush1.msra.mxu0 0.0
    %4269 = vmatprep.subr.mxu0 0.0
    %4270 = vmatpush1.msra.mxu0 0.0
    %4271 = vmatprep.subr.mxu0 0.0
    %4272 = vmatpush1.msra.mxu0 0.0
    %4273 = vmatprep.subr.mxu0 0.0
    %4274 = vmatpush1.msra.mxu0 0.0
    %4275 = vmatprep.subr.mxu0 0.0
    %4276 = vmatpush1.msra.mxu0 0.0
    %4277 = vmatprep.subr.mxu0 0.0
    %4278 = vmatpush1.msra.mxu0 0.0
    %4279 = vmatprep.subr.mxu0 0.0
    %4280 = vmatpush1.msra.mxu0 0.0
    %4281 = vmatprep.subr.mxu0 0.0
    %4282 = vmatpush1.msra.mxu0 0.0
    %4283 = vmatprep.subr.mxu0 0.0
    %4284 = vmatpush1.msra.mxu0 0.0
    %4285 = vmatprep.subr.mxu0 0.0
    %4286 = vmatpush1.msra.mxu0 0.0
    %4287 = vmatprep.subr.mxu0 0.0
    %4288 = vmatpush1.msra.mxu0 0.0
    %4289 = vmatprep.subr.mxu0 0.0
    %4290 = vmatpush1.msra.mxu0 0.0
    %4291 = vmatprep.subr.mxu0 0.0
    %4292 = vmatpush1.msra.mxu0 0.0
    %4293 = vmatprep.subr.mxu0 0.0
    %4294 = vmatpush1.msra.mxu0 0.0
    %4295 = vmatprep.subr.mxu0 0.0
    %4296 = vmatpush1.msra.mxu0 %v3545
    %4297 = vmatprep.subr.mxu0 0.0
    %4298 = vmatpush2.msra.mxu0 0.0
    %4299 = vmatprep.subr.mxu0 0.0
    %4300 = vmatpush2.msra.mxu0 0.0
    %4301 = vmatprep.subr.mxu0 0.0
    %4302 = vmatpush2.msra.mxu0 0.0
    %4303 = vmatprep.subr.mxu0 0.0
    %4304 = vmatpush2.msra.mxu0 0.0
    %4305 = vmatprep.subr.mxu0 0.0
    %4306 = vmatpush2.msra.mxu0 0.0
    %4307 = vmatprep.subr.mxu0 0.0
    %4308 = vmatpush2.msra.mxu0 0.0
    %4309 = vmatprep.subr.mxu0 0.0
    %4310 = vmatpush2.msra.mxu0 0.0
    %4311 = vmatprep.subr.mxu0 0.0
    %4312 = vmatpush2.msra.mxu0 0.0
    %4313 = vmatprep.subr.mxu0 0.0
    %4314 = vmatpush2.msra.mxu0 0.0
    %4315 = vmatprep.subr.mxu0 0.0
    %4316 = vmatpush2.msra.mxu0 0.0
    %4317 = vmatprep.subr.mxu0 0.0
    %4318 = vmatpush2.msra.mxu0 0.0
    %4319 = vmatprep.subr.mxu0 0.0
    %4320 = vmatpush2.msra.mxu0 0.0
    %4321 = vmatprep.subr.mxu0 0.0
    %4322 = vmatpush2.msra.mxu0 0.0
    %4323 = vmatprep.subr.mxu0 0.0
    %4324 = vmatpush2.msra.mxu0 0.0
    %4325 = vmatprep.subr.mxu0 0.0
    %4326 = vmatpush2.msra.mxu0 0.0
    %4327 = vmatprep.subr.mxu0 0.0
    %4328 = vmatpush2.msra.mxu0 0.0
    %4329 = vmatprep.mubr.f32.mxu0 0.0
    %4330 = vmatmul.mubr.f32.gmra.mxu0 %v4260
    %v4331 = vpop.f32.mrf.mxu0
    %v4332 = vadd.f32 0.0, %v4331
    %v4333 = vpop.f32.mrf.mxu0
    %4334 = vmatprep.mubr.f32.mxu0 0.0
    %4335 = vmatmul.mubr.f32.gmra.mxu0 %v4263
    %v4336 = vpop.f32.mrf.mxu0
    %v4337 = vadd.f32 0.0, %v4336
    %v4338 = vpop.f32.mrf.mxu0
    %4339 = vdwg.mxu0
    %v4341 = vsel %vm1059, %v3957, 0
    %v4344 = vsel %vm1059, %v3962, 0
    %v4347 = vsel %vm1059, %v3311, 0
    %4349 = vmatprep.subr.mxu0 0.0
    %4350 = vmatpush1.xpose.msra.mxu0 0.0
    %4351 = vmatprep.subr.mxu0 0.0
    %4352 = vmatpush1.xpose.msra.mxu0 0.0
    %4353 = vmatprep.subr.mxu0 0.0
    %4354 = vmatpush1.xpose.msra.mxu0 0.0
    %4355 = vmatprep.subr.mxu0 0.0
    %4356 = vmatpush1.xpose.msra.mxu0 0.0
    %4357 = vmatprep.subr.mxu0 0.0
    %4358 = vmatpush1.xpose.msra.mxu0 0.0
    %4359 = vmatprep.subr.mxu0 0.0
    %4360 = vmatpush1.xpose.msra.mxu0 0.0
    %4361 = vmatprep.subr.mxu0 0.0
    %4362 = vmatpush1.xpose.msra.mxu0 0.0
    %4363 = vmatprep.subr.mxu0 0.0
    %4364 = vmatpush1.xpose.msra.mxu0 0.0
    %4365 = vmatprep.subr.mxu0 0.0
    %4366 = vmatpush1.xpose.msra.mxu0 0.0
    %4367 = vmatprep.subr.mxu0 0.0
    %4368 = vmatpush1.xpose.msra.mxu0 0.0
    %4369 = vmatprep.subr.mxu0 0.0
    %4370 = vmatpush1.xpose.msra.mxu0 0.0
    %4371 = vmatprep.subr.mxu0 0.0
    %4372 = vmatpush1.xpose.msra.mxu0 0.0
    %4373 = vmatprep.subr.mxu0 0.0
    %4374 = vmatpush1.xpose.msra.mxu0 0.0
    %4375 = vmatprep.subr.mxu0 0.0
    %4376 = vmatpush1.xpose.msra.mxu0 0.0
    %4377 = vmatprep.subr.mxu0 0.0
    %4378 = vmatpush1.xpose.msra.mxu0 0.0
    %4379 = vmatprep.subr.mxu0 0.0
    %4380 = vmatpush1.xpose.msra.mxu0 %v4347
    %4381 = vmatprep.subr.mxu0 0.0
    %4382 = vmatpush2.xpose.msra.mxu0 0.0
    %4383 = vmatprep.subr.mxu0 0.0
    %4384 = vmatpush2.xpose.msra.mxu0 0.0
    %4385 = vmatprep.subr.mxu0 0.0
    %4386 = vmatpush2.xpose.msra.mxu0 0.0
    %4387 = vmatprep.subr.mxu0 0.0
    %4388 = vmatpush2.xpose.msra.mxu0 0.0
    %4389 = vmatprep.subr.mxu0 0.0
    %4390 = vmatpush2.xpose.msra.mxu0 0.0
    %4391 = vmatprep.subr.mxu0 0.0
    %4392 = vmatpush2.xpose.msra.mxu0 0.0
    %4393 = vmatprep.subr.mxu0 0.0
    %4394 = vmatpush2.xpose.msra.mxu0 0.0
    %4395 = vmatprep.subr.mxu0 0.0
    %4396 = vmatpush2.xpose.msra.mxu0 0.0
    %4397 = vmatprep.subr.mxu0 0.0
    %4398 = vmatpush2.xpose.msra.mxu0 0.0
    %4399 = vmatprep.subr.mxu0 0.0
    %4400 = vmatpush2.xpose.msra.mxu0 0.0
    %4401 = vmatprep.subr.mxu0 0.0
    %4402 = vmatpush2.xpose.msra.mxu0 0.0
    %4403 = vmatprep.subr.mxu0 0.0
    %4404 = vmatpush2.xpose.msra.mxu0 0.0
    %4405 = vmatprep.subr.mxu0 0.0
    %4406 = vmatpush2.xpose.msra.mxu0 0.0
    %4407 = vmatprep.subr.mxu0 0.0
    %4408 = vmatpush2.xpose.msra.mxu0 0.0
    %4409 = vmatprep.subr.mxu0 0.0
    %4410 = vmatpush2.xpose.msra.mxu0 0.0
    %4411 = vmatprep.subr.mxu0 0.0
    %4412 = vmatpush2.xpose.msra.mxu0 0.0
    %4413 = vmatprep.mubr.f32.mxu0 0.0
    %4414 = vmatmul.mubr.f32.gmra.mxu0 %v4341
    %v4415 = vpop.f32.mrf.mxu0
    %v4416 = vadd.f32 0.0, %v4415
    %v4417 = vpop.f32.mrf.mxu0
    %4418 = vmatprep.mubr.f32.mxu0 0.0
    %4419 = vmatmul.mubr.f32.gmra.mxu0 %v4344
    %v4420 = vpop.f32.mrf.mxu0
    %v4421 = vadd.f32 0.0, %v4420
    %v4422 = vpop.f32.mrf.mxu0
    %4423 = vdwg.mxu0
    %v4424 = vmul.f32 %v4416, 0.35355338
    %v4425 = vmul.f32 %v4421, 0.35355338
    %v4426 = vsel %vm1059, %v4424, -inf
    %4427 = vmax.xlane.f32.xlu0 %v4426
    %v4428 = vpop.xlane.xlu0 %4427
    %v4429 = vsel %vm1059, %v4425, -inf
    %4430 = vmax.xlane.f32.xlu0 %v4429
    %v4431 = vpop.xlane.xlu0 %4430
    %v4432 = vsub.f32 %v4424, %v4428
    %v4433 = vsub.f32 %v4425, %v4431
    %v4434 = vmul.f32 %v4432, 1.442695
    %v4435 = vpow.pop %v4434
    %v4436 = vmul.f32 %v4433, 1.442695
    %v4437 = vpow.pop %v4436
    %v4438 = vsel %vm1059, %v4435, 0.0
    %4439 = vadd.xlane.f32.xlu0 %v4438
    %v4440 = vpop.xlane.xlu0 %4439
    %v4441 = vsel %vm1059, %v4437, 0.0
    %4442 = vadd.xlane.f32.xlu0 %v4441
    %v4443 = vpop.xlane.xlu0 %4442
    %v4444 = vrcp.pop %v4440
    %v4445 = vrcp.pop %v4443
    %v4446 = vmul.f32 %v4435, %v4444
    %v4447 = vmul.f32 %v4437, %v4445
    %v4449 = vsel %vm1059, %v4446, 0
    %v4452 = vsel %vm1059, %v4447, 0
    %4454 = vmatprep.subr.mxu0 0.0
    %4455 = vmatpush1.msra.mxu0 0.0
    %4456 = vmatprep.subr.mxu0 0.0
    %4457 = vmatpush1.msra.mxu0 0.0
    %4458 = vmatprep.subr.mxu0 0.0
    %4459 = vmatpush1.msra.mxu0 0.0
    %4460 = vmatprep.subr.mxu0 0.0
    %4461 = vmatpush1.msra.mxu0 0.0
    %4462 = vmatprep.subr.mxu0 0.0
    %4463 = vmatpush1.msra.mxu0 0.0
    %4464 = vmatprep.subr.mxu0 0.0
    %4465 = vmatpush1.msra.mxu0 0.0
    %4466 = vmatprep.subr.mxu0 0.0
    %4467 = vmatpush1.msra.mxu0 0.0
    %4468 = vmatprep.subr.mxu0 0.0
    %4469 = vmatpush1.msra.mxu0 0.0
    %4470 = vmatprep.subr.mxu0 0.0
    %4471 = vmatpush1.msra.mxu0 0.0
    %4472 = vmatprep.subr.mxu0 0.0
    %4473 = vmatpush1.msra.mxu0 0.0
    %4474 = vmatprep.subr.mxu0 0.0
    %4475 = vmatpush1.msra.mxu0 0.0
    %4476 = vmatprep.subr.mxu0 0.0
    %4477 = vmatpush1.msra.mxu0 0.0
    %4478 = vmatprep.subr.mxu0 0.0
    %4479 = vmatpush1.msra.mxu0 0.0
    %4480 = vmatprep.subr.mxu0 0.0
    %4481 = vmatpush1.msra.mxu0 0.0
    %4482 = vmatprep.subr.mxu0 0.0
    %4483 = vmatpush1.msra.mxu0 0.0
    %4484 = vmatprep.subr.mxu0 0.0
    %4485 = vmatpush1.msra.mxu0 %v3623
    %4486 = vmatprep.subr.mxu0 0.0
    %4487 = vmatpush2.msra.mxu0 0.0
    %4488 = vmatprep.subr.mxu0 0.0
    %4489 = vmatpush2.msra.mxu0 0.0
    %4490 = vmatprep.subr.mxu0 0.0
    %4491 = vmatpush2.msra.mxu0 0.0
    %4492 = vmatprep.subr.mxu0 0.0
    %4493 = vmatpush2.msra.mxu0 0.0
    %4494 = vmatprep.subr.mxu0 0.0
    %4495 = vmatpush2.msra.mxu0 0.0
    %4496 = vmatprep.subr.mxu0 0.0
    %4497 = vmatpush2.msra.mxu0 0.0
    %4498 = vmatprep.subr.mxu0 0.0
    %4499 = vmatpush2.msra.mxu0 0.0
    %4500 = vmatprep.subr.mxu0 0.0
    %4501 = vmatpush2.msra.mxu0 0.0
    %4502 = vmatprep.subr.mxu0 0.0
    %4503 = vmatpush2.msra.mxu0 0.0
    %4504 = vmatprep.subr.mxu0 0.0
    %4505 = vmatpush2.msra.mxu0 0.0
    %4506 = vmatprep.subr.mxu0 0.0
    %4507 = vmatpush2.msra.mxu0 0.0
    %4508 = vmatprep.subr.mxu0 0.0
    %4509 = vmatpush2.msra.mxu0 0.0
    %4510 = vmatprep.subr.mxu0 0.0
    %4511 = vmatpush2.msra.mxu0 0.0
    %4512 = vmatprep.subr.mxu0 0.0
    %4513 = vmatpush2.msra.mxu0 0.0
    %4514 = vmatprep.subr.mxu0 0.0
    %4515 = vmatpush2.msra.mxu0 0.0
    %4516 = vmatprep.subr.mxu0 0.0
    %4517 = vmatpush2.msra.mxu0 0.0
    %4518 = vmatprep.mubr.f32.mxu0 0.0
    %4519 = vmatmul.mubr.f32.gmra.mxu0 %v4449
    %v4520 = vpop.f32.mrf.mxu0
    %v4521 = vadd.f32 0.0, %v4520
    %v4522 = vpop.f32.mrf.mxu0
    %4523 = vmatprep.mubr.f32.mxu0 0.0
    %4524 = vmatmul.mubr.f32.gmra.mxu0 %v4452
    %v4525 = vpop.f32.mrf.mxu0
    %v4526 = vadd.f32 0.0, %v4525
    %v4527 = vpop.f32.mrf.mxu0
    %4528 = vdwg.mxu0
    %v4530 = vsel %vm1059, %v4045, 0
    %v4533 = vsel %vm1059, %v4050, 0
    %v4536 = vsel %vm1059, %v3389, 0
    %4538 = vmatprep.subr.mxu0 0.0
    %4539 = vmatpush1.xpose.msra.mxu0 0.0
    %4540 = vmatprep.subr.mxu0 0.0
    %4541 = vmatpush1.xpose.msra.mxu0 0.0
    %4542 = vmatprep.subr.mxu0 0.0
    %4543 = vmatpush1.xpose.msra.mxu0 0.0
    %4544 = vmatprep.subr.mxu0 0.0
    %4545 = vmatpush1.xpose.msra.mxu0 0.0
    %4546 = vmatprep.subr.mxu0 0.0
    %4547 = vmatpush1.xpose.msra.mxu0 0.0
    %4548 = vmatprep.subr.mxu0 0.0
    %4549 = vmatpush1.xpose.msra.mxu0 0.0
    %4550 = vmatprep.subr.mxu0 0.0
    %4551 = vmatpush1.xpose.msra.mxu0 0.0
    %4552 = vmatprep.subr.mxu0 0.0
    %4553 = vmatpush1.xpose.msra.mxu0 0.0
    %4554 = vmatprep.subr.mxu0 0.0
    %4555 = vmatpush1.xpose.msra.mxu0 0.0
    %4556 = vmatprep.subr.mxu0 0.0
    %4557 = vmatpush1.xpose.msra.mxu0 0.0
    %4558 = vmatprep.subr.mxu0 0.0
    %4559 = vmatpush1.xpose.msra.mxu0 0.0
    %4560 = vmatprep.subr.mxu0 0.0
    %4561 = vmatpush1.xpose.msra.mxu0 0.0
    %4562 = vmatprep.subr.mxu0 0.0
    %4563 = vmatpush1.xpose.msra.mxu0 0.0
    %4564 = vmatprep.subr.mxu0 0.0
    %4565 = vmatpush1.xpose.msra.mxu0 0.0
    %4566 = vmatprep.subr.mxu0 0.0
    %4567 = vmatpush1.xpose.msra.mxu0 0.0
    %4568 = vmatprep.subr.mxu0 0.0
    %4569 = vmatpush1.xpose.msra.mxu0 %v4536
    %4570 = vmatprep.subr.mxu0 0.0
    %4571 = vmatpush2.xpose.msra.mxu0 0.0
    %4572 = vmatprep.subr.mxu0 0.0
    %4573 = vmatpush2.xpose.msra.mxu0 0.0
    %4574 = vmatprep.subr.mxu0 0.0
    %4575 = vmatpush2.xpose.msra.mxu0 0.0
    %4576 = vmatprep.subr.mxu0 0.0
    %4577 = vmatpush2.xpose.msra.mxu0 0.0
    %4578 = vmatprep.subr.mxu0 0.0
    %4579 = vmatpush2.xpose.msra.mxu0 0.0
    %4580 = vmatprep.subr.mxu0 0.0
    %4581 = vmatpush2.xpose.msra.mxu0 0.0
    %4582 = vmatprep.subr.mxu0 0.0
    %4583 = vmatpush2.xpose.msra.mxu0 0.0
    %4584 = vmatprep.subr.mxu0 0.0
    %4585 = vmatpush2.xpose.msra.mxu0 0.0
    %4586 = vmatprep.subr.mxu0 0.0
    %4587 = vmatpush2.xpose.msra.mxu0 0.0
    %4588 = vmatprep.subr.mxu0 0.0
    %4589 = vmatpush2.xpose.msra.mxu0 0.0
    %4590 = vmatprep.subr.mxu0 0.0
    %4591 = vmatpush2.xpose.msra.mxu0 0.0
    %4592 = vmatprep.subr.mxu0 0.0
    %4593 = vmatpush2.xpose.msra.mxu0 0.0
    %4594 = vmatprep.subr.mxu0 0.0
    %4595 = vmatpush2.xpose.msra.mxu0 0.0
    %4596 = vmatprep.subr.mxu0 0.0
    %4597 = vmatpush2.xpose.msra.mxu0 0.0
    %4598 = vmatprep.subr.mxu0 0.0
    %4599 = vmatpush2.xpose.msra.mxu0 0.0
    %4600 = vmatprep.subr.mxu0 0.0
    %4601 = vmatpush2.xpose.msra.mxu0 0.0
    %4602 = vmatprep.mubr.f32.mxu0 0.0
    %4603 = vmatmul.mubr.f32.gmra.mxu0 %v4530
    %v4604 = vpop.f32.mrf.mxu0
    %v4605 = vadd.f32 0.0, %v4604
    %v4606 = vpop.f32.mrf.mxu0
    %4607 = vmatprep.mubr.f32.mxu0 0.0
    %4608 = vmatmul.mubr.f32.gmra.mxu0 %v4533
    %v4609 = vpop.f32.mrf.mxu0
    %v4610 = vadd.f32 0.0, %v4609
    %v4611 = vpop.f32.mrf.mxu0
    %4612 = vdwg.mxu0
    %v4613 = vmul.f32 %v4605, 0.35355338
    %v4614 = vmul.f32 %v4610, 0.35355338
    %v4615 = vsel %vm1059, %v4613, -inf
    %4616 = vmax.xlane.f32.xlu0 %v4615
    %v4617 = vpop.xlane.xlu0 %4616
    %v4618 = vsel %vm1059, %v4614, -inf
    %4619 = vmax.xlane.f32.xlu0 %v4618
    %v4620 = vpop.xlane.xlu0 %4619
    %v4621 = vsub.f32 %v4613, %v4617
    %v4622 = vsub.f32 %v4614, %v4620
    %v4623 = vmul.f32 %v4621, 1.442695
    %v4624 = vpow.pop %v4623
    %v4625 = vmul.f32 %v4622, 1.442695
    %v4626 = vpow.pop %v4625
    %v4627 = vsel %vm1059, %v4624, 0.0
    %4628 = vadd.xlane.f32.xlu0 %v4627
    %v4629 = vpop.xlane.xlu0 %4628
    %v4630 = vsel %vm1059, %v4626, 0.0
    %4631 = vadd.xlane.f32.xlu0 %v4630
    %v4632 = vpop.xlane.xlu0 %4631
    %v4633 = vrcp.pop %v4629
    %v4634 = vrcp.pop %v4632
    %v4635 = vmul.f32 %v4624, %v4633
    %v4636 = vmul.f32 %v4626, %v4634
    %v4638 = vsel %vm1059, %v4635, 0
    %v4641 = vsel %vm1059, %v4636, 0
    %4643 = vmatprep.subr.mxu0 0.0
    %4644 = vmatpush1.msra.mxu0 0.0
    %4645 = vmatprep.subr.mxu0 0.0
    %4646 = vmatpush1.msra.mxu0 0.0
    %4647 = vmatprep.subr.mxu0 0.0
    %4648 = vmatpush1.msra.mxu0 0.0
    %4649 = vmatprep.subr.mxu0 0.0
    %4650 = vmatpush1.msra.mxu0 0.0
    %4651 = vmatprep.subr.mxu0 0.0
    %4652 = vmatpush1.msra.mxu0 0.0
    %4653 = vmatprep.subr.mxu0 0.0
    %4654 = vmatpush1.msra.mxu0 0.0
    %4655 = vmatprep.subr.mxu0 0.0
    %4656 = vmatpush1.msra.mxu0 0.0
    %4657 = vmatprep.subr.mxu0 0.0
    %4658 = vmatpush1.msra.mxu0 0.0
    %4659 = vmatprep.subr.mxu0 0.0
    %4660 = vmatpush1.msra.mxu0 0.0
    %4661 = vmatprep.subr.mxu0 0.0
    %4662 = vmatpush1.msra.mxu0 0.0
    %4663 = vmatprep.subr.mxu0 0.0
    %4664 = vmatpush1.msra.mxu0 0.0
    %4665 = vmatprep.subr.mxu0 0.0
    %4666 = vmatpush1.msra.mxu0 0.0
    %4667 = vmatprep.subr.mxu0 0.0
    %4668 = vmatpush1.msra.mxu0 0.0
    %4669 = vmatprep.subr.mxu0 0.0
    %4670 = vmatpush1.msra.mxu0 0.0
    %4671 = vmatprep.subr.mxu0 0.0
    %4672 = vmatpush1.msra.mxu0 0.0
    %4673 = vmatprep.subr.mxu0 0.0
    %4674 = vmatpush1.msra.mxu0 %v3701
    %4675 = vmatprep.subr.mxu0 0.0
    %4676 = vmatpush2.msra.mxu0 0.0
    %4677 = vmatprep.subr.mxu0 0.0
    %4678 = vmatpush2.msra.mxu0 0.0
    %4679 = vmatprep.subr.mxu0 0.0
    %4680 = vmatpush2.msra.mxu0 0.0
    %4681 = vmatprep.subr.mxu0 0.0
    %4682 = vmatpush2.msra.mxu0 0.0
    %4683 = vmatprep.subr.mxu0 0.0
    %4684 = vmatpush2.msra.mxu0 0.0
    %4685 = vmatprep.subr.mxu0 0.0
    %4686 = vmatpush2.msra.mxu0 0.0
    %4687 = vmatprep.subr.mxu0 0.0
    %4688 = vmatpush2.msra.mxu0 0.0
    %4689 = vmatprep.subr.mxu0 0.0
    %4690 = vmatpush2.msra.mxu0 0.0
    %4691 = vmatprep.subr.mxu0 0.0
    %4692 = vmatpush2.msra.mxu0 0.0
    %4693 = vmatprep.subr.mxu0 0.0
    %4694 = vmatpush2.msra.mxu0 0.0
    %4695 = vmatprep.subr.mxu0 0.0
    %4696 = vmatpush2.msra.mxu0 0.0
    %4697 = vmatprep.subr.mxu0 0.0
    %4698 = vmatpush2.msra.mxu0 0.0
    %4699 = vmatprep.subr.mxu0 0.0
    %4700 = vmatpush2.msra.mxu0 0.0
    %4701 = vmatprep.subr.mxu0 0.0
    %4702 = vmatpush2.msra.mxu0 0.0
    %4703 = vmatprep.subr.mxu0 0.0
    %4704 = vmatpush2.msra.mxu0 0.0
    %4705 = vmatprep.subr.mxu0 0.0
    %4706 = vmatpush2.msra.mxu0 0.0
    %4707 = vmatprep.mubr.f32.mxu0 0.0
    %4708 = vmatmul.mubr.f32.gmra.mxu0 %v4638
    %v4709 = vpop.f32.mrf.mxu0
    %v4710 = vadd.f32 0.0, %v4709
    %v4711 = vpop.f32.mrf.mxu0
    %4712 = vmatprep.mubr.f32.mxu0 0.0
    %4713 = vmatmul.mubr.f32.gmra.mxu0 %v4641
    %v4714 = vpop.f32.mrf.mxu0
    %v4715 = vadd.f32 0.0, %v4714
    %v4716 = vpop.f32.mrf.mxu0
    %4717 = vdwg.mxu0
    %v4719 = vsel %vm1059, %v4133, 0
    %v4722 = vsel %vm1059, %v4138, 0
    %v4725 = vsel %vm1059, %v3467, 0
    %4727 = vmatprep.subr.mxu0 0.0
    %4728 = vmatpush1.xpose.msra.mxu0 0.0
    %4729 = vmatprep.subr.mxu0 0.0
    %4730 = vmatpush1.xpose.msra.mxu0 0.0
    %4731 = vmatprep.subr.mxu0 0.0
    %4732 = vmatpush1.xpose.msra.mxu0 0.0
    %4733 = vmatprep.subr.mxu0 0.0
    %4734 = vmatpush1.xpose.msra.mxu0 0.0
    %4735 = vmatprep.subr.mxu0 0.0
    %4736 = vmatpush1.xpose.msra.mxu0 0.0
    %4737 = vmatprep.subr.mxu0 0.0
    %4738 = vmatpush1.xpose.msra.mxu0 0.0
    %4739 = vmatprep.subr.mxu0 0.0
    %4740 = vmatpush1.xpose.msra.mxu0 0.0
    %4741 = vmatprep.subr.mxu0 0.0
    %4742 = vmatpush1.xpose.msra.mxu0 0.0
    %4743 = vmatprep.subr.mxu0 0.0
    %4744 = vmatpush1.xpose.msra.mxu0 0.0
    %4745 = vmatprep.subr.mxu0 0.0
    %4746 = vmatpush1.xpose.msra.mxu0 0.0
    %4747 = vmatprep.subr.mxu0 0.0
    %4748 = vmatpush1.xpose.msra.mxu0 0.0
    %4749 = vmatprep.subr.mxu0 0.0
    %4750 = vmatpush1.xpose.msra.mxu0 0.0
    %4751 = vmatprep.subr.mxu0 0.0
    %4752 = vmatpush1.xpose.msra.mxu0 0.0
    %4753 = vmatprep.subr.mxu0 0.0
    %4754 = vmatpush1.xpose.msra.mxu0 0.0
    %4755 = vmatprep.subr.mxu0 0.0
    %4756 = vmatpush1.xpose.msra.mxu0 0.0
    %4757 = vmatprep.subr.mxu0 0.0
    %4758 = vmatpush1.xpose.msra.mxu0 %v4725
    %4759 = vmatprep.subr.mxu0 0.0
    %4760 = vmatpush2.xpose.msra.mxu0 0.0
    %4761 = vmatprep.subr.mxu0 0.0
    %4762 = vmatpush2.xpose.msra.mxu0 0.0
    %4763 = vmatprep.subr.mxu0 0.0
    %4764 = vmatpush2.xpose.msra.mxu0 0.0
    %4765 = vmatprep.subr.mxu0 0.0
    %4766 = vmatpush2.xpose.msra.mxu0 0.0
    %4767 = vmatprep.subr.mxu0 0.0
    %4768 = vmatpush2.xpose.msra.mxu0 0.0
    %4769 = vmatprep.subr.mxu0 0.0
    %4770 = vmatpush2.xpose.msra.mxu0 0.0
    %4771 = vmatprep.subr.mxu0 0.0
    %4772 = vmatpush2.xpose.msra.mxu0 0.0
    %4773 = vmatprep.subr.mxu0 0.0
    %4774 = vmatpush2.xpose.msra.mxu0 0.0
    %4775 = vmatprep.subr.mxu0 0.0
    %4776 = vmatpush2.xpose.msra.mxu0 0.0
    %4777 = vmatprep.subr.mxu0 0.0
    %4778 = vmatpush2.xpose.msra.mxu0 0.0
    %4779 = vmatprep.subr.mxu0 0.0
    %4780 = vmatpush2.xpose.msra.mxu0 0.0
    %4781 = vmatprep.subr.mxu0 0.0
    %4782 = vmatpush2.xpose.msra.mxu0 0.0
    %4783 = vmatprep.subr.mxu0 0.0
    %4784 = vmatpush2.xpose.msra.mxu0 0.0
    %4785 = vmatprep.subr.mxu0 0.0
    %4786 = vmatpush2.xpose.msra.mxu0 0.0
    %4787 = vmatprep.subr.mxu0 0.0
    %4788 = vmatpush2.xpose.msra.mxu0 0.0
    %4789 = vmatprep.subr.mxu0 0.0
    %4790 = vmatpush2.xpose.msra.mxu0 0.0
    %4791 = vmatprep.mubr.f32.mxu0 0.0
    %4792 = vmatmul.mubr.f32.gmra.mxu0 %v4719
    %v4793 = vpop.f32.mrf.mxu0
    %v4794 = vadd.f32 0.0, %v4793
    %v4795 = vpop.f32.mrf.mxu0
    %4796 = vmatprep.mubr.f32.mxu0 0.0
    %4797 = vmatmul.mubr.f32.gmra.mxu0 %v4722
    %v4798 = vpop.f32.mrf.mxu0
    %v4799 = vadd.f32 0.0, %v4798
    %v4800 = vpop.f32.mrf.mxu0
    %4801 = vdwg.mxu0
    %v4802 = vmul.f32 %v4794, 0.35355338
    %v4803 = vmul.f32 %v4799, 0.35355338
    %v4804 = vsel %vm1059, %v4802, -inf
    %4805 = vmax.xlane.f32.xlu0 %v4804
    %v4806 = vpop.xlane.xlu0 %4805
    %v4807 = vsel %vm1059, %v4803, -inf
    %4808 = vmax.xlane.f32.xlu0 %v4807
    %v4809 = vpop.xlane.xlu0 %4808
    %v4810 = vsub.f32 %v4802, %v4806
    %v4811 = vsub.f32 %v4803, %v4809
    %v4812 = vmul.f32 %v4810, 1.442695
    %v4813 = vpow.pop %v4812
    %v4814 = vmul.f32 %v4811, 1.442695
    %v4815 = vpow.pop %v4814
    %v4816 = vsel %vm1059, %v4813, 0.0
    %4817 = vadd.xlane.f32.xlu0 %v4816
    %v4818 = vpop.xlane.xlu0 %4817
    %v4819 = vsel %vm1059, %v4815, 0.0
    %4820 = vadd.xlane.f32.xlu0 %v4819
    %v4821 = vpop.xlane.xlu0 %4820
    %v4822 = vrcp.pop %v4818
    %v4823 = vrcp.pop %v4821
    %v4824 = vmul.f32 %v4813, %v4822
    %v4825 = vmul.f32 %v4815, %v4823
    %v4827 = vsel %vm1059, %v4824, 0
    %v4830 = vsel %vm1059, %v4825, 0
    %4832 = vmatprep.subr.mxu0 0.0
    %4833 = vmatpush1.msra.mxu0 0.0
    %4834 = vmatprep.subr.mxu0 0.0
    %4835 = vmatpush1.msra.mxu0 0.0
    %4836 = vmatprep.subr.mxu0 0.0
    %4837 = vmatpush1.msra.mxu0 0.0
    %4838 = vmatprep.subr.mxu0 0.0
    %4839 = vmatpush1.msra.mxu0 0.0
    %4840 = vmatprep.subr.mxu0 0.0
    %4841 = vmatpush1.msra.mxu0 0.0
    %4842 = vmatprep.subr.mxu0 0.0
    %4843 = vmatpush1.msra.mxu0 0.0
    %4844 = vmatprep.subr.mxu0 0.0
    %4845 = vmatpush1.msra.mxu0 0.0
    %4846 = vmatprep.subr.mxu0 0.0
    %4847 = vmatpush1.msra.mxu0 0.0
    %4848 = vmatprep.subr.mxu0 0.0
    %4849 = vmatpush1.msra.mxu0 0.0
    %4850 = vmatprep.subr.mxu0 0.0
    %4851 = vmatpush1.msra.mxu0 0.0
    %4852 = vmatprep.subr.mxu0 0.0
    %4853 = vmatpush1.msra.mxu0 0.0
    %4854 = vmatprep.subr.mxu0 0.0
    %4855 = vmatpush1.msra.mxu0 0.0
    %4856 = vmatprep.subr.mxu0 0.0
    %4857 = vmatpush1.msra.mxu0 0.0
    %4858 = vmatprep.subr.mxu0 0.0
    %4859 = vmatpush1.msra.mxu0 0.0
    %4860 = vmatprep.subr.mxu0 0.0
    %4861 = vmatpush1.msra.mxu0 0.0
    %4862 = vmatprep.subr.mxu0 0.0
    %4863 = vmatpush1.msra.mxu0 %v3779
    %4864 = vmatprep.subr.mxu0 0.0
    %4865 = vmatpush2.msra.mxu0 0.0
    %4866 = vmatprep.subr.mxu0 0.0
    %4867 = vmatpush2.msra.mxu0 0.0
    %4868 = vmatprep.subr.mxu0 0.0
    %4869 = vmatpush2.msra.mxu0 0.0
    %4870 = vmatprep.subr.mxu0 0.0
    %4871 = vmatpush2.msra.mxu0 0.0
    %4872 = vmatprep.subr.mxu0 0.0
    %4873 = vmatpush2.msra.mxu0 0.0
    %4874 = vmatprep.subr.mxu0 0.0
    %4875 = vmatpush2.msra.mxu0 0.0
    %4876 = vmatprep.subr.mxu0 0.0
    %4877 = vmatpush2.msra.mxu0 0.0
    %4878 = vmatprep.subr.mxu0 0.0
    %4879 = vmatpush2.msra.mxu0 0.0
    %4880 = vmatprep.subr.mxu0 0.0
    %4881 = vmatpush2.msra.mxu0 0.0
    %4882 = vmatprep.subr.mxu0 0.0
    %4883 = vmatpush2.msra.mxu0 0.0
    %4884 = vmatprep.subr.mxu0 0.0
    %4885 = vmatpush2.msra.mxu0 0.0
    %4886 = vmatprep.subr.mxu0 0.0
    %4887 = vmatpush2.msra.mxu0 0.0
    %4888 = vmatprep.subr.mxu0 0.0
    %4889 = vmatpush2.msra.mxu0 0.0
    %4890 = vmatprep.subr.mxu0 0.0
    %4891 = vmatpush2.msra.mxu0 0.0
    %4892 = vmatprep.subr.mxu0 0.0
    %4893 = vmatpush2.msra.mxu0 0.0
    %4894 = vmatprep.subr.mxu0 0.0
    %4895 = vmatpush2.msra.mxu0 0.0
    %4896 = vmatprep.mubr.f32.mxu0 0.0
    %4897 = vmatmul.mubr.f32.gmra.mxu0 %v4827
    %v4898 = vpop.f32.mrf.mxu0
    %v4899 = vadd.f32 0.0, %v4898
    %v4900 = vpop.f32.mrf.mxu0
    %4901 = vmatprep.mubr.f32.mxu0 0.0
    %4902 = vmatmul.mubr.f32.gmra.mxu0 %v4830
    %v4903 = vpop.f32.mrf.mxu0
    %v4904 = vadd.f32 0.0, %v4903
    %v4905 = vpop.f32.mrf.mxu0
    %4906 = vdwg.mxu0
    %4909 = vrot.lane.b32.xlu0 %v4521, 8
    %v4910 = vpop.permute.xlu0 %4909
    %4911 = vrot.lane.b32.xlu0 %v4526, 8
    %v4912 = vpop.permute.xlu0 %4911
    %4917 = vrot.lane.b32.xlu0 %v4710, 16
    %v4918 = vpop.permute.xlu0 %4917
    %4919 = vrot.lane.b32.xlu0 %v4715, 16
    %v4920 = vpop.permute.xlu0 %4919
    %4925 = vrot.lane.b32.xlu0 %v4899, 24
    %v4926 = vpop.permute.xlu0 %4925
    %4927 = vrot.lane.b32.xlu0 %v4904, 24
    %v4928 = vpop.permute.xlu0 %4927
    %v4931 = vsel %vm1059, %v4332, %v4910
    %v4932 = vsel %vm1059, %v4337, %v4912
    %v4933 = vsel %vm1842, %v4931, %v4918
    %v4934 = vsel %vm1842, %v4932, %v4920
    %v4935 = vsel %vm1845, %v4933, %v4926
    %v4936 = vsel %vm1845, %v4934, %v4928
    %v4938 = vsel %vm1059, %v3879, 0
    %v4941 = vsel %vm1059, %v3884, 0
    %v4944 = vsel %vm1059, %v3238, 0
    %4946 = vmatprep.subr.mxu0 0.0
    %4947 = vmatpush1.xpose.msra.mxu0 0.0
    %4948 = vmatprep.subr.mxu0 0.0
    %4949 = vmatpush1.xpose.msra.mxu0 0.0
    %4950 = vmatprep.subr.mxu0 0.0
    %4951 = vmatpush1.xpose.msra.mxu0 0.0
    %4952 = vmatprep.subr.mxu0 0.0
    %4953 = vmatpush1.xpose.msra.mxu0 0.0
    %4954 = vmatprep.subr.mxu0 0.0
    %4955 = vmatpush1.xpose.msra.mxu0 0.0
    %4956 = vmatprep.subr.mxu0 0.0
    %4957 = vmatpush1.xpose.msra.mxu0 0.0
    %4958 = vmatprep.subr.mxu0 0.0
    %4959 = vmatpush1.xpose.msra.mxu0 0.0
    %4960 = vmatprep.subr.mxu0 0.0
    %4961 = vmatpush1.xpose.msra.mxu0 0.0
    %4962 = vmatprep.subr.mxu0 0.0
    %4963 = vmatpush1.xpose.msra.mxu0 0.0
    %4964 = vmatprep.subr.mxu0 0.0
    %4965 = vmatpush1.xpose.msra.mxu0 0.0
    %4966 = vmatprep.subr.mxu0 0.0
    %4967 = vmatpush1.xpose.msra.mxu0 0.0
    %4968 = vmatprep.subr.mxu0 0.0
    %4969 = vmatpush1.xpose.msra.mxu0 0.0
    %4970 = vmatprep.subr.mxu0 0.0
    %4971 = vmatpush1.xpose.msra.mxu0 0.0
    %4972 = vmatprep.subr.mxu0 0.0
    %4973 = vmatpush1.xpose.msra.mxu0 0.0
    %4974 = vmatprep.subr.mxu0 0.0
    %4975 = vmatpush1.xpose.msra.mxu0 0.0
    %4976 = vmatprep.subr.mxu0 0.0
    %4977 = vmatpush1.xpose.msra.mxu0 %v4944
    %4978 = vmatprep.subr.mxu0 0.0
    %4979 = vmatpush2.xpose.msra.mxu0 0.0
    %4980 = vmatprep.subr.mxu0 0.0
    %4981 = vmatpush2.xpose.msra.mxu0 0.0
    %4982 = vmatprep.subr.mxu0 0.0
    %4983 = vmatpush2.xpose.msra.mxu0 0.0
    %4984 = vmatprep.subr.mxu0 0.0
    %4985 = vmatpush2.xpose.msra.mxu0 0.0
    %4986 = vmatprep.subr.mxu0 0.0
    %4987 = vmatpush2.xpose.msra.mxu0 0.0
    %4988 = vmatprep.subr.mxu0 0.0
    %4989 = vmatpush2.xpose.msra.mxu0 0.0
    %4990 = vmatprep.subr.mxu0 0.0
    %4991 = vmatpush2.xpose.msra.mxu0 0.0
    %4992 = vmatprep.subr.mxu0 0.0
    %4993 = vmatpush2.xpose.msra.mxu0 0.0
    %4994 = vmatprep.subr.mxu0 0.0
    %4995 = vmatpush2.xpose.msra.mxu0 0.0
    %4996 = vmatprep.subr.mxu0 0.0
    %4997 = vmatpush2.xpose.msra.mxu0 0.0
    %4998 = vmatprep.subr.mxu0 0.0
    %4999 = vmatpush2.xpose.msra.mxu0 0.0
    %5000 = vmatprep.subr.mxu0 0.0
    %5001 = vmatpush2.xpose.msra.mxu0 0.0
    %5002 = vmatprep.subr.mxu0 0.0
    %5003 = vmatpush2.xpose.msra.mxu0 0.0
    %5004 = vmatprep.subr.mxu0 0.0
    %5005 = vmatpush2.xpose.msra.mxu0 0.0
    %5006 = vmatprep.subr.mxu0 0.0
    %5007 = vmatpush2.xpose.msra.mxu0 0.0
    %5008 = vmatprep.subr.mxu0 0.0
    %5009 = vmatpush2.xpose.msra.mxu0 0.0
    %5010 = vmatprep.mubr.f32.mxu0 0.0
    %5011 = vmatmul.mubr.f32.gmra.mxu0 %v4938
    %v5012 = vpop.f32.mrf.mxu0
    %v5013 = vadd.f32 0.0, %v5012
    %v5014 = vpop.f32.mrf.mxu0
    %5015 = vmatprep.mubr.f32.mxu0 0.0
    %5016 = vmatmul.mubr.f32.gmra.mxu0 %v4941
    %v5017 = vpop.f32.mrf.mxu0
    %v5018 = vadd.f32 0.0, %v5017
    %v5019 = vpop.f32.mrf.mxu0
    %5020 = vdwg.mxu0
    %v5021 = vmul.f32 %v5013, 0.35355338
    %v5022 = vmul.f32 %v5018, 0.35355338
    %v5023 = vsel %vm1059, %v5021, -inf
    %5024 = vmax.xlane.f32.xlu0 %v5023
    %v5025 = vpop.xlane.xlu0 %5024
    %v5026 = vsel %vm1059, %v5022, -inf
    %5027 = vmax.xlane.f32.xlu0 %v5026
    %v5028 = vpop.xlane.xlu0 %5027
    %v5029 = vsub.f32 %v5021, %v5025
    %v5030 = vsub.f32 %v5022, %v5028
    %v5031 = vmul.f32 %v5029, 1.442695
    %v5032 = vpow.pop %v5031
    %v5033 = vmul.f32 %v5030, 1.442695
    %v5034 = vpow.pop %v5033
    %v5035 = vsel %vm1059, %v5032, 0.0
    %5036 = vadd.xlane.f32.xlu0 %v5035
    %v5037 = vpop.xlane.xlu0 %5036
    %v5038 = vsel %vm1059, %v5034, 0.0
    %5039 = vadd.xlane.f32.xlu0 %v5038
    %v5040 = vpop.xlane.xlu0 %5039
    %v5041 = vrcp.pop %v5037
    %v5042 = vrcp.pop %v5040
    %v5043 = vmul.f32 %v5032, %v5041
    %v5044 = vmul.f32 %v5034, %v5042
    %v5046 = vsel %vm1059, %v5043, 0
    %v5049 = vsel %vm1059, %v5044, 0
    %5051 = vmatprep.subr.mxu0 0.0
    %5052 = vmatpush1.msra.mxu0 0.0
    %5053 = vmatprep.subr.mxu0 0.0
    %5054 = vmatpush1.msra.mxu0 0.0
    %5055 = vmatprep.subr.mxu0 0.0
    %5056 = vmatpush1.msra.mxu0 0.0
    %5057 = vmatprep.subr.mxu0 0.0
    %5058 = vmatpush1.msra.mxu0 0.0
    %5059 = vmatprep.subr.mxu0 0.0
    %5060 = vmatpush1.msra.mxu0 0.0
    %5061 = vmatprep.subr.mxu0 0.0
    %5062 = vmatpush1.msra.mxu0 0.0
    %5063 = vmatprep.subr.mxu0 0.0
    %5064 = vmatpush1.msra.mxu0 0.0
    %5065 = vmatprep.subr.mxu0 0.0
    %5066 = vmatpush1.msra.mxu0 0.0
    %5067 = vmatprep.subr.mxu0 0.0
    %5068 = vmatpush1.msra.mxu0 0.0
    %5069 = vmatprep.subr.mxu0 0.0
    %5070 = vmatpush1.msra.mxu0 0.0
    %5071 = vmatprep.subr.mxu0 0.0
    %5072 = vmatpush1.msra.mxu0 0.0
    %5073 = vmatprep.subr.mxu0 0.0
    %5074 = vmatpush1.msra.mxu0 0.0
    %5075 = vmatprep.subr.mxu0 0.0
    %5076 = vmatpush1.msra.mxu0 0.0
    %5077 = vmatprep.subr.mxu0 0.0
    %5078 = vmatpush1.msra.mxu0 0.0
    %5079 = vmatprep.subr.mxu0 0.0
    %5080 = vmatpush1.msra.mxu0 0.0
    %5081 = vmatprep.subr.mxu0 0.0
    %5082 = vmatpush1.msra.mxu0 %v3550
    %5083 = vmatprep.subr.mxu0 0.0
    %5084 = vmatpush2.msra.mxu0 0.0
    %5085 = vmatprep.subr.mxu0 0.0
    %5086 = vmatpush2.msra.mxu0 0.0
    %5087 = vmatprep.subr.mxu0 0.0
    %5088 = vmatpush2.msra.mxu0 0.0
    %5089 = vmatprep.subr.mxu0 0.0
    %5090 = vmatpush2.msra.mxu0 0.0
    %5091 = vmatprep.subr.mxu0 0.0
    %5092 = vmatpush2.msra.mxu0 0.0
    %5093 = vmatprep.subr.mxu0 0.0
    %5094 = vmatpush2.msra.mxu0 0.0
    %5095 = vmatprep.subr.mxu0 0.0
    %5096 = vmatpush2.msra.mxu0 0.0
    %5097 = vmatprep.subr.mxu0 0.0
    %5098 = vmatpush2.msra.mxu0 0.0
    %5099 = vmatprep.subr.mxu0 0.0
    %5100 = vmatpush2.msra.mxu0 0.0
    %5101 = vmatprep.subr.mxu0 0.0
    %5102 = vmatpush2.msra.mxu0 0.0
    %5103 = vmatprep.subr.mxu0 0.0
    %5104 = vmatpush2.msra.mxu0 0.0
    %5105 = vmatprep.subr.mxu0 0.0
    %5106 = vmatpush2.msra.mxu0 0.0
    %5107 = vmatprep.subr.mxu0 0.0
    %5108 = vmatpush2.msra.mxu0 0.0
    %5109 = vmatprep.subr.mxu0 0.0
    %5110 = vmatpush2.msra.mxu0 0.0
    %5111 = vmatprep.subr.mxu0 0.0
    %5112 = vmatpush2.msra.mxu0 0.0
    %5113 = vmatprep.subr.mxu0 0.0
    %5114 = vmatpush2.msra.mxu0 0.0
    %5115 = vmatprep.mubr.f32.mxu0 0.0
    %5116 = vmatmul.mubr.f32.gmra.mxu0 %v5046
    %v5117 = vpop.f32.mrf.mxu0
    %v5118 = vadd.f32 0.0, %v5117
    %v5119 = vpop.f32.mrf.mxu0
    %5120 = vmatprep.mubr.f32.mxu0 0.0
    %5121 = vmatmul.mubr.f32.gmra.mxu0 %v5049
    %v5122 = vpop.f32.mrf.mxu0
    %v5123 = vadd.f32 0.0, %v5122
    %v5124 = vpop.f32.mrf.mxu0
    %5125 = vdwg.mxu0
    %v5127 = vsel %vm1059, %v3967, 0
    %v5130 = vsel %vm1059, %v3972, 0
    %v5133 = vsel %vm1059, %v3316, 0
    %5135 = vmatprep.subr.mxu0 0.0
    %5136 = vmatpush1.xpose.msra.mxu0 0.0
    %5137 = vmatprep.subr.mxu0 0.0
    %5138 = vmatpush1.xpose.msra.mxu0 0.0
    %5139 = vmatprep.subr.mxu0 0.0
    %5140 = vmatpush1.xpose.msra.mxu0 0.0
    %5141 = vmatprep.subr.mxu0 0.0
    %5142 = vmatpush1.xpose.msra.mxu0 0.0
    %5143 = vmatprep.subr.mxu0 0.0
    %5144 = vmatpush1.xpose.msra.mxu0 0.0
    %5145 = vmatprep.subr.mxu0 0.0
    %5146 = vmatpush1.xpose.msra.mxu0 0.0
    %5147 = vmatprep.subr.mxu0 0.0
    %5148 = vmatpush1.xpose.msra.mxu0 0.0
    %5149 = vmatprep.subr.mxu0 0.0
    %5150 = vmatpush1.xpose.msra.mxu0 0.0
    %5151 = vmatprep.subr.mxu0 0.0
    %5152 = vmatpush1.xpose.msra.mxu0 0.0
    %5153 = vmatprep.subr.mxu0 0.0
    %5154 = vmatpush1.xpose.msra.mxu0 0.0
    %5155 = vmatprep.subr.mxu0 0.0
    %5156 = vmatpush1.xpose.msra.mxu0 0.0
    %5157 = vmatprep.subr.mxu0 0.0
    %5158 = vmatpush1.xpose.msra.mxu0 0.0
    %5159 = vmatprep.subr.mxu0 0.0
    %5160 = vmatpush1.xpose.msra.mxu0 0.0
    %5161 = vmatprep.subr.mxu0 0.0
    %5162 = vmatpush1.xpose.msra.mxu0 0.0
    %5163 = vmatprep.subr.mxu0 0.0
    %5164 = vmatpush1.xpose.msra.mxu0 0.0
    %5165 = vmatprep.subr.mxu0 0.0
    %5166 = vmatpush1.xpose.msra.mxu0 %v5133
    %5167 = vmatprep.subr.mxu0 0.0
    %5168 = vmatpush2.xpose.msra.mxu0 0.0
    %5169 = vmatprep.subr.mxu0 0.0
    %5170 = vmatpush2.xpose.msra.mxu0 0.0
    %5171 = vmatprep.subr.mxu0 0.0
    %5172 = vmatpush2.xpose.msra.mxu0 0.0
    %5173 = vmatprep.subr.mxu0 0.0
    %5174 = vmatpush2.xpose.msra.mxu0 0.0
    %5175 = vmatprep.subr.mxu0 0.0
    %5176 = vmatpush2.xpose.msra.mxu0 0.0
    %5177 = vmatprep.subr.mxu0 0.0
    %5178 = vmatpush2.xpose.msra.mxu0 0.0
    %5179 = vmatprep.subr.mxu0 0.0
    %5180 = vmatpush2.xpose.msra.mxu0 0.0
    %5181 = vmatprep.subr.mxu0 0.0
    %5182 = vmatpush2.xpose.msra.mxu0 0.0
    %5183 = vmatprep.subr.mxu0 0.0
    %5184 = vmatpush2.xpose.msra.mxu0 0.0
    %5185 = vmatprep.subr.mxu0 0.0
    %5186 = vmatpush2.xpose.msra.mxu0 0.0
    %5187 = vmatprep.subr.mxu0 0.0
    %5188 = vmatpush2.xpose.msra.mxu0 0.0
    %5189 = vmatprep.subr.mxu0 0.0
    %5190 = vmatpush2.xpose.msra.mxu0 0.0
    %5191 = vmatprep.subr.mxu0 0.0
    %5192 = vmatpush2.xpose.msra.mxu0 0.0
    %5193 = vmatprep.subr.mxu0 0.0
    %5194 = vmatpush2.xpose.msra.mxu0 0.0
    %5195 = vmatprep.subr.mxu0 0.0
    %5196 = vmatpush2.xpose.msra.mxu0 0.0
    %5197 = vmatprep.subr.mxu0 0.0
    %5198 = vmatpush2.xpose.msra.mxu0 0.0
    %5199 = vmatprep.mubr.f32.mxu0 0.0
    %5200 = vmatmul.mubr.f32.gmra.mxu0 %v5127
    %v5201 = vpop.f32.mrf.mxu0
    %v5202 = vadd.f32 0.0, %v5201
    %v5203 = vpop.f32.mrf.mxu0
    %5204 = vmatprep.mubr.f32.mxu0 0.0
    %5205 = vmatmul.mubr.f32.gmra.mxu0 %v5130
    %v5206 = vpop.f32.mrf.mxu0
    %v5207 = vadd.f32 0.0, %v5206
    %v5208 = vpop.f32.mrf.mxu0
    %5209 = vdwg.mxu0
    %v5210 = vmul.f32 %v5202, 0.35355338
    %v5211 = vmul.f32 %v5207, 0.35355338
    %v5212 = vsel %vm1059, %v5210, -inf
    %5213 = vmax.xlane.f32.xlu0 %v5212
    %v5214 = vpop.xlane.xlu0 %5213
    %v5215 = vsel %vm1059, %v5211, -inf
    %5216 = vmax.xlane.f32.xlu0 %v5215
    %v5217 = vpop.xlane.xlu0 %5216
    %v5218 = vsub.f32 %v5210, %v5214
    %v5219 = vsub.f32 %v5211, %v5217
    %v5220 = vmul.f32 %v5218, 1.442695
    %v5221 = vpow.pop %v5220
    %v5222 = vmul.f32 %v5219, 1.442695
    %v5223 = vpow.pop %v5222
    %v5224 = vsel %vm1059, %v5221, 0.0
    %5225 = vadd.xlane.f32.xlu0 %v5224
    %v5226 = vpop.xlane.xlu0 %5225
    %v5227 = vsel %vm1059, %v5223, 0.0
    %5228 = vadd.xlane.f32.xlu0 %v5227
    %v5229 = vpop.xlane.xlu0 %5228
    %v5230 = vrcp.pop %v5226
    %v5231 = vrcp.pop %v5229
    %v5232 = vmul.f32 %v5221, %v5230
    %v5233 = vmul.f32 %v5223, %v5231
    %v5235 = vsel %vm1059, %v5232, 0
    %v5238 = vsel %vm1059, %v5233, 0
    %5240 = vmatprep.subr.mxu0 0.0
    %5241 = vmatpush1.msra.mxu0 0.0
    %5242 = vmatprep.subr.mxu0 0.0
    %5243 = vmatpush1.msra.mxu0 0.0
    %5244 = vmatprep.subr.mxu0 0.0
    %5245 = vmatpush1.msra.mxu0 0.0
    %5246 = vmatprep.subr.mxu0 0.0
    %5247 = vmatpush1.msra.mxu0 0.0
    %5248 = vmatprep.subr.mxu0 0.0
    %5249 = vmatpush1.msra.mxu0 0.0
    %5250 = vmatprep.subr.mxu0 0.0
    %5251 = vmatpush1.msra.mxu0 0.0
    %5252 = vmatprep.subr.mxu0 0.0
    %5253 = vmatpush1.msra.mxu0 0.0
    %5254 = vmatprep.subr.mxu0 0.0
    %5255 = vmatpush1.msra.mxu0 0.0
    %5256 = vmatprep.subr.mxu0 0.0
    %5257 = vmatpush1.msra.mxu0 0.0
    %5258 = vmatprep.subr.mxu0 0.0
    %5259 = vmatpush1.msra.mxu0 0.0
    %5260 = vmatprep.subr.mxu0 0.0
    %5261 = vmatpush1.msra.mxu0 0.0
    %5262 = vmatprep.subr.mxu0 0.0
    %5263 = vmatpush1.msra.mxu0 0.0
    %5264 = vmatprep.subr.mxu0 0.0
    %5265 = vmatpush1.msra.mxu0 0.0
    %5266 = vmatprep.subr.mxu0 0.0
    %5267 = vmatpush1.msra.mxu0 0.0
    %5268 = vmatprep.subr.mxu0 0.0
    %5269 = vmatpush1.msra.mxu0 0.0
    %5270 = vmatprep.subr.mxu0 0.0
    %5271 = vmatpush1.msra.mxu0 %v3628
    %5272 = vmatprep.subr.mxu0 0.0
    %5273 = vmatpush2.msra.mxu0 0.0
    %5274 = vmatprep.subr.mxu0 0.0
    %5275 = vmatpush2.msra.mxu0 0.0
    %5276 = vmatprep.subr.mxu0 0.0
    %5277 = vmatpush2.msra.mxu0 0.0
    %5278 = vmatprep.subr.mxu0 0.0
    %5279 = vmatpush2.msra.mxu0 0.0
    %5280 = vmatprep.subr.mxu0 0.0
    %5281 = vmatpush2.msra.mxu0 0.0
    %5282 = vmatprep.subr.mxu0 0.0
    %5283 = vmatpush2.msra.mxu0 0.0
    %5284 = vmatprep.subr.mxu0 0.0
    %5285 = vmatpush2.msra.mxu0 0.0
    %5286 = vmatprep.subr.mxu0 0.0
    %5287 = vmatpush2.msra.mxu0 0.0
    %5288 = vmatprep.subr.mxu0 0.0
    %5289 = vmatpush2.msra.mxu0 0.0
    %5290 = vmatprep.subr.mxu0 0.0
    %5291 = vmatpush2.msra.mxu0 0.0
    %5292 = vmatprep.subr.mxu0 0.0
    %5293 = vmatpush2.msra.mxu0 0.0
    %5294 = vmatprep.subr.mxu0 0.0
    %5295 = vmatpush2.msra.mxu0 0.0
    %5296 = vmatprep.subr.mxu0 0.0
    %5297 = vmatpush2.msra.mxu0 0.0
    %5298 = vmatprep.subr.mxu0 0.0
    %5299 = vmatpush2.msra.mxu0 0.0
    %5300 = vmatprep.subr.mxu0 0.0
    %5301 = vmatpush2.msra.mxu0 0.0
    %5302 = vmatprep.subr.mxu0 0.0
    %5303 = vmatpush2.msra.mxu0 0.0
    %5304 = vmatprep.mubr.f32.mxu0 0.0
    %5305 = vmatmul.mubr.f32.gmra.mxu0 %v5235
    %v5306 = vpop.f32.mrf.mxu0
    %v5307 = vadd.f32 0.0, %v5306
    %v5308 = vpop.f32.mrf.mxu0
    %5309 = vmatprep.mubr.f32.mxu0 0.0
    %5310 = vmatmul.mubr.f32.gmra.mxu0 %v5238
    %v5311 = vpop.f32.mrf.mxu0
    %v5312 = vadd.f32 0.0, %v5311
    %v5313 = vpop.f32.mrf.mxu0
    %5314 = vdwg.mxu0
    %v5316 = vsel %vm1059, %v4055, 0
    %v5319 = vsel %vm1059, %v4060, 0
    %v5322 = vsel %vm1059, %v3394, 0
    %5324 = vmatprep.subr.mxu0 0.0
    %5325 = vmatpush1.xpose.msra.mxu0 0.0
    %5326 = vmatprep.subr.mxu0 0.0
    %5327 = vmatpush1.xpose.msra.mxu0 0.0
    %5328 = vmatprep.subr.mxu0 0.0
    %5329 = vmatpush1.xpose.msra.mxu0 0.0
    %5330 = vmatprep.subr.mxu0 0.0
    %5331 = vmatpush1.xpose.msra.mxu0 0.0
    %5332 = vmatprep.subr.mxu0 0.0
    %5333 = vmatpush1.xpose.msra.mxu0 0.0
    %5334 = vmatprep.subr.mxu0 0.0
    %5335 = vmatpush1.xpose.msra.mxu0 0.0
    %5336 = vmatprep.subr.mxu0 0.0
    %5337 = vmatpush1.xpose.msra.mxu0 0.0
    %5338 = vmatprep.subr.mxu0 0.0
    %5339 = vmatpush1.xpose.msra.mxu0 0.0
    %5340 = vmatprep.subr.mxu0 0.0
    %5341 = vmatpush1.xpose.msra.mxu0 0.0
    %5342 = vmatprep.subr.mxu0 0.0
    %5343 = vmatpush1.xpose.msra.mxu0 0.0
    %5344 = vmatprep.subr.mxu0 0.0
    %5345 = vmatpush1.xpose.msra.mxu0 0.0
    %5346 = vmatprep.subr.mxu0 0.0
    %5347 = vmatpush1.xpose.msra.mxu0 0.0
    %5348 = vmatprep.subr.mxu0 0.0
    %5349 = vmatpush1.xpose.msra.mxu0 0.0
    %5350 = vmatprep.subr.mxu0 0.0
    %5351 = vmatpush1.xpose.msra.mxu0 0.0
    %5352 = vmatprep.subr.mxu0 0.0
    %5353 = vmatpush1.xpose.msra.mxu0 0.0
    %5354 = vmatprep.subr.mxu0 0.0
    %5355 = vmatpush1.xpose.msra.mxu0 %v5322
    %5356 = vmatprep.subr.mxu0 0.0
    %5357 = vmatpush2.xpose.msra.mxu0 0.0
    %5358 = vmatprep.subr.mxu0 0.0
    %5359 = vmatpush2.xpose.msra.mxu0 0.0
    %5360 = vmatprep.subr.mxu0 0.0
    %5361 = vmatpush2.xpose.msra.mxu0 0.0
    %5362 = vmatprep.subr.mxu0 0.0
    %5363 = vmatpush2.xpose.msra.mxu0 0.0
    %5364 = vmatprep.subr.mxu0 0.0
    %5365 = vmatpush2.xpose.msra.mxu0 0.0
    %5366 = vmatprep.subr.mxu0 0.0
    %5367 = vmatpush2.xpose.msra.mxu0 0.0
    %5368 = vmatprep.subr.mxu0 0.0
    %5369 = vmatpush2.xpose.msra.mxu0 0.0
    %5370 = vmatprep.subr.mxu0 0.0
    %5371 = vmatpush2.xpose.msra.mxu0 0.0
    %5372 = vmatprep.subr.mxu0 0.0
    %5373 = vmatpush2.xpose.msra.mxu0 0.0
    %5374 = vmatprep.subr.mxu0 0.0
    %5375 = vmatpush2.xpose.msra.mxu0 0.0
    %5376 = vmatprep.subr.mxu0 0.0
    %5377 = vmatpush2.xpose.msra.mxu0 0.0
    %5378 = vmatprep.subr.mxu0 0.0
    %5379 = vmatpush2.xpose.msra.mxu0 0.0
    %5380 = vmatprep.subr.mxu0 0.0
    %5381 = vmatpush2.xpose.msra.mxu0 0.0
    %5382 = vmatprep.subr.mxu0 0.0
    %5383 = vmatpush2.xpose.msra.mxu0 0.0
    %5384 = vmatprep.subr.mxu0 0.0
    %5385 = vmatpush2.xpose.msra.mxu0 0.0
    %5386 = vmatprep.subr.mxu0 0.0
    %5387 = vmatpush2.xpose.msra.mxu0 0.0
    %5388 = vmatprep.mubr.f32.mxu0 0.0
    %5389 = vmatmul.mubr.f32.gmra.mxu0 %v5316
    %v5390 = vpop.f32.mrf.mxu0
    %v5391 = vadd.f32 0.0, %v5390
    %v5392 = vpop.f32.mrf.mxu0
    %5393 = vmatprep.mubr.f32.mxu0 0.0
    %5394 = vmatmul.mubr.f32.gmra.mxu0 %v5319
    %v5395 = vpop.f32.mrf.mxu0
    %v5396 = vadd.f32 0.0, %v5395
    %v5397 = vpop.f32.mrf.mxu0
    %5398 = vdwg.mxu0
    %v5399 = vmul.f32 %v5391, 0.35355338
    %v5400 = vmul.f32 %v5396, 0.35355338
    %v5401 = vsel %vm1059, %v5399, -inf
    %5402 = vmax.xlane.f32.xlu0 %v5401
    %v5403 = vpop.xlane.xlu0 %5402
    %v5404 = vsel %vm1059, %v5400, -inf
    %5405 = vmax.xlane.f32.xlu0 %v5404
    %v5406 = vpop.xlane.xlu0 %5405
    %v5407 = vsub.f32 %v5399, %v5403
    %v5408 = vsub.f32 %v5400, %v5406
    %v5409 = vmul.f32 %v5407, 1.442695
    %v5410 = vpow.pop %v5409
    %v5411 = vmul.f32 %v5408, 1.442695
    %v5412 = vpow.pop %v5411
    %v5413 = vsel %vm1059, %v5410, 0.0
    %5414 = vadd.xlane.f32.xlu0 %v5413
    %v5415 = vpop.xlane.xlu0 %5414
    %v5416 = vsel %vm1059, %v5412, 0.0
    %5417 = vadd.xlane.f32.xlu0 %v5416
    %v5418 = vpop.xlane.xlu0 %5417
    %v5419 = vrcp.pop %v5415
    %v5420 = vrcp.pop %v5418
    %v5421 = vmul.f32 %v5410, %v5419
    %v5422 = vmul.f32 %v5412, %v5420
    %v5424 = vsel %vm1059, %v5421, 0
    %v5427 = vsel %vm1059, %v5422, 0
    %5429 = vmatprep.subr.mxu0 0.0
    %5430 = vmatpush1.msra.mxu0 0.0
    %5431 = vmatprep.subr.mxu0 0.0
    %5432 = vmatpush1.msra.mxu0 0.0
    %5433 = vmatprep.subr.mxu0 0.0
    %5434 = vmatpush1.msra.mxu0 0.0
    %5435 = vmatprep.subr.mxu0 0.0
    %5436 = vmatpush1.msra.mxu0 0.0
    %5437 = vmatprep.subr.mxu0 0.0
    %5438 = vmatpush1.msra.mxu0 0.0
    %5439 = vmatprep.subr.mxu0 0.0
    %5440 = vmatpush1.msra.mxu0 0.0
    %5441 = vmatprep.subr.mxu0 0.0
    %5442 = vmatpush1.msra.mxu0 0.0
    %5443 = vmatprep.subr.mxu0 0.0
    %5444 = vmatpush1.msra.mxu0 0.0
    %5445 = vmatprep.subr.mxu0 0.0
    %5446 = vmatpush1.msra.mxu0 0.0
    %5447 = vmatprep.subr.mxu0 0.0
    %5448 = vmatpush1.msra.mxu0 0.0
    %5449 = vmatprep.subr.mxu0 0.0
    %5450 = vmatpush1.msra.mxu0 0.0
    %5451 = vmatprep.subr.mxu0 0.0
    %5452 = vmatpush1.msra.mxu0 0.0
    %5453 = vmatprep.subr.mxu0 0.0
    %5454 = vmatpush1.msra.mxu0 0.0
    %5455 = vmatprep.subr.mxu0 0.0
    %5456 = vmatpush1.msra.mxu0 0.0
    %5457 = vmatprep.subr.mxu0 0.0
    %5458 = vmatpush1.msra.mxu0 0.0
    %5459 = vmatprep.subr.mxu0 0.0
    %5460 = vmatpush1.msra.mxu0 %v3706
    %5461 = vmatprep.subr.mxu0 0.0
    %5462 = vmatpush2.msra.mxu0 0.0
    %5463 = vmatprep.subr.mxu0 0.0
    %5464 = vmatpush2.msra.mxu0 0.0
    %5465 = vmatprep.subr.mxu0 0.0
    %5466 = vmatpush2.msra.mxu0 0.0
    %5467 = vmatprep.subr.mxu0 0.0
    %5468 = vmatpush2.msra.mxu0 0.0
    %5469 = vmatprep.subr.mxu0 0.0
    %5470 = vmatpush2.msra.mxu0 0.0
    %5471 = vmatprep.subr.mxu0 0.0
    %5472 = vmatpush2.msra.mxu0 0.0
    %5473 = vmatprep.subr.mxu0 0.0
    %5474 = vmatpush2.msra.mxu0 0.0
    %5475 = vmatprep.subr.mxu0 0.0
    %5476 = vmatpush2.msra.mxu0 0.0
    %5477 = vmatprep.subr.mxu0 0.0
    %5478 = vmatpush2.msra.mxu0 0.0
    %5479 = vmatprep.subr.mxu0 0.0
    %5480 = vmatpush2.msra.mxu0 0.0
    %5481 = vmatprep.subr.mxu0 0.0
    %5482 = vmatpush2.msra.mxu0 0.0
    %5483 = vmatprep.subr.mxu0 0.0
    %5484 = vmatpush2.msra.mxu0 0.0
    %5485 = vmatprep.subr.mxu0 0.0
    %5486 = vmatpush2.msra.mxu0 0.0
    %5487 = vmatprep.subr.mxu0 0.0
    %5488 = vmatpush2.msra.mxu0 0.0
    %5489 = vmatprep.subr.mxu0 0.0
    %5490 = vmatpush2.msra.mxu0 0.0
    %5491 = vmatprep.subr.mxu0 0.0
    %5492 = vmatpush2.msra.mxu0 0.0
    %5493 = vmatprep.mubr.f32.mxu0 0.0
    %5494 = vmatmul.mubr.f32.gmra.mxu0 %v5424
    %v5495 = vpop.f32.mrf.mxu0
    %v5496 = vadd.f32 0.0, %v5495
    %v5497 = vpop.f32.mrf.mxu0
    %5498 = vmatprep.mubr.f32.mxu0 0.0
    %5499 = vmatmul.mubr.f32.gmra.mxu0 %v5427
    %v5500 = vpop.f32.mrf.mxu0
    %v5501 = vadd.f32 0.0, %v5500
    %v5502 = vpop.f32.mrf.mxu0
    %5503 = vdwg.mxu0
    %v5505 = vsel %vm1059, %v4143, 0
    %v5508 = vsel %vm1059, %v4148, 0
    %v5511 = vsel %vm1059, %v3472, 0
    %5513 = vmatprep.subr.mxu0 0.0
    %5514 = vmatpush1.xpose.msra.mxu0 0.0
    %5515 = vmatprep.subr.mxu0 0.0
    %5516 = vmatpush1.xpose.msra.mxu0 0.0
    %5517 = vmatprep.subr.mxu0 0.0
    %5518 = vmatpush1.xpose.msra.mxu0 0.0
    %5519 = vmatprep.subr.mxu0 0.0
    %5520 = vmatpush1.xpose.msra.mxu0 0.0
    %5521 = vmatprep.subr.mxu0 0.0
    %5522 = vmatpush1.xpose.msra.mxu0 0.0
    %5523 = vmatprep.subr.mxu0 0.0
    %5524 = vmatpush1.xpose.msra.mxu0 0.0
    %5525 = vmatprep.subr.mxu0 0.0
    %5526 = vmatpush1.xpose.msra.mxu0 0.0
    %5527 = vmatprep.subr.mxu0 0.0
    %5528 = vmatpush1.xpose.msra.mxu0 0.0
    %5529 = vmatprep.subr.mxu0 0.0
    %5530 = vmatpush1.xpose.msra.mxu0 0.0
    %5531 = vmatprep.subr.mxu0 0.0
    %5532 = vmatpush1.xpose.msra.mxu0 0.0
    %5533 = vmatprep.subr.mxu0 0.0
    %5534 = vmatpush1.xpose.msra.mxu0 0.0
    %5535 = vmatprep.subr.mxu0 0.0
    %5536 = vmatpush1.xpose.msra.mxu0 0.0
    %5537 = vmatprep.subr.mxu0 0.0
    %5538 = vmatpush1.xpose.msra.mxu0 0.0
    %5539 = vmatprep.subr.mxu0 0.0
    %5540 = vmatpush1.xpose.msra.mxu0 0.0
    %5541 = vmatprep.subr.mxu0 0.0
    %5542 = vmatpush1.xpose.msra.mxu0 0.0
    %5543 = vmatprep.subr.mxu0 0.0
    %5544 = vmatpush1.xpose.msra.mxu0 %v5511
    %5545 = vmatprep.subr.mxu0 0.0
    %5546 = vmatpush2.xpose.msra.mxu0 0.0
    %5547 = vmatprep.subr.mxu0 0.0
    %5548 = vmatpush2.xpose.msra.mxu0 0.0
    %5549 = vmatprep.subr.mxu0 0.0
    %5550 = vmatpush2.xpose.msra.mxu0 0.0
    %5551 = vmatprep.subr.mxu0 0.0
    %5552 = vmatpush2.xpose.msra.mxu0 0.0
    %5553 = vmatprep.subr.mxu0 0.0
    %5554 = vmatpush2.xpose.msra.mxu0 0.0
    %5555 = vmatprep.subr.mxu0 0.0
    %5556 = vmatpush2.xpose.msra.mxu0 0.0
    %5557 = vmatprep.subr.mxu0 0.0
    %5558 = vmatpush2.xpose.msra.mxu0 0.0
    %5559 = vmatprep.subr.mxu0 0.0
    %5560 = vmatpush2.xpose.msra.mxu0 0.0
    %5561 = vmatprep.subr.mxu0 0.0
    %5562 = vmatpush2.xpose.msra.mxu0 0.0
    %5563 = vmatprep.subr.mxu0 0.0
    %5564 = vmatpush2.xpose.msra.mxu0 0.0
    %5565 = vmatprep.subr.mxu0 0.0
    %5566 = vmatpush2.xpose.msra.mxu0 0.0
    %5567 = vmatprep.subr.mxu0 0.0
    %5568 = vmatpush2.xpose.msra.mxu0 0.0
    %5569 = vmatprep.subr.mxu0 0.0
    %5570 = vmatpush2.xpose.msra.mxu0 0.0
    %5571 = vmatprep.subr.mxu0 0.0
    %5572 = vmatpush2.xpose.msra.mxu0 0.0
    %5573 = vmatprep.subr.mxu0 0.0
    %5574 = vmatpush2.xpose.msra.mxu0 0.0
    %5575 = vmatprep.subr.mxu0 0.0
    %5576 = vmatpush2.xpose.msra.mxu0 0.0
    %5577 = vmatprep.mubr.f32.mxu0 0.0
    %5578 = vmatmul.mubr.f32.gmra.mxu0 %v5505
    %v5579 = vpop.f32.mrf.mxu0
    %v5580 = vadd.f32 0.0, %v5579
    %v5581 = vpop.f32.mrf.mxu0
    %5582 = vmatprep.mubr.f32.mxu0 0.0
    %5583 = vmatmul.mubr.f32.gmra.mxu0 %v5508
    %v5584 = vpop.f32.mrf.mxu0
    %v5585 = vadd.f32 0.0, %v5584
    %v5586 = vpop.f32.mrf.mxu0
    %5587 = vdwg.mxu0
    %v5588 = vmul.f32 %v5580, 0.35355338
    %v5589 = vmul.f32 %v5585, 0.35355338
    %v5590 = vsel %vm1059, %v5588, -inf
    %5591 = vmax.xlane.f32.xlu0 %v5590
    %v5592 = vpop.xlane.xlu0 %5591
    %v5593 = vsel %vm1059, %v5589, -inf
    %5594 = vmax.xlane.f32.xlu0 %v5593
    %v5595 = vpop.xlane.xlu0 %5594
    %v5596 = vsub.f32 %v5588, %v5592
    %v5597 = vsub.f32 %v5589, %v5595
    %v5598 = vmul.f32 %v5596, 1.442695
    %v5599 = vpow.pop %v5598
    %v5600 = vmul.f32 %v5597, 1.442695
    %v5601 = vpow.pop %v5600
    %v5602 = vsel %vm1059, %v5599, 0.0
    %5603 = vadd.xlane.f32.xlu0 %v5602
    %v5604 = vpop.xlane.xlu0 %5603
    %v5605 = vsel %vm1059, %v5601, 0.0
    %5606 = vadd.xlane.f32.xlu0 %v5605
    %v5607 = vpop.xlane.xlu0 %5606
    %v5608 = vrcp.pop %v5604
    %v5609 = vrcp.pop %v5607
    %v5610 = vmul.f32 %v5599, %v5608
    %v5611 = vmul.f32 %v5601, %v5609
    %v5613 = vsel %vm1059, %v5610, 0
    %v5616 = vsel %vm1059, %v5611, 0
    %5618 = vmatprep.subr.mxu0 0.0
    %5619 = vmatpush1.msra.mxu0 0.0
    %5620 = vmatprep.subr.mxu0 0.0
    %5621 = vmatpush1.msra.mxu0 0.0
    %5622 = vmatprep.subr.mxu0 0.0
    %5623 = vmatpush1.msra.mxu0 0.0
    %5624 = vmatprep.subr.mxu0 0.0
    %5625 = vmatpush1.msra.mxu0 0.0
    %5626 = vmatprep.subr.mxu0 0.0
    %5627 = vmatpush1.msra.mxu0 0.0
    %5628 = vmatprep.subr.mxu0 0.0
    %5629 = vmatpush1.msra.mxu0 0.0
    %5630 = vmatprep.subr.mxu0 0.0
    %5631 = vmatpush1.msra.mxu0 0.0
    %5632 = vmatprep.subr.mxu0 0.0
    %5633 = vmatpush1.msra.mxu0 0.0
    %5634 = vmatprep.subr.mxu0 0.0
    %5635 = vmatpush1.msra.mxu0 0.0
    %5636 = vmatprep.subr.mxu0 0.0
    %5637 = vmatpush1.msra.mxu0 0.0
    %5638 = vmatprep.subr.mxu0 0.0
    %5639 = vmatpush1.msra.mxu0 0.0
    %5640 = vmatprep.subr.mxu0 0.0
    %5641 = vmatpush1.msra.mxu0 0.0
    %5642 = vmatprep.subr.mxu0 0.0
    %5643 = vmatpush1.msra.mxu0 0.0
    %5644 = vmatprep.subr.mxu0 0.0
    %5645 = vmatpush1.msra.mxu0 0.0
    %5646 = vmatprep.subr.mxu0 0.0
    %5647 = vmatpush1.msra.mxu0 0.0
    %5648 = vmatprep.subr.mxu0 0.0
    %5649 = vmatpush1.msra.mxu0 %v3784
    %5650 = vmatprep.subr.mxu0 0.0
    %5651 = vmatpush2.msra.mxu0 0.0
    %5652 = vmatprep.subr.mxu0 0.0
    %5653 = vmatpush2.msra.mxu0 0.0
    %5654 = vmatprep.subr.mxu0 0.0
    %5655 = vmatpush2.msra.mxu0 0.0
    %5656 = vmatprep.subr.mxu0 0.0
    %5657 = vmatpush2.msra.mxu0 0.0
    %5658 = vmatprep.subr.mxu0 0.0
    %5659 = vmatpush2.msra.mxu0 0.0
    %5660 = vmatprep.subr.mxu0 0.0
    %5661 = vmatpush2.msra.mxu0 0.0
    %5662 = vmatprep.subr.mxu0 0.0
    %5663 = vmatpush2.msra.mxu0 0.0
    %5664 = vmatprep.subr.mxu0 0.0
    %5665 = vmatpush2.msra.mxu0 0.0
    %5666 = vmatprep.subr.mxu0 0.0
    %5667 = vmatpush2.msra.mxu0 0.0
    %5668 = vmatprep.subr.mxu0 0.0
    %5669 = vmatpush2.msra.mxu0 0.0
    %5670 = vmatprep.subr.mxu0 0.0
    %5671 = vmatpush2.msra.mxu0 0.0
    %5672 = vmatprep.subr.mxu0 0.0
    %5673 = vmatpush2.msra.mxu0 0.0
    %5674 = vmatprep.subr.mxu0 0.0
    %5675 = vmatpush2.msra.mxu0 0.0
    %5676 = vmatprep.subr.mxu0 0.0
    %5677 = vmatpush2.msra.mxu0 0.0
    %5678 = vmatprep.subr.mxu0 0.0
    %5679 = vmatpush2.msra.mxu0 0.0
    %5680 = vmatprep.subr.mxu0 0.0
    %5681 = vmatpush2.msra.mxu0 0.0
    %5682 = vmatprep.mubr.f32.mxu0 0.0
    %5683 = vmatmul.mubr.f32.gmra.mxu0 %v5613
    %v5684 = vpop.f32.mrf.mxu0
    %v5685 = vadd.f32 0.0, %v5684
    %v5686 = vpop.f32.mrf.mxu0
    %5687 = vmatprep.mubr.f32.mxu0 0.0
    %5688 = vmatmul.mubr.f32.gmra.mxu0 %v5616
    %v5689 = vpop.f32.mrf.mxu0
    %v5690 = vadd.f32 0.0, %v5689
    %v5691 = vpop.f32.mrf.mxu0
    %5692 = vdwg.mxu0
    %5695 = vrot.lane.b32.xlu0 %v5307, 8
    %v5696 = vpop.permute.xlu0 %5695
    %5697 = vrot.lane.b32.xlu0 %v5312, 8
    %v5698 = vpop.permute.xlu0 %5697
    %5703 = vrot.lane.b32.xlu0 %v5496, 16
    %v5704 = vpop.permute.xlu0 %5703
    %5705 = vrot.lane.b32.xlu0 %v5501, 16
    %v5706 = vpop.permute.xlu0 %5705
    %5711 = vrot.lane.b32.xlu0 %v5685, 24
    %v5712 = vpop.permute.xlu0 %5711
    %5713 = vrot.lane.b32.xlu0 %v5690, 24
    %v5714 = vpop.permute.xlu0 %5713
    %v5717 = vsel %vm1059, %v5118, %v5696
    %v5718 = vsel %vm1059, %v5123, %v5698
    %v5719 = vsel %vm1842, %v5717, %v5704
    %v5720 = vsel %vm1842, %v5718, %v5706
    %v5721 = vsel %vm1845, %v5719, %v5712
    %v5722 = vsel %vm1845, %v5720, %v5714
    %v5724 = vsel %vm58, %v4935, 0
    %v5727 = vsel %vm58, %v4936, 0
    %v5730 = vsel %vm58, %v5721, 0
    %v5733 = vsel %vm58, %v5722, 0
    %5735 = vmatprep.subr.mxu0 0.0
    %5736 = vmatpush1.msra.mxu0 0.0
    %5737 = vmatprep.subr.mxu0 0.0
    %5738 = vmatpush1.msra.mxu0 0.0
    %5739 = vmatprep.subr.mxu0 0.0
    %5740 = vmatpush1.msra.mxu0 0.0
    %5741 = vmatprep.subr.mxu0 0.0
    %5742 = vmatpush1.msra.mxu0 0.0
    %5743 = vmatprep.subr.mxu0 0.0
    %5744 = vmatpush1.msra.mxu0 0.0
    %5745 = vmatprep.subr.mxu0 0.0
    %5746 = vmatpush1.msra.mxu0 0.0
    %5747 = vmatprep.subr.mxu0 0.0
    %5748 = vmatpush1.msra.mxu0 0.0
    %5749 = vmatprep.subr.mxu0 0.0
    %5750 = vmatpush1.msra.mxu0 0.0
    %5751 = vmatprep.subr.mxu0 0.0
    %5752 = vmatpush1.msra.mxu0 0.0
    %5753 = vmatprep.subr.mxu0 0.0
    %5754 = vmatpush1.msra.mxu0 0.0
    %5755 = vmatprep.subr.mxu0 0.0
    %5756 = vmatpush1.msra.mxu0 0.0
    %5757 = vmatprep.subr.mxu0 0.0
    %5758 = vmatpush1.msra.mxu0 0.0
    %5759 = vmatprep.subr.mxu0 0.0
    %5760 = vmatpush1.msra.mxu0 %v3162
    %5761 = vmatprep.subr.mxu0 0.0
    %5762 = vmatpush1.msra.mxu0 %v3161
    %5763 = vmatprep.subr.mxu0 0.0
    %5764 = vmatpush1.msra.mxu0 %v3160
    %5765 = vmatprep.subr.mxu0 0.0
    %5766 = vmatpush1.msra.mxu0 %v3159
    %5767 = vmatprep.subr.mxu0 0.0
    %5768 = vmatpush2.msra.mxu0 0.0
    %5769 = vmatprep.subr.mxu0 0.0
    %5770 = vmatpush2.msra.mxu0 0.0
    %5771 = vmatprep.subr.mxu0 0.0
    %5772 = vmatpush2.msra.mxu0 0.0
    %5773 = vmatprep.subr.mxu0 0.0
    %5774 = vmatpush2.msra.mxu0 0.0
    %5775 = vmatprep.subr.mxu0 0.0
    %5776 = vmatpush2.msra.mxu0 0.0
    %5777 = vmatprep.subr.mxu0 0.0
    %5778 = vmatpush2.msra.mxu0 0.0
    %5779 = vmatprep.subr.mxu0 0.0
    %5780 = vmatpush2.msra.mxu0 0.0
    %5781 = vmatprep.subr.mxu0 0.0
    %5782 = vmatpush2.msra.mxu0 0.0
    %5783 = vmatprep.subr.mxu0 0.0
    %5784 = vmatpush2.msra.mxu0 0.0
    %5785 = vmatprep.subr.mxu0 0.0
    %5786 = vmatpush2.msra.mxu0 0.0
    %5787 = vmatprep.subr.mxu0 0.0
    %5788 = vmatpush2.msra.mxu0 0.0
    %5789 = vmatprep.subr.mxu0 0.0
    %5790 = vmatpush2.msra.mxu0 0.0
    %5791 = vmatprep.subr.mxu0 0.0
    %5792 = vmatpush2.msra.mxu0 0.0
    %5793 = vmatprep.subr.mxu0 0.0
    %5794 = vmatpush2.msra.mxu0 0.0
    %5795 = vmatprep.subr.mxu0 0.0
    %5796 = vmatpush2.msra.mxu0 0.0
    %5797 = vmatprep.subr.mxu0 0.0
    %5798 = vmatpush2.msra.mxu0 0.0
    %5799 = vmatprep.mubr.f32.mxu0 0.0
    %5800 = vmatmul.mubr.f32.gmra.mxu0 %v5724
    %v5801 = vpop.f32.mrf.mxu0
    %v5802 = vadd.f32 0.0, %v5801
    %v5803 = vpop.f32.mrf.mxu0
    %5804 = vmatprep.mubr.f32.mxu0 0.0
    %5805 = vmatmul.mubr.f32.gmra.mxu0 %v5727
    %v5806 = vpop.f32.mrf.mxu0
    %v5807 = vadd.f32 0.0, %v5806
    %v5808 = vpop.f32.mrf.mxu0
    %5809 = vmatprep.mubr.f32.mxu0 0.0
    %5810 = vmatmul.mubr.f32.gmra.mxu0 %v5730
    %v5811 = vpop.f32.mrf.mxu0
    %v5812 = vadd.f32 0.0, %v5811
    %v5813 = vpop.f32.mrf.mxu0
    %5814 = vmatprep.mubr.f32.mxu0 0.0
    %5815 = vmatmul.mubr.f32.gmra.mxu0 %v5733
    %v5816 = vpop.f32.mrf.mxu0
    %v5817 = vadd.f32 0.0, %v5816
    %v5818 = vpop.f32.mrf.mxu0
    %5819 = vdwg.mxu0
    %v5820 = vadd.f32 %v3143, %v5802
    %v5821 = vadd.f32 %v3144, %v5807
    %v5822 = vadd.f32 %v3145, %v5812
    %v5823 = vadd.f32 %v3146, %v5817
    %v5824 = vld [vmem:[%s3 + $0x235] sm:$0x1]
    %v5825 = vld [vmem:[%s3 + $0x236] sm:$0x1]
    %v5826 = vsel %vm58, %v5820, 0.0
    %5827 = vadd.xlane.f32.xlu0 %v5826
    %v5828 = vpop.xlane.xlu0 %5827
    %v5829 = vsel %vm58, %v5821, 0.0
    %5830 = vadd.xlane.f32.xlu0 %v5829
    %v5831 = vpop.xlane.xlu0 %5830
    %v5832 = vsel %vm58, %v5822, 0.0
    %5833 = vadd.xlane.f32.xlu0 %v5832
    %v5834 = vpop.xlane.xlu0 %5833
    %v5835 = vsel %vm58, %v5823, 0.0
    %5836 = vadd.xlane.f32.xlu0 %v5835
    %v5837 = vpop.xlane.xlu0 %5836
    %v5838 = vmul.f32 %v5828, %v2749
    %v5839 = vmul.f32 %v5831, %v2749
    %v5840 = vmul.f32 %v5834, %v2749
    %v5841 = vmul.f32 %v5837, %v2749
    %v5842 = vmul.f32 %v5820, %v5820
    %v5843 = vmul.f32 %v5821, %v5821
    %v5844 = vmul.f32 %v5822, %v5822
    %v5845 = vmul.f32 %v5823, %v5823
    %v5846 = vsel %vm58, %v5842, 0.0
    %5847 = vadd.xlane.f32.xlu0 %v5846
    %v5848 = vpop.xlane.xlu0 %5847
    %v5849 = vsel %vm58, %v5843, 0.0
    %5850 = vadd.xlane.f32.xlu0 %v5849
    %v5851 = vpop.xlane.xlu0 %5850
    %v5852 = vsel %vm58, %v5844, 0.0
    %5853 = vadd.xlane.f32.xlu0 %v5852
    %v5854 = vpop.xlane.xlu0 %5853
    %v5855 = vsel %vm58, %v5845, 0.0
    %5856 = vadd.xlane.f32.xlu0 %v5855
    %v5857 = vpop.xlane.xlu0 %5856
    %v5858 = vmul.f32 %v5848, %v2749
    %v5859 = vmul.f32 %v5851, %v2749
    %v5860 = vmul.f32 %v5854, %v2749
    %v5861 = vmul.f32 %v5857, %v2749
    %v5862 = vmul.f32 %v5838, %v5838
    %v5863 = vmul.f32 %v5839, %v5839
    %v5864 = vmul.f32 %v5840, %v5840
    %v5865 = vmul.f32 %v5841, %v5841
    %v5866 = vsub.f32 %v5858, %v5862
    %v5867 = vsub.f32 %v5859, %v5863
    %v5868 = vsub.f32 %v5860, %v5864
    %v5869 = vsub.f32 %v5861, %v5865
    %v5870 = vsub.f32 %v5820, %v5838
    %v5871 = vsub.f32 %v5821, %v5839
    %v5872 = vsub.f32 %v5822, %v5840
    %v5873 = vsub.f32 %v5823, %v5841
    %v5874 = vadd.f32 %v5866, 1e-05
    %v5875 = vadd.f32 %v5867, 1e-05
    %v5876 = vadd.f32 %v5868, 1e-05
    %v5877 = vadd.f32 %v5869, 1e-05
    %v5878 = vrsqrt.pop %v5874
    %v5879 = vrsqrt.pop %v5875
    %v5880 = vrsqrt.pop %v5876
    %v5881 = vrsqrt.pop %v5877
    %v5882 = vmul.f32 %v5870, %v5878
    %v5883 = vmul.f32 %v5871, %v5879
    %v5884 = vmul.f32 %v5872, %v5880
    %v5885 = vmul.f32 %v5873, %v5881
    %v5886 = vlaneseq
    %v5887 = vshrl.u32 %v5886, 7
    %v5888 = vsub.s32 0, %v5887
    %v5889 = vrot.slane %v5824, %v5888
    %v5890 = vmul.f32 %v5882, %v5889
    %v5891 = vmul.f32 %v5883, %v5889
    %v5892 = vmul.f32 %v5884, %v5889
    %v5893 = vmul.f32 %v5885, %v5889
    %v5894 = vlaneseq
    %v5895 = vshrl.u32 %v5894, 7
    %v5896 = vsub.s32 0, %v5895
    %v5897 = vrot.slane %v5825, %v5896
    %v5898 = vadd.f32 %v5890, %v5897
    %v5899 = vadd.f32 %v5891, %v5897
    %v5900 = vadd.f32 %v5892, %v5897
    %v5901 = vadd.f32 %v5893, %v5897
    %v5902 = vld [vmem:[%s3 + $0x180] sm:$0xff]
    %v5903 = vld [vmem:[%s3 + $0x188] sm:$0xff]
    %v5904 = vld [vmem:[%s3 + $0x190] sm:$0xff]
    %v5905 = vld [vmem:[%s3 + $0x198] sm:$0xff]
    %v5906 = vld [vmem:[%s3 + $0x1a0] sm:$0xff]
    %v5907 = vld [vmem:[%s3 + $0x1a8] sm:$0xff]
    %v5908 = vld [vmem:[%s3 + $0x1b0] sm:$0xff]
    %v5909 = vld [vmem:[%s3 + $0x1b8] sm:$0xff]
    %s5910 = scalar_lea.vmem %s4, 1
    %v5911 = vld [vmem:[%s5910] sm:$0x1]
    %v5913 = vlaneseq
    %v5914 = vshrl.u32 %v5913, 7
    %v5915 = vsub.s32 0, %v5914
    %v5916 = vrot.slane %v5911, %v5915
    %v5919 = vsel %vm58, %v5898, 0
    %v5922 = vsel %vm58, %v5899, 0
    %v5925 = vsel %vm58, %v5900, 0
    %v5928 = vsel %vm58, %v5901, 0
    %v5931 = vsel %vm58, %v5902, 0
    %v5934 = vsel %vm58, %v5903, 0
    %v5937 = vsel %vm58, %v5904, 0
    %v5940 = vsel %vm58, %v5905, 0
    %v5943 = vsel %vm58, %v5906, 0
    %v5946 = vsel %vm58, %v5907, 0
    %v5949 = vsel %vm58, %v5908, 0
    %v5952 = vsel %vm58, %v5909, 0
    %5954 = vmatprep.subr.mxu0 0.0
    %5955 = vmatpush1.xpose.msra.mxu0 0.0
    %5956 = vmatprep.subr.mxu0 0.0
    %5957 = vmatpush1.xpose.msra.mxu0 0.0
    %5958 = vmatprep.subr.mxu0 0.0
    %5959 = vmatpush1.xpose.msra.mxu0 0.0
    %5960 = vmatprep.subr.mxu0 0.0
    %5961 = vmatpush1.xpose.msra.mxu0 0.0
    %5962 = vmatprep.subr.mxu0 0.0
    %5963 = vmatpush1.xpose.msra.mxu0 0.0
    %5964 = vmatprep.subr.mxu0 0.0
    %5965 = vmatpush1.xpose.msra.mxu0 0.0
    %5966 = vmatprep.subr.mxu0 0.0
    %5967 = vmatpush1.xpose.msra.mxu0 0.0
    %5968 = vmatprep.subr.mxu0 0.0
    %5969 = vmatpush1.xpose.msra.mxu0 0.0
    %5970 = vmatprep.subr.mxu0 0.0
    %5971 = vmatpush1.xpose.msra.mxu0 %v5952
    %5972 = vmatprep.subr.mxu0 0.0
    %5973 = vmatpush1.xpose.msra.mxu0 %v5949
    %5974 = vmatprep.subr.mxu0 0.0
    %5975 = vmatpush1.xpose.msra.mxu0 %v5946
    %5976 = vmatprep.subr.mxu0 0.0
    %5977 = vmatpush1.xpose.msra.mxu0 %v5943
    %5978 = vmatprep.subr.mxu0 0.0
    %5979 = vmatpush1.xpose.msra.mxu0 %v5940
    %5980 = vmatprep.subr.mxu0 0.0
    %5981 = vmatpush1.xpose.msra.mxu0 %v5937
    %5982 = vmatprep.subr.mxu0 0.0
    %5983 = vmatpush1.xpose.msra.mxu0 %v5934
    %5984 = vmatprep.subr.mxu0 0.0
    %5985 = vmatpush1.xpose.msra.mxu0 %v5931
    %5986 = vmatprep.subr.mxu0 0.0
    %5987 = vmatpush2.xpose.msra.mxu0 0.0
    %5988 = vmatprep.subr.mxu0 0.0
    %5989 = vmatpush2.xpose.msra.mxu0 0.0
    %5990 = vmatprep.subr.mxu0 0.0
    %5991 = vmatpush2.xpose.msra.mxu0 0.0
    %5992 = vmatprep.subr.mxu0 0.0
    %5993 = vmatpush2.xpose.msra.mxu0 0.0
    %5994 = vmatprep.subr.mxu0 0.0
    %5995 = vmatpush2.xpose.msra.mxu0 0.0
    %5996 = vmatprep.subr.mxu0 0.0
    %5997 = vmatpush2.xpose.msra.mxu0 0.0
    %5998 = vmatprep.subr.mxu0 0.0
    %5999 = vmatpush2.xpose.msra.mxu0 0.0
    %6000 = vmatprep.subr.mxu0 0.0
    %6001 = vmatpush2.xpose.msra.mxu0 0.0
    %6002 = vmatprep.subr.mxu0 0.0
    %6003 = vmatpush2.xpose.msra.mxu0 0.0
    %6004 = vmatprep.subr.mxu0 0.0
    %6005 = vmatpush2.xpose.msra.mxu0 0.0
    %6006 = vmatprep.subr.mxu0 0.0
    %6007 = vmatpush2.xpose.msra.mxu0 0.0
    %6008 = vmatprep.subr.mxu0 0.0
    %6009 = vmatpush2.xpose.msra.mxu0 0.0
    %6010 = vmatprep.subr.mxu0 0.0
    %6011 = vmatpush2.xpose.msra.mxu0 0.0
    %6012 = vmatprep.subr.mxu0 0.0
    %6013 = vmatpush2.xpose.msra.mxu0 0.0
    %6014 = vmatprep.subr.mxu0 0.0
    %6015 = vmatpush2.xpose.msra.mxu0 0.0
    %6016 = vmatprep.subr.mxu0 0.0
    %6017 = vmatpush2.xpose.msra.mxu0 0.0
    %6018 = vmatprep.mubr.f32.mxu0 0.0
    %6019 = vmatmul.mubr.f32.gmra.mxu0 %v5919
    %v6020 = vpop.f32.mrf.mxu0
    %v6021 = vadd.f32 %v5916, %v6020
    %v6022 = vpop.f32.mrf.mxu0
    %6023 = vmatprep.mubr.f32.mxu0 0.0
    %6024 = vmatmul.mubr.f32.gmra.mxu0 %v5922
    %v6025 = vpop.f32.mrf.mxu0
    %v6026 = vadd.f32 %v5916, %v6025
    %v6027 = vpop.f32.mrf.mxu0
    %6028 = vmatprep.mubr.f32.mxu0 0.0
    %6029 = vmatmul.mubr.f32.gmra.mxu0 %v5925
    %v6030 = vpop.f32.mrf.mxu0
    %v6031 = vadd.f32 %v5916, %v6030
    %v6032 = vpop.f32.mrf.mxu0
    %6033 = vmatprep.mubr.f32.mxu0 0.0
    %6034 = vmatmul.mubr.f32.gmra.mxu0 %v5928
    %v6035 = vpop.f32.mrf.mxu0
    %v6036 = vadd.f32 %v5916, %v6035
    %v6037 = vpop.f32.mrf.mxu0
    %6038 = vdwg.mxu0
    %v6039 = vmax.f32 %v6021, 0.0
    %v6040 = vmax.f32 %v6026, 0.0
    %v6041 = vmax.f32 %v6031, 0.0
    %v6042 = vmax.f32 %v6036, 0.0
    %v6043 = vld [vmem:[%s3 + $0x1c0] sm:$0xff]
    %v6044 = vld [vmem:[%s3 + $0x1c8] sm:$0xff]
    %v6045 = vld [vmem:[%s3 + $0x1d0] sm:$0xff]
    %v6046 = vld [vmem:[%s3 + $0x1d8] sm:$0xff]
    %v6047 = vld [vmem:[%s3 + $0x1e0] sm:$0xff]
    %v6048 = vld [vmem:[%s3 + $0x1e8] sm:$0xff]
    %v6049 = vld [vmem:[%s3 + $0x1f0] sm:$0xff]
    %v6050 = vld [vmem:[%s3 + $0x1f8] sm:$0xff]
    %v6051 = vld [vmem:[%s3 + $0x239] sm:$0x1]
    %v6052 = vlaneseq
    %v6053 = vshrl.u32 %v6052, 7
    %v6054 = vsub.s32 0, %v6053
    %v6055 = vrot.slane %v6051, %v6054
    %v6057 = vsel %vm2967, %v6039, 0
    %v6060 = vsel %vm2967, %v6040, 0
    %v6063 = vsel %vm2967, %v6041, 0
    %v6066 = vsel %vm2967, %v6042, 0
    %6068 = vmatprep.subr.mxu0 0.0
    %6069 = vmatpush1.msra.mxu0 0.0
    %6070 = vmatprep.subr.mxu0 0.0
    %6071 = vmatpush1.msra.mxu0 0.0
    %6072 = vmatprep.subr.mxu0 0.0
    %6073 = vmatpush1.msra.mxu0 0.0
    %6074 = vmatprep.subr.mxu0 0.0
    %6075 = vmatpush1.msra.mxu0 0.0
    %6076 = vmatprep.subr.mxu0 0.0
    %6077 = vmatpush1.msra.mxu0 0.0
    %6078 = vmatprep.subr.mxu0 0.0
    %6079 = vmatpush1.msra.mxu0 0.0
    %6080 = vmatprep.subr.mxu0 0.0
    %6081 = vmatpush1.msra.mxu0 0.0
    %6082 = vmatprep.subr.mxu0 0.0
    %6083 = vmatpush1.msra.mxu0 0.0
    %6084 = vmatprep.subr.mxu0 0.0
    %6085 = vmatpush1.msra.mxu0 %v6050
    %6086 = vmatprep.subr.mxu0 0.0
    %6087 = vmatpush1.msra.mxu0 %v6049
    %6088 = vmatprep.subr.mxu0 0.0
    %6089 = vmatpush1.msra.mxu0 %v6048
    %6090 = vmatprep.subr.mxu0 0.0
    %6091 = vmatpush1.msra.mxu0 %v6047
    %6092 = vmatprep.subr.mxu0 0.0
    %6093 = vmatpush1.msra.mxu0 %v6046
    %6094 = vmatprep.subr.mxu0 0.0
    %6095 = vmatpush1.msra.mxu0 %v6045
    %6096 = vmatprep.subr.mxu0 0.0
    %6097 = vmatpush1.msra.mxu0 %v6044
    %6098 = vmatprep.subr.mxu0 0.0
    %6099 = vmatpush1.msra.mxu0 %v6043
    %6100 = vmatprep.subr.mxu0 0.0
    %6101 = vmatpush2.msra.mxu0 0.0
    %6102 = vmatprep.subr.mxu0 0.0
    %6103 = vmatpush2.msra.mxu0 0.0
    %6104 = vmatprep.subr.mxu0 0.0
    %6105 = vmatpush2.msra.mxu0 0.0
    %6106 = vmatprep.subr.mxu0 0.0
    %6107 = vmatpush2.msra.mxu0 0.0
    %6108 = vmatprep.subr.mxu0 0.0
    %6109 = vmatpush2.msra.mxu0 0.0
    %6110 = vmatprep.subr.mxu0 0.0
    %6111 = vmatpush2.msra.mxu0 0.0
    %6112 = vmatprep.subr.mxu0 0.0
    %6113 = vmatpush2.msra.mxu0 0.0
    %6114 = vmatprep.subr.mxu0 0.0
    %6115 = vmatpush2.msra.mxu0 0.0
    %6116 = vmatprep.subr.mxu0 0.0
    %6117 = vmatpush2.msra.mxu0 0.0
    %6118 = vmatprep.subr.mxu0 0.0
    %6119 = vmatpush2.msra.mxu0 0.0
    %6120 = vmatprep.subr.mxu0 0.0
    %6121 = vmatpush2.msra.mxu0 0.0
    %6122 = vmatprep.subr.mxu0 0.0
    %6123 = vmatpush2.msra.mxu0 0.0
    %6124 = vmatprep.subr.mxu0 0.0
    %6125 = vmatpush2.msra.mxu0 0.0
    %6126 = vmatprep.subr.mxu0 0.0
    %6127 = vmatpush2.msra.mxu0 0.0
    %6128 = vmatprep.subr.mxu0 0.0
    %6129 = vmatpush2.msra.mxu0 0.0
    %6130 = vmatprep.subr.mxu0 0.0
    %6131 = vmatpush2.msra.mxu0 0.0
    %6132 = vmatprep.mubr.f32.mxu0 0.0
    %6133 = vmatmul.mubr.f32.gmra.mxu0 %v6057
    %v6134 = vpop.f32.mrf.mxu0
    %v6135 = vadd.f32 %v6055, %v6134
    %v6136 = vpop.f32.mrf.mxu0
    %6137 = vmatprep.mubr.f32.mxu0 0.0
    %6138 = vmatmul.mubr.f32.gmra.mxu0 %v6060
    %v6139 = vpop.f32.mrf.mxu0
    %v6140 = vadd.f32 %v6055, %v6139
    %v6141 = vpop.f32.mrf.mxu0
    %6142 = vmatprep.mubr.f32.mxu0 0.0
    %6143 = vmatmul.mubr.f32.gmra.mxu0 %v6063
    %v6144 = vpop.f32.mrf.mxu0
    %v6145 = vadd.f32 %v6055, %v6144
    %v6146 = vpop.f32.mrf.mxu0
    %6147 = vmatprep.mubr.f32.mxu0 0.0
    %6148 = vmatmul.mubr.f32.gmra.mxu0 %v6066
    %v6149 = vpop.f32.mrf.mxu0
    %v6150 = vadd.f32 %v6055, %v6149
    %v6151 = vpop.f32.mrf.mxu0
    %6152 = vdwg.mxu0
    %v6153 = vadd.f32 %v5898, %v6135
    %v6154 = vadd.f32 %v5899, %v6140
    %v6155 = vadd.f32 %v5900, %v6145
    %v6156 = vadd.f32 %v5901, %v6150
    %v6157 = vld [vmem:[%s3 + $0x237] sm:$0x1]
    %v6158 = vld [vmem:[%s3 + $0x238] sm:$0x1]
    %v6159 = vsel %vm58, %v6153, 0.0
    %6160 = vadd.xlane.f32.xlu0 %v6159
    %v6161 = vpop.xlane.xlu0 %6160
    %v6162 = vsel %vm58, %v6154, 0.0
    %6163 = vadd.xlane.f32.xlu0 %v6162
    %v6164 = vpop.xlane.xlu0 %6163
    %v6165 = vsel %vm58, %v6155, 0.0
    %6166 = vadd.xlane.f32.xlu0 %v6165
    %v6167 = vpop.xlane.xlu0 %6166
    %v6168 = vsel %vm58, %v6156, 0.0
    %6169 = vadd.xlane.f32.xlu0 %v6168
    %v6170 = vpop.xlane.xlu0 %6169
    %v6171 = vmul.f32 %v6161, %v2749
    %v6172 = vmul.f32 %v6164, %v2749
    %v6173 = vmul.f32 %v6167, %v2749
    %v6174 = vmul.f32 %v6170, %v2749
    %v6175 = vmul.f32 %v6153, %v6153
    %v6176 = vmul.f32 %v6154, %v6154
    %v6177 = vmul.f32 %v6155, %v6155
    %v6178 = vmul.f32 %v6156, %v6156
    %v6179 = vsel %vm58, %v6175, 0.0
    %6180 = vadd.xlane.f32.xlu0 %v6179
    %v6181 = vpop.xlane.xlu0 %6180
    %v6182 = vsel %vm58, %v6176, 0.0
    %6183 = vadd.xlane.f32.xlu0 %v6182
    %v6184 = vpop.xlane.xlu0 %6183
    %v6185 = vsel %vm58, %v6177, 0.0
    %6186 = vadd.xlane.f32.xlu0 %v6185
    %v6187 = vpop.xlane.xlu0 %6186
    %v6188 = vsel %vm58, %v6178, 0.0
    %6189 = vadd.xlane.f32.xlu0 %v6188
    %v6190 = vpop.xlane.xlu0 %6189
    %v6191 = vmul.f32 %v6181, %v2749
    %v6192 = vmul.f32 %v6184, %v2749
    %v6193 = vmul.f32 %v6187, %v2749
    %v6194 = vmul.f32 %v6190, %v2749
    %v6195 = vmul.f32 %v6171, %v6171
    %v6196 = vmul.f32 %v6172, %v6172
    %v6197 = vmul.f32 %v6173, %v6173
    %v6198 = vmul.f32 %v6174, %v6174
    %v6199 = vsub.f32 %v6191, %v6195
    %v6200 = vsub.f32 %v6192, %v6196
    %v6201 = vsub.f32 %v6193, %v6197
    %v6202 = vsub.f32 %v6194, %v6198
    %v6203 = vsub.f32 %v6153, %v6171
    %v6204 = vsub.f32 %v6154, %v6172
    %v6205 = vsub.f32 %v6155, %v6173
    %v6206 = vsub.f32 %v6156, %v6174
    %v6207 = vadd.f32 %v6199, 1e-05
    %v6208 = vadd.f32 %v6200, 1e-05
    %v6209 = vadd.f32 %v6201, 1e-05
    %v6210 = vadd.f32 %v6202, 1e-05
    %v6211 = vrsqrt.pop %v6207
    %v6212 = vrsqrt.pop %v6208
    %v6213 = vrsqrt.pop %v6209
    %v6214 = vrsqrt.pop %v6210
    %v6215 = vmul.f32 %v6203, %v6211
    %v6216 = vmul.f32 %v6204, %v6212
    %v6217 = vmul.f32 %v6205, %v6213
    %v6218 = vmul.f32 %v6206, %v6214
    %v6219 = vlaneseq
    %v6220 = vshrl.u32 %v6219, 7
    %v6221 = vsub.s32 0, %v6220
    %v6222 = vrot.slane %v6157, %v6221
    %v6223 = vmul.f32 %v6215, %v6222
    %v6224 = vmul.f32 %v6216, %v6222
    %v6225 = vmul.f32 %v6217, %v6222
    %v6226 = vmul.f32 %v6218, %v6222
    %v6227 = vlaneseq
    %v6228 = vshrl.u32 %v6227, 7
    %v6229 = vsub.s32 0, %v6228
    %v6230 = vrot.slane %v6158, %v6229
    %v6231 = vadd.f32 %v6223, %v6230
    %v6232 = vadd.f32 %v6224, %v6230
    %v6233 = vadd.f32 %v6225, %v6230
    %v6234 = vadd.f32 %v6226, %v6230
    %v6235 = vld [vmem:[%s1] sm:$0xff]
    %v6236 = vld [vmem:[%s1 + $0x8] sm:$0xff]
    %v6237 = vld [vmem:[%s1 + $0x10] sm:$0xff]
    %v6238 = vld [vmem:[%s1 + $0x18] sm:$0xff]
    %s6239 = scalar_lea.vmem %s1, 32
    %v6240 = vld [vmem:[%s6239] sm:$0xff]
    %v6241 = vld [vmem:[%s6239 + $0x8] sm:$0xff]
    %v6242 = vld [vmem:[%s6239 + $0x10] sm:$0xff]
    %v6243 = vld [vmem:[%s6239 + $0x18] sm:$0xff]
    %v6244 = vsub.f32 0.0, %v6240
    %v6245 = vsub.f32 0.0, %v6241
    %v6246 = vsub.f32 0.0, %v6242
    %v6247 = vsub.f32 0.0, %v6243
    %v6248 = vmul.f32 %v6244, %v6235
    %v6249 = vmul.f32 %v6245, %v6236
    %v6250 = vmul.f32 %v6246, %v6237
    %v6251 = vmul.f32 %v6247, %v6238
    %v6252 = vmul.f32 %v6248, 1.442695
    %v6253 = vpow.pop %v6252
    %v6254 = vmul.f32 %v6249, 1.442695
    %v6255 = vpow.pop %v6254
    %v6256 = vmul.f32 %v6250, 1.442695
    %v6257 = vpow.pop %v6256
    %v6258 = vmul.f32 %v6251, 1.442695
    %v6259 = vpow.pop %v6258
    %v6260 = vadd.f32 %v6253, 1.0
    %v6261 = vadd.f32 %v6255, 1.0
    %v6262 = vadd.f32 %v6257, 1.0
    %v6263 = vadd.f32 %v6259, 1.0
    %v6264 = vrcp.pop %v6260
    %v6265 = vrcp.pop %v6261
    %v6266 = vrcp.pop %v6262
    %v6267 = vrcp.pop %v6263
    %6269 = vset.pattern.permute.xlu0 0
    %6270 = vperm.xlu0 %6269, %v6264
    %v6271 = vpop.permute.xlu0 %6270
    %6274 = vset.pattern.permute.xlu0 0
    %6275 = vperm.xlu0 %6274, %v6265
    %v6276 = vpop.permute.xlu0 %6275
    %6279 = vset.pattern.permute.xlu0 0
    %6280 = vperm.xlu0 %6279, %v6266
    %v6281 = vpop.permute.xlu0 %6280
    %6284 = vset.pattern.permute.xlu0 0
    %6285 = vperm.xlu0 %6284, %v6267
    %v6286 = vpop.permute.xlu0 %6285
    %v6288 = vmul.f32 %v6231, %v6271
    %v6289 = vmul.f32 %v6232, %v6276
    %v6290 = vmul.f32 %v6233, %v6281
    %v6291 = vmul.f32 %v6234, %v6286
    %v6292 = vld [vmem:[%s2] sm:$0xff]
    %v6293 = vld [vmem:[%s2 + $0x8] sm:$0xff]
    %s6294 = scalar_lea.vmem %s2, 16
    %v6295 = vld [vmem:[%s6294] sm:$0xff]
    %v6296 = vld [vmem:[%s6294 + $0x8] sm:$0xff]
    %v6297 = vmul.f32 %v6292, %v6295
    %v6298 = vmul.f32 %v6293, %v6296
    %v6299 = vld [vmem:[%s3 + $0x200] sm:$0xff]
    %v6300 = vld [vmem:[%s3 + $0x208] sm:$0xff]
    %v6301 = vld [vmem:[%s3 + $0x210] sm:$0xff]
    %v6302 = vld [vmem:[%s3 + $0x218] sm:$0xff]
    %v6304 = vsel %vm58, %v6288, 0
    %v6307 = vsel %vm58, %v6289, 0
    %v6310 = vsel %vm58, %v6290, 0
    %v6313 = vsel %vm58, %v6291, 0
    %6315 = vmatprep.subr.mxu0 0.0
    %6316 = vmatpush1.msra.mxu0 0.0
    %6317 = vmatprep.subr.mxu0 0.0
    %6318 = vmatpush1.msra.mxu0 0.0
    %6319 = vmatprep.subr.mxu0 0.0
    %6320 = vmatpush1.msra.mxu0 0.0
    %6321 = vmatprep.subr.mxu0 0.0
    %6322 = vmatpush1.msra.mxu0 0.0
    %6323 = vmatprep.subr.mxu0 0.0
    %6324 = vmatpush1.msra.mxu0 0.0
    %6325 = vmatprep.subr.mxu0 0.0
    %6326 = vmatpush1.msra.mxu0 0.0
    %6327 = vmatprep.subr.mxu0 0.0
    %6328 = vmatpush1.msra.mxu0 0.0
    %6329 = vmatprep.subr.mxu0 0.0
    %6330 = vmatpush1.msra.mxu0 0.0
    %6331 = vmatprep.subr.mxu0 0.0
    %6332 = vmatpush1.msra.mxu0 0.0
    %6333 = vmatprep.subr.mxu0 0.0
    %6334 = vmatpush1.msra.mxu0 0.0
    %6335 = vmatprep.subr.mxu0 0.0
    %6336 = vmatpush1.msra.mxu0 0.0
    %6337 = vmatprep.subr.mxu0 0.0
    %6338 = vmatpush1.msra.mxu0 0.0
    %6339 = vmatprep.subr.mxu0 0.0
    %6340 = vmatpush1.msra.mxu0 %v6302
    %6341 = vmatprep.subr.mxu0 0.0
    %6342 = vmatpush1.msra.mxu0 %v6301
    %6343 = vmatprep.subr.mxu0 0.0
    %6344 = vmatpush1.msra.mxu0 %v6300
    %6345 = vmatprep.subr.mxu0 0.0
    %6346 = vmatpush1.msra.mxu0 %v6299
    %6347 = vmatprep.subr.mxu0 0.0
    %6348 = vmatpush2.msra.mxu0 0.0
    %6349 = vmatprep.subr.mxu0 0.0
    %6350 = vmatpush2.msra.mxu0 0.0
    %6351 = vmatprep.subr.mxu0 0.0
    %6352 = vmatpush2.msra.mxu0 0.0
    %6353 = vmatprep.subr.mxu0 0.0
    %6354 = vmatpush2.msra.mxu0 0.0
    %6355 = vmatprep.subr.mxu0 0.0
    %6356 = vmatpush2.msra.mxu0 0.0
    %6357 = vmatprep.subr.mxu0 0.0
    %6358 = vmatpush2.msra.mxu0 0.0
    %6359 = vmatprep.subr.mxu0 0.0
    %6360 = vmatpush2.msra.mxu0 0.0
    %6361 = vmatprep.subr.mxu0 0.0
    %6362 = vmatpush2.msra.mxu0 0.0
    %6363 = vmatprep.subr.mxu0 0.0
    %6364 = vmatpush2.msra.mxu0 0.0
    %6365 = vmatprep.subr.mxu0 0.0
    %6366 = vmatpush2.msra.mxu0 0.0
    %6367 = vmatprep.subr.mxu0 0.0
    %6368 = vmatpush2.msra.mxu0 0.0
    %6369 = vmatprep.subr.mxu0 0.0
    %6370 = vmatpush2.msra.mxu0 0.0
    %6371 = vmatprep.subr.mxu0 0.0
    %6372 = vmatpush2.msra.mxu0 0.0
    %6373 = vmatprep.subr.mxu0 0.0
    %6374 = vmatpush2.msra.mxu0 0.0
    %6375 = vmatprep.subr.mxu0 0.0
    %6376 = vmatpush2.msra.mxu0 0.0
    %6377 = vmatprep.subr.mxu0 0.0
    %6378 = vmatpush2.msra.mxu0 0.0
    %6379 = vmatprep.mubr.f32.mxu0 0.0
    %6380 = vmatmul.mubr.f32.gmra.mxu0 %v6304
    %v6381 = vpop.f32.mrf.mxu0
    %v6382 = vadd.f32 0.0, %v6381
    %v6383 = vpop.f32.mrf.mxu0
    %6384 = vmatprep.mubr.f32.mxu0 0.0
    %6385 = vmatmul.mubr.f32.gmra.mxu0 %v6307
    %v6386 = vpop.f32.mrf.mxu0
    %v6387 = vadd.f32 0.0, %v6386
    %v6388 = vpop.f32.mrf.mxu0
    %6389 = vmatprep.mubr.f32.mxu0 0.0
    %6390 = vmatmul.mubr.f32.gmra.mxu0 %v6310
    %v6391 = vpop.f32.mrf.mxu0
    %v6392 = vadd.f32 0.0, %v6391
    %v6393 = vpop.f32.mrf.mxu0
    %6394 = vmatprep.mubr.f32.mxu0 0.0
    %6395 = vmatmul.mubr.f32.gmra.mxu0 %v6313
    %v6396 = vpop.f32.mrf.mxu0
    %v6397 = vadd.f32 0.0, %v6396
    %v6398 = vpop.f32.mrf.mxu0
    %6399 = vdwg.mxu0
    %v6401 = vsel %vm1842, %v6297, 0
    %v6404 = vsel %vm1842, %v6298, 0
    %6406 = vmatprep.subr.mxu0 0.0
    %6407 = vmatpush1.msra.mxu0 0.0
    %6408 = vmatprep.subr.mxu0 0.0
    %6409 = vmatpush1.msra.mxu0 0.0
    %6410 = vmatprep.subr.mxu0 0.0
    %6411 = vmatpush1.msra.mxu0 0.0
    %6412 = vmatprep.subr.mxu0 0.0
    %6413 = vmatpush1.msra.mxu0 0.0
    %6414 = vmatprep.subr.mxu0 0.0
    %6415 = vmatpush1.msra.mxu0 0.0
    %6416 = vmatprep.subr.mxu0 0.0
    %6417 = vmatpush1.msra.mxu0 0.0
    %6418 = vmatprep.subr.mxu0 0.0
    %6419 = vmatpush1.msra.mxu0 0.0
    %6420 = vmatprep.subr.mxu0 0.0
    %6421 = vmatpush1.msra.mxu0 0.0
    %6422 = vmatprep.subr.mxu0 0.0
    %6423 = vmatpush1.msra.mxu0 0.0
    %6424 = vmatprep.subr.mxu0 0.0
    %6425 = vmatpush1.msra.mxu0 0.0
    %6426 = vmatprep.subr.mxu0 0.0
    %6427 = vmatpush1.msra.mxu0 0.0
    %6428 = vmatprep.subr.mxu0 0.0
    %6429 = vmatpush1.msra.mxu0 0.0
    %6430 = vmatprep.subr.mxu0 0.0
    %6431 = vmatpush1.msra.mxu0 0.0
    %6432 = vmatprep.subr.mxu0 0.0
    %6433 = vmatpush1.msra.mxu0 0.0
    %6434 = vmatprep.subr.mxu0 0.0
    %6435 = vmatpush1.msra.mxu0 %v6387
    %6436 = vmatprep.subr.mxu0 0.0
    %6437 = vmatpush1.msra.mxu0 %v6382
    %6438 = vmatprep.subr.mxu0 0.0
    %6439 = vmatpush2.msra.mxu0 0.0
    %6440 = vmatprep.subr.mxu0 0.0
    %6441 = vmatpush2.msra.mxu0 0.0
    %6442 = vmatprep.subr.mxu0 0.0
    %6443 = vmatpush2.msra.mxu0 0.0
    %6444 = vmatprep.subr.mxu0 0.0
    %6445 = vmatpush2.msra.mxu0 0.0
    %6446 = vmatprep.subr.mxu0 0.0
    %6447 = vmatpush2.msra.mxu0 0.0
    %6448 = vmatprep.subr.mxu0 0.0
    %6449 = vmatpush2.msra.mxu0 0.0
    %6450 = vmatprep.subr.mxu0 0.0
    %6451 = vmatpush2.msra.mxu0 0.0
    %6452 = vmatprep.subr.mxu0 0.0
    %6453 = vmatpush2.msra.mxu0 0.0
    %6454 = vmatprep.subr.mxu0 0.0
    %6455 = vmatpush2.msra.mxu0 0.0
    %6456 = vmatprep.subr.mxu0 0.0
    %6457 = vmatpush2.msra.mxu0 0.0
    %6458 = vmatprep.subr.mxu0 0.0
    %6459 = vmatpush2.msra.mxu0 0.0
    %6460 = vmatprep.subr.mxu0 0.0
    %6461 = vmatpush2.msra.mxu0 0.0
    %6462 = vmatprep.subr.mxu0 0.0
    %6463 = vmatpush2.msra.mxu0 0.0
    %6464 = vmatprep.subr.mxu0 0.0
    %6465 = vmatpush2.msra.mxu0 0.0
    %6466 = vmatprep.subr.mxu0 0.0
    %6467 = vmatpush2.msra.mxu0 0.0
    %6468 = vmatprep.subr.mxu0 0.0
    %6469 = vmatpush2.msra.mxu0 0.0
    %6470 = vmatprep.mubr.f32.mxu0 0.0
    %6471 = vmatmul.mubr.f32.gmra.mxu0 %v6401
    %v6472 = vpop.f32.mrf.mxu0
    %v6473 = vadd.f32 0.0, %v6472
    %v6474 = vpop.f32.mrf.mxu0
    %6475 = vmatprep.mubr.f32.mxu0 0.0
    %6476 = vmatmul.mubr.f32.gmra.mxu0 %v6404
    %v6477 = vpop.f32.mrf.mxu0
    %v6478 = vadd.f32 0.0, %v6477
    %v6479 = vpop.f32.mrf.mxu0
    %6480 = vdwg.mxu0
    %6481 = vmatprep.subr.mxu0 0.0
    %6482 = vmatpush1.msra.mxu0 0.0
    %6483 = vmatprep.subr.mxu0 0.0
    %6484 = vmatpush1.msra.mxu0 0.0
    %6485 = vmatprep.subr.mxu0 0.0
    %6486 = vmatpush1.msra.mxu0 0.0
    %6487 = vmatprep.subr.mxu0 0.0
    %6488 = vmatpush1.msra.mxu0 0.0
    %6489 = vmatprep.subr.mxu0 0.0
    %6490 = vmatpush1.msra.mxu0 0.0
    %6491 = vmatprep.subr.mxu0 0.0
    %6492 = vmatpush1.msra.mxu0 0.0
    %6493 = vmatprep.subr.mxu0 0.0
    %6494 = vmatpush1.msra.mxu0 0.0
    %6495 = vmatprep.subr.mxu0 0.0
    %6496 = vmatpush1.msra.mxu0 0.0
    %6497 = vmatprep.subr.mxu0 0.0
    %6498 = vmatpush1.msra.mxu0 0.0
    %6499 = vmatprep.subr.mxu0 0.0
    %6500 = vmatpush1.msra.mxu0 0.0
    %6501 = vmatprep.subr.mxu0 0.0
    %6502 = vmatpush1.msra.mxu0 0.0
    %6503 = vmatprep.subr.mxu0 0.0
    %6504 = vmatpush1.msra.mxu0 0.0
    %6505 = vmatprep.subr.mxu0 0.0
    %6506 = vmatpush1.msra.mxu0 0.0
    %6507 = vmatprep.subr.mxu0 0.0
    %6508 = vmatpush1.msra.mxu0 0.0
    %6509 = vmatprep.subr.mxu0 0.0
    %6510 = vmatpush1.msra.mxu0 %v6397
    %6511 = vmatprep.subr.mxu0 0.0
    %6512 = vmatpush1.msra.mxu0 %v6392
    %6513 = vmatprep.subr.mxu0 0.0
    %6514 = vmatpush2.msra.mxu0 0.0
    %6515 = vmatprep.subr.mxu0 0.0
    %6516 = vmatpush2.msra.mxu0 0.0
    %6517 = vmatprep.subr.mxu0 0.0
    %6518 = vmatpush2.msra.mxu0 0.0
    %6519 = vmatprep.subr.mxu0 0.0
    %6520 = vmatpush2.msra.mxu0 0.0
    %6521 = vmatprep.subr.mxu0 0.0
    %6522 = vmatpush2.msra.mxu0 0.0
    %6523 = vmatprep.subr.mxu0 0.0
    %6524 = vmatpush2.msra.mxu0 0.0
    %6525 = vmatprep.subr.mxu0 0.0
    %6526 = vmatpush2.msra.mxu0 0.0
    %6527 = vmatprep.subr.mxu0 0.0
    %6528 = vmatpush2.msra.mxu0 0.0
    %6529 = vmatprep.subr.mxu0 0.0
    %6530 = vmatpush2.msra.mxu0 0.0
    %6531 = vmatprep.subr.mxu0 0.0
    %6532 = vmatpush2.msra.mxu0 0.0
    %6533 = vmatprep.subr.mxu0 0.0
    %6534 = vmatpush2.msra.mxu0 0.0
    %6535 = vmatprep.subr.mxu0 0.0
    %6536 = vmatpush2.msra.mxu0 0.0
    %6537 = vmatprep.subr.mxu0 0.0
    %6538 = vmatpush2.msra.mxu0 0.0
    %6539 = vmatprep.subr.mxu0 0.0
    %6540 = vmatpush2.msra.mxu0 0.0
    %6541 = vmatprep.subr.mxu0 0.0
    %6542 = vmatpush2.msra.mxu0 0.0
    %6543 = vmatprep.subr.mxu0 0.0
    %6544 = vmatpush2.msra.mxu0 0.0
    %6545 = vmatprep.mubr.f32.mxu0 0.0
    %6546 = vmatmul.mubr.f32.gmra.mxu0 %v6401
    %v6547 = vpop.f32.mrf.mxu0
    %v6548 = vadd.f32 0.0, %v6547
    %v6549 = vpop.f32.mrf.mxu0
    %6550 = vmatprep.mubr.f32.mxu0 0.0
    %6551 = vmatmul.mubr.f32.gmra.mxu0 %v6404
    %v6552 = vpop.f32.mrf.mxu0
    %v6553 = vadd.f32 0.0, %v6552
    %v6554 = vpop.f32.mrf.mxu0
    %6555 = vdwg.mxu0
    %v6556 = vld [vmem:[%s3 + $0x23a] sm:$0x1]
    %v6557 = vlaneseq
    %v6558 = vshrl.u32 %v6557, 7
    %v6559 = vsub.s32 0, %v6558
    %v6560 = vrot.slane %v6556, %v6559
    %v6561 = vadd.f32 %v6473, %v6560
    %v6562 = vadd.f32 %v6478, %v6560
    %v6563 = vadd.f32 %v6548, %v6560
    %v6564 = vadd.f32 %v6553, %v6560
    %v6565 = vmax.f32 %v6561, 0.0
    %v6566 = vmax.f32 %v6562, 0.0
    %v6567 = vmax.f32 %v6563, 0.0
    %v6568 = vmax.f32 %v6564, 0.0
    %v6569 = vld [vmem:[%s3 + $0x220] sm:$0xff]
    %v6570 = vld [vmem:[%s3 + $0x228] sm:$0xff]
    %v6572 = vsel %vm58, %v6565, 0
    %v6575 = vsel %vm58, %v6566, 0
    %v6578 = vsel %vm58, %v6567, 0
    %v6581 = vsel %vm58, %v6568, 0
    %v6584 = vsel %vm58, %v6569, 0
    %v6587 = vsel %vm58, %v6570, 0
    %6589 = vmatprep.subr.mxu0 0.0
    %6590 = vmatpush1.xpose.msra.mxu0 0.0
    %6591 = vmatprep.subr.mxu0 0.0
    %6592 = vmatpush1.xpose.msra.mxu0 0.0
    %6593 = vmatprep.subr.mxu0 0.0
    %6594 = vmatpush1.xpose.msra.mxu0 0.0
    %6595 = vmatprep.subr.mxu0 0.0
    %6596 = vmatpush1.xpose.msra.mxu0 0.0
    %6597 = vmatprep.subr.mxu0 0.0
    %6598 = vmatpush1.xpose.msra.mxu0 0.0
    %6599 = vmatprep.subr.mxu0 0.0
    %6600 = vmatpush1.xpose.msra.mxu0 0.0
    %6601 = vmatprep.subr.mxu0 0.0
    %6602 = vmatpush1.xpose.msra.mxu0 0.0
    %6603 = vmatprep.subr.mxu0 0.0
    %6604 = vmatpush1.xpose.msra.mxu0 0.0
    %6605 = vmatprep.subr.mxu0 0.0
    %6606 = vmatpush1.xpose.msra.mxu0 0.0
    %6607 = vmatprep.subr.mxu0 0.0
    %6608 = vmatpush1.xpose.msra.mxu0 0.0
    %6609 = vmatprep.subr.mxu0 0.0
    %6610 = vmatpush1.xpose.msra.mxu0 0.0
    %6611 = vmatprep.subr.mxu0 0.0
    %6612 = vmatpush1.xpose.msra.mxu0 0.0
    %6613 = vmatprep.subr.mxu0 0.0
    %6614 = vmatpush1.xpose.msra.mxu0 0.0
    %6615 = vmatprep.subr.mxu0 0.0
    %6616 = vmatpush1.xpose.msra.mxu0 0.0
    %6617 = vmatprep.subr.mxu0 0.0
    %6618 = vmatpush1.xpose.msra.mxu0 %v6587
    %6619 = vmatprep.subr.mxu0 0.0
    %6620 = vmatpush1.xpose.msra.mxu0 %v6584
    %6621 = vmatprep.subr.mxu0 0.0
    %6622 = vmatpush2.xpose.msra.mxu0 0.0
    %6623 = vmatprep.subr.mxu0 0.0
    %6624 = vmatpush2.xpose.msra.mxu0 0.0
    %6625 = vmatprep.subr.mxu0 0.0
    %6626 = vmatpush2.xpose.msra.mxu0 0.0
    %6627 = vmatprep.subr.mxu0 0.0
    %6628 = vmatpush2.xpose.msra.mxu0 0.0
    %6629 = vmatprep.subr.mxu0 0.0
    %6630 = vmatpush2.xpose.msra.mxu0 0.0
    %6631 = vmatprep.subr.mxu0 0.0
    %6632 = vmatpush2.xpose.msra.mxu0 0.0
    %6633 = vmatprep.subr.mxu0 0.0
    %6634 = vmatpush2.xpose.msra.mxu0 0.0
    %6635 = vmatprep.subr.mxu0 0.0
    %6636 = vmatpush2.xpose.msra.mxu0 0.0
    %6637 = vmatprep.subr.mxu0 0.0
    %6638 = vmatpush2.xpose.msra.mxu0 0.0
    %6639 = vmatprep.subr.mxu0 0.0
    %6640 = vmatpush2.xpose.msra.mxu0 0.0
    %6641 = vmatprep.subr.mxu0 0.0
    %6642 = vmatpush2.xpose.msra.mxu0 0.0
    %6643 = vmatprep.subr.mxu0 0.0
    %6644 = vmatpush2.xpose.msra.mxu0 0.0
    %6645 = vmatprep.subr.mxu0 0.0
    %6646 = vmatpush2.xpose.msra.mxu0 0.0
    %6647 = vmatprep.subr.mxu0 0.0
    %6648 = vmatpush2.xpose.msra.mxu0 0.0
    %6649 = vmatprep.subr.mxu0 0.0
    %6650 = vmatpush2.xpose.msra.mxu0 0.0
    %6651 = vmatprep.subr.mxu0 0.0
    %6652 = vmatpush2.xpose.msra.mxu0 0.0
    %6653 = vmatprep.mubr.f32.mxu0 0.0
    %6654 = vmatmul.mubr.f32.gmra.mxu0 %v6572
    %v6655 = vpop.f32.mrf.mxu0
    %v6656 = vadd.f32 0.0, %v6655
    %v6657 = vpop.f32.mrf.mxu0
    %6658 = vmatprep.mubr.f32.mxu0 0.0
    %6659 = vmatmul.mubr.f32.gmra.mxu0 %v6575
    %v6660 = vpop.f32.mrf.mxu0
    %v6661 = vadd.f32 0.0, %v6660
    %v6662 = vpop.f32.mrf.mxu0
    %6663 = vmatprep.mubr.f32.mxu0 0.0
    %6664 = vmatmul.mubr.f32.gmra.mxu0 %v6578
    %v6665 = vpop.f32.mrf.mxu0
    %v6666 = vadd.f32 0.0, %v6665
    %v6667 = vpop.f32.mrf.mxu0
    %6668 = vmatprep.mubr.f32.mxu0 0.0
    %6669 = vmatmul.mubr.f32.gmra.mxu0 %v6581
    %v6670 = vpop.f32.mrf.mxu0
    %v6671 = vadd.f32 0.0, %v6670
    %v6672 = vpop.f32.mrf.mxu0
    %6673 = vdwg.mxu0
    %6674 = vmatprep.subr.mxu0 0.0
    %6675 = vmatpush1.msra.mxu0 0.0
    %6676 = vmatprep.subr.mxu0 0.0
    %6677 = vmatpush1.msra.mxu0 0.0
    %6678 = vmatprep.subr.mxu0 0.0
    %6679 = vmatpush1.msra.mxu0 0.0
    %6680 = vmatprep.subr.mxu0 0.0
    %6681 = vmatpush1.msra.mxu0 0.0
    %6682 = vmatprep.subr.mxu0 0.0
    %6683 = vmatpush1.msra.mxu0 0.0
    %6684 = vmatprep.subr.mxu0 0.0
    %6685 = vmatpush1.msra.mxu0 0.0
    %6686 = vmatprep.subr.mxu0 0.0
    %6687 = vmatpush1.msra.mxu0 0.0
    %6688 = vmatprep.subr.mxu0 0.0
    %6689 = vmatpush1.msra.mxu0 0.0
    %6690 = vmatprep.subr.mxu0 0.0
    %6691 = vmatpush1.msra.mxu0 0.0
    %6692 = vmatprep.subr.mxu0 0.0
    %6693 = vmatpush1.msra.mxu0 0.0
    %6694 = vmatprep.subr.mxu0 0.0
    %6695 = vmatpush1.msra.mxu0 0.0
    %6696 = vmatprep.subr.mxu0 0.0
    %6697 = vmatpush1.msra.mxu0 0.0
    %6698 = vmatprep.subr.mxu0 0.0
    %6699 = vmatpush1.msra.mxu0 0.0
    %6700 = vmatprep.subr.mxu0 0.0
    %6701 = vmatpush1.msra.mxu0 0.0
    %6702 = vmatprep.subr.mxu0 0.0
    %6703 = vmatpush1.msra.mxu0 %v6661
    %6704 = vmatprep.subr.mxu0 0.0
    %6705 = vmatpush1.msra.mxu0 %v6656
    %6706 = vmatprep.subr.mxu0 0.0
    %6707 = vmatpush2.msra.mxu0 0.0
    %6708 = vmatprep.subr.mxu0 0.0
    %6709 = vmatpush2.msra.mxu0 0.0
    %6710 = vmatprep.subr.mxu0 0.0
    %6711 = vmatpush2.msra.mxu0 0.0
    %6712 = vmatprep.subr.mxu0 0.0
    %6713 = vmatpush2.msra.mxu0 0.0
    %6714 = vmatprep.subr.mxu0 0.0
    %6715 = vmatpush2.msra.mxu0 0.0
    %6716 = vmatprep.subr.mxu0 0.0
    %6717 = vmatpush2.msra.mxu0 0.0
    %6718 = vmatprep.subr.mxu0 0.0
    %6719 = vmatpush2.msra.mxu0 0.0
    %6720 = vmatprep.subr.mxu0 0.0
    %6721 = vmatpush2.msra.mxu0 0.0
    %6722 = vmatprep.subr.mxu0 0.0
    %6723 = vmatpush2.msra.mxu0 0.0
    %6724 = vmatprep.subr.mxu0 0.0
    %6725 = vmatpush2.msra.mxu0 0.0
    %6726 = vmatprep.subr.mxu0 0.0
    %6727 = vmatpush2.msra.mxu0 0.0
    %6728 = vmatprep.subr.mxu0 0.0
    %6729 = vmatpush2.msra.mxu0 0.0
    %6730 = vmatprep.subr.mxu0 0.0
    %6731 = vmatpush2.msra.mxu0 0.0
    %6732 = vmatprep.subr.mxu0 0.0
    %6733 = vmatpush2.msra.mxu0 0.0
    %6734 = vmatprep.subr.mxu0 0.0
    %6735 = vmatpush2.msra.mxu0 0.0
    %6736 = vmatprep.subr.mxu0 0.0
    %6737 = vmatpush2.msra.mxu0 0.0
    %6738 = vmatprep.mubr.f32.mxu0 0.0
    %6739 = vmatmul.mubr.f32.gmra.mxu0 %v6401
    %v6740 = vpop.f32.mrf.mxu0
    %v6741 = vadd.f32 0.0, %v6740
    %v6742 = vpop.f32.mrf.mxu0
    %6743 = vmatprep.mubr.f32.mxu0 0.0
    %6744 = vmatmul.mubr.f32.gmra.mxu0 %v6404
    %v6745 = vpop.f32.mrf.mxu0
    %v6746 = vadd.f32 0.0, %v6745
    %v6747 = vpop.f32.mrf.mxu0
    %6748 = vdwg.mxu0
    %6749 = vmatprep.subr.mxu0 0.0
    %6750 = vmatpush1.msra.mxu0 0.0
    %6751 = vmatprep.subr.mxu0 0.0
    %6752 = vmatpush1.msra.mxu0 0.0
    %6753 = vmatprep.subr.mxu0 0.0
    %6754 = vmatpush1.msra.mxu0 0.0
    %6755 = vmatprep.subr.mxu0 0.0
    %6756 = vmatpush1.msra.mxu0 0.0
    %6757 = vmatprep.subr.mxu0 0.0
    %6758 = vmatpush1.msra.mxu0 0.0
    %6759 = vmatprep.subr.mxu0 0.0
    %6760 = vmatpush1.msra.mxu0 0.0
    %6761 = vmatprep.subr.mxu0 0.0
    %6762 = vmatpush1.msra.mxu0 0.0
    %6763 = vmatprep.subr.mxu0 0.0
    %6764 = vmatpush1.msra.mxu0 0.0
    %6765 = vmatprep.subr.mxu0 0.0
    %6766 = vmatpush1.msra.mxu0 0.0
    %6767 = vmatprep.subr.mxu0 0.0
    %6768 = vmatpush1.msra.mxu0 0.0
    %6769 = vmatprep.subr.mxu0 0.0
    %6770 = vmatpush1.msra.mxu0 0.0
    %6771 = vmatprep.subr.mxu0 0.0
    %6772 = vmatpush1.msra.mxu0 0.0
    %6773 = vmatprep.subr.mxu0 0.0
    %6774 = vmatpush1.msra.mxu0 0.0
    %6775 = vmatprep.subr.mxu0 0.0
    %6776 = vmatpush1.msra.mxu0 0.0
    %6777 = vmatprep.subr.mxu0 0.0
    %6778 = vmatpush1.msra.mxu0 %v6671
    %6779 = vmatprep.subr.mxu0 0.0
    %6780 = vmatpush1.msra.mxu0 %v6666
    %6781 = vmatprep.subr.mxu0 0.0
    %6782 = vmatpush2.msra.mxu0 0.0
    %6783 = vmatprep.subr.mxu0 0.0
    %6784 = vmatpush2.msra.mxu0 0.0
    %6785 = vmatprep.subr.mxu0 0.0
    %6786 = vmatpush2.msra.mxu0 0.0
    %6787 = vmatprep.subr.mxu0 0.0
    %6788 = vmatpush2.msra.mxu0 0.0
    %6789 = vmatprep.subr.mxu0 0.0
    %6790 = vmatpush2.msra.mxu0 0.0
    %6791 = vmatprep.subr.mxu0 0.0
    %6792 = vmatpush2.msra.mxu0 0.0
    %6793 = vmatprep.subr.mxu0 0.0
    %6794 = vmatpush2.msra.mxu0 0.0
    %6795 = vmatprep.subr.mxu0 0.0
    %6796 = vmatpush2.msra.mxu0 0.0
    %6797 = vmatprep.subr.mxu0 0.0
    %6798 = vmatpush2.msra.mxu0 0.0
    %6799 = vmatprep.subr.mxu0 0.0
    %6800 = vmatpush2.msra.mxu0 0.0
    %6801 = vmatprep.subr.mxu0 0.0
    %6802 = vmatpush2.msra.mxu0 0.0
    %6803 = vmatprep.subr.mxu0 0.0
    %6804 = vmatpush2.msra.mxu0 0.0
    %6805 = vmatprep.subr.mxu0 0.0
    %6806 = vmatpush2.msra.mxu0 0.0
    %6807 = vmatprep.subr.mxu0 0.0
    %6808 = vmatpush2.msra.mxu0 0.0
    %6809 = vmatprep.subr.mxu0 0.0
    %6810 = vmatpush2.msra.mxu0 0.0
    %6811 = vmatprep.subr.mxu0 0.0
    %6812 = vmatpush2.msra.mxu0 0.0
    %6813 = vmatprep.mubr.f32.mxu0 0.0
    %6814 = vmatmul.mubr.f32.gmra.mxu0 %v6401
    %v6815 = vpop.f32.mrf.mxu0
    %v6816 = vadd.f32 0.0, %v6815
    %v6817 = vpop.f32.mrf.mxu0
    %6818 = vmatprep.mubr.f32.mxu0 0.0
    %6819 = vmatmul.mubr.f32.gmra.mxu0 %v6404
    %v6820 = vpop.f32.mrf.mxu0
    %v6821 = vadd.f32 0.0, %v6820
    %v6822 = vpop.f32.mrf.mxu0
    %6823 = vdwg.mxu0
    %v6824 = vld [vmem:[%s3 + $0x23b] sm:$0x1]
    %v6825 = vlaneseq
    %v6826 = vshrl.u32 %v6825, 7
    %v6827 = vsub.s32 0, %v6826
    %v6828 = vrot.slane %v6824, %v6827
    %v6829 = vadd.f32 %v6741, %v6828
    %v6830 = vadd.f32 %v6746, %v6828
    %v6831 = vadd.f32 %v6816, %v6828
    %v6832 = vadd.f32 %v6821, %v6828
    %6833 = vst.msk [vmem:[#allocation2] sm:$0xff] %vm1842, %v6829
    %6834 = vst.msk [vmem:[#allocation2 + $0x8] sm:$0xff] %vm1842, %v6830
    %6835 = vst.msk [vmem:[#allocation2 + $0x10] sm:$0xff] %vm1842, %v6831
    %6836 = vst.msk [vmem:[#allocation2 + $0x18] sm:$0xff] %vm1842, %v6832
    // Predicated region
    $region22: #{time_series_prediction.1} parent=1 // pred_check
      _
    $region23: #{time_series_prediction.1} parent=1 // pred_check_branch
      %6838 = sbr.rel (0) target = $region25
    $region24: #{time_series_prediction.1} parent=1 // pred_region
      %s6840 = ssub.s32 512, 512
      %6841 = vsyncadd [#allocation3], %s6840
      %s6842 = sshll.u32 [#allocation2], 4
      %s6843 = int_to_ptr.vmem [resolvable:$true] %s6842
      %6848 = dma.vmem_to_hbm [thread:$0]  %s6843, 512, %s5, [#allocation3], 128, 128, 8
    $region25: #{time_series_prediction.1} parent=1 // pred_fallthru
      _
    // Predicated region
    $region26: #{time_series_prediction.1} parent=1 // pred_check
      _
    $region27: #{time_series_prediction.1} parent=1 // pred_check_branch
      %6850 = sbr.rel (0) target = $region29
    $region28: #{time_series_prediction.1} parent=1 // pred_region
      %6851 = dma.done [#allocation3], 512
    $region29: #{time_series_prediction.1} parent=1 // pred_fallthru
      _
    %6852 = vsyncpa [#allocation3], 1

</llo_original>
